<compile_context>
chip_gen: v7x
topology: tpu7x:2x2x1
jax: 0.10.0
libtpu: 0.0.40
codegen_flags: <defaults>
</compile_context>

<pallas_src>
import functools

import jax
import jax.numpy as jnp
from jax import lax
from jax.experimental import pallas as pl
from jax.experimental.pallas import tpu as pltpu

C_PAD = 128  # lane-dense channel width (one full vreg lane row)


# ----------------------------- Pallas kernel ------------------------------- #

def _full_spec(shape):
    nd = len(shape)
    return pl.BlockSpec(shape, lambda i, _nd=nd: (0,) * _nd)


def make_multiscale_kernel(scale_shapes, layer_counts):
    """Fused [conv3x3 + BN + ReLU]*L + maxpool-over-H for EVERY scale.

    Ref layout (all channel dims padded to C_PAD):
      inputs : x_s (bs, H_s, W, C) f32 for each scale s, then per scale/layer
               w9 (9, C, C) bf16, gamma (1, C) f32, beta (1, C) f32
      outputs: out_s (bs, W, C) f32  -- max over H_s of the last layer
      scratch: a_pad_s (bs, H_s+2, W+2, C) f32  -- zero-bordered activation
    """
    num_scales = len(scale_shapes)
    num_param_refs = 3 * sum(layer_counts)

    def kernel(*refs):
        x_refs = refs[:num_scales]
        pos = num_scales
        prm_refs = refs[pos:pos + num_param_refs]
        pos += num_param_refs
        out_refs = refs[pos:pos + num_scales]
        pad_refs = refs[pos + num_scales:]

        p_off = 0
        for s in range(num_scales):
            bs, H, W = scale_shapes[s]
            L = layer_counts[s]
            M = bs * H * W
            inv_m = 1.0 / float(M)
            x_ref, o_ref, a_pad = x_refs[s], out_refs[s], pad_refs[s]

            # Zero-padded activation buffer: interior is overwritten per layer,
            # the one-wide spatial border stays zero (== Conv2d padding=1).
            a_pad[...] = jnp.zeros_like(a_pad)
            a_pad[:, 1:H + 1, 1:W + 1, :] = x_ref[...]

            for l in range(L):
                w_ref = prm_refs[p_off + 3 * l]
                g_ref = prm_refs[p_off + 3 * l + 1]
                b_ref = prm_refs[p_off + 3 * l + 2]

                # 3x3 conv as 9 shifted bf16 matmuls accumulated in f32
                # (fused im2col straight from the VMEM-resident scratch).
                acc = jnp.zeros((M, C_PAD), jnp.float32)
                for kh in range(3):
                    for kw in range(3):
                        win = a_pad[:, kh:kh + H, kw:kw + W, :]
                        xm = win.reshape(M, C_PAD).astype(jnp.bfloat16)
                        acc = acc + jnp.dot(xm, w_ref[kh * 3 + kw],
                                            preferred_element_type=jnp.float32)

                # Training-mode BatchNorm (biased variance, eps=1e-5), one-pass
                # stats (conv bias omitted: cancelled by mean subtraction).
                mean = jnp.sum(acc, axis=0, keepdims=True) * inv_m
                msq = jnp.sum(acc * acc, axis=0, keepdims=True) * inv_m
                var = jnp.maximum(msq - mean * mean, 0.0)
                y = (acc - mean) * lax.rsqrt(var + 1e-5)
                y = jnp.maximum(y * g_ref[...] + b_ref[...], 0.0)

                if l + 1 < L:
                    # Next layer's input: back into the padded VMEM scratch.
                    a_pad[:, 1:H + 1, 1:W + 1, :] = y.reshape(bs, H, W, C_PAD)
                else:
                    # Fused max-pool over H (num_nearby); lane-dense store.
                    o_ref[...] = jnp.max(y.reshape(bs, H, W, C_PAD), axis=1)

            p_off += 3 * L

    return kernel


def multiscale_mlp(x_list, params):
    """Runs every scale's whole MLP + maxpool in a SINGLE pallas_call.

    x_list[s]: (bs, H_s, W, C_in) f32.  Returns tuple of (bs, W, C_PAD) f32.
    """
    num_scales = len(x_list)
    scale_shapes, layer_counts = [], []
    args, in_specs = [], []

    for x in x_list:
        bs, H, W, c_in = x.shape
        xp = jnp.pad(x, ((0, 0), (0, 0), (0, 0), (0, C_PAD - c_in)))
        scale_shapes.append((bs, H, W))
        args.append(xp)
        in_specs.append(_full_spec(xp.shape))

    for lp in params:
        layer_counts.append(len(lp))
        for w9, gamma, beta in lp:
            args += [w9, gamma, beta]
            in_specs += [_full_spec(w9.shape), _full_spec(gamma.shape),
                         _full_spec(beta.shape)]

    out_shapes, out_specs, scratch = [], [], []
    for bs, H, W in scale_shapes:
        out_shapes.append(jax.ShapeDtypeStruct((bs, W, C_PAD), jnp.float32))
        out_specs.append(_full_spec((bs, W, C_PAD)))
        scratch.append(pltpu.VMEM((bs, H + 2, W + 2, C_PAD), jnp.float32))

    kernel = make_multiscale_kernel(tuple(scale_shapes), tuple(layer_counts))
    return pl.pallas_call(
        kernel,
        out_shape=tuple(out_shapes),
        grid=(1,),
        in_specs=in_specs,
        out_specs=tuple(out_specs),
        scratch_shapes=scratch,
        compiler_params=pltpu.CompilerParams(
            dimension_semantics=("arbitrary",)),
    )(*args)


# ------------------------------ JAX glue ----------------------------------- #

def fps(data, n, key):
    # data: (bs, N, 3).  torch.randint initial seed -> deterministic jax key.
    bs, N, _ = data.shape
    farthest0 = jax.random.randint(key, (bs,), 0, N)
    distances0 = jnp.full((bs, N), 100000.0, dtype=jnp.float32)
    idxs0 = jnp.zeros((bs, n), dtype=jnp.int32)
    batch = jnp.arange(bs)

    def body(i, carry):
        idxs, distances, farthest = carry
        idxs = idxs.at[:, i].set(farthest)
        centroid = data[batch, farthest, :][:, None, :]
        dist = jnp.sum((data - centroid) ** 2, -1)
        distances = jnp.minimum(distances, dist)
        farthest = jnp.argmax(distances, -1)
        return idxs, distances, farthest

    idxs, _, _ = lax.fori_loop(0, n, body, (idxs0, distances0, farthest0))
    return idxs  # (bs, n)


def index_points(idx, points):
    bs, S = idx.shape
    C = points.shape[2]
    return jnp.take_along_axis(
        points, jnp.broadcast_to(idx[:, :, None], (bs, S, C)), axis=1)


def dis_fn(points, centroids):
    return jnp.sum((points[:, None, :, :] - centroids[:, :, None, :]) ** 2, -1)


def rgroup(points, centroids, radius, num_nearby):
    # Faithful to the reference bug: the radius mask writes into idx which is
    # then overwritten by the sort indices (dim=1), so radius has no effect and
    # the result is the centroid-rank ordering for the first num_nearby points.
    del radius
    d = dis_fn(points[:, :num_nearby, :], centroids)   # (bs, nc, num_nearby)
    return jnp.argsort(d, axis=1)                      # (bs, nc, num_nearby)


def init_params(key, add_attribute, mlp):
    params = []
    k = key
    for i in range(len(mlp)):
        layer_params = []
        in_ch = add_attribute + 3
        for out_ch in mlp[i]:
            k, kw = jax.random.split(k)
            w = 0.1 * jax.random.normal(kw, (out_ch, in_ch, 3, 3), jnp.float32)
            # (C_out, C_in, 3, 3) -> (9, C_in, C_out) shifted-matmul weights,
            # zero-padded to (9, C_PAD, C_PAD), bf16 for the MXU.
            w9 = jnp.transpose(w, (2, 3, 1, 0)).reshape(9, in_ch, out_ch)
            w9 = jnp.pad(w9, ((0, 0), (0, C_PAD - in_ch), (0, C_PAD - out_ch)))
            gamma = jnp.pad(jnp.ones((1, out_ch), jnp.float32),
                            ((0, 0), (0, C_PAD - out_ch)))
            beta = jnp.zeros((1, C_PAD), jnp.float32)
            layer_params.append((w9.astype(jnp.bfloat16), gamma, beta))
            in_ch = out_ch
        params.append(layer_params)
    return params


def point_net_set_abstraction(points, feature_vector, params, key, *, n,
                              radius, num_nearby_values, add_attribute, mlp):
    # points: (bs, 3, N); feature_vector: (bs, add_attribute, N)
    bs = points.shape[0]
    if add_attribute == 0:
        feat = points
    else:
        feat = jnp.concatenate((points, feature_vector), axis=-2)  # (bs, 3+a, N)

    pts = jnp.transpose(points, (0, 2, 1))                 # (bs, N, 3)
    idx_centroids = fps(pts, n, key)                       # (bs, n)
    centroids = index_points(idx_centroids, pts)           # (bs, n, 3)
    featp = jnp.transpose(feat, (0, 2, 1))                 # (bs, N, C_feat)

    xs = []
    for i in range(len(mlp)):
        H = num_nearby_values[i]
        group_idx = rgroup(pts, centroids, radius[i], H)           # (bs, n, H)
        gp = featp[jnp.arange(bs)[:, None, None], group_idx, :]    # (bs, n, H, Cf)
        xs.append(jnp.transpose(gp, (0, 2, 1, 3)).astype(jnp.float32))  # (bs,H,n,Cf)

    pooled = multiscale_mlp(xs, params)                    # tuple of (bs, n, C_PAD)

    total = []
    for i in range(len(mlp)):
        c_out = mlp[i][-1]
        total.append(jnp.transpose(pooled[i][:, :, :c_out], (0, 2, 1)))  # (bs,Cout,n)

    new_points = jnp.transpose(centroids, (0, 2, 1))               # (bs, 3, n)
    total_feature = jnp.concatenate(total, axis=-2)                # (bs, sumC, n)
    return new_points, total_feature


# --------------------------------- main ------------------------------------ #

if __name__ == "__main__":
    key = jax.random.PRNGKey(0)
    k_pts, k_feat, k_fps, k_par = jax.random.split(key, 4)

    bs, N = 2, 16
    add_attribute = 3
    n_centroids = 8
    radius = [0.4, 0.8]
    num_nearby_values = [8, 16]
    mlp = [[16, 32], [16, 32]]

    points = jax.random.normal(k_pts, (bs, 3, N), dtype=jnp.float32)
    feature_vector = jax.random.normal(k_feat, (bs, add_attribute, N),
                                       dtype=jnp.float32)
    params = init_params(k_par, add_attribute, mlp)

    fwd = jax.jit(functools.partial(
        point_net_set_abstraction,
        n=n_centroids, radius=tuple(radius),
        num_nearby_values=tuple(num_nearby_values),
        add_attribute=add_attribute,
        mlp=tuple(tuple(m) for m in mlp)))

    new_points, total_feature = fwd(points, feature_vector, params, k_fps)
    jax.block_until_ready((new_points, total_feature))

    assert new_points.shape == (bs, 3, n_centroids)
    assert total_feature.shape == (bs, mlp[0][-1] + mlp[1][-1], n_centroids)
    print("KERNEL_OK")
</pallas_src>

<mosaic_0001>
module attributes {stable_mosaic.version = 11 : i64} {
  func.func @kernel(%arg0: i32, %arg1: memref<2x8x8x128xf32, #tpu.memory_space<vmem>>, %arg2: memref<2x16x8x128xf32, #tpu.memory_space<vmem>>, %arg3: memref<9x128x128xbf16, #tpu.memory_space<vmem>>, %arg4: memref<1x128xf32, #tpu.memory_space<vmem>>, %arg5: memref<1x128xf32, #tpu.memory_space<vmem>>, %arg6: memref<9x128x128xbf16, #tpu.memory_space<vmem>>, %arg7: memref<1x128xf32, #tpu.memory_space<vmem>>, %arg8: memref<1x128xf32, #tpu.memory_space<vmem>>, %arg9: memref<9x128x128xbf16, #tpu.memory_space<vmem>>, %arg10: memref<1x128xf32, #tpu.memory_space<vmem>>, %arg11: memref<1x128xf32, #tpu.memory_space<vmem>>, %arg12: memref<9x128x128xbf16, #tpu.memory_space<vmem>>, %arg13: memref<1x128xf32, #tpu.memory_space<vmem>>, %arg14: memref<1x128xf32, #tpu.memory_space<vmem>>, %arg15: memref<2x8x128xf32, #tpu.memory_space<vmem>>, %arg16: memref<2x8x128xf32, #tpu.memory_space<vmem>>, %arg17: memref<2x10x10x128xf32, #tpu.memory_space<vmem>>, %arg18: memref<2x18x10x128xf32, #tpu.memory_space<vmem>>) attributes {dimension_semantics = [#tpu.dimension_semantics<arbitrary>], iteration_bounds = array<i64: 1>, scalar_prefetch = 0 : i64, scratch_operands = 2 : i64, tpu.core_type = #tpu.core_type<tc>, window_params = [{pipeline_mode = #tpu.pipeline_mode<synchronous>, transform_indices = @transform_0, window_bounds = array<i64: 2, 8, 8, 128>}, {pipeline_mode = #tpu.pipeline_mode<synchronous>, transform_indices = @transform_1, window_bounds = array<i64: 2, 16, 8, 128>}, {pipeline_mode = #tpu.pipeline_mode<synchronous>, transform_indices = @transform_2, window_bounds = array<i64: 9, 128, 128>}, {pipeline_mode = #tpu.pipeline_mode<synchronous>, transform_indices = @transform_3, window_bounds = array<i64: 1, 128>}, {pipeline_mode = #tpu.pipeline_mode<synchronous>, transform_indices = @transform_4, window_bounds = array<i64: 1, 128>}, {pipeline_mode = #tpu.pipeline_mode<synchronous>, transform_indices = @transform_5, window_bounds = array<i64: 9, 128, 128>}, {pipeline_mode = #tpu.pipeline_mode<synchronous>, transform_indices = @transform_6, window_bounds = array<i64: 1, 128>}, {pipeline_mode = #tpu.pipeline_mode<synchronous>, transform_indices = @transform_7, window_bounds = array<i64: 1, 128>}, {pipeline_mode = #tpu.pipeline_mode<synchronous>, transform_indices = @transform_8, window_bounds = array<i64: 9, 128, 128>}, {pipeline_mode = #tpu.pipeline_mode<synchronous>, transform_indices = @transform_9, window_bounds = array<i64: 1, 128>}, {pipeline_mode = #tpu.pipeline_mode<synchronous>, transform_indices = @transform_10, window_bounds = array<i64: 1, 128>}, {pipeline_mode = #tpu.pipeline_mode<synchronous>, transform_indices = @transform_11, window_bounds = array<i64: 9, 128, 128>}, {pipeline_mode = #tpu.pipeline_mode<synchronous>, transform_indices = @transform_12, window_bounds = array<i64: 1, 128>}, {pipeline_mode = #tpu.pipeline_mode<synchronous>, transform_indices = @transform_13, window_bounds = array<i64: 1, 128>}, {pipeline_mode = #tpu.pipeline_mode<synchronous>, transform_indices = @transform_14, window_bounds = array<i64: 2, 8, 128>}, {pipeline_mode = #tpu.pipeline_mode<synchronous>, transform_indices = @transform_15, window_bounds = array<i64: 2, 8, 128>}]} {
    %cst = arith.constant 0.000000e+00 : f32
    %0 = vector.broadcast %cst : f32 to vector<2x10x10x128xf32>
    %c0 = arith.constant 0 : index
    %c0_0 = arith.constant 0 : index
    %c0_1 = arith.constant 0 : index
    %c0_2 = arith.constant 0 : index
    %1 = vector.load %arg17[%c0, %c0_0, %c0_1, %c0_2] : memref<2x10x10x128xf32, #tpu.memory_space<vmem>>, vector<2x10x10x128xf32>
    tpu.vector_store %arg17[%c0, %c0_0, %c0_1, %c0_2], %0 {strides = array<i32>} : memref<2x10x10x128xf32, #tpu.memory_space<vmem>>, vector<2x10x10x128xf32>,
    %c0_3 = arith.constant 0 : index
    %c0_4 = arith.constant 0 : index
    %c0_5 = arith.constant 0 : index
    %c0_6 = arith.constant 0 : index
    %2 = vector.load %arg1[%c0_3, %c0_4, %c0_5, %c0_6] : memref<2x8x8x128xf32, #tpu.memory_space<vmem>>, vector<2x8x8x128xf32>
    %c0_7 = arith.constant 0 : index
    %c1 = arith.constant 1 : index
    %c1_8 = arith.constant 1 : index
    %c0_9 = arith.constant 0 : index
    %3 = vector.load %arg17[%c0_7, %c1, %c1_8, %c0_9] : memref<2x10x10x128xf32, #tpu.memory_space<vmem>>, vector<2x8x8x128xf32>
    tpu.vector_store %arg17[%c0_7, %c1, %c1_8, %c0_9], %2 {strides = array<i32>} : memref<2x10x10x128xf32, #tpu.memory_space<vmem>>, vector<2x8x8x128xf32>,
    %cst_10 = arith.constant 0.000000e+00 : f32
    %4 = vector.broadcast %cst_10 : f32 to vector<128x128xf32>
    %c0_11 = arith.constant 0 : index
    %c0_12 = arith.constant 0 : index
    %c0_13 = arith.constant 0 : index
    %c0_14 = arith.constant 0 : index
    %5 = vector.load %arg17[%c0_11, %c0_12, %c0_13, %c0_14] : memref<2x10x10x128xf32, #tpu.memory_space<vmem>>, vector<2x8x8x128xf32>
    %6 = vector.shape_cast %5 : vector<2x8x8x128xf32> to vector<128x128xf32>
    %7 = arith.truncf %6 : vector<128x128xf32> to vector<128x128xbf16>
    %c0_15 = arith.constant 0 : index
    %c0_16 = arith.constant 0 : index
    %c0_17 = arith.constant 0 : index
    %8 = vector.load %arg3[%c0_15, %c0_16, %c0_17] : memref<9x128x128xbf16, #tpu.memory_space<vmem>>, vector<1x128x128xbf16>
    %9 = vector.shape_cast %8 : vector<1x128x128xbf16> to vector<128x128xbf16>
    %cst_18 = arith.constant dense<0.000000e+00> : vector<128x128xf32>
    %10 = tpu.matmul %7, %9, %cst_18 {dimension_numbers = #tpu.dot_dimension_numbers<[1], [0], [0], [1], [0, 0, 1, 1], [], []>} : vector<128x128xbf16>, vector<128x128xbf16>, vector<128x128xf32> -> vector<128x128xf32>
    %11 = arith.addf %4, %10 : vector<128x128xf32>
    %c0_19 = arith.constant 0 : index
    %c0_20 = arith.constant 0 : index
    %c1_21 = arith.constant 1 : index
    %c0_22 = arith.constant 0 : index
    %12 = vector.load %arg17[%c0_19, %c0_20, %c1_21, %c0_22] : memref<2x10x10x128xf32, #tpu.memory_space<vmem>>, vector<2x8x8x128xf32>
    %13 = vector.shape_cast %12 : vector<2x8x8x128xf32> to vector<128x128xf32>
    %14 = arith.truncf %13 : vector<128x128xf32> to vector<128x128xbf16>
    %c1_23 = arith.constant 1 : index
    %c0_24 = arith.constant 0 : index
    %c0_25 = arith.constant 0 : index
    %15 = vector.load %arg3[%c1_23, %c0_24, %c0_25] : memref<9x128x128xbf16, #tpu.memory_space<vmem>>, vector<1x128x128xbf16>
    %16 = vector.shape_cast %15 : vector<1x128x128xbf16> to vector<128x128xbf16>
    %cst_26 = arith.constant dense<0.000000e+00> : vector<128x128xf32>
    %17 = tpu.matmul %14, %16, %cst_26 {dimension_numbers = #tpu.dot_dimension_numbers<[1], [0], [0], [1], [0, 0, 1, 1], [], []>} : vector<128x128xbf16>, vector<128x128xbf16>, vector<128x128xf32> -> vector<128x128xf32>
    %18 = arith.addf %11, %17 : vector<128x128xf32>
    %c0_27 = arith.constant 0 : index
    %c0_28 = arith.constant 0 : index
    %c2 = arith.constant 2 : index
    %c0_29 = arith.constant 0 : index
    %19 = vector.load %arg17[%c0_27, %c0_28, %c2, %c0_29] : memref<2x10x10x128xf32, #tpu.memory_space<vmem>>, vector<2x8x8x128xf32>
    %20 = vector.shape_cast %19 : vector<2x8x8x128xf32> to vector<128x128xf32>
    %21 = arith.truncf %20 : vector<128x128xf32> to vector<128x128xbf16>
    %c2_30 = arith.constant 2 : index
    %c0_31 = arith.constant 0 : index
    %c0_32 = arith.constant 0 : index
    %22 = vector.load %arg3[%c2_30, %c0_31, %c0_32] : memref<9x128x128xbf16, #tpu.memory_space<vmem>>, vector<1x128x128xbf16>
    %23 = vector.shape_cast %22 : vector<1x128x128xbf16> to vector<128x128xbf16>
    %cst_33 = arith.constant dense<0.000000e+00> : vector<128x128xf32>
    %24 = tpu.matmul %21, %23, %cst_33 {dimension_numbers = #tpu.dot_dimension_numbers<[1], [0], [0], [1], [0, 0, 1, 1], [], []>} : vector<128x128xbf16>, vector<128x128xbf16>, vector<128x128xf32> -> vector<128x128xf32>
    %25 = arith.addf %18, %24 : vector<128x128xf32>
    %c0_34 = arith.constant 0 : index
    %c1_35 = arith.constant 1 : index
    %c0_36 = arith.constant 0 : index
    %c0_37 = arith.constant 0 : index
    %26 = vector.load %arg17[%c0_34, %c1_35, %c0_36, %c0_37] : memref<2x10x10x128xf32, #tpu.memory_space<vmem>>, vector<2x8x8x128xf32>
    %27 = vector.shape_cast %26 : vector<2x8x8x128xf32> to vector<128x128xf32>
    %28 = arith.truncf %27 : vector<128x128xf32> to vector<128x128xbf16>
    %c3 = arith.constant 3 : index
    %c0_38 = arith.constant 0 : index
    %c0_39 = arith.constant 0 : index
    %29 = vector.load %arg3[%c3, %c0_38, %c0_39] : memref<9x128x128xbf16, #tpu.memory_space<vmem>>, vector<1x128x128xbf16>
    %30 = vector.shape_cast %29 : vector<1x128x128xbf16> to vector<128x128xbf16>
    %cst_40 = arith.constant dense<0.000000e+00> : vector<128x128xf32>
    %31 = tpu.matmul %28, %30, %cst_40 {dimension_numbers = #tpu.dot_dimension_numbers<[1], [0], [0], [1], [0, 0, 1, 1], [], []>} : vector<128x128xbf16>, vector<128x128xbf16>, vector<128x128xf32> -> vector<128x128xf32>
    %32 = arith.addf %25, %31 : vector<128x128xf32>
    %c0_41 = arith.constant 0 : index
    %c1_42 = arith.constant 1 : index
    %c1_43 = arith.constant 1 : index
    %c0_44 = arith.constant 0 : index
    %33 = vector.load %arg17[%c0_41, %c1_42, %c1_43, %c0_44] : memref<2x10x10x128xf32, #tpu.memory_space<vmem>>, vector<2x8x8x128xf32>
    %34 = vector.shape_cast %33 : vector<2x8x8x128xf32> to vector<128x128xf32>
    %35 = arith.truncf %34 : vector<128x128xf32> to vector<128x128xbf16>
    %c4 = arith.constant 4 : index
    %c0_45 = arith.constant 0 : index
    %c0_46 = arith.constant 0 : index
    %36 = vector.load %arg3[%c4, %c0_45, %c0_46] : memref<9x128x128xbf16, #tpu.memory_space<vmem>>, vector<1x128x128xbf16>
    %37 = vector.shape_cast %36 : vector<1x128x128xbf16> to vector<128x128xbf16>
    %cst_47 = arith.constant dense<0.000000e+00> : vector<128x128xf32>
    %38 = tpu.matmul %35, %37, %cst_47 {dimension_numbers = #tpu.dot_dimension_numbers<[1], [0], [0], [1], [0, 0, 1, 1], [], []>} : vector<128x128xbf16>, vector<128x128xbf16>, vector<128x128xf32> -> vector<128x128xf32>
    %39 = arith.addf %32, %38 : vector<128x128xf32>
    %c0_48 = arith.constant 0 : index
    %c1_49 = arith.constant 1 : index
    %c2_50 = arith.constant 2 : index
    %c0_51 = arith.constant 0 : index
    %40 = vector.load %arg17[%c0_48, %c1_49, %c2_50, %c0_51] : memref<2x10x10x128xf32, #tpu.memory_space<vmem>>, vector<2x8x8x128xf32>
    %41 = vector.shape_cast %40 : vector<2x8x8x128xf32> to vector<128x128xf32>
    %42 = arith.truncf %41 : vector<128x128xf32> to vector<128x128xbf16>
    %c5 = arith.constant 5 : index
    %c0_52 = arith.constant 0 : index
    %c0_53 = arith.constant 0 : index
    %43 = vector.load %arg3[%c5, %c0_52, %c0_53] : memref<9x128x128xbf16, #tpu.memory_space<vmem>>, vector<1x128x128xbf16>
    %44 = vector.shape_cast %43 : vector<1x128x128xbf16> to vector<128x128xbf16>
    %cst_54 = arith.constant dense<0.000000e+00> : vector<128x128xf32>
    %45 = tpu.matmul %42, %44, %cst_54 {dimension_numbers = #tpu.dot_dimension_numbers<[1], [0], [0], [1], [0, 0, 1, 1], [], []>} : vector<128x128xbf16>, vector<128x128xbf16>, vector<128x128xf32> -> vector<128x128xf32>
    %46 = arith.addf %39, %45 : vector<128x128xf32>
    %c0_55 = arith.constant 0 : index
    %c2_56 = arith.constant 2 : index
    %c0_57 = arith.constant 0 : index
    %c0_58 = arith.constant 0 : index
    %47 = vector.load %arg17[%c0_55, %c2_56, %c0_57, %c0_58] : memref<2x10x10x128xf32, #tpu.memory_space<vmem>>, vector<2x8x8x128xf32>
    %48 = vector.shape_cast %47 : vector<2x8x8x128xf32> to vector<128x128xf32>
    %49 = arith.truncf %48 : vector<128x128xf32> to vector<128x128xbf16>
    %c6 = arith.constant 6 : index
    %c0_59 = arith.constant 0 : index
    %c0_60 = arith.constant 0 : index
    %50 = vector.load %arg3[%c6, %c0_59, %c0_60] : memref<9x128x128xbf16, #tpu.memory_space<vmem>>, vector<1x128x128xbf16>
    %51 = vector.shape_cast %50 : vector<1x128x128xbf16> to vector<128x128xbf16>
    %cst_61 = arith.constant dense<0.000000e+00> : vector<128x128xf32>
    %52 = tpu.matmul %49, %51, %cst_61 {dimension_numbers = #tpu.dot_dimension_numbers<[1], [0], [0], [1], [0, 0, 1, 1], [], []>} : vector<128x128xbf16>, vector<128x128xbf16>, vector<128x128xf32> -> vector<128x128xf32>
    %53 = arith.addf %46, %52 : vector<128x128xf32>
    %c0_62 = arith.constant 0 : index
    %c2_63 = arith.constant 2 : index
    %c1_64 = arith.constant 1 : index
    %c0_65 = arith.constant 0 : index
    %54 = vector.load %arg17[%c0_62, %c2_63, %c1_64, %c0_65] : memref<2x10x10x128xf32, #tpu.memory_space<vmem>>, vector<2x8x8x128xf32>
    %55 = vector.shape_cast %54 : vector<2x8x8x128xf32> to vector<128x128xf32>
    %56 = arith.truncf %55 : vector<128x128xf32> to vector<128x128xbf16>
    %c7 = arith.constant 7 : index
    %c0_66 = arith.constant 0 : index
    %c0_67 = arith.constant 0 : index
    %57 = vector.load %arg3[%c7, %c0_66, %c0_67] : memref<9x128x128xbf16, #tpu.memory_space<vmem>>, vector<1x128x128xbf16>
    %58 = vector.shape_cast %57 : vector<1x128x128xbf16> to vector<128x128xbf16>
    %cst_68 = arith.constant dense<0.000000e+00> : vector<128x128xf32>
    %59 = tpu.matmul %56, %58, %cst_68 {dimension_numbers = #tpu.dot_dimension_numbers<[1], [0], [0], [1], [0, 0, 1, 1], [], []>} : vector<128x128xbf16>, vector<128x128xbf16>, vector<128x128xf32> -> vector<128x128xf32>
    %60 = arith.addf %53, %59 : vector<128x128xf32>
    %c0_69 = arith.constant 0 : index
    %c2_70 = arith.constant 2 : index
    %c2_71 = arith.constant 2 : index
    %c0_72 = arith.constant 0 : index
    %61 = vector.load %arg17[%c0_69, %c2_70, %c2_71, %c0_72] : memref<2x10x10x128xf32, #tpu.memory_space<vmem>>, vector<2x8x8x128xf32>
    %62 = vector.shape_cast %61 : vector<2x8x8x128xf32> to vector<128x128xf32>
    %63 = arith.truncf %62 : vector<128x128xf32> to vector<128x128xbf16>
    %c8 = arith.constant 8 : index
    %c0_73 = arith.constant 0 : index
    %c0_74 = arith.constant 0 : index
    %64 = vector.load %arg3[%c8, %c0_73, %c0_74] : memref<9x128x128xbf16, #tpu.memory_space<vmem>>, vector<1x128x128xbf16>
    %65 = vector.shape_cast %64 : vector<1x128x128xbf16> to vector<128x128xbf16>
    %cst_75 = arith.constant dense<0.000000e+00> : vector<128x128xf32>
    %66 = tpu.matmul %63, %65, %cst_75 {dimension_numbers = #tpu.dot_dimension_numbers<[1], [0], [0], [1], [0, 0, 1, 1], [], []>} : vector<128x128xbf16>, vector<128x128xbf16>, vector<128x128xf32> -> vector<128x128xf32>
    %67 = arith.addf %60, %66 : vector<128x128xf32>
    %cst_76 = arith.constant dense<0.000000e+00> : vector<128xf32>
    %68 = vector.multi_reduction <add>, %67, %cst_76 [0] : vector<128x128xf32> to vector<128xf32>
    %69 = vector.shape_cast %68 : vector<128xf32> to vector<1x128xf32>
    %cst_77 = arith.constant 7.812500e-03 : f32
    %70 = vector.broadcast %cst_77 : f32 to vector<1x128xf32>
    %71 = arith.mulf %69, %70 : vector<1x128xf32>
    %72 = arith.mulf %67, %67 : vector<128x128xf32>
    %cst_78 = arith.constant dense<0.000000e+00> : vector<128xf32>
    %73 = vector.multi_reduction <add>, %72, %cst_78 [0] : vector<128x128xf32> to vector<128xf32>
    %74 = vector.shape_cast %73 : vector<128xf32> to vector<1x128xf32>
    %cst_79 = arith.constant 7.812500e-03 : f32
    %75 = vector.broadcast %cst_79 : f32 to vector<1x128xf32>
    %76 = arith.mulf %74, %75 : vector<1x128xf32>
    %77 = arith.mulf %71, %71 : vector<1x128xf32>
    %78 = arith.subf %76, %77 : vector<1x128xf32>
    %cst_80 = arith.constant 0.000000e+00 : f32
    %79 = vector.broadcast %cst_80 : f32 to vector<1x128xf32>
    %80 = arith.maximumf %78, %79 : vector<1x128xf32>
    %81 = vector.broadcast %71 : vector<1x128xf32> to vector<128x128xf32>
    %82 = arith.subf %67, %81 : vector<128x128xf32>
    %cst_81 = arith.constant 9.99999974E-6 : f32
    %83 = vector.broadcast %cst_81 : f32 to vector<1x128xf32>
    %84 = arith.addf %80, %83 : vector<1x128xf32>
    %85 = math.rsqrt %84 : vector<1x128xf32>
    %86 = vector.broadcast %85 : vector<1x128xf32> to vector<128x128xf32>
    %87 = arith.mulf %82, %86 : vector<128x128xf32>
    %c0_82 = arith.constant 0 : index
    %c0_83 = arith.constant 0 : index
    %88 = vector.load %arg4[%c0_82, %c0_83] : memref<1x128xf32, #tpu.memory_space<vmem>>, vector<1x128xf32>
    %89 = vector.broadcast %88 : vector<1x128xf32> to vector<128x128xf32>
    %90 = arith.mulf %87, %89 : vector<128x128xf32>
    %c0_84 = arith.constant 0 : index
    %c0_85 = arith.constant 0 : index
    %91 = vector.load %arg5[%c0_84, %c0_85] : memref<1x128xf32, #tpu.memory_space<vmem>>, vector<1x128xf32>
    %92 = vector.broadcast %91 : vector<1x128xf32> to vector<128x128xf32>
    %93 = arith.addf %90, %92 : vector<128x128xf32>
    %cst_86 = arith.constant 0.000000e+00 : f32
    %94 = vector.broadcast %cst_86 : f32 to vector<128x128xf32>
    %95 = arith.maximumf %93, %94 : vector<128x128xf32>
    %96 = vector.shape_cast %95 : vector<128x128xf32> to vector<2x8x8x128xf32>
    %c0_87 = arith.constant 0 : index
    %c1_88 = arith.constant 1 : index
    %c1_89 = arith.constant 1 : index
    %c0_90 = arith.constant 0 : index
    %97 = vector.load %arg17[%c0_87, %c1_88, %c1_89, %c0_90] : memref<2x10x10x128xf32, #tpu.memory_space<vmem>>, vector<2x8x8x128xf32>
    tpu.vector_store %arg17[%c0_87, %c1_88, %c1_89, %c0_90], %96 {strides = array<i32>} : memref<2x10x10x128xf32, #tpu.memory_space<vmem>>, vector<2x8x8x128xf32>,
    %cst_91 = arith.constant 0.000000e+00 : f32
    %98 = vector.broadcast %cst_91 : f32 to vector<128x128xf32>
    %c0_92 = arith.constant 0 : index
    %c0_93 = arith.constant 0 : index
    %c0_94 = arith.constant 0 : index
    %c0_95 = arith.constant 0 : index
    %99 = vector.load %arg17[%c0_92, %c0_93, %c0_94, %c0_95] : memref<2x10x10x128xf32, #tpu.memory_space<vmem>>, vector<2x8x8x128xf32>
    %100 = vector.shape_cast %99 : vector<2x8x8x128xf32> to vector<128x128xf32>
    %101 = arith.truncf %100 : vector<128x128xf32> to vector<128x128xbf16>
    %c0_96 = arith.constant 0 : index
    %c0_97 = arith.constant 0 : index
    %c0_98 = arith.constant 0 : index
    %102 = vector.load %arg6[%c0_96, %c0_97, %c0_98] : memref<9x128x128xbf16, #tpu.memory_space<vmem>>, vector<1x128x128xbf16>
    %103 = vector.shape_cast %102 : vector<1x128x128xbf16> to vector<128x128xbf16>
    %cst_99 = arith.constant dense<0.000000e+00> : vector<128x128xf32>
    %104 = tpu.matmul %101, %103, %cst_99 {dimension_numbers = #tpu.dot_dimension_numbers<[1], [0], [0], [1], [0, 0, 1, 1], [], []>} : vector<128x128xbf16>, vector<128x128xbf16>, vector<128x128xf32> -> vector<128x128xf32>
    %105 = arith.addf %98, %104 : vector<128x128xf32>
    %c0_100 = arith.constant 0 : index
    %c0_101 = arith.constant 0 : index
    %c1_102 = arith.constant 1 : index
    %c0_103 = arith.constant 0 : index
    %106 = vector.load %arg17[%c0_100, %c0_101, %c1_102, %c0_103] : memref<2x10x10x128xf32, #tpu.memory_space<vmem>>, vector<2x8x8x128xf32>
    %107 = vector.shape_cast %106 : vector<2x8x8x128xf32> to vector<128x128xf32>
    %108 = arith.truncf %107 : vector<128x128xf32> to vector<128x128xbf16>
    %c1_104 = arith.constant 1 : index
    %c0_105 = arith.constant 0 : index
    %c0_106 = arith.constant 0 : index
    %109 = vector.load %arg6[%c1_104, %c0_105, %c0_106] : memref<9x128x128xbf16, #tpu.memory_space<vmem>>, vector<1x128x128xbf16>
    %110 = vector.shape_cast %109 : vector<1x128x128xbf16> to vector<128x128xbf16>
    %cst_107 = arith.constant dense<0.000000e+00> : vector<128x128xf32>
    %111 = tpu.matmul %108, %110, %cst_107 {dimension_numbers = #tpu.dot_dimension_numbers<[1], [0], [0], [1], [0, 0, 1, 1], [], []>} : vector<128x128xbf16>, vector<128x128xbf16>, vector<128x128xf32> -> vector<128x128xf32>
    %112 = arith.addf %105, %111 : vector<128x128xf32>
    %c0_108 = arith.constant 0 : index
    %c0_109 = arith.constant 0 : index
    %c2_110 = arith.constant 2 : index
    %c0_111 = arith.constant 0 : index
    %113 = vector.load %arg17[%c0_108, %c0_109, %c2_110, %c0_111] : memref<2x10x10x128xf32, #tpu.memory_space<vmem>>, vector<2x8x8x128xf32>
    %114 = vector.shape_cast %113 : vector<2x8x8x128xf32> to vector<128x128xf32>
    %115 = arith.truncf %114 : vector<128x128xf32> to vector<128x128xbf16>
    %c2_112 = arith.constant 2 : index
    %c0_113 = arith.constant 0 : index
    %c0_114 = arith.constant 0 : index
    %116 = vector.load %arg6[%c2_112, %c0_113, %c0_114] : memref<9x128x128xbf16, #tpu.memory_space<vmem>>, vector<1x128x128xbf16>
    %117 = vector.shape_cast %116 : vector<1x128x128xbf16> to vector<128x128xbf16>
    %cst_115 = arith.constant dense<0.000000e+00> : vector<128x128xf32>
    %118 = tpu.matmul %115, %117, %cst_115 {dimension_numbers = #tpu.dot_dimension_numbers<[1], [0], [0], [1], [0, 0, 1, 1], [], []>} : vector<128x128xbf16>, vector<128x128xbf16>, vector<128x128xf32> -> vector<128x128xf32>
    %119 = arith.addf %112, %118 : vector<128x128xf32>
    %c0_116 = arith.constant 0 : index
    %c1_117 = arith.constant 1 : index
    %c0_118 = arith.constant 0 : index
    %c0_119 = arith.constant 0 : index
    %120 = vector.load %arg17[%c0_116, %c1_117, %c0_118, %c0_119] : memref<2x10x10x128xf32, #tpu.memory_space<vmem>>, vector<2x8x8x128xf32>
    %121 = vector.shape_cast %120 : vector<2x8x8x128xf32> to vector<128x128xf32>
    %122 = arith.truncf %121 : vector<128x128xf32> to vector<128x128xbf16>
    %c3_120 = arith.constant 3 : index
    %c0_121 = arith.constant 0 : index
    %c0_122 = arith.constant 0 : index
    %123 = vector.load %arg6[%c3_120, %c0_121, %c0_122] : memref<9x128x128xbf16, #tpu.memory_space<vmem>>, vector<1x128x128xbf16>
    %124 = vector.shape_cast %123 : vector<1x128x128xbf16> to vector<128x128xbf16>
    %cst_123 = arith.constant dense<0.000000e+00> : vector<128x128xf32>
    %125 = tpu.matmul %122, %124, %cst_123 {dimension_numbers = #tpu.dot_dimension_numbers<[1], [0], [0], [1], [0, 0, 1, 1], [], []>} : vector<128x128xbf16>, vector<128x128xbf16>, vector<128x128xf32> -> vector<128x128xf32>
    %126 = arith.addf %119, %125 : vector<128x128xf32>
    %c0_124 = arith.constant 0 : index
    %c1_125 = arith.constant 1 : index
    %c1_126 = arith.constant 1 : index
    %c0_127 = arith.constant 0 : index
    %127 = vector.load %arg17[%c0_124, %c1_125, %c1_126, %c0_127] : memref<2x10x10x128xf32, #tpu.memory_space<vmem>>, vector<2x8x8x128xf32>
    %128 = vector.shape_cast %127 : vector<2x8x8x128xf32> to vector<128x128xf32>
    %129 = arith.truncf %128 : vector<128x128xf32> to vector<128x128xbf16>
    %c4_128 = arith.constant 4 : index
    %c0_129 = arith.constant 0 : index
    %c0_130 = arith.constant 0 : index
    %130 = vector.load %arg6[%c4_128, %c0_129, %c0_130] : memref<9x128x128xbf16, #tpu.memory_space<vmem>>, vector<1x128x128xbf16>
    %131 = vector.shape_cast %130 : vector<1x128x128xbf16> to vector<128x128xbf16>
    %cst_131 = arith.constant dense<0.000000e+00> : vector<128x128xf32>
    %132 = tpu.matmul %129, %131, %cst_131 {dimension_numbers = #tpu.dot_dimension_numbers<[1], [0], [0], [1], [0, 0, 1, 1], [], []>} : vector<128x128xbf16>, vector<128x128xbf16>, vector<128x128xf32> -> vector<128x128xf32>
    %133 = arith.addf %126, %132 : vector<128x128xf32>
    %c0_132 = arith.constant 0 : index
    %c1_133 = arith.constant 1 : index
    %c2_134 = arith.constant 2 : index
    %c0_135 = arith.constant 0 : index
    %134 = vector.load %arg17[%c0_132, %c1_133, %c2_134, %c0_135] : memref<2x10x10x128xf32, #tpu.memory_space<vmem>>, vector<2x8x8x128xf32>
    %135 = vector.shape_cast %134 : vector<2x8x8x128xf32> to vector<128x128xf32>
    %136 = arith.truncf %135 : vector<128x128xf32> to vector<128x128xbf16>
    %c5_136 = arith.constant 5 : index
    %c0_137 = arith.constant 0 : index
    %c0_138 = arith.constant 0 : index
    %137 = vector.load %arg6[%c5_136, %c0_137, %c0_138] : memref<9x128x128xbf16, #tpu.memory_space<vmem>>, vector<1x128x128xbf16>
    %138 = vector.shape_cast %137 : vector<1x128x128xbf16> to vector<128x128xbf16>
    %cst_139 = arith.constant dense<0.000000e+00> : vector<128x128xf32>
    %139 = tpu.matmul %136, %138, %cst_139 {dimension_numbers = #tpu.dot_dimension_numbers<[1], [0], [0], [1], [0, 0, 1, 1], [], []>} : vector<128x128xbf16>, vector<128x128xbf16>, vector<128x128xf32> -> vector<128x128xf32>
    %140 = arith.addf %133, %139 : vector<128x128xf32>
    %c0_140 = arith.constant 0 : index
    %c2_141 = arith.constant 2 : index
    %c0_142 = arith.constant 0 : index
    %c0_143 = arith.constant 0 : index
    %141 = vector.load %arg17[%c0_140, %c2_141, %c0_142, %c0_143] : memref<2x10x10x128xf32, #tpu.memory_space<vmem>>, vector<2x8x8x128xf32>
    %142 = vector.shape_cast %141 : vector<2x8x8x128xf32> to vector<128x128xf32>
    %143 = arith.truncf %142 : vector<128x128xf32> to vector<128x128xbf16>
    %c6_144 = arith.constant 6 : index
    %c0_145 = arith.constant 0 : index
    %c0_146 = arith.constant 0 : index
    %144 = vector.load %arg6[%c6_144, %c0_145, %c0_146] : memref<9x128x128xbf16, #tpu.memory_space<vmem>>, vector<1x128x128xbf16>
    %145 = vector.shape_cast %144 : vector<1x128x128xbf16> to vector<128x128xbf16>
    %cst_147 = arith.constant dense<0.000000e+00> : vector<128x128xf32>
    %146 = tpu.matmul %143, %145, %cst_147 {dimension_numbers = #tpu.dot_dimension_numbers<[1], [0], [0], [1], [0, 0, 1, 1], [], []>} : vector<128x128xbf16>, vector<128x128xbf16>, vector<128x128xf32> -> vector<128x128xf32>
    %147 = arith.addf %140, %146 : vector<128x128xf32>
    %c0_148 = arith.constant 0 : index
    %c2_149 = arith.constant 2 : index
    %c1_150 = arith.constant 1 : index
    %c0_151 = arith.constant 0 : index
    %148 = vector.load %arg17[%c0_148, %c2_149, %c1_150, %c0_151] : memref<2x10x10x128xf32, #tpu.memory_space<vmem>>, vector<2x8x8x128xf32>
    %149 = vector.shape_cast %148 : vector<2x8x8x128xf32> to vector<128x128xf32>
    %150 = arith.truncf %149 : vector<128x128xf32> to vector<128x128xbf16>
    %c7_152 = arith.constant 7 : index
    %c0_153 = arith.constant 0 : index
    %c0_154 = arith.constant 0 : index
    %151 = vector.load %arg6[%c7_152, %c0_153, %c0_154] : memref<9x128x128xbf16, #tpu.memory_space<vmem>>, vector<1x128x128xbf16>
    %152 = vector.shape_cast %151 : vector<1x128x128xbf16> to vector<128x128xbf16>
    %cst_155 = arith.constant dense<0.000000e+00> : vector<128x128xf32>
    %153 = tpu.matmul %150, %152, %cst_155 {dimension_numbers = #tpu.dot_dimension_numbers<[1], [0], [0], [1], [0, 0, 1, 1], [], []>} : vector<128x128xbf16>, vector<128x128xbf16>, vector<128x128xf32> -> vector<128x128xf32>
    %154 = arith.addf %147, %153 : vector<128x128xf32>
    %c0_156 = arith.constant 0 : index
    %c2_157 = arith.constant 2 : index
    %c2_158 = arith.constant 2 : index
    %c0_159 = arith.constant 0 : index
    %155 = vector.load %arg17[%c0_156, %c2_157, %c2_158, %c0_159] : memref<2x10x10x128xf32, #tpu.memory_space<vmem>>, vector<2x8x8x128xf32>
    %156 = vector.shape_cast %155 : vector<2x8x8x128xf32> to vector<128x128xf32>
    %157 = arith.truncf %156 : vector<128x128xf32> to vector<128x128xbf16>
    %c8_160 = arith.constant 8 : index
    %c0_161 = arith.constant 0 : index
    %c0_162 = arith.constant 0 : index
    %158 = vector.load %arg6[%c8_160, %c0_161, %c0_162] : memref<9x128x128xbf16, #tpu.memory_space<vmem>>, vector<1x128x128xbf16>
    %159 = vector.shape_cast %158 : vector<1x128x128xbf16> to vector<128x128xbf16>
    %cst_163 = arith.constant dense<0.000000e+00> : vector<128x128xf32>
    %160 = tpu.matmul %157, %159, %cst_163 {dimension_numbers = #tpu.dot_dimension_numbers<[1], [0], [0], [1], [0, 0, 1, 1], [], []>} : vector<128x128xbf16>, vector<128x128xbf16>, vector<128x128xf32> -> vector<128x128xf32>
    %161 = arith.addf %154, %160 : vector<128x128xf32>
    %cst_164 = arith.constant dense<0.000000e+00> : vector<128xf32>
    %162 = vector.multi_reduction <add>, %161, %cst_164 [0] : vector<128x128xf32> to vector<128xf32>
    %163 = vector.shape_cast %162 : vector<128xf32> to vector<1x128xf32>
    %cst_165 = arith.constant 7.812500e-03 : f32
    %164 = vector.broadcast %cst_165 : f32 to vector<1x128xf32>
    %165 = arith.mulf %163, %164 : vector<1x128xf32>
    %166 = arith.mulf %161, %161 : vector<128x128xf32>
    %cst_166 = arith.constant dense<0.000000e+00> : vector<128xf32>
    %167 = vector.multi_reduction <add>, %166, %cst_166 [0] : vector<128x128xf32> to vector<128xf32>
    %168 = vector.shape_cast %167 : vector<128xf32> to vector<1x128xf32>
    %cst_167 = arith.constant 7.812500e-03 : f32
    %169 = vector.broadcast %cst_167 : f32 to vector<1x128xf32>
    %170 = arith.mulf %168, %169 : vector<1x128xf32>
    %171 = arith.mulf %165, %165 : vector<1x128xf32>
    %172 = arith.subf %170, %171 : vector<1x128xf32>
    %cst_168 = arith.constant 0.000000e+00 : f32
    %173 = vector.broadcast %cst_168 : f32 to vector<1x128xf32>
    %174 = arith.maximumf %172, %173 : vector<1x128xf32>
    %175 = vector.broadcast %165 : vector<1x128xf32> to vector<128x128xf32>
    %176 = arith.subf %161, %175 : vector<128x128xf32>
    %cst_169 = arith.constant 9.99999974E-6 : f32
    %177 = vector.broadcast %cst_169 : f32 to vector<1x128xf32>
    %178 = arith.addf %174, %177 : vector<1x128xf32>
    %179 = math.rsqrt %178 : vector<1x128xf32>
    %180 = vector.broadcast %179 : vector<1x128xf32> to vector<128x128xf32>
    %181 = arith.mulf %176, %180 : vector<128x128xf32>
    %c0_170 = arith.constant 0 : index
    %c0_171 = arith.constant 0 : index
    %182 = vector.load %arg7[%c0_170, %c0_171] : memref<1x128xf32, #tpu.memory_space<vmem>>, vector<1x128xf32>
    %183 = vector.broadcast %182 : vector<1x128xf32> to vector<128x128xf32>
    %184 = arith.mulf %181, %183 : vector<128x128xf32>
    %c0_172 = arith.constant 0 : index
    %c0_173 = arith.constant 0 : index
    %185 = vector.load %arg8[%c0_172, %c0_173] : memref<1x128xf32, #tpu.memory_space<vmem>>, vector<1x128xf32>
    %186 = vector.broadcast %185 : vector<1x128xf32> to vector<128x128xf32>
    %187 = arith.addf %184, %186 : vector<128x128xf32>
    %cst_174 = arith.constant 0.000000e+00 : f32
    %188 = vector.broadcast %cst_174 : f32 to vector<128x128xf32>
    %189 = arith.maximumf %187, %188 : vector<128x128xf32>
    %190 = vector.shape_cast %189 : vector<128x128xf32> to vector<2x8x8x128xf32>
    %cst_175 = arith.constant dense<0xFF800000> : vector<2x8x128xf32>
    %191 = vector.multi_reduction <maximumf>, %190, %cst_175 [1] : vector<2x8x8x128xf32> to vector<2x8x128xf32>
    %c0_176 = arith.constant 0 : index
    %c0_177 = arith.constant 0 : index
    %c0_178 = arith.constant 0 : index
    %192 = vector.load %arg15[%c0_176, %c0_177, %c0_178] : memref<2x8x128xf32, #tpu.memory_space<vmem>>, vector<2x8x128xf32>
    tpu.vector_store %arg15[%c0_176, %c0_177, %c0_178], %191 {strides = array<i32>} : memref<2x8x128xf32, #tpu.memory_space<vmem>>, vector<2x8x128xf32>,
    %cst_179 = arith.constant 0.000000e+00 : f32
    %193 = vector.broadcast %cst_179 : f32 to vector<2x18x10x128xf32>
    %c0_180 = arith.constant 0 : index
    %c0_181 = arith.constant 0 : index
    %c0_182 = arith.constant 0 : index
    %c0_183 = arith.constant 0 : index
    %194 = vector.load %arg18[%c0_180, %c0_181, %c0_182, %c0_183] : memref<2x18x10x128xf32, #tpu.memory_space<vmem>>, vector<2x18x10x128xf32>
    tpu.vector_store %arg18[%c0_180, %c0_181, %c0_182, %c0_183], %193 {strides = array<i32>} : memref<2x18x10x128xf32, #tpu.memory_space<vmem>>, vector<2x18x10x128xf32>,
    %c0_184 = arith.constant 0 : index
    %c0_185 = arith.constant 0 : index
    %c0_186 = arith.constant 0 : index
    %c0_187 = arith.constant 0 : index
    %195 = vector.load %arg2[%c0_184, %c0_185, %c0_186, %c0_187] : memref<2x16x8x128xf32, #tpu.memory_space<vmem>>, vector<2x16x8x128xf32>
    %c0_188 = arith.constant 0 : index
    %c1_189 = arith.constant 1 : index
    %c1_190 = arith.constant 1 : index
    %c0_191 = arith.constant 0 : index
    %196 = vector.load %arg18[%c0_188, %c1_189, %c1_190, %c0_191] : memref<2x18x10x128xf32, #tpu.memory_space<vmem>>, vector<2x16x8x128xf32>
    tpu.vector_store %arg18[%c0_188, %c1_189, %c1_190, %c0_191], %195 {strides = array<i32>} : memref<2x18x10x128xf32, #tpu.memory_space<vmem>>, vector<2x16x8x128xf32>,
    %cst_192 = arith.constant 0.000000e+00 : f32
    %197 = vector.broadcast %cst_192 : f32 to vector<256x128xf32>
    %c0_193 = arith.constant 0 : index
    %c0_194 = arith.constant 0 : index
    %c0_195 = arith.constant 0 : index
    %c0_196 = arith.constant 0 : index
    %198 = vector.load %arg18[%c0_193, %c0_194, %c0_195, %c0_196] : memref<2x18x10x128xf32, #tpu.memory_space<vmem>>, vector<2x16x8x128xf32>
    %199 = vector.shape_cast %198 : vector<2x16x8x128xf32> to vector<256x128xf32>
    %200 = arith.truncf %199 : vector<256x128xf32> to vector<256x128xbf16>
    %c0_197 = arith.constant 0 : index
    %c0_198 = arith.constant 0 : index
    %c0_199 = arith.constant 0 : index
    %201 = vector.load %arg9[%c0_197, %c0_198, %c0_199] : memref<9x128x128xbf16, #tpu.memory_space<vmem>>, vector<1x128x128xbf16>
    %202 = vector.shape_cast %201 : vector<1x128x128xbf16> to vector<128x128xbf16>
    %cst_200 = arith.constant dense<0.000000e+00> : vector<256x128xf32>
    %203 = tpu.matmul %200, %202, %cst_200 {dimension_numbers = #tpu.dot_dimension_numbers<[1], [0], [0], [1], [0, 0, 1, 1], [], []>} : vector<256x128xbf16>, vector<128x128xbf16>, vector<256x128xf32> -> vector<256x128xf32>
    %204 = arith.addf %197, %203 : vector<256x128xf32>
    %c0_201 = arith.constant 0 : index
    %c0_202 = arith.constant 0 : index
    %c1_203 = arith.constant 1 : index
    %c0_204 = arith.constant 0 : index
    %205 = vector.load %arg18[%c0_201, %c0_202, %c1_203, %c0_204] : memref<2x18x10x128xf32, #tpu.memory_space<vmem>>, vector<2x16x8x128xf32>
    %206 = vector.shape_cast %205 : vector<2x16x8x128xf32> to vector<256x128xf32>
    %207 = arith.truncf %206 : vector<256x128xf32> to vector<256x128xbf16>
    %c1_205 = arith.constant 1 : index
    %c0_206 = arith.constant 0 : index
    %c0_207 = arith.constant 0 : index
    %208 = vector.load %arg9[%c1_205, %c0_206, %c0_207] : memref<9x128x128xbf16, #tpu.memory_space<vmem>>, vector<1x128x128xbf16>
    %209 = vector.shape_cast %208 : vector<1x128x128xbf16> to vector<128x128xbf16>
    %cst_208 = arith.constant dense<0.000000e+00> : vector<256x128xf32>
    %210 = tpu.matmul %207, %209, %cst_208 {dimension_numbers = #tpu.dot_dimension_numbers<[1], [0], [0], [1], [0, 0, 1, 1], [], []>} : vector<256x128xbf16>, vector<128x128xbf16>, vector<256x128xf32> -> vector<256x128xf32>
    %211 = arith.addf %204, %210 : vector<256x128xf32>
    %c0_209 = arith.constant 0 : index
    %c0_210 = arith.constant 0 : index
    %c2_211 = arith.constant 2 : index
    %c0_212 = arith.constant 0 : index
    %212 = vector.load %arg18[%c0_209, %c0_210, %c2_211, %c0_212] : memref<2x18x10x128xf32, #tpu.memory_space<vmem>>, vector<2x16x8x128xf32>
    %213 = vector.shape_cast %212 : vector<2x16x8x128xf32> to vector<256x128xf32>
    %214 = arith.truncf %213 : vector<256x128xf32> to vector<256x128xbf16>
    %c2_213 = arith.constant 2 : index
    %c0_214 = arith.constant 0 : index
    %c0_215 = arith.constant 0 : index
    %215 = vector.load %arg9[%c2_213, %c0_214, %c0_215] : memref<9x128x128xbf16, #tpu.memory_space<vmem>>, vector<1x128x128xbf16>
    %216 = vector.shape_cast %215 : vector<1x128x128xbf16> to vector<128x128xbf16>
    %cst_216 = arith.constant dense<0.000000e+00> : vector<256x128xf32>
    %217 = tpu.matmul %214, %216, %cst_216 {dimension_numbers = #tpu.dot_dimension_numbers<[1], [0], [0], [1], [0, 0, 1, 1], [], []>} : vector<256x128xbf16>, vector<128x128xbf16>, vector<256x128xf32> -> vector<256x128xf32>
    %218 = arith.addf %211, %217 : vector<256x128xf32>
    %c0_217 = arith.constant 0 : index
    %c1_218 = arith.constant 1 : index
    %c0_219 = arith.constant 0 : index
    %c0_220 = arith.constant 0 : index
    %219 = vector.load %arg18[%c0_217, %c1_218, %c0_219, %c0_220] : memref<2x18x10x128xf32, #tpu.memory_space<vmem>>, vector<2x16x8x128xf32>
    %220 = vector.shape_cast %219 : vector<2x16x8x128xf32> to vector<256x128xf32>
    %221 = arith.truncf %220 : vector<256x128xf32> to vector<256x128xbf16>
    %c3_221 = arith.constant 3 : index
    %c0_222 = arith.constant 0 : index
    %c0_223 = arith.constant 0 : index
    %222 = vector.load %arg9[%c3_221, %c0_222, %c0_223] : memref<9x128x128xbf16, #tpu.memory_space<vmem>>, vector<1x128x128xbf16>
    %223 = vector.shape_cast %222 : vector<1x128x128xbf16> to vector<128x128xbf16>
    %cst_224 = arith.constant dense<0.000000e+00> : vector<256x128xf32>
    %224 = tpu.matmul %221, %223, %cst_224 {dimension_numbers = #tpu.dot_dimension_numbers<[1], [0], [0], [1], [0, 0, 1, 1], [], []>} : vector<256x128xbf16>, vector<128x128xbf16>, vector<256x128xf32> -> vector<256x128xf32>
    %225 = arith.addf %218, %224 : vector<256x128xf32>
    %c0_225 = arith.constant 0 : index
    %c1_226 = arith.constant 1 : index
    %c1_227 = arith.constant 1 : index
    %c0_228 = arith.constant 0 : index
    %226 = vector.load %arg18[%c0_225, %c1_226, %c1_227, %c0_228] : memref<2x18x10x128xf32, #tpu.memory_space<vmem>>, vector<2x16x8x128xf32>
    %227 = vector.shape_cast %226 : vector<2x16x8x128xf32> to vector<256x128xf32>
    %228 = arith.truncf %227 : vector<256x128xf32> to vector<256x128xbf16>
    %c4_229 = arith.constant 4 : index
    %c0_230 = arith.constant 0 : index
    %c0_231 = arith.constant 0 : index
    %229 = vector.load %arg9[%c4_229, %c0_230, %c0_231] : memref<9x128x128xbf16, #tpu.memory_space<vmem>>, vector<1x128x128xbf16>
    %230 = vector.shape_cast %229 : vector<1x128x128xbf16> to vector<128x128xbf16>
    %cst_232 = arith.constant dense<0.000000e+00> : vector<256x128xf32>
    %231 = tpu.matmul %228, %230, %cst_232 {dimension_numbers = #tpu.dot_dimension_numbers<[1], [0], [0], [1], [0, 0, 1, 1], [], []>} : vector<256x128xbf16>, vector<128x128xbf16>, vector<256x128xf32> -> vector<256x128xf32>
    %232 = arith.addf %225, %231 : vector<256x128xf32>
    %c0_233 = arith.constant 0 : index
    %c1_234 = arith.constant 1 : index
    %c2_235 = arith.constant 2 : index
    %c0_236 = arith.constant 0 : index
    %233 = vector.load %arg18[%c0_233, %c1_234, %c2_235, %c0_236] : memref<2x18x10x128xf32, #tpu.memory_space<vmem>>, vector<2x16x8x128xf32>
    %234 = vector.shape_cast %233 : vector<2x16x8x128xf32> to vector<256x128xf32>
    %235 = arith.truncf %234 : vector<256x128xf32> to vector<256x128xbf16>
    %c5_237 = arith.constant 5 : index
    %c0_238 = arith.constant 0 : index
    %c0_239 = arith.constant 0 : index
    %236 = vector.load %arg9[%c5_237, %c0_238, %c0_239] : memref<9x128x128xbf16, #tpu.memory_space<vmem>>, vector<1x128x128xbf16>
    %237 = vector.shape_cast %236 : vector<1x128x128xbf16> to vector<128x128xbf16>
    %cst_240 = arith.constant dense<0.000000e+00> : vector<256x128xf32>
    %238 = tpu.matmul %235, %237, %cst_240 {dimension_numbers = #tpu.dot_dimension_numbers<[1], [0], [0], [1], [0, 0, 1, 1], [], []>} : vector<256x128xbf16>, vector<128x128xbf16>, vector<256x128xf32> -> vector<256x128xf32>
    %239 = arith.addf %232, %238 : vector<256x128xf32>
    %c0_241 = arith.constant 0 : index
    %c2_242 = arith.constant 2 : index
    %c0_243 = arith.constant 0 : index
    %c0_244 = arith.constant 0 : index
    %240 = vector.load %arg18[%c0_241, %c2_242, %c0_243, %c0_244] : memref<2x18x10x128xf32, #tpu.memory_space<vmem>>, vector<2x16x8x128xf32>
    %241 = vector.shape_cast %240 : vector<2x16x8x128xf32> to vector<256x128xf32>
    %242 = arith.truncf %241 : vector<256x128xf32> to vector<256x128xbf16>
    %c6_245 = arith.constant 6 : index
    %c0_246 = arith.constant 0 : index
    %c0_247 = arith.constant 0 : index
    %243 = vector.load %arg9[%c6_245, %c0_246, %c0_247] : memref<9x128x128xbf16, #tpu.memory_space<vmem>>, vector<1x128x128xbf16>
    %244 = vector.shape_cast %243 : vector<1x128x128xbf16> to vector<128x128xbf16>
    %cst_248 = arith.constant dense<0.000000e+00> : vector<256x128xf32>
    %245 = tpu.matmul %242, %244, %cst_248 {dimension_numbers = #tpu.dot_dimension_numbers<[1], [0], [0], [1], [0, 0, 1, 1], [], []>} : vector<256x128xbf16>, vector<128x128xbf16>, vector<256x128xf32> -> vector<256x128xf32>
    %246 = arith.addf %239, %245 : vector<256x128xf32>
    %c0_249 = arith.constant 0 : index
    %c2_250 = arith.constant 2 : index
    %c1_251 = arith.constant 1 : index
    %c0_252 = arith.constant 0 : index
    %247 = vector.load %arg18[%c0_249, %c2_250, %c1_251, %c0_252] : memref<2x18x10x128xf32, #tpu.memory_space<vmem>>, vector<2x16x8x128xf32>
    %248 = vector.shape_cast %247 : vector<2x16x8x128xf32> to vector<256x128xf32>
    %249 = arith.truncf %248 : vector<256x128xf32> to vector<256x128xbf16>
    %c7_253 = arith.constant 7 : index
    %c0_254 = arith.constant 0 : index
    %c0_255 = arith.constant 0 : index
    %250 = vector.load %arg9[%c7_253, %c0_254, %c0_255] : memref<9x128x128xbf16, #tpu.memory_space<vmem>>, vector<1x128x128xbf16>
    %251 = vector.shape_cast %250 : vector<1x128x128xbf16> to vector<128x128xbf16>
    %cst_256 = arith.constant dense<0.000000e+00> : vector<256x128xf32>
    %252 = tpu.matmul %249, %251, %cst_256 {dimension_numbers = #tpu.dot_dimension_numbers<[1], [0], [0], [1], [0, 0, 1, 1], [], []>} : vector<256x128xbf16>, vector<128x128xbf16>, vector<256x128xf32> -> vector<256x128xf32>
    %253 = arith.addf %246, %252 : vector<256x128xf32>
    %c0_257 = arith.constant 0 : index
    %c2_258 = arith.constant 2 : index
    %c2_259 = arith.constant 2 : index
    %c0_260 = arith.constant 0 : index
    %254 = vector.load %arg18[%c0_257, %c2_258, %c2_259, %c0_260] : memref<2x18x10x128xf32, #tpu.memory_space<vmem>>, vector<2x16x8x128xf32>
    %255 = vector.shape_cast %254 : vector<2x16x8x128xf32> to vector<256x128xf32>
    %256 = arith.truncf %255 : vector<256x128xf32> to vector<256x128xbf16>
    %c8_261 = arith.constant 8 : index
    %c0_262 = arith.constant 0 : index
    %c0_263 = arith.constant 0 : index
    %257 = vector.load %arg9[%c8_261, %c0_262, %c0_263] : memref<9x128x128xbf16, #tpu.memory_space<vmem>>, vector<1x128x128xbf16>
    %258 = vector.shape_cast %257 : vector<1x128x128xbf16> to vector<128x128xbf16>
    %cst_264 = arith.constant dense<0.000000e+00> : vector<256x128xf32>
    %259 = tpu.matmul %256, %258, %cst_264 {dimension_numbers = #tpu.dot_dimension_numbers<[1], [0], [0], [1], [0, 0, 1, 1], [], []>} : vector<256x128xbf16>, vector<128x128xbf16>, vector<256x128xf32> -> vector<256x128xf32>
    %260 = arith.addf %253, %259 : vector<256x128xf32>
    %cst_265 = arith.constant dense<0.000000e+00> : vector<128xf32>
    %261 = vector.multi_reduction <add>, %260, %cst_265 [0] : vector<256x128xf32> to vector<128xf32>
    %262 = vector.shape_cast %261 : vector<128xf32> to vector<1x128xf32>
    %cst_266 = arith.constant 3.906250e-03 : f32
    %263 = vector.broadcast %cst_266 : f32 to vector<1x128xf32>
    %264 = arith.mulf %262, %263 : vector<1x128xf32>
    %265 = arith.mulf %260, %260 : vector<256x128xf32>
    %cst_267 = arith.constant dense<0.000000e+00> : vector<128xf32>
    %266 = vector.multi_reduction <add>, %265, %cst_267 [0] : vector<256x128xf32> to vector<128xf32>
    %267 = vector.shape_cast %266 : vector<128xf32> to vector<1x128xf32>
    %cst_268 = arith.constant 3.906250e-03 : f32
    %268 = vector.broadcast %cst_268 : f32 to vector<1x128xf32>
    %269 = arith.mulf %267, %268 : vector<1x128xf32>
    %270 = arith.mulf %264, %264 : vector<1x128xf32>
    %271 = arith.subf %269, %270 : vector<1x128xf32>
    %cst_269 = arith.constant 0.000000e+00 : f32
    %272 = vector.broadcast %cst_269 : f32 to vector<1x128xf32>
    %273 = arith.maximumf %271, %272 : vector<1x128xf32>
    %274 = vector.broadcast %264 : vector<1x128xf32> to vector<256x128xf32>
    %275 = arith.subf %260, %274 : vector<256x128xf32>
    %cst_270 = arith.constant 9.99999974E-6 : f32
    %276 = vector.broadcast %cst_270 : f32 to vector<1x128xf32>
    %277 = arith.addf %273, %276 : vector<1x128xf32>
    %278 = math.rsqrt %277 : vector<1x128xf32>
    %279 = vector.broadcast %278 : vector<1x128xf32> to vector<256x128xf32>
    %280 = arith.mulf %275, %279 : vector<256x128xf32>
    %c0_271 = arith.constant 0 : index
    %c0_272 = arith.constant 0 : index
    %281 = vector.load %arg10[%c0_271, %c0_272] : memref<1x128xf32, #tpu.memory_space<vmem>>, vector<1x128xf32>
    %282 = vector.broadcast %281 : vector<1x128xf32> to vector<256x128xf32>
    %283 = arith.mulf %280, %282 : vector<256x128xf32>
    %c0_273 = arith.constant 0 : index
    %c0_274 = arith.constant 0 : index
    %284 = vector.load %arg11[%c0_273, %c0_274] : memref<1x128xf32, #tpu.memory_space<vmem>>, vector<1x128xf32>
    %285 = vector.broadcast %284 : vector<1x128xf32> to vector<256x128xf32>
    %286 = arith.addf %283, %285 : vector<256x128xf32>
    %cst_275 = arith.constant 0.000000e+00 : f32
    %287 = vector.broadcast %cst_275 : f32 to vector<256x128xf32>
    %288 = arith.maximumf %286, %287 : vector<256x128xf32>
    %289 = vector.shape_cast %288 : vector<256x128xf32> to vector<2x16x8x128xf32>
    %c0_276 = arith.constant 0 : index
    %c1_277 = arith.constant 1 : index
    %c1_278 = arith.constant 1 : index
    %c0_279 = arith.constant 0 : index
    %290 = vector.load %arg18[%c0_276, %c1_277, %c1_278, %c0_279] : memref<2x18x10x128xf32, #tpu.memory_space<vmem>>, vector<2x16x8x128xf32>
    tpu.vector_store %arg18[%c0_276, %c1_277, %c1_278, %c0_279], %289 {strides = array<i32>} : memref<2x18x10x128xf32, #tpu.memory_space<vmem>>, vector<2x16x8x128xf32>,
    %cst_280 = arith.constant 0.000000e+00 : f32
    %291 = vector.broadcast %cst_280 : f32 to vector<256x128xf32>
    %c0_281 = arith.constant 0 : index
    %c0_282 = arith.constant 0 : index
    %c0_283 = arith.constant 0 : index
    %c0_284 = arith.constant 0 : index
    %292 = vector.load %arg18[%c0_281, %c0_282, %c0_283, %c0_284] : memref<2x18x10x128xf32, #tpu.memory_space<vmem>>, vector<2x16x8x128xf32>
    %293 = vector.shape_cast %292 : vector<2x16x8x128xf32> to vector<256x128xf32>
    %294 = arith.truncf %293 : vector<256x128xf32> to vector<256x128xbf16>
    %c0_285 = arith.constant 0 : index
    %c0_286 = arith.constant 0 : index
    %c0_287 = arith.constant 0 : index
    %295 = vector.load %arg12[%c0_285, %c0_286, %c0_287] : memref<9x128x128xbf16, #tpu.memory_space<vmem>>, vector<1x128x128xbf16>
    %296 = vector.shape_cast %295 : vector<1x128x128xbf16> to vector<128x128xbf16>
    %cst_288 = arith.constant dense<0.000000e+00> : vector<256x128xf32>
    %297 = tpu.matmul %294, %296, %cst_288 {dimension_numbers = #tpu.dot_dimension_numbers<[1], [0], [0], [1], [0, 0, 1, 1], [], []>} : vector<256x128xbf16>, vector<128x128xbf16>, vector<256x128xf32> -> vector<256x128xf32>
    %298 = arith.addf %291, %297 : vector<256x128xf32>
    %c0_289 = arith.constant 0 : index
    %c0_290 = arith.constant 0 : index
    %c1_291 = arith.constant 1 : index
    %c0_292 = arith.constant 0 : index
    %299 = vector.load %arg18[%c0_289, %c0_290, %c1_291, %c0_292] : memref<2x18x10x128xf32, #tpu.memory_space<vmem>>, vector<2x16x8x128xf32>
    %300 = vector.shape_cast %299 : vector<2x16x8x128xf32> to vector<256x128xf32>
    %301 = arith.truncf %300 : vector<256x128xf32> to vector<256x128xbf16>
    %c1_293 = arith.constant 1 : index
    %c0_294 = arith.constant 0 : index
    %c0_295 = arith.constant 0 : index
    %302 = vector.load %arg12[%c1_293, %c0_294, %c0_295] : memref<9x128x128xbf16, #tpu.memory_space<vmem>>, vector<1x128x128xbf16>
    %303 = vector.shape_cast %302 : vector<1x128x128xbf16> to vector<128x128xbf16>
    %cst_296 = arith.constant dense<0.000000e+00> : vector<256x128xf32>
    %304 = tpu.matmul %301, %303, %cst_296 {dimension_numbers = #tpu.dot_dimension_numbers<[1], [0], [0], [1], [0, 0, 1, 1], [], []>} : vector<256x128xbf16>, vector<128x128xbf16>, vector<256x128xf32> -> vector<256x128xf32>
    %305 = arith.addf %298, %304 : vector<256x128xf32>
    %c0_297 = arith.constant 0 : index
    %c0_298 = arith.constant 0 : index
    %c2_299 = arith.constant 2 : index
    %c0_300 = arith.constant 0 : index
    %306 = vector.load %arg18[%c0_297, %c0_298, %c2_299, %c0_300] : memref<2x18x10x128xf32, #tpu.memory_space<vmem>>, vector<2x16x8x128xf32>
    %307 = vector.shape_cast %306 : vector<2x16x8x128xf32> to vector<256x128xf32>
    %308 = arith.truncf %307 : vector<256x128xf32> to vector<256x128xbf16>
    %c2_301 = arith.constant 2 : index
    %c0_302 = arith.constant 0 : index
    %c0_303 = arith.constant 0 : index
    %309 = vector.load %arg12[%c2_301, %c0_302, %c0_303] : memref<9x128x128xbf16, #tpu.memory_space<vmem>>, vector<1x128x128xbf16>
    %310 = vector.shape_cast %309 : vector<1x128x128xbf16> to vector<128x128xbf16>
    %cst_304 = arith.constant dense<0.000000e+00> : vector<256x128xf32>
    %311 = tpu.matmul %308, %310, %cst_304 {dimension_numbers = #tpu.dot_dimension_numbers<[1], [0], [0], [1], [0, 0, 1, 1], [], []>} : vector<256x128xbf16>, vector<128x128xbf16>, vector<256x128xf32> -> vector<256x128xf32>
    %312 = arith.addf %305, %311 : vector<256x128xf32>
    %c0_305 = arith.constant 0 : index
    %c1_306 = arith.constant 1 : index
    %c0_307 = arith.constant 0 : index
    %c0_308 = arith.constant 0 : index
    %313 = vector.load %arg18[%c0_305, %c1_306, %c0_307, %c0_308] : memref<2x18x10x128xf32, #tpu.memory_space<vmem>>, vector<2x16x8x128xf32>
    %314 = vector.shape_cast %313 : vector<2x16x8x128xf32> to vector<256x128xf32>
    %315 = arith.truncf %314 : vector<256x128xf32> to vector<256x128xbf16>
    %c3_309 = arith.constant 3 : index
    %c0_310 = arith.constant 0 : index
    %c0_311 = arith.constant 0 : index
    %316 = vector.load %arg12[%c3_309, %c0_310, %c0_311] : memref<9x128x128xbf16, #tpu.memory_space<vmem>>, vector<1x128x128xbf16>
    %317 = vector.shape_cast %316 : vector<1x128x128xbf16> to vector<128x128xbf16>
    %cst_312 = arith.constant dense<0.000000e+00> : vector<256x128xf32>
    %318 = tpu.matmul %315, %317, %cst_312 {dimension_numbers = #tpu.dot_dimension_numbers<[1], [0], [0], [1], [0, 0, 1, 1], [], []>} : vector<256x128xbf16>, vector<128x128xbf16>, vector<256x128xf32> -> vector<256x128xf32>
    %319 = arith.addf %312, %318 : vector<256x128xf32>
    %c0_313 = arith.constant 0 : index
    %c1_314 = arith.constant 1 : index
    %c1_315 = arith.constant 1 : index
    %c0_316 = arith.constant 0 : index
    %320 = vector.load %arg18[%c0_313, %c1_314, %c1_315, %c0_316] : memref<2x18x10x128xf32, #tpu.memory_space<vmem>>, vector<2x16x8x128xf32>
    %321 = vector.shape_cast %320 : vector<2x16x8x128xf32> to vector<256x128xf32>
    %322 = arith.truncf %321 : vector<256x128xf32> to vector<256x128xbf16>
    %c4_317 = arith.constant 4 : index
    %c0_318 = arith.constant 0 : index
    %c0_319 = arith.constant 0 : index
    %323 = vector.load %arg12[%c4_317, %c0_318, %c0_319] : memref<9x128x128xbf16, #tpu.memory_space<vmem>>, vector<1x128x128xbf16>
    %324 = vector.shape_cast %323 : vector<1x128x128xbf16> to vector<128x128xbf16>
    %cst_320 = arith.constant dense<0.000000e+00> : vector<256x128xf32>
    %325 = tpu.matmul %322, %324, %cst_320 {dimension_numbers = #tpu.dot_dimension_numbers<[1], [0], [0], [1], [0, 0, 1, 1], [], []>} : vector<256x128xbf16>, vector<128x128xbf16>, vector<256x128xf32> -> vector<256x128xf32>
    %326 = arith.addf %319, %325 : vector<256x128xf32>
    %c0_321 = arith.constant 0 : index
    %c1_322 = arith.constant 1 : index
    %c2_323 = arith.constant 2 : index
    %c0_324 = arith.constant 0 : index
    %327 = vector.load %arg18[%c0_321, %c1_322, %c2_323, %c0_324] : memref<2x18x10x128xf32, #tpu.memory_space<vmem>>, vector<2x16x8x128xf32>
    %328 = vector.shape_cast %327 : vector<2x16x8x128xf32> to vector<256x128xf32>
    %329 = arith.truncf %328 : vector<256x128xf32> to vector<256x128xbf16>
    %c5_325 = arith.constant 5 : index
    %c0_326 = arith.constant 0 : index
    %c0_327 = arith.constant 0 : index
    %330 = vector.load %arg12[%c5_325, %c0_326, %c0_327] : memref<9x128x128xbf16, #tpu.memory_space<vmem>>, vector<1x128x128xbf16>
    %331 = vector.shape_cast %330 : vector<1x128x128xbf16> to vector<128x128xbf16>
    %cst_328 = arith.constant dense<0.000000e+00> : vector<256x128xf32>
    %332 = tpu.matmul %329, %331, %cst_328 {dimension_numbers = #tpu.dot_dimension_numbers<[1], [0], [0], [1], [0, 0, 1, 1], [], []>} : vector<256x128xbf16>, vector<128x128xbf16>, vector<256x128xf32> -> vector<256x128xf32>
    %333 = arith.addf %326, %332 : vector<256x128xf32>
    %c0_329 = arith.constant 0 : index
    %c2_330 = arith.constant 2 : index
    %c0_331 = arith.constant 0 : index
    %c0_332 = arith.constant 0 : index
    %334 = vector.load %arg18[%c0_329, %c2_330, %c0_331, %c0_332] : memref<2x18x10x128xf32, #tpu.memory_space<vmem>>, vector<2x16x8x128xf32>
    %335 = vector.shape_cast %334 : vector<2x16x8x128xf32> to vector<256x128xf32>
    %336 = arith.truncf %335 : vector<256x128xf32> to vector<256x128xbf16>
    %c6_333 = arith.constant 6 : index
    %c0_334 = arith.constant 0 : index
    %c0_335 = arith.constant 0 : index
    %337 = vector.load %arg12[%c6_333, %c0_334, %c0_335] : memref<9x128x128xbf16, #tpu.memory_space<vmem>>, vector<1x128x128xbf16>
    %338 = vector.shape_cast %337 : vector<1x128x128xbf16> to vector<128x128xbf16>
    %cst_336 = arith.constant dense<0.000000e+00> : vector<256x128xf32>
    %339 = tpu.matmul %336, %338, %cst_336 {dimension_numbers = #tpu.dot_dimension_numbers<[1], [0], [0], [1], [0, 0, 1, 1], [], []>} : vector<256x128xbf16>, vector<128x128xbf16>, vector<256x128xf32> -> vector<256x128xf32>
    %340 = arith.addf %333, %339 : vector<256x128xf32>
    %c0_337 = arith.constant 0 : index
    %c2_338 = arith.constant 2 : index
    %c1_339 = arith.constant 1 : index
    %c0_340 = arith.constant 0 : index
    %341 = vector.load %arg18[%c0_337, %c2_338, %c1_339, %c0_340] : memref<2x18x10x128xf32, #tpu.memory_space<vmem>>, vector<2x16x8x128xf32>
    %342 = vector.shape_cast %341 : vector<2x16x8x128xf32> to vector<256x128xf32>
    %343 = arith.truncf %342 : vector<256x128xf32> to vector<256x128xbf16>
    %c7_341 = arith.constant 7 : index
    %c0_342 = arith.constant 0 : index
    %c0_343 = arith.constant 0 : index
    %344 = vector.load %arg12[%c7_341, %c0_342, %c0_343] : memref<9x128x128xbf16, #tpu.memory_space<vmem>>, vector<1x128x128xbf16>
    %345 = vector.shape_cast %344 : vector<1x128x128xbf16> to vector<128x128xbf16>
    %cst_344 = arith.constant dense<0.000000e+00> : vector<256x128xf32>
    %346 = tpu.matmul %343, %345, %cst_344 {dimension_numbers = #tpu.dot_dimension_numbers<[1], [0], [0], [1], [0, 0, 1, 1], [], []>} : vector<256x128xbf16>, vector<128x128xbf16>, vector<256x128xf32> -> vector<256x128xf32>
    %347 = arith.addf %340, %346 : vector<256x128xf32>
    %c0_345 = arith.constant 0 : index
    %c2_346 = arith.constant 2 : index
    %c2_347 = arith.constant 2 : index
    %c0_348 = arith.constant 0 : index
    %348 = vector.load %arg18[%c0_345, %c2_346, %c2_347, %c0_348] : memref<2x18x10x128xf32, #tpu.memory_space<vmem>>, vector<2x16x8x128xf32>
    %349 = vector.shape_cast %348 : vector<2x16x8x128xf32> to vector<256x128xf32>
    %350 = arith.truncf %349 : vector<256x128xf32> to vector<256x128xbf16>
    %c8_349 = arith.constant 8 : index
    %c0_350 = arith.constant 0 : index
    %c0_351 = arith.constant 0 : index
    %351 = vector.load %arg12[%c8_349, %c0_350, %c0_351] : memref<9x128x128xbf16, #tpu.memory_space<vmem>>, vector<1x128x128xbf16>
    %352 = vector.shape_cast %351 : vector<1x128x128xbf16> to vector<128x128xbf16>
    %cst_352 = arith.constant dense<0.000000e+00> : vector<256x128xf32>
    %353 = tpu.matmul %350, %352, %cst_352 {dimension_numbers = #tpu.dot_dimension_numbers<[1], [0], [0], [1], [0, 0, 1, 1], [], []>} : vector<256x128xbf16>, vector<128x128xbf16>, vector<256x128xf32> -> vector<256x128xf32>
    %354 = arith.addf %347, %353 : vector<256x128xf32>
    %cst_353 = arith.constant dense<0.000000e+00> : vector<128xf32>
    %355 = vector.multi_reduction <add>, %354, %cst_353 [0] : vector<256x128xf32> to vector<128xf32>
    %356 = vector.shape_cast %355 : vector<128xf32> to vector<1x128xf32>
    %cst_354 = arith.constant 3.906250e-03 : f32
    %357 = vector.broadcast %cst_354 : f32 to vector<1x128xf32>
    %358 = arith.mulf %356, %357 : vector<1x128xf32>
    %359 = arith.mulf %354, %354 : vector<256x128xf32>
    %cst_355 = arith.constant dense<0.000000e+00> : vector<128xf32>
    %360 = vector.multi_reduction <add>, %359, %cst_355 [0] : vector<256x128xf32> to vector<128xf32>
    %361 = vector.shape_cast %360 : vector<128xf32> to vector<1x128xf32>
    %cst_356 = arith.constant 3.906250e-03 : f32
    %362 = vector.broadcast %cst_356 : f32 to vector<1x128xf32>
    %363 = arith.mulf %361, %362 : vector<1x128xf32>
    %364 = arith.mulf %358, %358 : vector<1x128xf32>
    %365 = arith.subf %363, %364 : vector<1x128xf32>
    %cst_357 = arith.constant 0.000000e+00 : f32
    %366 = vector.broadcast %cst_357 : f32 to vector<1x128xf32>
    %367 = arith.maximumf %365, %366 : vector<1x128xf32>
    %368 = vector.broadcast %358 : vector<1x128xf32> to vector<256x128xf32>
    %369 = arith.subf %354, %368 : vector<256x128xf32>
    %cst_358 = arith.constant 9.99999974E-6 : f32
    %370 = vector.broadcast %cst_358 : f32 to vector<1x128xf32>
    %371 = arith.addf %367, %370 : vector<1x128xf32>
    %372 = math.rsqrt %371 : vector<1x128xf32>
    %373 = vector.broadcast %372 : vector<1x128xf32> to vector<256x128xf32>
    %374 = arith.mulf %369, %373 : vector<256x128xf32>
    %c0_359 = arith.constant 0 : index
    %c0_360 = arith.constant 0 : index
    %375 = vector.load %arg13[%c0_359, %c0_360] : memref<1x128xf32, #tpu.memory_space<vmem>>, vector<1x128xf32>
    %376 = vector.broadcast %375 : vector<1x128xf32> to vector<256x128xf32>
    %377 = arith.mulf %374, %376 : vector<256x128xf32>
    %c0_361 = arith.constant 0 : index
    %c0_362 = arith.constant 0 : index
    %378 = vector.load %arg14[%c0_361, %c0_362] : memref<1x128xf32, #tpu.memory_space<vmem>>, vector<1x128xf32>
    %379 = vector.broadcast %378 : vector<1x128xf32> to vector<256x128xf32>
    %380 = arith.addf %377, %379 : vector<256x128xf32>
    %cst_363 = arith.constant 0.000000e+00 : f32
    %381 = vector.broadcast %cst_363 : f32 to vector<256x128xf32>
    %382 = arith.maximumf %380, %381 : vector<256x128xf32>
    %383 = vector.shape_cast %382 : vector<256x128xf32> to vector<2x16x8x128xf32>
    %cst_364 = arith.constant dense<0xFF800000> : vector<2x8x128xf32>
    %384 = vector.multi_reduction <maximumf>, %383, %cst_364 [1] : vector<2x16x8x128xf32> to vector<2x8x128xf32>
    %c0_365 = arith.constant 0 : index
    %c0_366 = arith.constant 0 : index
    %c0_367 = arith.constant 0 : index
    %385 = vector.load %arg16[%c0_365, %c0_366, %c0_367] : memref<2x8x128xf32, #tpu.memory_space<vmem>>, vector<2x8x128xf32>
    tpu.vector_store %arg16[%c0_365, %c0_366, %c0_367], %384 {strides = array<i32>} : memref<2x8x128xf32, #tpu.memory_space<vmem>>, vector<2x8x128xf32>,
    return
  }
  func.func @transform_0(%arg0: i32) -> (i32, i32, i32, i32) {
    %c0_i32 = arith.constant 0 : i32
    %c0_i32_0 = arith.constant 0 : i32
    %c0_i32_1 = arith.constant 0 : i32
    %c0_i32_2 = arith.constant 0 : i32
    %c0_i32_3 = arith.constant 0 : i32
    return %c0_i32, %c0_i32_0, %c0_i32_1, %c0_i32_2 : i32, i32, i32, i32
  }
  func.func @transform_1(%arg0: i32) -> (i32, i32, i32, i32) {
    %c0_i32 = arith.constant 0 : i32
    %c0_i32_0 = arith.constant 0 : i32
    %c0_i32_1 = arith.constant 0 : i32
    %c0_i32_2 = arith.constant 0 : i32
    %c0_i32_3 = arith.constant 0 : i32
    return %c0_i32, %c0_i32_0, %c0_i32_1, %c0_i32_2 : i32, i32, i32, i32
  }
  func.func @transform_2(%arg0: i32) -> (i32, i32, i32) {
    %c0_i32 = arith.constant 0 : i32
    %c0_i32_0 = arith.constant 0 : i32
    %c0_i32_1 = arith.constant 0 : i32
    %c0_i32_2 = arith.constant 0 : i32
    return %c0_i32, %c0_i32_0, %c0_i32_1 : i32, i32, i32
  }
  func.func @transform_3(%arg0: i32) -> (i32, i32) {
    %c0_i32 = arith.constant 0 : i32
    %c0_i32_0 = arith.constant 0 : i32
    %c0_i32_1 = arith.constant 0 : i32
    return %c0_i32, %c0_i32_0 : i32, i32
  }
  func.func @transform_4(%arg0: i32) -> (i32, i32) {
    %c0_i32 = arith.constant 0 : i32
    %c0_i32_0 = arith.constant 0 : i32
    %c0_i32_1 = arith.constant 0 : i32
    return %c0_i32, %c0_i32_0 : i32, i32
  }
  func.func @transform_5(%arg0: i32) -> (i32, i32, i32) {
    %c0_i32 = arith.constant 0 : i32
    %c0_i32_0 = arith.constant 0 : i32
    %c0_i32_1 = arith.constant 0 : i32
    %c0_i32_2 = arith.constant 0 : i32
    return %c0_i32, %c0_i32_0, %c0_i32_1 : i32, i32, i32
  }
  func.func @transform_6(%arg0: i32) -> (i32, i32) {
    %c0_i32 = arith.constant 0 : i32
    %c0_i32_0 = arith.constant 0 : i32
    %c0_i32_1 = arith.constant 0 : i32
    return %c0_i32, %c0_i32_0 : i32, i32
  }
  func.func @transform_7(%arg0: i32) -> (i32, i32) {
    %c0_i32 = arith.constant 0 : i32
    %c0_i32_0 = arith.constant 0 : i32
    %c0_i32_1 = arith.constant 0 : i32
    return %c0_i32, %c0_i32_0 : i32, i32
  }
  func.func @transform_8(%arg0: i32) -> (i32, i32, i32) {
    %c0_i32 = arith.constant 0 : i32
    %c0_i32_0 = arith.constant 0 : i32
    %c0_i32_1 = arith.constant 0 : i32
    %c0_i32_2 = arith.constant 0 : i32
    return %c0_i32, %c0_i32_0, %c0_i32_1 : i32, i32, i32
  }
  func.func @transform_9(%arg0: i32) -> (i32, i32) {
    %c0_i32 = arith.constant 0 : i32
    %c0_i32_0 = arith.constant 0 : i32
    %c0_i32_1 = arith.constant 0 : i32
    return %c0_i32, %c0_i32_0 : i32, i32
  }
  func.func @transform_10(%arg0: i32) -> (i32, i32) {
    %c0_i32 = arith.constant 0 : i32
    %c0_i32_0 = arith.constant 0 : i32
    %c0_i32_1 = arith.constant 0 : i32
    return %c0_i32, %c0_i32_0 : i32, i32
  }
  func.func @transform_11(%arg0: i32) -> (i32, i32, i32) {
    %c0_i32 = arith.constant 0 : i32
    %c0_i32_0 = arith.constant 0 : i32
    %c0_i32_1 = arith.constant 0 : i32
    %c0_i32_2 = arith.constant 0 : i32
    return %c0_i32, %c0_i32_0, %c0_i32_1 : i32, i32, i32
  }
  func.func @transform_12(%arg0: i32) -> (i32, i32) {
    %c0_i32 = arith.constant 0 : i32
    %c0_i32_0 = arith.constant 0 : i32
    %c0_i32_1 = arith.constant 0 : i32
    return %c0_i32, %c0_i32_0 : i32, i32
  }
  func.func @transform_13(%arg0: i32) -> (i32, i32) {
    %c0_i32 = arith.constant 0 : i32
    %c0_i32_0 = arith.constant 0 : i32
    %c0_i32_1 = arith.constant 0 : i32
    return %c0_i32, %c0_i32_0 : i32, i32
  }
  func.func @transform_14(%arg0: i32) -> (i32, i32, i32) {
    %c0_i32 = arith.constant 0 : i32
    %c0_i32_0 = arith.constant 0 : i32
    %c0_i32_1 = arith.constant 0 : i32
    %c0_i32_2 = arith.constant 0 : i32
    return %c0_i32, %c0_i32_0, %c0_i32_1 : i32, i32, i32
  }
  func.func @transform_15(%arg0: i32) -> (i32, i32, i32) {
    %c0_i32 = arith.constant 0 : i32
    %c0_i32_0 = arith.constant 0 : i32
    %c0_i32_1 = arith.constant 0 : i32
    %c0_i32_2 = arith.constant 0 : i32
    return %c0_i32, %c0_i32_0, %c0_i32_1 : i32, i32, i32
  }
}

</mosaic_0001>

<llo_original>
// kernel: custom-call.8
$region0: #{custom-call.8}
  %s0 = inlined_call_operand.vmem [shape: f32[2,16], index: 0, kind: output, shape index: {}]

// kernel: point_net_set_abstraction.1
$region0: #{point_net_set_abstraction.1}
  #allocation0 [shape = 'u32[]', space=smem, size = 0x4, offset = 0x4, fixed_abs, tag = 'smem constant byte address 0x4 - core index']
  #allocation1 [shape = 'u32[144,128]{1,0:T(1,128)}', space=vmem, size = 0x12000, scoped, tag = 'internal scratch']
  #allocation2 [shape = 'f32[2,10,10,128]{3,2,1,0:T(8,128)}', space=vmem, size = 0x28000, scoped, tag = 'scratch operand']
  #allocation3 [shape = 'f32[2,18,10,128]{3,2,1,0:T(8,128)}', space=vmem, size = 0x48000, scoped, tag = 'scratch operand']
  %s0 = inlined_call_operand.vmem [shape: f32[2,8,8,128], index: 0, kind: input, shape index: {}]
  %s1 = inlined_call_operand.vmem [shape: f32[2,16,8,128], index: 1, kind: input, shape index: {}]
  %s2 = inlined_call_operand.vmem [shape: bf16[9,128,128], index: 2, kind: input, shape index: {}]
  %s3 = inlined_call_operand.vmem [shape: f32[1,128], index: 3, kind: input, shape index: {}]
  %s4 = inlined_call_operand.vmem [shape: f32[1,128], index: 4, kind: input, shape index: {}]
  %s5 = inlined_call_operand.vmem [shape: bf16[9,128,128], index: 5, kind: input, shape index: {}]
  %s6 = inlined_call_operand.vmem [shape: f32[1,128], index: 6, kind: input, shape index: {}]
  %s7 = inlined_call_operand.vmem [shape: f32[1,128], index: 7, kind: input, shape index: {}]
  %s8 = inlined_call_operand.vmem [shape: bf16[9,128,128], index: 8, kind: input, shape index: {}]
  %s9 = inlined_call_operand.vmem [shape: f32[1,128], index: 9, kind: input, shape index: {}]
  %s10 = inlined_call_operand.vmem [shape: f32[1,128], index: 10, kind: input, shape index: {}]
  %s11 = inlined_call_operand.vmem [shape: bf16[9,128,128], index: 11, kind: input, shape index: {}]
  %s12 = inlined_call_operand.vmem [shape: f32[1,128], index: 12, kind: input, shape index: {}]
  %s13 = inlined_call_operand.vmem [shape: f32[1,128], index: 13, kind: input, shape index: {}]
  %s14 = inlined_call_operand.vmem [shape: f32[2,8,128], index: 14, kind: output, shape index: {0}]
  %s15 = inlined_call_operand.vmem [shape: f32[2,8,128], index: 15, kind: output, shape index: {1}]
  %16 = xla_tuple %s14, %s15
  %s17 = sld [smem:[#allocation0]]
  $region74: #{point_net_set_abstraction.1} parent=0
    _
  %s19 = ssub.s32 1, %s17
  %s20 = scalar_select 0, %s19, %s17
  // Predicated region
  $region2: #{point_net_set_abstraction.1} parent=0 // pred_check
    _
  $region3: #{point_net_set_abstraction.1} parent=0 // pred_check_branch
    %22 = sbr.rel (0) target = $region5
  $region4: #{point_net_set_abstraction.1} parent=0 // pred_region
    _
  $region5: #{point_net_set_abstraction.1} parent=0 // pred_fallthru
    _
  // Predicated region
  $region6: #{point_net_set_abstraction.1} parent=0 // pred_check
    _
  $region7: #{point_net_set_abstraction.1} parent=0 // pred_check_branch
    %24 = sbr.rel (0) target = $region9
  $region8: #{point_net_set_abstraction.1} parent=0 // pred_region
    _
  $region9: #{point_net_set_abstraction.1} parent=0 // pred_fallthru
    _
  // Predicated region
  $region10: #{point_net_set_abstraction.1} parent=0 // pred_check
    _
  $region11: #{point_net_set_abstraction.1} parent=0 // pred_check_branch
    %26 = sbr.rel (0) target = $region13
  $region12: #{point_net_set_abstraction.1} parent=0 // pred_region
    _
  $region13: #{point_net_set_abstraction.1} parent=0 // pred_fallthru
    _
  // Predicated region
  $region14: #{point_net_set_abstraction.1} parent=0 // pred_check
    _
  $region15: #{point_net_set_abstraction.1} parent=0 // pred_check_branch
    %28 = sbr.rel (0) target = $region17
  $region16: #{point_net_set_abstraction.1} parent=0 // pred_region
    _
  $region17: #{point_net_set_abstraction.1} parent=0 // pred_fallthru
    _
  // Predicated region
  $region18: #{point_net_set_abstraction.1} parent=0 // pred_check
    _
  $region19: #{point_net_set_abstraction.1} parent=0 // pred_check_branch
    %30 = sbr.rel (0) target = $region21
  $region20: #{point_net_set_abstraction.1} parent=0 // pred_region
    _
  $region21: #{point_net_set_abstraction.1} parent=0 // pred_fallthru
    _
  // Predicated region
  $region22: #{point_net_set_abstraction.1} parent=0 // pred_check
    _
  $region23: #{point_net_set_abstraction.1} parent=0 // pred_check_branch
    %32 = sbr.rel (0) target = $region25
  $region24: #{point_net_set_abstraction.1} parent=0 // pred_region
    _
  $region25: #{point_net_set_abstraction.1} parent=0 // pred_fallthru
    _
  // Predicated region
  $region26: #{point_net_set_abstraction.1} parent=0 // pred_check
    _
  $region27: #{point_net_set_abstraction.1} parent=0 // pred_check_branch
    %34 = sbr.rel (0) target = $region29
  $region28: #{point_net_set_abstraction.1} parent=0 // pred_region
    _
  $region29: #{point_net_set_abstraction.1} parent=0 // pred_fallthru
    _
  // Predicated region
  $region30: #{point_net_set_abstraction.1} parent=0 // pred_check
    _
  $region31: #{point_net_set_abstraction.1} parent=0 // pred_check_branch
    %36 = sbr.rel (0) target = $region33
  $region32: #{point_net_set_abstraction.1} parent=0 // pred_region
    _
  $region33: #{point_net_set_abstraction.1} parent=0 // pred_fallthru
    _
  // Predicated region
  $region34: #{point_net_set_abstraction.1} parent=0 // pred_check
    _
  $region35: #{point_net_set_abstraction.1} parent=0 // pred_check_branch
    %38 = sbr.rel (0) target = $region37
  $region36: #{point_net_set_abstraction.1} parent=0 // pred_region
    _
  $region37: #{point_net_set_abstraction.1} parent=0 // pred_fallthru
    _
  // Predicated region
  $region38: #{point_net_set_abstraction.1} parent=0 // pred_check
    _
  $region39: #{point_net_set_abstraction.1} parent=0 // pred_check_branch
    %40 = sbr.rel (0) target = $region41
  $region40: #{point_net_set_abstraction.1} parent=0 // pred_region
    _
  $region41: #{point_net_set_abstraction.1} parent=0 // pred_fallthru
    _
  // Predicated region
  $region42: #{point_net_set_abstraction.1} parent=0 // pred_check
    _
  $region43: #{point_net_set_abstraction.1} parent=0 // pred_check_branch
    %42 = sbr.rel (0) target = $region45
  $region44: #{point_net_set_abstraction.1} parent=0 // pred_region
    _
  $region45: #{point_net_set_abstraction.1} parent=0 // pred_fallthru
    _
  // Predicated region
  $region46: #{point_net_set_abstraction.1} parent=0 // pred_check
    _
  $region47: #{point_net_set_abstraction.1} parent=0 // pred_check_branch
    %44 = sbr.rel (0) target = $region49
  $region48: #{point_net_set_abstraction.1} parent=0 // pred_region
    _
  $region49: #{point_net_set_abstraction.1} parent=0 // pred_fallthru
    _
  // Predicated region
  $region50: #{point_net_set_abstraction.1} parent=0 // pred_check
    _
  $region51: #{point_net_set_abstraction.1} parent=0 // pred_check_branch
    %46 = sbr.rel (0) target = $region53
  $region52: #{point_net_set_abstraction.1} parent=0 // pred_region
    _
  $region53: #{point_net_set_abstraction.1} parent=0 // pred_fallthru
    _
  // Predicated region
  $region54: #{point_net_set_abstraction.1} parent=0 // pred_check
    _
  $region55: #{point_net_set_abstraction.1} parent=0 // pred_check_branch
    %48 = sbr.rel (0) target = $region57
  $region56: #{point_net_set_abstraction.1} parent=0 // pred_region
    _
  $region57: #{point_net_set_abstraction.1} parent=0 // pred_fallthru
    _
  %50 = vst [vmem:[#allocation2] sm:$0xff] 0.0
  %51 = vst [vmem:[#allocation2 + $0x8] sm:$0x3] 0.0
  %52 = vst [vmem:[#allocation2 + $0x10] sm:$0xff] 0.0
  %53 = vst [vmem:[#allocation2 + $0x18] sm:$0x3] 0.0
  %54 = vst [vmem:[#allocation2 + $0x20] sm:$0xff] 0.0
  %55 = vst [vmem:[#allocation2 + $0x28] sm:$0x3] 0.0
  %56 = vst [vmem:[#allocation2 + $0x30] sm:$0xff] 0.0
  %57 = vst [vmem:[#allocation2 + $0x38] sm:$0x3] 0.0
  %58 = vst [vmem:[#allocation2 + $0x40] sm:$0xff] 0.0
  %59 = vst [vmem:[#allocation2 + $0x48] sm:$0x3] 0.0
  %60 = vst [vmem:[#allocation2 + $0x50] sm:$0xff] 0.0
  %61 = vst [vmem:[#allocation2 + $0x58] sm:$0x3] 0.0
  %62 = vst [vmem:[#allocation2 + $0x60] sm:$0xff] 0.0
  %63 = vst [vmem:[#allocation2 + $0x68] sm:$0x3] 0.0
  %64 = vst [vmem:[#allocation2 + $0x70] sm:$0xff] 0.0
  %65 = vst [vmem:[#allocation2 + $0x78] sm:$0x3] 0.0
  %66 = vst [vmem:[#allocation2 + $0x80] sm:$0xff] 0.0
  %67 = vst [vmem:[#allocation2 + $0x88] sm:$0x3] 0.0
  %68 = vst [vmem:[#allocation2 + $0x90] sm:$0xff] 0.0
  %69 = vst [vmem:[#allocation2 + $0x98] sm:$0x3] 0.0
  %70 = vst [vmem:[#allocation2 + $0xa0] sm:$0xff] 0.0
  %71 = vst [vmem:[#allocation2 + $0xa8] sm:$0x3] 0.0
  %72 = vst [vmem:[#allocation2 + $0xb0] sm:$0xff] 0.0
  %73 = vst [vmem:[#allocation2 + $0xb8] sm:$0x3] 0.0
  %74 = vst [vmem:[#allocation2 + $0xc0] sm:$0xff] 0.0
  %75 = vst [vmem:[#allocation2 + $0xc8] sm:$0x3] 0.0
  %76 = vst [vmem:[#allocation2 + $0xd0] sm:$0xff] 0.0
  %77 = vst [vmem:[#allocation2 + $0xd8] sm:$0x3] 0.0
  %78 = vst [vmem:[#allocation2 + $0xe0] sm:$0xff] 0.0
  %79 = vst [vmem:[#allocation2 + $0xe8] sm:$0x3] 0.0
  %80 = vst [vmem:[#allocation2 + $0xf0] sm:$0xff] 0.0
  %81 = vst [vmem:[#allocation2 + $0xf8] sm:$0x3] 0.0
  %82 = vst [vmem:[#allocation2 + $0x100] sm:$0xff] 0.0
  %83 = vst [vmem:[#allocation2 + $0x108] sm:$0x3] 0.0
  %84 = vst [vmem:[#allocation2 + $0x110] sm:$0xff] 0.0
  %85 = vst [vmem:[#allocation2 + $0x118] sm:$0x3] 0.0
  %86 = vst [vmem:[#allocation2 + $0x120] sm:$0xff] 0.0
  %87 = vst [vmem:[#allocation2 + $0x128] sm:$0x3] 0.0
  %88 = vst [vmem:[#allocation2 + $0x130] sm:$0xff] 0.0
  %89 = vst [vmem:[#allocation2 + $0x138] sm:$0x3] 0.0
  %v90 = vld [vmem:[%s0] sm:$0xff]
  %v91 = vld [vmem:[%s0 + $0x8] sm:$0xff]
  %v92 = vld [vmem:[%s0 + $0x10] sm:$0xff]
  %v93 = vld [vmem:[%s0 + $0x18] sm:$0xff]
  %v94 = vld [vmem:[%s0 + $0x20] sm:$0xff]
  %v95 = vld [vmem:[%s0 + $0x28] sm:$0xff]
  %v96 = vld [vmem:[%s0 + $0x30] sm:$0xff]
  %v97 = vld [vmem:[%s0 + $0x38] sm:$0xff]
  %v98 = vld [vmem:[%s0 + $0x40] sm:$0xff]
  %v99 = vld [vmem:[%s0 + $0x48] sm:$0xff]
  %v100 = vld [vmem:[%s0 + $0x50] sm:$0xff]
  %v101 = vld [vmem:[%s0 + $0x58] sm:$0xff]
  %v102 = vld [vmem:[%s0 + $0x60] sm:$0xff]
  %v103 = vld [vmem:[%s0 + $0x68] sm:$0xff]
  %v104 = vld [vmem:[%s0 + $0x70] sm:$0xff]
  %v105 = vld [vmem:[%s0 + $0x78] sm:$0xff]
  %s106 = scalar_lea.vmem [#allocation2], 16
  %107 = vst [vmem:[%s106 + $0x1] sm:$0xff] %v90
  %108 = vst [vmem:[%s106 + $0x11] sm:$0xff] %v91
  %109 = vst [vmem:[%s106 + $0x21] sm:$0xff] %v92
  %110 = vst [vmem:[%s106 + $0x31] sm:$0xff] %v93
  %111 = vst [vmem:[%s106 + $0x41] sm:$0xff] %v94
  %112 = vst [vmem:[%s106 + $0x51] sm:$0xff] %v95
  %113 = vst [vmem:[%s106 + $0x61] sm:$0xff] %v96
  %114 = vst [vmem:[%s106 + $0x71] sm:$0xff] %v97
  %115 = vst [vmem:[%s106 + $0xa1] sm:$0xff] %v98
  %116 = vst [vmem:[%s106 + $0xb1] sm:$0xff] %v99
  %117 = vst [vmem:[%s106 + $0xc1] sm:$0xff] %v100
  %118 = vst [vmem:[%s106 + $0xd1] sm:$0xff] %v101
  %119 = vst [vmem:[%s106 + $0xe1] sm:$0xff] %v102
  %120 = vst [vmem:[%s106 + $0xf1] sm:$0xff] %v103
  %121 = vst [vmem:[%s106 + $0x101] sm:$0xff] %v104
  %122 = vst [vmem:[%s106 + $0x111] sm:$0xff] %v105
  %v123 = vld [vmem:[#allocation2] sm:$0xff]
  %v124 = vld [vmem:[#allocation2 + $0x10] sm:$0xff]
  %v125 = vld [vmem:[#allocation2 + $0x20] sm:$0xff]
  %v126 = vld [vmem:[#allocation2 + $0x30] sm:$0xff]
  %v127 = vld [vmem:[#allocation2 + $0x40] sm:$0xff]
  %v128 = vld [vmem:[#allocation2 + $0x50] sm:$0xff]
  %v129 = vld [vmem:[#allocation2 + $0x60] sm:$0xff]
  %v130 = vld [vmem:[#allocation2 + $0x70] sm:$0xff]
  %v131 = vld [vmem:[#allocation2 + $0xa0] sm:$0xff]
  %v132 = vld [vmem:[#allocation2 + $0xb0] sm:$0xff]
  %v133 = vld [vmem:[#allocation2 + $0xc0] sm:$0xff]
  %v134 = vld [vmem:[#allocation2 + $0xd0] sm:$0xff]
  %v135 = vld [vmem:[#allocation2 + $0xe0] sm:$0xff]
  %v136 = vld [vmem:[#allocation2 + $0xf0] sm:$0xff]
  %v137 = vld [vmem:[#allocation2 + $0x100] sm:$0xff]
  %v138 = vld [vmem:[#allocation2 + $0x110] sm:$0xff]
  %v139 = vpack.c.bf16 %v124, %v123
  %v140 = vpack.c.bf16 %v126, %v125
  %v141 = vpack.c.bf16 %v128, %v127
  %v142 = vpack.c.bf16 %v130, %v129
  %v143 = vpack.c.bf16 %v132, %v131
  %v144 = vpack.c.bf16 %v134, %v133
  %v145 = vpack.c.bf16 %v136, %v135
  %v146 = vpack.c.bf16 %v138, %v137
  %v147 = vld [vmem:[%s2] sm:$0xf]
  %v148 = vld [vmem:[%s2 + $0x4] sm:$0xf]
  %v149 = vld [vmem:[%s2 + $0x8] sm:$0xf]
  %v150 = vld [vmem:[%s2 + $0xc] sm:$0xf]
  %v151 = vld [vmem:[%s2 + $0x10] sm:$0xf]
  %v152 = vld [vmem:[%s2 + $0x14] sm:$0xf]
  %v153 = vld [vmem:[%s2 + $0x18] sm:$0xf]
  %v154 = vld [vmem:[%s2 + $0x1c] sm:$0xf]
  %v155 = vld [vmem:[%s2 + $0x20] sm:$0xf]
  %v156 = vld [vmem:[%s2 + $0x24] sm:$0xf]
  %v157 = vld [vmem:[%s2 + $0x28] sm:$0xf]
  %v158 = vld [vmem:[%s2 + $0x2c] sm:$0xf]
  %v159 = vld [vmem:[%s2 + $0x30] sm:$0xf]
  %v160 = vld [vmem:[%s2 + $0x34] sm:$0xf]
  %v161 = vld [vmem:[%s2 + $0x38] sm:$0xf]
  %v162 = vld [vmem:[%s2 + $0x3c] sm:$0xf]
  %v163 = vld [vmem:[#allocation2 + $0x1] sm:$0xff]
  %v164 = vld [vmem:[#allocation2 + $0x11] sm:$0xff]
  %v165 = vld [vmem:[#allocation2 + $0x21] sm:$0xff]
  %v166 = vld [vmem:[#allocation2 + $0x31] sm:$0xff]
  %v167 = vld [vmem:[#allocation2 + $0x41] sm:$0xff]
  %v168 = vld [vmem:[#allocation2 + $0x51] sm:$0xff]
  %v169 = vld [vmem:[#allocation2 + $0x61] sm:$0xff]
  %v170 = vld [vmem:[#allocation2 + $0x71] sm:$0xff]
  %v171 = vld [vmem:[#allocation2 + $0xa1] sm:$0xff]
  %v172 = vld [vmem:[#allocation2 + $0xb1] sm:$0xff]
  %v173 = vld [vmem:[#allocation2 + $0xc1] sm:$0xff]
  %v174 = vld [vmem:[#allocation2 + $0xd1] sm:$0xff]
  %v175 = vld [vmem:[#allocation2 + $0xe1] sm:$0xff]
  %v176 = vld [vmem:[#allocation2 + $0xf1] sm:$0xff]
  %v177 = vld [vmem:[#allocation2 + $0x101] sm:$0xff]
  %v178 = vld [vmem:[#allocation2 + $0x111] sm:$0xff]
  %v179 = vpack.c.bf16 %v164, %v163
  %v180 = vpack.c.bf16 %v166, %v165
  %v181 = vpack.c.bf16 %v168, %v167
  %v182 = vpack.c.bf16 %v170, %v169
  %v183 = vpack.c.bf16 %v172, %v171
  %v184 = vpack.c.bf16 %v174, %v173
  %v185 = vpack.c.bf16 %v176, %v175
  %v186 = vpack.c.bf16 %v178, %v177
  %s187 = scalar_lea.vmem %s2, 64
  %v188 = vld [vmem:[%s187] sm:$0xf]
  %v189 = vld [vmem:[%s187 + $0x4] sm:$0xf]
  %v190 = vld [vmem:[%s187 + $0x8] sm:$0xf]
  %v191 = vld [vmem:[%s187 + $0xc] sm:$0xf]
  %v192 = vld [vmem:[%s187 + $0x10] sm:$0xf]
  %v193 = vld [vmem:[%s187 + $0x14] sm:$0xf]
  %v194 = vld [vmem:[%s187 + $0x18] sm:$0xf]
  %v195 = vld [vmem:[%s187 + $0x1c] sm:$0xf]
  %v196 = vld [vmem:[%s187 + $0x20] sm:$0xf]
  %v197 = vld [vmem:[%s187 + $0x24] sm:$0xf]
  %v198 = vld [vmem:[%s187 + $0x28] sm:$0xf]
  %v199 = vld [vmem:[%s187 + $0x2c] sm:$0xf]
  %v200 = vld [vmem:[%s187 + $0x30] sm:$0xf]
  %v201 = vld [vmem:[%s187 + $0x34] sm:$0xf]
  %v202 = vld [vmem:[%s187 + $0x38] sm:$0xf]
  %v203 = vld [vmem:[%s187 + $0x3c] sm:$0xf]
  %v220 = vunpack.c.l.b16 %v188
  %v221 = vunpack.c.l.b16 %v189
  %v222 = vunpack.c.l.b16 %v190
  %v223 = vunpack.c.l.b16 %v191
  %v224 = vunpack.c.l.b16 %v192
  %v225 = vunpack.c.l.b16 %v193
  %v226 = vunpack.c.l.b16 %v194
  %v227 = vunpack.c.l.b16 %v195
  %v228 = vunpack.c.l.b16 %v196
  %v229 = vunpack.c.l.b16 %v197
  %v230 = vunpack.c.l.b16 %v198
  %v231 = vunpack.c.l.b16 %v199
  %v232 = vunpack.c.l.b16 %v200
  %v233 = vunpack.c.l.b16 %v201
  %v234 = vunpack.c.l.b16 %v202
  %v235 = vunpack.c.l.b16 %v203
  %v236 = vpack.c.b16 %v221, %v220
  %v237 = vpack.c.b16 %v223, %v222
  %v238 = vpack.c.b16 %v225, %v224
  %v239 = vpack.c.b16 %v227, %v226
  %v240 = vpack.c.b16 %v229, %v228
  %v241 = vpack.c.b16 %v231, %v230
  %v242 = vpack.c.b16 %v233, %v232
  %v243 = vpack.c.b16 %v235, %v234
  %252 = vmatprep.subr.bf16.mxu0 0
  %253 = vmatpush1.bf16.msra.mxu0 %v236
  %254 = vmatprep.subr.bf16.mxu0 0
  %255 = vmatpush1.bf16.msra.mxu0 %v237
  %256 = vmatprep.subr.bf16.mxu0 0
  %257 = vmatpush1.bf16.msra.mxu0 %v238
  %258 = vmatprep.subr.bf16.mxu0 0
  %259 = vmatpush1.bf16.msra.mxu0 %v239
  %260 = vmatprep.subr.bf16.mxu0 0
  %261 = vmatpush1.bf16.msra.mxu0 %v240
  %262 = vmatprep.subr.bf16.mxu0 0
  %263 = vmatpush1.bf16.msra.mxu0 %v241
  %264 = vmatprep.subr.bf16.mxu0 0
  %265 = vmatpush1.bf16.msra.mxu0 %v242
  %266 = vmatprep.subr.bf16.mxu0 0
  %267 = vmatpush1.bf16.msra.mxu0 %v243
  %268 = vmatprep.subr.bf16.mxu0 0
  %269 = vmatpush1.bf16.msra.mxu0 0
  %270 = vmatprep.subr.bf16.mxu0 0
  %271 = vmatpush1.bf16.msra.mxu0 0
  %272 = vmatprep.subr.bf16.mxu0 0
  %273 = vmatpush1.bf16.msra.mxu0 0
  %274 = vmatprep.subr.bf16.mxu0 0
  %275 = vmatpush1.bf16.msra.mxu0 0
  %276 = vmatprep.subr.bf16.mxu0 0
  %277 = vmatpush1.bf16.msra.mxu0 0
  %278 = vmatprep.subr.bf16.mxu0 0
  %279 = vmatpush1.bf16.msra.mxu0 0
  %280 = vmatprep.subr.bf16.mxu0 0
  %281 = vmatpush1.bf16.msra.mxu0 0
  %282 = vmatprep.subr.bf16.mxu0 0
  %283 = vmatpush1.bf16.msra.mxu0 0
  %284 = vmatprep.mubr.bf16.mxu0 0
  %285 = vmatmul.mubr.bf16.gmra.mrb[0].mxu0 %v179
  %v286 = vpop.f32.mrb[0].mxu0
  %v287 = vadd.f32 0.0, %v286
  %v288 = vpop.f32.mrb[0].mxu0
  %v289 = vpop.f32.mrb[0].mxu0
  %v290 = vadd.f32 0.0, %v289
  %v291 = vpop.f32.mrb[0].mxu0
  %292 = vmatprep.mubr.bf16.mxu0 0
  %293 = vmatmul.mubr.bf16.gmra.mrb[0].mxu0 %v180
  %v294 = vpop.f32.mrb[0].mxu0
  %v295 = vadd.f32 0.0, %v294
  %v296 = vpop.f32.mrb[0].mxu0
  %v297 = vpop.f32.mrb[0].mxu0
  %v298 = vadd.f32 0.0, %v297
  %v299 = vpop.f32.mrb[0].mxu0
  %300 = vmatprep.mubr.bf16.mxu0 0
  %301 = vmatmul.mubr.bf16.gmra.mrb[0].mxu0 %v181
  %v302 = vpop.f32.mrb[0].mxu0
  %v303 = vadd.f32 0.0, %v302
  %v304 = vpop.f32.mrb[0].mxu0
  %v305 = vpop.f32.mrb[0].mxu0
  %v306 = vadd.f32 0.0, %v305
  %v307 = vpop.f32.mrb[0].mxu0
  %308 = vmatprep.mubr.bf16.mxu0 0
  %309 = vmatmul.mubr.bf16.gmra.mrb[0].mxu0 %v182
  %v310 = vpop.f32.mrb[0].mxu0
  %v311 = vadd.f32 0.0, %v310
  %v312 = vpop.f32.mrb[0].mxu0
  %v313 = vpop.f32.mrb[0].mxu0
  %v314 = vadd.f32 0.0, %v313
  %v315 = vpop.f32.mrb[0].mxu0
  %316 = vmatprep.mubr.bf16.mxu0 0
  %317 = vmatmul.mubr.bf16.gmra.mrb[0].mxu0 %v183
  %v318 = vpop.f32.mrb[0].mxu0
  %v319 = vadd.f32 0.0, %v318
  %v320 = vpop.f32.mrb[0].mxu0
  %v321 = vpop.f32.mrb[0].mxu0
  %v322 = vadd.f32 0.0, %v321
  %v323 = vpop.f32.mrb[0].mxu0
  %324 = vmatprep.mubr.bf16.mxu0 0
  %325 = vmatmul.mubr.bf16.gmra.mrb[0].mxu0 %v184
  %v326 = vpop.f32.mrb[0].mxu0
  %v327 = vadd.f32 0.0, %v326
  %v328 = vpop.f32.mrb[0].mxu0
  %v329 = vpop.f32.mrb[0].mxu0
  %v330 = vadd.f32 0.0, %v329
  %v331 = vpop.f32.mrb[0].mxu0
  %332 = vmatprep.mubr.bf16.mxu0 0
  %333 = vmatmul.mubr.bf16.gmra.mrb[0].mxu0 %v185
  %v334 = vpop.f32.mrb[0].mxu0
  %v335 = vadd.f32 0.0, %v334
  %v336 = vpop.f32.mrb[0].mxu0
  %v337 = vpop.f32.mrb[0].mxu0
  %v338 = vadd.f32 0.0, %v337
  %v339 = vpop.f32.mrb[0].mxu0
  %340 = vmatprep.mubr.bf16.mxu0 0
  %341 = vmatmul.mubr.bf16.gmra.mrb[0].mxu0 %v186
  %v342 = vpop.f32.mrb[0].mxu0
  %v343 = vadd.f32 0.0, %v342
  %v344 = vpop.f32.mrb[0].mxu0
  %v345 = vpop.f32.mrb[0].mxu0
  %v346 = vadd.f32 0.0, %v345
  %v347 = vpop.f32.mrb[0].mxu0
  %348 = vdwg.mxu0
  %v365 = vunpack.c.l.b16 %v147
  %v366 = vunpack.c.l.b16 %v148
  %v367 = vunpack.c.l.b16 %v149
  %v368 = vunpack.c.l.b16 %v150
  %v369 = vunpack.c.l.b16 %v151
  %v370 = vunpack.c.l.b16 %v152
  %v371 = vunpack.c.l.b16 %v153
  %v372 = vunpack.c.l.b16 %v154
  %v373 = vunpack.c.l.b16 %v155
  %v374 = vunpack.c.l.b16 %v156
  %v375 = vunpack.c.l.b16 %v157
  %v376 = vunpack.c.l.b16 %v158
  %v377 = vunpack.c.l.b16 %v159
  %v378 = vunpack.c.l.b16 %v160
  %v379 = vunpack.c.l.b16 %v161
  %v380 = vunpack.c.l.b16 %v162
  %v381 = vpack.c.b16 %v366, %v365
  %v382 = vpack.c.b16 %v368, %v367
  %v383 = vpack.c.b16 %v370, %v369
  %v384 = vpack.c.b16 %v372, %v371
  %v385 = vpack.c.b16 %v374, %v373
  %v386 = vpack.c.b16 %v376, %v375
  %v387 = vpack.c.b16 %v378, %v377
  %v388 = vpack.c.b16 %v380, %v379
  %397 = vmatprep.subr.bf16.mxu0 0
  %398 = vmatpush1.bf16.msra.mxu0 %v381
  %399 = vmatprep.subr.bf16.mxu0 0
  %400 = vmatpush1.bf16.msra.mxu0 %v382
  %401 = vmatprep.subr.bf16.mxu0 0
  %402 = vmatpush1.bf16.msra.mxu0 %v383
  %403 = vmatprep.subr.bf16.mxu0 0
  %404 = vmatpush1.bf16.msra.mxu0 %v384
  %405 = vmatprep.subr.bf16.mxu0 0
  %406 = vmatpush1.bf16.msra.mxu0 %v385
  %407 = vmatprep.subr.bf16.mxu0 0
  %408 = vmatpush1.bf16.msra.mxu0 %v386
  %409 = vmatprep.subr.bf16.mxu0 0
  %410 = vmatpush1.bf16.msra.mxu0 %v387
  %411 = vmatprep.subr.bf16.mxu0 0
  %412 = vmatpush1.bf16.msra.mxu0 %v388
  %413 = vmatprep.subr.bf16.mxu0 0
  %414 = vmatpush1.bf16.msra.mxu0 0
  %415 = vmatprep.subr.bf16.mxu0 0
  %416 = vmatpush1.bf16.msra.mxu0 0
  %417 = vmatprep.subr.bf16.mxu0 0
  %418 = vmatpush1.bf16.msra.mxu0 0
  %419 = vmatprep.subr.bf16.mxu0 0
  %420 = vmatpush1.bf16.msra.mxu0 0
  %421 = vmatprep.subr.bf16.mxu0 0
  %422 = vmatpush1.bf16.msra.mxu0 0
  %423 = vmatprep.subr.bf16.mxu0 0
  %424 = vmatpush1.bf16.msra.mxu0 0
  %425 = vmatprep.subr.bf16.mxu0 0
  %426 = vmatpush1.bf16.msra.mxu0 0
  %427 = vmatprep.subr.bf16.mxu0 0
  %428 = vmatpush1.bf16.msra.mxu0 0
  %429 = vmatprep.mubr.bf16.mxu0 0
  %430 = vmatmul.mubr.bf16.gmra.mrb[0].mxu0 %v139
  %v431 = vpop.f32.mrb[0].mxu0
  %v432 = vadd.f32 %v287, %v431
  %v433 = vpop.f32.mrb[0].mxu0
  %v434 = vpop.f32.mrb[0].mxu0
  %v435 = vadd.f32 %v290, %v434
  %v436 = vpop.f32.mrb[0].mxu0
  %437 = vmatprep.mubr.bf16.mxu0 0
  %438 = vmatmul.mubr.bf16.gmra.mrb[0].mxu0 %v140
  %v439 = vpop.f32.mrb[0].mxu0
  %v440 = vadd.f32 %v295, %v439
  %v441 = vpop.f32.mrb[0].mxu0
  %v442 = vpop.f32.mrb[0].mxu0
  %v443 = vadd.f32 %v298, %v442
  %v444 = vpop.f32.mrb[0].mxu0
  %445 = vmatprep.mubr.bf16.mxu0 0
  %446 = vmatmul.mubr.bf16.gmra.mrb[0].mxu0 %v141
  %v447 = vpop.f32.mrb[0].mxu0
  %v448 = vadd.f32 %v303, %v447
  %v449 = vpop.f32.mrb[0].mxu0
  %v450 = vpop.f32.mrb[0].mxu0
  %v451 = vadd.f32 %v306, %v450
  %v452 = vpop.f32.mrb[0].mxu0
  %453 = vmatprep.mubr.bf16.mxu0 0
  %454 = vmatmul.mubr.bf16.gmra.mrb[0].mxu0 %v142
  %v455 = vpop.f32.mrb[0].mxu0
  %v456 = vadd.f32 %v311, %v455
  %v457 = vpop.f32.mrb[0].mxu0
  %v458 = vpop.f32.mrb[0].mxu0
  %v459 = vadd.f32 %v314, %v458
  %v460 = vpop.f32.mrb[0].mxu0
  %461 = vmatprep.mubr.bf16.mxu0 0
  %462 = vmatmul.mubr.bf16.gmra.mrb[0].mxu0 %v143
  %v463 = vpop.f32.mrb[0].mxu0
  %v464 = vadd.f32 %v319, %v463
  %v465 = vpop.f32.mrb[0].mxu0
  %v466 = vpop.f32.mrb[0].mxu0
  %v467 = vadd.f32 %v322, %v466
  %v468 = vpop.f32.mrb[0].mxu0
  %469 = vmatprep.mubr.bf16.mxu0 0
  %470 = vmatmul.mubr.bf16.gmra.mrb[0].mxu0 %v144
  %v471 = vpop.f32.mrb[0].mxu0
  %v472 = vadd.f32 %v327, %v471
  %v473 = vpop.f32.mrb[0].mxu0
  %v474 = vpop.f32.mrb[0].mxu0
  %v475 = vadd.f32 %v330, %v474
  %v476 = vpop.f32.mrb[0].mxu0
  %477 = vmatprep.mubr.bf16.mxu0 0
  %478 = vmatmul.mubr.bf16.gmra.mrb[0].mxu0 %v145
  %v479 = vpop.f32.mrb[0].mxu0
  %v480 = vadd.f32 %v335, %v479
  %v481 = vpop.f32.mrb[0].mxu0
  %v482 = vpop.f32.mrb[0].mxu0
  %v483 = vadd.f32 %v338, %v482
  %v484 = vpop.f32.mrb[0].mxu0
  %485 = vmatprep.mubr.bf16.mxu0 0
  %486 = vmatmul.mubr.bf16.gmra.mrb[0].mxu0 %v146
  %v487 = vpop.f32.mrb[0].mxu0
  %v488 = vadd.f32 %v343, %v487
  %v489 = vpop.f32.mrb[0].mxu0
  %v490 = vpop.f32.mrb[0].mxu0
  %v491 = vadd.f32 %v346, %v490
  %v492 = vpop.f32.mrb[0].mxu0
  %493 = vdwg.mxu0
  %v494 = vld [vmem:[#allocation2 + $0x2] sm:$0xff]
  %v495 = vld [vmem:[#allocation2 + $0x12] sm:$0xff]
  %v496 = vld [vmem:[#allocation2 + $0x22] sm:$0xff]
  %v497 = vld [vmem:[#allocation2 + $0x32] sm:$0xff]
  %v498 = vld [vmem:[#allocation2 + $0x42] sm:$0xff]
  %v499 = vld [vmem:[#allocation2 + $0x52] sm:$0xff]
  %v500 = vld [vmem:[#allocation2 + $0x62] sm:$0xff]
  %v501 = vld [vmem:[#allocation2 + $0x72] sm:$0xff]
  %v502 = vld [vmem:[#allocation2 + $0xa2] sm:$0xff]
  %v503 = vld [vmem:[#allocation2 + $0xb2] sm:$0xff]
  %v504 = vld [vmem:[#allocation2 + $0xc2] sm:$0xff]
  %v505 = vld [vmem:[#allocation2 + $0xd2] sm:$0xff]
  %v506 = vld [vmem:[#allocation2 + $0xe2] sm:$0xff]
  %v507 = vld [vmem:[#allocation2 + $0xf2] sm:$0xff]
  %v508 = vld [vmem:[#allocation2 + $0x102] sm:$0xff]
  %v509 = vld [vmem:[#allocation2 + $0x112] sm:$0xff]
  %v510 = vpack.c.bf16 %v495, %v494
  %v511 = vpack.c.bf16 %v497, %v496
  %v512 = vpack.c.bf16 %v499, %v498
  %v513 = vpack.c.bf16 %v501, %v500
  %v514 = vpack.c.bf16 %v503, %v502
  %v515 = vpack.c.bf16 %v505, %v504
  %v516 = vpack.c.bf16 %v507, %v506
  %v517 = vpack.c.bf16 %v509, %v508
  %s518 = scalar_lea.vmem %s2, 128
  %v519 = vld [vmem:[%s518] sm:$0xf]
  %v520 = vld [vmem:[%s518 + $0x4] sm:$0xf]
  %v521 = vld [vmem:[%s518 + $0x8] sm:$0xf]
  %v522 = vld [vmem:[%s518 + $0xc] sm:$0xf]
  %v523 = vld [vmem:[%s518 + $0x10] sm:$0xf]
  %v524 = vld [vmem:[%s518 + $0x14] sm:$0xf]
  %v525 = vld [vmem:[%s518 + $0x18] sm:$0xf]
  %v526 = vld [vmem:[%s518 + $0x1c] sm:$0xf]
  %v527 = vld [vmem:[%s518 + $0x20] sm:$0xf]
  %v528 = vld [vmem:[%s518 + $0x24] sm:$0xf]
  %v529 = vld [vmem:[%s518 + $0x28] sm:$0xf]
  %v530 = vld [vmem:[%s518 + $0x2c] sm:$0xf]
  %v531 = vld [vmem:[%s518 + $0x30] sm:$0xf]
  %v532 = vld [vmem:[%s518 + $0x34] sm:$0xf]
  %v533 = vld [vmem:[%s518 + $0x38] sm:$0xf]
  %v534 = vld [vmem:[%s518 + $0x3c] sm:$0xf]
  %v551 = vunpack.c.l.b16 %v519
  %v552 = vunpack.c.l.b16 %v520
  %v553 = vunpack.c.l.b16 %v521
  %v554 = vunpack.c.l.b16 %v522
  %v555 = vunpack.c.l.b16 %v523
  %v556 = vunpack.c.l.b16 %v524
  %v557 = vunpack.c.l.b16 %v525
  %v558 = vunpack.c.l.b16 %v526
  %v559 = vunpack.c.l.b16 %v527
  %v560 = vunpack.c.l.b16 %v528
  %v561 = vunpack.c.l.b16 %v529
  %v562 = vunpack.c.l.b16 %v530
  %v563 = vunpack.c.l.b16 %v531
  %v564 = vunpack.c.l.b16 %v532
  %v565 = vunpack.c.l.b16 %v533
  %v566 = vunpack.c.l.b16 %v534
  %v567 = vpack.c.b16 %v552, %v551
  %v568 = vpack.c.b16 %v554, %v553
  %v569 = vpack.c.b16 %v556, %v555
  %v570 = vpack.c.b16 %v558, %v557
  %v571 = vpack.c.b16 %v560, %v559
  %v572 = vpack.c.b16 %v562, %v561
  %v573 = vpack.c.b16 %v564, %v563
  %v574 = vpack.c.b16 %v566, %v565
  %583 = vmatprep.subr.bf16.mxu0 0
  %584 = vmatpush1.bf16.msra.mxu0 %v567
  %585 = vmatprep.subr.bf16.mxu0 0
  %586 = vmatpush1.bf16.msra.mxu0 %v568
  %587 = vmatprep.subr.bf16.mxu0 0
  %588 = vmatpush1.bf16.msra.mxu0 %v569
  %589 = vmatprep.subr.bf16.mxu0 0
  %590 = vmatpush1.bf16.msra.mxu0 %v570
  %591 = vmatprep.subr.bf16.mxu0 0
  %592 = vmatpush1.bf16.msra.mxu0 %v571
  %593 = vmatprep.subr.bf16.mxu0 0
  %594 = vmatpush1.bf16.msra.mxu0 %v572
  %595 = vmatprep.subr.bf16.mxu0 0
  %596 = vmatpush1.bf16.msra.mxu0 %v573
  %597 = vmatprep.subr.bf16.mxu0 0
  %598 = vmatpush1.bf16.msra.mxu0 %v574
  %599 = vmatprep.subr.bf16.mxu0 0
  %600 = vmatpush1.bf16.msra.mxu0 0
  %601 = vmatprep.subr.bf16.mxu0 0
  %602 = vmatpush1.bf16.msra.mxu0 0
  %603 = vmatprep.subr.bf16.mxu0 0
  %604 = vmatpush1.bf16.msra.mxu0 0
  %605 = vmatprep.subr.bf16.mxu0 0
  %606 = vmatpush1.bf16.msra.mxu0 0
  %607 = vmatprep.subr.bf16.mxu0 0
  %608 = vmatpush1.bf16.msra.mxu0 0
  %609 = vmatprep.subr.bf16.mxu0 0
  %610 = vmatpush1.bf16.msra.mxu0 0
  %611 = vmatprep.subr.bf16.mxu0 0
  %612 = vmatpush1.bf16.msra.mxu0 0
  %613 = vmatprep.subr.bf16.mxu0 0
  %614 = vmatpush1.bf16.msra.mxu0 0
  %615 = vmatprep.mubr.bf16.mxu0 0
  %616 = vmatmul.mubr.bf16.gmra.mrb[0].mxu0 %v510
  %v617 = vpop.f32.mrb[0].mxu0
  %v618 = vadd.f32 0.0, %v617
  %v619 = vpop.f32.mrb[0].mxu0
  %v620 = vpop.f32.mrb[0].mxu0
  %v621 = vadd.f32 0.0, %v620
  %v622 = vpop.f32.mrb[0].mxu0
  %623 = vmatprep.mubr.bf16.mxu0 0
  %624 = vmatmul.mubr.bf16.gmra.mrb[0].mxu0 %v511
  %v625 = vpop.f32.mrb[0].mxu0
  %v626 = vadd.f32 0.0, %v625
  %v627 = vpop.f32.mrb[0].mxu0
  %v628 = vpop.f32.mrb[0].mxu0
  %v629 = vadd.f32 0.0, %v628
  %v630 = vpop.f32.mrb[0].mxu0
  %631 = vmatprep.mubr.bf16.mxu0 0
  %632 = vmatmul.mubr.bf16.gmra.mrb[0].mxu0 %v512
  %v633 = vpop.f32.mrb[0].mxu0
  %v634 = vadd.f32 0.0, %v633
  %v635 = vpop.f32.mrb[0].mxu0
  %v636 = vpop.f32.mrb[0].mxu0
  %v637 = vadd.f32 0.0, %v636
  %v638 = vpop.f32.mrb[0].mxu0
  %639 = vmatprep.mubr.bf16.mxu0 0
  %640 = vmatmul.mubr.bf16.gmra.mrb[0].mxu0 %v513
  %v641 = vpop.f32.mrb[0].mxu0
  %v642 = vadd.f32 0.0, %v641
  %v643 = vpop.f32.mrb[0].mxu0
  %v644 = vpop.f32.mrb[0].mxu0
  %v645 = vadd.f32 0.0, %v644
  %v646 = vpop.f32.mrb[0].mxu0
  %647 = vmatprep.mubr.bf16.mxu0 0
  %648 = vmatmul.mubr.bf16.gmra.mrb[0].mxu0 %v514
  %v649 = vpop.f32.mrb[0].mxu0
  %v650 = vadd.f32 0.0, %v649
  %v651 = vpop.f32.mrb[0].mxu0
  %v652 = vpop.f32.mrb[0].mxu0
  %v653 = vadd.f32 0.0, %v652
  %v654 = vpop.f32.mrb[0].mxu0
  %655 = vmatprep.mubr.bf16.mxu0 0
  %656 = vmatmul.mubr.bf16.gmra.mrb[0].mxu0 %v515
  %v657 = vpop.f32.mrb[0].mxu0
  %v658 = vadd.f32 0.0, %v657
  %v659 = vpop.f32.mrb[0].mxu0
  %v660 = vpop.f32.mrb[0].mxu0
  %v661 = vadd.f32 0.0, %v660
  %v662 = vpop.f32.mrb[0].mxu0
  %663 = vmatprep.mubr.bf16.mxu0 0
  %664 = vmatmul.mubr.bf16.gmra.mrb[0].mxu0 %v516
  %v665 = vpop.f32.mrb[0].mxu0
  %v666 = vadd.f32 0.0, %v665
  %v667 = vpop.f32.mrb[0].mxu0
  %v668 = vpop.f32.mrb[0].mxu0
  %v669 = vadd.f32 0.0, %v668
  %v670 = vpop.f32.mrb[0].mxu0
  %671 = vmatprep.mubr.bf16.mxu0 0
  %672 = vmatmul.mubr.bf16.gmra.mrb[0].mxu0 %v517
  %v673 = vpop.f32.mrb[0].mxu0
  %v674 = vadd.f32 0.0, %v673
  %v675 = vpop.f32.mrb[0].mxu0
  %v676 = vpop.f32.mrb[0].mxu0
  %v677 = vadd.f32 0.0, %v676
  %v678 = vpop.f32.mrb[0].mxu0
  %679 = vdwg.mxu0
  %v680 = vadd.f32 %v432, %v618
  %v681 = vadd.f32 %v435, %v621
  %v682 = vadd.f32 %v440, %v626
  %v683 = vadd.f32 %v443, %v629
  %v684 = vadd.f32 %v448, %v634
  %v685 = vadd.f32 %v451, %v637
  %v686 = vadd.f32 %v456, %v642
  %v687 = vadd.f32 %v459, %v645
  %v688 = vadd.f32 %v464, %v650
  %v689 = vadd.f32 %v467, %v653
  %v690 = vadd.f32 %v472, %v658
  %v691 = vadd.f32 %v475, %v661
  %v692 = vadd.f32 %v480, %v666
  %v693 = vadd.f32 %v483, %v669
  %v694 = vadd.f32 %v488, %v674
  %v695 = vadd.f32 %v491, %v677
  %v696 = vld [vmem:[%s106] sm:$0xff]
  %v697 = vld [vmem:[%s106 + $0x10] sm:$0xff]
  %v698 = vld [vmem:[%s106 + $0x20] sm:$0xff]
  %v699 = vld [vmem:[%s106 + $0x30] sm:$0xff]
  %v700 = vld [vmem:[%s106 + $0x40] sm:$0xff]
  %v701 = vld [vmem:[%s106 + $0x50] sm:$0xff]
  %v702 = vld [vmem:[%s106 + $0x60] sm:$0xff]
  %v703 = vld [vmem:[%s106 + $0x70] sm:$0xff]
  %v704 = vld [vmem:[%s106 + $0xa0] sm:$0xff]
  %v705 = vld [vmem:[%s106 + $0xb0] sm:$0xff]
  %v706 = vld [vmem:[%s106 + $0xc0] sm:$0xff]
  %v707 = vld [vmem:[%s106 + $0xd0] sm:$0xff]
  %v708 = vld [vmem:[%s106 + $0xe0] sm:$0xff]
  %v709 = vld [vmem:[%s106 + $0xf0] sm:$0xff]
  %v710 = vld [vmem:[%s106 + $0x100] sm:$0xff]
  %v711 = vld [vmem:[%s106 + $0x110] sm:$0xff]
  %v712 = vpack.c.bf16 %v697, %v696
  %v713 = vpack.c.bf16 %v699, %v698
  %v714 = vpack.c.bf16 %v701, %v700
  %v715 = vpack.c.bf16 %v703, %v702
  %v716 = vpack.c.bf16 %v705, %v704
  %v717 = vpack.c.bf16 %v707, %v706
  %v718 = vpack.c.bf16 %v709, %v708
  %v719 = vpack.c.bf16 %v711, %v710
  %s720 = scalar_lea.vmem %s2, 192
  %v721 = vld [vmem:[%s720] sm:$0xf]
  %v722 = vld [vmem:[%s720 + $0x4] sm:$0xf]
  %v723 = vld [vmem:[%s720 + $0x8] sm:$0xf]
  %v724 = vld [vmem:[%s720 + $0xc] sm:$0xf]
  %v725 = vld [vmem:[%s720 + $0x10] sm:$0xf]
  %v726 = vld [vmem:[%s720 + $0x14] sm:$0xf]
  %v727 = vld [vmem:[%s720 + $0x18] sm:$0xf]
  %v728 = vld [vmem:[%s720 + $0x1c] sm:$0xf]
  %v729 = vld [vmem:[%s720 + $0x20] sm:$0xf]
  %v730 = vld [vmem:[%s720 + $0x24] sm:$0xf]
  %v731 = vld [vmem:[%s720 + $0x28] sm:$0xf]
  %v732 = vld [vmem:[%s720 + $0x2c] sm:$0xf]
  %v733 = vld [vmem:[%s720 + $0x30] sm:$0xf]
  %v734 = vld [vmem:[%s720 + $0x34] sm:$0xf]
  %v735 = vld [vmem:[%s720 + $0x38] sm:$0xf]
  %v736 = vld [vmem:[%s720 + $0x3c] sm:$0xf]
  %v753 = vunpack.c.l.b16 %v721
  %v754 = vunpack.c.l.b16 %v722
  %v755 = vunpack.c.l.b16 %v723
  %v756 = vunpack.c.l.b16 %v724
  %v757 = vunpack.c.l.b16 %v725
  %v758 = vunpack.c.l.b16 %v726
  %v759 = vunpack.c.l.b16 %v727
  %v760 = vunpack.c.l.b16 %v728
  %v761 = vunpack.c.l.b16 %v729
  %v762 = vunpack.c.l.b16 %v730
  %v763 = vunpack.c.l.b16 %v731
  %v764 = vunpack.c.l.b16 %v732
  %v765 = vunpack.c.l.b16 %v733
  %v766 = vunpack.c.l.b16 %v734
  %v767 = vunpack.c.l.b16 %v735
  %v768 = vunpack.c.l.b16 %v736
  %v769 = vpack.c.b16 %v754, %v753
  %v770 = vpack.c.b16 %v756, %v755
  %v771 = vpack.c.b16 %v758, %v757
  %v772 = vpack.c.b16 %v760, %v759
  %v773 = vpack.c.b16 %v762, %v761
  %v774 = vpack.c.b16 %v764, %v763
  %v775 = vpack.c.b16 %v766, %v765
  %v776 = vpack.c.b16 %v768, %v767
  %785 = vmatprep.subr.bf16.mxu0 0
  %786 = vmatpush1.bf16.msra.mxu0 %v769
  %787 = vmatprep.subr.bf16.mxu0 0
  %788 = vmatpush1.bf16.msra.mxu0 %v770
  %789 = vmatprep.subr.bf16.mxu0 0
  %790 = vmatpush1.bf16.msra.mxu0 %v771
  %791 = vmatprep.subr.bf16.mxu0 0
  %792 = vmatpush1.bf16.msra.mxu0 %v772
  %793 = vmatprep.subr.bf16.mxu0 0
  %794 = vmatpush1.bf16.msra.mxu0 %v773
  %795 = vmatprep.subr.bf16.mxu0 0
  %796 = vmatpush1.bf16.msra.mxu0 %v774
  %797 = vmatprep.subr.bf16.mxu0 0
  %798 = vmatpush1.bf16.msra.mxu0 %v775
  %799 = vmatprep.subr.bf16.mxu0 0
  %800 = vmatpush1.bf16.msra.mxu0 %v776
  %801 = vmatprep.subr.bf16.mxu0 0
  %802 = vmatpush1.bf16.msra.mxu0 0
  %803 = vmatprep.subr.bf16.mxu0 0
  %804 = vmatpush1.bf16.msra.mxu0 0
  %805 = vmatprep.subr.bf16.mxu0 0
  %806 = vmatpush1.bf16.msra.mxu0 0
  %807 = vmatprep.subr.bf16.mxu0 0
  %808 = vmatpush1.bf16.msra.mxu0 0
  %809 = vmatprep.subr.bf16.mxu0 0
  %810 = vmatpush1.bf16.msra.mxu0 0
  %811 = vmatprep.subr.bf16.mxu0 0
  %812 = vmatpush1.bf16.msra.mxu0 0
  %813 = vmatprep.subr.bf16.mxu0 0
  %814 = vmatpush1.bf16.msra.mxu0 0
  %815 = vmatprep.subr.bf16.mxu0 0
  %816 = vmatpush1.bf16.msra.mxu0 0
  %817 = vmatprep.mubr.bf16.mxu0 0
  %818 = vmatmul.mubr.bf16.gmra.mrb[0].mxu0 %v712
  %v819 = vpop.f32.mrb[0].mxu0
  %v820 = vadd.f32 0.0, %v819
  %v821 = vpop.f32.mrb[0].mxu0
  %v822 = vpop.f32.mrb[0].mxu0
  %v823 = vadd.f32 0.0, %v822
  %v824 = vpop.f32.mrb[0].mxu0
  %825 = vmatprep.mubr.bf16.mxu0 0
  %826 = vmatmul.mubr.bf16.gmra.mrb[0].mxu0 %v713
  %v827 = vpop.f32.mrb[0].mxu0
  %v828 = vadd.f32 0.0, %v827
  %v829 = vpop.f32.mrb[0].mxu0
  %v830 = vpop.f32.mrb[0].mxu0
  %v831 = vadd.f32 0.0, %v830
  %v832 = vpop.f32.mrb[0].mxu0
  %833 = vmatprep.mubr.bf16.mxu0 0
  %834 = vmatmul.mubr.bf16.gmra.mrb[0].mxu0 %v714
  %v835 = vpop.f32.mrb[0].mxu0
  %v836 = vadd.f32 0.0, %v835
  %v837 = vpop.f32.mrb[0].mxu0
  %v838 = vpop.f32.mrb[0].mxu0
  %v839 = vadd.f32 0.0, %v838
  %v840 = vpop.f32.mrb[0].mxu0
  %841 = vmatprep.mubr.bf16.mxu0 0
  %842 = vmatmul.mubr.bf16.gmra.mrb[0].mxu0 %v715
  %v843 = vpop.f32.mrb[0].mxu0
  %v844 = vadd.f32 0.0, %v843
  %v845 = vpop.f32.mrb[0].mxu0
  %v846 = vpop.f32.mrb[0].mxu0
  %v847 = vadd.f32 0.0, %v846
  %v848 = vpop.f32.mrb[0].mxu0
  %849 = vmatprep.mubr.bf16.mxu0 0
  %850 = vmatmul.mubr.bf16.gmra.mrb[0].mxu0 %v716
  %v851 = vpop.f32.mrb[0].mxu0
  %v852 = vadd.f32 0.0, %v851
  %v853 = vpop.f32.mrb[0].mxu0
  %v854 = vpop.f32.mrb[0].mxu0
  %v855 = vadd.f32 0.0, %v854
  %v856 = vpop.f32.mrb[0].mxu0
  %857 = vmatprep.mubr.bf16.mxu0 0
  %858 = vmatmul.mubr.bf16.gmra.mrb[0].mxu0 %v717
  %v859 = vpop.f32.mrb[0].mxu0
  %v860 = vadd.f32 0.0, %v859
  %v861 = vpop.f32.mrb[0].mxu0
  %v862 = vpop.f32.mrb[0].mxu0
  %v863 = vadd.f32 0.0, %v862
  %v864 = vpop.f32.mrb[0].mxu0
  %865 = vmatprep.mubr.bf16.mxu0 0
  %866 = vmatmul.mubr.bf16.gmra.mrb[0].mxu0 %v718
  %v867 = vpop.f32.mrb[0].mxu0
  %v868 = vadd.f32 0.0, %v867
  %v869 = vpop.f32.mrb[0].mxu0
  %v870 = vpop.f32.mrb[0].mxu0
  %v871 = vadd.f32 0.0, %v870
  %v872 = vpop.f32.mrb[0].mxu0
  %873 = vmatprep.mubr.bf16.mxu0 0
  %874 = vmatmul.mubr.bf16.gmra.mrb[0].mxu0 %v719
  %v875 = vpop.f32.mrb[0].mxu0
  %v876 = vadd.f32 0.0, %v875
  %v877 = vpop.f32.mrb[0].mxu0
  %v878 = vpop.f32.mrb[0].mxu0
  %v879 = vadd.f32 0.0, %v878
  %v880 = vpop.f32.mrb[0].mxu0
  %881 = vdwg.mxu0
  %v882 = vadd.f32 %v680, %v820
  %v883 = vadd.f32 %v681, %v823
  %v884 = vadd.f32 %v682, %v828
  %v885 = vadd.f32 %v683, %v831
  %v886 = vadd.f32 %v684, %v836
  %v887 = vadd.f32 %v685, %v839
  %v888 = vadd.f32 %v686, %v844
  %v889 = vadd.f32 %v687, %v847
  %v890 = vadd.f32 %v688, %v852
  %v891 = vadd.f32 %v689, %v855
  %v892 = vadd.f32 %v690, %v860
  %v893 = vadd.f32 %v691, %v863
  %v894 = vadd.f32 %v692, %v868
  %v895 = vadd.f32 %v693, %v871
  %v896 = vadd.f32 %v694, %v876
  %v897 = vadd.f32 %v695, %v879
  %v898 = vld [vmem:[%s106 + $0x1] sm:$0xff]
  %v899 = vld [vmem:[%s106 + $0x11] sm:$0xff]
  %v900 = vld [vmem:[%s106 + $0x21] sm:$0xff]
  %v901 = vld [vmem:[%s106 + $0x31] sm:$0xff]
  %v902 = vld [vmem:[%s106 + $0x41] sm:$0xff]
  %v903 = vld [vmem:[%s106 + $0x51] sm:$0xff]
  %v904 = vld [vmem:[%s106 + $0x61] sm:$0xff]
  %v905 = vld [vmem:[%s106 + $0x71] sm:$0xff]
  %v906 = vld [vmem:[%s106 + $0xa1] sm:$0xff]
  %v907 = vld [vmem:[%s106 + $0xb1] sm:$0xff]
  %v908 = vld [vmem:[%s106 + $0xc1] sm:$0xff]
  %v909 = vld [vmem:[%s106 + $0xd1] sm:$0xff]
  %v910 = vld [vmem:[%s106 + $0xe1] sm:$0xff]
  %v911 = vld [vmem:[%s106 + $0xf1] sm:$0xff]
  %v912 = vld [vmem:[%s106 + $0x101] sm:$0xff]
  %v913 = vld [vmem:[%s106 + $0x111] sm:$0xff]
  %v914 = vpack.c.bf16 %v899, %v898
  %v915 = vpack.c.bf16 %v901, %v900
  %v916 = vpack.c.bf16 %v903, %v902
  %v917 = vpack.c.bf16 %v905, %v904
  %v918 = vpack.c.bf16 %v907, %v906
  %v919 = vpack.c.bf16 %v909, %v908
  %v920 = vpack.c.bf16 %v911, %v910
  %v921 = vpack.c.bf16 %v913, %v912
  %s922 = scalar_lea.vmem %s2, 256
  %v923 = vld [vmem:[%s922] sm:$0xf]
  %v924 = vld [vmem:[%s922 + $0x4] sm:$0xf]
  %v925 = vld [vmem:[%s922 + $0x8] sm:$0xf]
  %v926 = vld [vmem:[%s922 + $0xc] sm:$0xf]
  %v927 = vld [vmem:[%s922 + $0x10] sm:$0xf]
  %v928 = vld [vmem:[%s922 + $0x14] sm:$0xf]
  %v929 = vld [vmem:[%s922 + $0x18] sm:$0xf]
  %v930 = vld [vmem:[%s922 + $0x1c] sm:$0xf]
  %v931 = vld [vmem:[%s922 + $0x20] sm:$0xf]
  %v932 = vld [vmem:[%s922 + $0x24] sm:$0xf]
  %v933 = vld [vmem:[%s922 + $0x28] sm:$0xf]
  %v934 = vld [vmem:[%s922 + $0x2c] sm:$0xf]
  %v935 = vld [vmem:[%s922 + $0x30] sm:$0xf]
  %v936 = vld [vmem:[%s922 + $0x34] sm:$0xf]
  %v937 = vld [vmem:[%s922 + $0x38] sm:$0xf]
  %v938 = vld [vmem:[%s922 + $0x3c] sm:$0xf]
  %v955 = vunpack.c.l.b16 %v923
  %v956 = vunpack.c.l.b16 %v924
  %v957 = vunpack.c.l.b16 %v925
  %v958 = vunpack.c.l.b16 %v926
  %v959 = vunpack.c.l.b16 %v927
  %v960 = vunpack.c.l.b16 %v928
  %v961 = vunpack.c.l.b16 %v929
  %v962 = vunpack.c.l.b16 %v930
  %v963 = vunpack.c.l.b16 %v931
  %v964 = vunpack.c.l.b16 %v932
  %v965 = vunpack.c.l.b16 %v933
  %v966 = vunpack.c.l.b16 %v934
  %v967 = vunpack.c.l.b16 %v935
  %v968 = vunpack.c.l.b16 %v936
  %v969 = vunpack.c.l.b16 %v937
  %v970 = vunpack.c.l.b16 %v938
  %v971 = vpack.c.b16 %v956, %v955
  %v972 = vpack.c.b16 %v958, %v957
  %v973 = vpack.c.b16 %v960, %v959
  %v974 = vpack.c.b16 %v962, %v961
  %v975 = vpack.c.b16 %v964, %v963
  %v976 = vpack.c.b16 %v966, %v965
  %v977 = vpack.c.b16 %v968, %v967
  %v978 = vpack.c.b16 %v970, %v969
  %987 = vmatprep.subr.bf16.mxu0 0
  %988 = vmatpush1.bf16.msra.mxu0 %v971
  %989 = vmatprep.subr.bf16.mxu0 0
  %990 = vmatpush1.bf16.msra.mxu0 %v972
  %991 = vmatprep.subr.bf16.mxu0 0
  %992 = vmatpush1.bf16.msra.mxu0 %v973
  %993 = vmatprep.subr.bf16.mxu0 0
  %994 = vmatpush1.bf16.msra.mxu0 %v974
  %995 = vmatprep.subr.bf16.mxu0 0
  %996 = vmatpush1.bf16.msra.mxu0 %v975
  %997 = vmatprep.subr.bf16.mxu0 0
  %998 = vmatpush1.bf16.msra.mxu0 %v976
  %999 = vmatprep.subr.bf16.mxu0 0
  %1000 = vmatpush1.bf16.msra.mxu0 %v977
  %1001 = vmatprep.subr.bf16.mxu0 0
  %1002 = vmatpush1.bf16.msra.mxu0 %v978
  %1003 = vmatprep.subr.bf16.mxu0 0
  %1004 = vmatpush1.bf16.msra.mxu0 0
  %1005 = vmatprep.subr.bf16.mxu0 0
  %1006 = vmatpush1.bf16.msra.mxu0 0
  %1007 = vmatprep.subr.bf16.mxu0 0
  %1008 = vmatpush1.bf16.msra.mxu0 0
  %1009 = vmatprep.subr.bf16.mxu0 0
  %1010 = vmatpush1.bf16.msra.mxu0 0
  %1011 = vmatprep.subr.bf16.mxu0 0
  %1012 = vmatpush1.bf16.msra.mxu0 0
  %1013 = vmatprep.subr.bf16.mxu0 0
  %1014 = vmatpush1.bf16.msra.mxu0 0
  %1015 = vmatprep.subr.bf16.mxu0 0
  %1016 = vmatpush1.bf16.msra.mxu0 0
  %1017 = vmatprep.subr.bf16.mxu0 0
  %1018 = vmatpush1.bf16.msra.mxu0 0
  %1019 = vmatprep.mubr.bf16.mxu0 0
  %1020 = vmatmul.mubr.bf16.gmra.mrb[0].mxu0 %v914
  %v1021 = vpop.f32.mrb[0].mxu0
  %v1022 = vadd.f32 0.0, %v1021
  %v1023 = vpop.f32.mrb[0].mxu0
  %v1024 = vpop.f32.mrb[0].mxu0
  %v1025 = vadd.f32 0.0, %v1024
  %v1026 = vpop.f32.mrb[0].mxu0
  %1027 = vmatprep.mubr.bf16.mxu0 0
  %1028 = vmatmul.mubr.bf16.gmra.mrb[0].mxu0 %v915
  %v1029 = vpop.f32.mrb[0].mxu0
  %v1030 = vadd.f32 0.0, %v1029
  %v1031 = vpop.f32.mrb[0].mxu0
  %v1032 = vpop.f32.mrb[0].mxu0
  %v1033 = vadd.f32 0.0, %v1032
  %v1034 = vpop.f32.mrb[0].mxu0
  %1035 = vmatprep.mubr.bf16.mxu0 0
  %1036 = vmatmul.mubr.bf16.gmra.mrb[0].mxu0 %v916
  %v1037 = vpop.f32.mrb[0].mxu0
  %v1038 = vadd.f32 0.0, %v1037
  %v1039 = vpop.f32.mrb[0].mxu0
  %v1040 = vpop.f32.mrb[0].mxu0
  %v1041 = vadd.f32 0.0, %v1040
  %v1042 = vpop.f32.mrb[0].mxu0
  %1043 = vmatprep.mubr.bf16.mxu0 0
  %1044 = vmatmul.mubr.bf16.gmra.mrb[0].mxu0 %v917
  %v1045 = vpop.f32.mrb[0].mxu0
  %v1046 = vadd.f32 0.0, %v1045
  %v1047 = vpop.f32.mrb[0].mxu0
  %v1048 = vpop.f32.mrb[0].mxu0
  %v1049 = vadd.f32 0.0, %v1048
  %v1050 = vpop.f32.mrb[0].mxu0
  %1051 = vmatprep.mubr.bf16.mxu0 0
  %1052 = vmatmul.mubr.bf16.gmra.mrb[0].mxu0 %v918
  %v1053 = vpop.f32.mrb[0].mxu0
  %v1054 = vadd.f32 0.0, %v1053
  %v1055 = vpop.f32.mrb[0].mxu0
  %v1056 = vpop.f32.mrb[0].mxu0
  %v1057 = vadd.f32 0.0, %v1056
  %v1058 = vpop.f32.mrb[0].mxu0
  %1059 = vmatprep.mubr.bf16.mxu0 0
  %1060 = vmatmul.mubr.bf16.gmra.mrb[0].mxu0 %v919
  %v1061 = vpop.f32.mrb[0].mxu0
  %v1062 = vadd.f32 0.0, %v1061
  %v1063 = vpop.f32.mrb[0].mxu0
  %v1064 = vpop.f32.mrb[0].mxu0
  %v1065 = vadd.f32 0.0, %v1064
  %v1066 = vpop.f32.mrb[0].mxu0
  %1067 = vmatprep.mubr.bf16.mxu0 0
  %1068 = vmatmul.mubr.bf16.gmra.mrb[0].mxu0 %v920
  %v1069 = vpop.f32.mrb[0].mxu0
  %v1070 = vadd.f32 0.0, %v1069
  %v1071 = vpop.f32.mrb[0].mxu0
  %v1072 = vpop.f32.mrb[0].mxu0
  %v1073 = vadd.f32 0.0, %v1072
  %v1074 = vpop.f32.mrb[0].mxu0
  %1075 = vmatprep.mubr.bf16.mxu0 0
  %1076 = vmatmul.mubr.bf16.gmra.mrb[0].mxu0 %v921
  %v1077 = vpop.f32.mrb[0].mxu0
  %v1078 = vadd.f32 0.0, %v1077
  %v1079 = vpop.f32.mrb[0].mxu0
  %v1080 = vpop.f32.mrb[0].mxu0
  %v1081 = vadd.f32 0.0, %v1080
  %v1082 = vpop.f32.mrb[0].mxu0
  %1083 = vdwg.mxu0
  %v1084 = vadd.f32 %v882, %v1022
  %v1085 = vadd.f32 %v883, %v1025
  %v1086 = vadd.f32 %v884, %v1030
  %v1087 = vadd.f32 %v885, %v1033
  %v1088 = vadd.f32 %v886, %v1038
  %v1089 = vadd.f32 %v887, %v1041
  %v1090 = vadd.f32 %v888, %v1046
  %v1091 = vadd.f32 %v889, %v1049
  %v1092 = vadd.f32 %v890, %v1054
  %v1093 = vadd.f32 %v891, %v1057
  %v1094 = vadd.f32 %v892, %v1062
  %v1095 = vadd.f32 %v893, %v1065
  %v1096 = vadd.f32 %v894, %v1070
  %v1097 = vadd.f32 %v895, %v1073
  %v1098 = vadd.f32 %v896, %v1078
  %v1099 = vadd.f32 %v897, %v1081
  %v1100 = vld [vmem:[%s106 + $0x2] sm:$0xff]
  %v1101 = vld [vmem:[%s106 + $0x12] sm:$0xff]
  %v1102 = vld [vmem:[%s106 + $0x22] sm:$0xff]
  %v1103 = vld [vmem:[%s106 + $0x32] sm:$0xff]
  %v1104 = vld [vmem:[%s106 + $0x42] sm:$0xff]
  %v1105 = vld [vmem:[%s106 + $0x52] sm:$0xff]
  %v1106 = vld [vmem:[%s106 + $0x62] sm:$0xff]
  %v1107 = vld [vmem:[%s106 + $0x72] sm:$0xff]
  %v1108 = vld [vmem:[%s106 + $0xa2] sm:$0xff]
  %v1109 = vld [vmem:[%s106 + $0xb2] sm:$0xff]
  %v1110 = vld [vmem:[%s106 + $0xc2] sm:$0xff]
  %v1111 = vld [vmem:[%s106 + $0xd2] sm:$0xff]
  %v1112 = vld [vmem:[%s106 + $0xe2] sm:$0xff]
  %v1113 = vld [vmem:[%s106 + $0xf2] sm:$0xff]
  %v1114 = vld [vmem:[%s106 + $0x102] sm:$0xff]
  %v1115 = vld [vmem:[%s106 + $0x112] sm:$0xff]
  %v1116 = vpack.c.bf16 %v1101, %v1100
  %v1117 = vpack.c.bf16 %v1103, %v1102
  %v1118 = vpack.c.bf16 %v1105, %v1104
  %v1119 = vpack.c.bf16 %v1107, %v1106
  %v1120 = vpack.c.bf16 %v1109, %v1108
  %v1121 = vpack.c.bf16 %v1111, %v1110
  %v1122 = vpack.c.bf16 %v1113, %v1112
  %v1123 = vpack.c.bf16 %v1115, %v1114
  %s1124 = scalar_lea.vmem %s2, 320
  %v1125 = vld [vmem:[%s1124] sm:$0xf]
  %v1126 = vld [vmem:[%s1124 + $0x4] sm:$0xf]
  %v1127 = vld [vmem:[%s1124 + $0x8] sm:$0xf]
  %v1128 = vld [vmem:[%s1124 + $0xc] sm:$0xf]
  %v1129 = vld [vmem:[%s1124 + $0x10] sm:$0xf]
  %v1130 = vld [vmem:[%s1124 + $0x14] sm:$0xf]
  %v1131 = vld [vmem:[%s1124 + $0x18] sm:$0xf]
  %v1132 = vld [vmem:[%s1124 + $0x1c] sm:$0xf]
  %v1133 = vld [vmem:[%s1124 + $0x20] sm:$0xf]
  %v1134 = vld [vmem:[%s1124 + $0x24] sm:$0xf]
  %v1135 = vld [vmem:[%s1124 + $0x28] sm:$0xf]
  %v1136 = vld [vmem:[%s1124 + $0x2c] sm:$0xf]
  %v1137 = vld [vmem:[%s1124 + $0x30] sm:$0xf]
  %v1138 = vld [vmem:[%s1124 + $0x34] sm:$0xf]
  %v1139 = vld [vmem:[%s1124 + $0x38] sm:$0xf]
  %v1140 = vld [vmem:[%s1124 + $0x3c] sm:$0xf]
  %v1157 = vunpack.c.l.b16 %v1125
  %v1158 = vunpack.c.l.b16 %v1126
  %v1159 = vunpack.c.l.b16 %v1127
  %v1160 = vunpack.c.l.b16 %v1128
  %v1161 = vunpack.c.l.b16 %v1129
  %v1162 = vunpack.c.l.b16 %v1130
  %v1163 = vunpack.c.l.b16 %v1131
  %v1164 = vunpack.c.l.b16 %v1132
  %v1165 = vunpack.c.l.b16 %v1133
  %v1166 = vunpack.c.l.b16 %v1134
  %v1167 = vunpack.c.l.b16 %v1135
  %v1168 = vunpack.c.l.b16 %v1136
  %v1169 = vunpack.c.l.b16 %v1137
  %v1170 = vunpack.c.l.b16 %v1138
  %v1171 = vunpack.c.l.b16 %v1139
  %v1172 = vunpack.c.l.b16 %v1140
  %v1173 = vpack.c.b16 %v1158, %v1157
  %v1174 = vpack.c.b16 %v1160, %v1159
  %v1175 = vpack.c.b16 %v1162, %v1161
  %v1176 = vpack.c.b16 %v1164, %v1163
  %v1177 = vpack.c.b16 %v1166, %v1165
  %v1178 = vpack.c.b16 %v1168, %v1167
  %v1179 = vpack.c.b16 %v1170, %v1169
  %v1180 = vpack.c.b16 %v1172, %v1171
  %1189 = vmatprep.subr.bf16.mxu0 0
  %1190 = vmatpush1.bf16.msra.mxu0 %v1173
  %1191 = vmatprep.subr.bf16.mxu0 0
  %1192 = vmatpush1.bf16.msra.mxu0 %v1174
  %1193 = vmatprep.subr.bf16.mxu0 0
  %1194 = vmatpush1.bf16.msra.mxu0 %v1175
  %1195 = vmatprep.subr.bf16.mxu0 0
  %1196 = vmatpush1.bf16.msra.mxu0 %v1176
  %1197 = vmatprep.subr.bf16.mxu0 0
  %1198 = vmatpush1.bf16.msra.mxu0 %v1177
  %1199 = vmatprep.subr.bf16.mxu0 0
  %1200 = vmatpush1.bf16.msra.mxu0 %v1178
  %1201 = vmatprep.subr.bf16.mxu0 0
  %1202 = vmatpush1.bf16.msra.mxu0 %v1179
  %1203 = vmatprep.subr.bf16.mxu0 0
  %1204 = vmatpush1.bf16.msra.mxu0 %v1180
  %1205 = vmatprep.subr.bf16.mxu0 0
  %1206 = vmatpush1.bf16.msra.mxu0 0
  %1207 = vmatprep.subr.bf16.mxu0 0
  %1208 = vmatpush1.bf16.msra.mxu0 0
  %1209 = vmatprep.subr.bf16.mxu0 0
  %1210 = vmatpush1.bf16.msra.mxu0 0
  %1211 = vmatprep.subr.bf16.mxu0 0
  %1212 = vmatpush1.bf16.msra.mxu0 0
  %1213 = vmatprep.subr.bf16.mxu0 0
  %1214 = vmatpush1.bf16.msra.mxu0 0
  %1215 = vmatprep.subr.bf16.mxu0 0
  %1216 = vmatpush1.bf16.msra.mxu0 0
  %1217 = vmatprep.subr.bf16.mxu0 0
  %1218 = vmatpush1.bf16.msra.mxu0 0
  %1219 = vmatprep.subr.bf16.mxu0 0
  %1220 = vmatpush1.bf16.msra.mxu0 0
  %1221 = vmatprep.mubr.bf16.mxu0 0
  %1222 = vmatmul.mubr.bf16.gmra.mrb[0].mxu0 %v1116
  %v1223 = vpop.f32.mrb[0].mxu0
  %v1224 = vadd.f32 0.0, %v1223
  %v1225 = vpop.f32.mrb[0].mxu0
  %v1226 = vpop.f32.mrb[0].mxu0
  %v1227 = vadd.f32 0.0, %v1226
  %v1228 = vpop.f32.mrb[0].mxu0
  %1229 = vmatprep.mubr.bf16.mxu0 0
  %1230 = vmatmul.mubr.bf16.gmra.mrb[0].mxu0 %v1117
  %v1231 = vpop.f32.mrb[0].mxu0
  %v1232 = vadd.f32 0.0, %v1231
  %v1233 = vpop.f32.mrb[0].mxu0
  %v1234 = vpop.f32.mrb[0].mxu0
  %v1235 = vadd.f32 0.0, %v1234
  %v1236 = vpop.f32.mrb[0].mxu0
  %1237 = vmatprep.mubr.bf16.mxu0 0
  %1238 = vmatmul.mubr.bf16.gmra.mrb[0].mxu0 %v1118
  %v1239 = vpop.f32.mrb[0].mxu0
  %v1240 = vadd.f32 0.0, %v1239
  %v1241 = vpop.f32.mrb[0].mxu0
  %v1242 = vpop.f32.mrb[0].mxu0
  %v1243 = vadd.f32 0.0, %v1242
  %v1244 = vpop.f32.mrb[0].mxu0
  %1245 = vmatprep.mubr.bf16.mxu0 0
  %1246 = vmatmul.mubr.bf16.gmra.mrb[0].mxu0 %v1119
  %v1247 = vpop.f32.mrb[0].mxu0
  %v1248 = vadd.f32 0.0, %v1247
  %v1249 = vpop.f32.mrb[0].mxu0
  %v1250 = vpop.f32.mrb[0].mxu0
  %v1251 = vadd.f32 0.0, %v1250
  %v1252 = vpop.f32.mrb[0].mxu0
  %1253 = vmatprep.mubr.bf16.mxu0 0
  %1254 = vmatmul.mubr.bf16.gmra.mrb[0].mxu0 %v1120
  %v1255 = vpop.f32.mrb[0].mxu0
  %v1256 = vadd.f32 0.0, %v1255
  %v1257 = vpop.f32.mrb[0].mxu0
  %v1258 = vpop.f32.mrb[0].mxu0
  %v1259 = vadd.f32 0.0, %v1258
  %v1260 = vpop.f32.mrb[0].mxu0
  %1261 = vmatprep.mubr.bf16.mxu0 0
  %1262 = vmatmul.mubr.bf16.gmra.mrb[0].mxu0 %v1121
  %v1263 = vpop.f32.mrb[0].mxu0
  %v1264 = vadd.f32 0.0, %v1263
  %v1265 = vpop.f32.mrb[0].mxu0
  %v1266 = vpop.f32.mrb[0].mxu0
  %v1267 = vadd.f32 0.0, %v1266
  %v1268 = vpop.f32.mrb[0].mxu0
  %1269 = vmatprep.mubr.bf16.mxu0 0
  %1270 = vmatmul.mubr.bf16.gmra.mrb[0].mxu0 %v1122
  %v1271 = vpop.f32.mrb[0].mxu0
  %v1272 = vadd.f32 0.0, %v1271
  %v1273 = vpop.f32.mrb[0].mxu0
  %v1274 = vpop.f32.mrb[0].mxu0
  %v1275 = vadd.f32 0.0, %v1274
  %v1276 = vpop.f32.mrb[0].mxu0
  %1277 = vmatprep.mubr.bf16.mxu0 0
  %1278 = vmatmul.mubr.bf16.gmra.mrb[0].mxu0 %v1123
  %v1279 = vpop.f32.mrb[0].mxu0
  %v1280 = vadd.f32 0.0, %v1279
  %v1281 = vpop.f32.mrb[0].mxu0
  %v1282 = vpop.f32.mrb[0].mxu0
  %v1283 = vadd.f32 0.0, %v1282
  %v1284 = vpop.f32.mrb[0].mxu0
  %1285 = vdwg.mxu0
  %v1286 = vadd.f32 %v1084, %v1224
  %v1287 = vadd.f32 %v1085, %v1227
  %v1288 = vadd.f32 %v1086, %v1232
  %v1289 = vadd.f32 %v1087, %v1235
  %v1290 = vadd.f32 %v1088, %v1240
  %v1291 = vadd.f32 %v1089, %v1243
  %v1292 = vadd.f32 %v1090, %v1248
  %v1293 = vadd.f32 %v1091, %v1251
  %v1294 = vadd.f32 %v1092, %v1256
  %v1295 = vadd.f32 %v1093, %v1259
  %v1296 = vadd.f32 %v1094, %v1264
  %v1297 = vadd.f32 %v1095, %v1267
  %v1298 = vadd.f32 %v1096, %v1272
  %v1299 = vadd.f32 %v1097, %v1275
  %v1300 = vadd.f32 %v1098, %v1280
  %v1301 = vadd.f32 %v1099, %v1283
  %s1302 = scalar_lea.vmem [#allocation2], 32
  %v1303 = vld [vmem:[%s1302] sm:$0xff]
  %v1304 = vld [vmem:[%s1302 + $0x10] sm:$0xff]
  %v1305 = vld [vmem:[%s1302 + $0x20] sm:$0xff]
  %v1306 = vld [vmem:[%s1302 + $0x30] sm:$0xff]
  %v1307 = vld [vmem:[%s1302 + $0x40] sm:$0xff]
  %v1308 = vld [vmem:[%s1302 + $0x50] sm:$0xff]
  %v1309 = vld [vmem:[%s1302 + $0x60] sm:$0xff]
  %v1310 = vld [vmem:[%s1302 + $0x70] sm:$0xff]
  %v1311 = vld [vmem:[%s1302 + $0xa0] sm:$0xff]
  %v1312 = vld [vmem:[%s1302 + $0xb0] sm:$0xff]
  %v1313 = vld [vmem:[%s1302 + $0xc0] sm:$0xff]
  %v1314 = vld [vmem:[%s1302 + $0xd0] sm:$0xff]
  %v1315 = vld [vmem:[%s1302 + $0xe0] sm:$0xff]
  %v1316 = vld [vmem:[%s1302 + $0xf0] sm:$0xff]
  %v1317 = vld [vmem:[%s1302 + $0x100] sm:$0xff]
  %v1318 = vld [vmem:[%s1302 + $0x110] sm:$0xff]
  %v1319 = vpack.c.bf16 %v1304, %v1303
  %v1320 = vpack.c.bf16 %v1306, %v1305
  %v1321 = vpack.c.bf16 %v1308, %v1307
  %v1322 = vpack.c.bf16 %v1310, %v1309
  %v1323 = vpack.c.bf16 %v1312, %v1311
  %v1324 = vpack.c.bf16 %v1314, %v1313
  %v1325 = vpack.c.bf16 %v1316, %v1315
  %v1326 = vpack.c.bf16 %v1318, %v1317
  %s1327 = scalar_lea.vmem %s2, 384
  %v1328 = vld [vmem:[%s1327] sm:$0xf]
  %v1329 = vld [vmem:[%s1327 + $0x4] sm:$0xf]
  %v1330 = vld [vmem:[%s1327 + $0x8] sm:$0xf]
  %v1331 = vld [vmem:[%s1327 + $0xc] sm:$0xf]
  %v1332 = vld [vmem:[%s1327 + $0x10] sm:$0xf]
  %v1333 = vld [vmem:[%s1327 + $0x14] sm:$0xf]
  %v1334 = vld [vmem:[%s1327 + $0x18] sm:$0xf]
  %v1335 = vld [vmem:[%s1327 + $0x1c] sm:$0xf]
  %v1336 = vld [vmem:[%s1327 + $0x20] sm:$0xf]
  %v1337 = vld [vmem:[%s1327 + $0x24] sm:$0xf]
  %v1338 = vld [vmem:[%s1327 + $0x28] sm:$0xf]
  %v1339 = vld [vmem:[%s1327 + $0x2c] sm:$0xf]
  %v1340 = vld [vmem:[%s1327 + $0x30] sm:$0xf]
  %v1341 = vld [vmem:[%s1327 + $0x34] sm:$0xf]
  %v1342 = vld [vmem:[%s1327 + $0x38] sm:$0xf]
  %v1343 = vld [vmem:[%s1327 + $0x3c] sm:$0xf]
  %v1360 = vunpack.c.l.b16 %v1328
  %v1361 = vunpack.c.l.b16 %v1329
  %v1362 = vunpack.c.l.b16 %v1330
  %v1363 = vunpack.c.l.b16 %v1331
  %v1364 = vunpack.c.l.b16 %v1332
  %v1365 = vunpack.c.l.b16 %v1333
  %v1366 = vunpack.c.l.b16 %v1334
  %v1367 = vunpack.c.l.b16 %v1335
  %v1368 = vunpack.c.l.b16 %v1336
  %v1369 = vunpack.c.l.b16 %v1337
  %v1370 = vunpack.c.l.b16 %v1338
  %v1371 = vunpack.c.l.b16 %v1339
  %v1372 = vunpack.c.l.b16 %v1340
  %v1373 = vunpack.c.l.b16 %v1341
  %v1374 = vunpack.c.l.b16 %v1342
  %v1375 = vunpack.c.l.b16 %v1343
  %v1376 = vpack.c.b16 %v1361, %v1360
  %v1377 = vpack.c.b16 %v1363, %v1362
  %v1378 = vpack.c.b16 %v1365, %v1364
  %v1379 = vpack.c.b16 %v1367, %v1366
  %v1380 = vpack.c.b16 %v1369, %v1368
  %v1381 = vpack.c.b16 %v1371, %v1370
  %v1382 = vpack.c.b16 %v1373, %v1372
  %v1383 = vpack.c.b16 %v1375, %v1374
  %1392 = vmatprep.subr.bf16.mxu0 0
  %1393 = vmatpush1.bf16.msra.mxu0 %v1376
  %1394 = vmatprep.subr.bf16.mxu0 0
  %1395 = vmatpush1.bf16.msra.mxu0 %v1377
  %1396 = vmatprep.subr.bf16.mxu0 0
  %1397 = vmatpush1.bf16.msra.mxu0 %v1378
  %1398 = vmatprep.subr.bf16.mxu0 0
  %1399 = vmatpush1.bf16.msra.mxu0 %v1379
  %1400 = vmatprep.subr.bf16.mxu0 0
  %1401 = vmatpush1.bf16.msra.mxu0 %v1380
  %1402 = vmatprep.subr.bf16.mxu0 0
  %1403 = vmatpush1.bf16.msra.mxu0 %v1381
  %1404 = vmatprep.subr.bf16.mxu0 0
  %1405 = vmatpush1.bf16.msra.mxu0 %v1382
  %1406 = vmatprep.subr.bf16.mxu0 0
  %1407 = vmatpush1.bf16.msra.mxu0 %v1383
  %1408 = vmatprep.subr.bf16.mxu0 0
  %1409 = vmatpush1.bf16.msra.mxu0 0
  %1410 = vmatprep.subr.bf16.mxu0 0
  %1411 = vmatpush1.bf16.msra.mxu0 0
  %1412 = vmatprep.subr.bf16.mxu0 0
  %1413 = vmatpush1.bf16.msra.mxu0 0
  %1414 = vmatprep.subr.bf16.mxu0 0
  %1415 = vmatpush1.bf16.msra.mxu0 0
  %1416 = vmatprep.subr.bf16.mxu0 0
  %1417 = vmatpush1.bf16.msra.mxu0 0
  %1418 = vmatprep.subr.bf16.mxu0 0
  %1419 = vmatpush1.bf16.msra.mxu0 0
  %1420 = vmatprep.subr.bf16.mxu0 0
  %1421 = vmatpush1.bf16.msra.mxu0 0
  %1422 = vmatprep.subr.bf16.mxu0 0
  %1423 = vmatpush1.bf16.msra.mxu0 0
  %1424 = vmatprep.mubr.bf16.mxu0 0
  %1425 = vmatmul.mubr.bf16.gmra.mrb[0].mxu0 %v1319
  %v1426 = vpop.f32.mrb[0].mxu0
  %v1427 = vadd.f32 0.0, %v1426
  %v1428 = vpop.f32.mrb[0].mxu0
  %v1429 = vpop.f32.mrb[0].mxu0
  %v1430 = vadd.f32 0.0, %v1429
  %v1431 = vpop.f32.mrb[0].mxu0
  %1432 = vmatprep.mubr.bf16.mxu0 0
  %1433 = vmatmul.mubr.bf16.gmra.mrb[0].mxu0 %v1320
  %v1434 = vpop.f32.mrb[0].mxu0
  %v1435 = vadd.f32 0.0, %v1434
  %v1436 = vpop.f32.mrb[0].mxu0
  %v1437 = vpop.f32.mrb[0].mxu0
  %v1438 = vadd.f32 0.0, %v1437
  %v1439 = vpop.f32.mrb[0].mxu0
  %1440 = vmatprep.mubr.bf16.mxu0 0
  %1441 = vmatmul.mubr.bf16.gmra.mrb[0].mxu0 %v1321
  %v1442 = vpop.f32.mrb[0].mxu0
  %v1443 = vadd.f32 0.0, %v1442
  %v1444 = vpop.f32.mrb[0].mxu0
  %v1445 = vpop.f32.mrb[0].mxu0
  %v1446 = vadd.f32 0.0, %v1445
  %v1447 = vpop.f32.mrb[0].mxu0
  %1448 = vmatprep.mubr.bf16.mxu0 0
  %1449 = vmatmul.mubr.bf16.gmra.mrb[0].mxu0 %v1322
  %v1450 = vpop.f32.mrb[0].mxu0
  %v1451 = vadd.f32 0.0, %v1450
  %v1452 = vpop.f32.mrb[0].mxu0
  %v1453 = vpop.f32.mrb[0].mxu0
  %v1454 = vadd.f32 0.0, %v1453
  %v1455 = vpop.f32.mrb[0].mxu0
  %1456 = vmatprep.mubr.bf16.mxu0 0
  %1457 = vmatmul.mubr.bf16.gmra.mrb[0].mxu0 %v1323
  %v1458 = vpop.f32.mrb[0].mxu0
  %v1459 = vadd.f32 0.0, %v1458
  %v1460 = vpop.f32.mrb[0].mxu0
  %v1461 = vpop.f32.mrb[0].mxu0
  %v1462 = vadd.f32 0.0, %v1461
  %v1463 = vpop.f32.mrb[0].mxu0
  %1464 = vmatprep.mubr.bf16.mxu0 0
  %1465 = vmatmul.mubr.bf16.gmra.mrb[0].mxu0 %v1324
  %v1466 = vpop.f32.mrb[0].mxu0
  %v1467 = vadd.f32 0.0, %v1466
  %v1468 = vpop.f32.mrb[0].mxu0
  %v1469 = vpop.f32.mrb[0].mxu0
  %v1470 = vadd.f32 0.0, %v1469
  %v1471 = vpop.f32.mrb[0].mxu0
  %1472 = vmatprep.mubr.bf16.mxu0 0
  %1473 = vmatmul.mubr.bf16.gmra.mrb[0].mxu0 %v1325
  %v1474 = vpop.f32.mrb[0].mxu0
  %v1475 = vadd.f32 0.0, %v1474
  %v1476 = vpop.f32.mrb[0].mxu0
  %v1477 = vpop.f32.mrb[0].mxu0
  %v1478 = vadd.f32 0.0, %v1477
  %v1479 = vpop.f32.mrb[0].mxu0
  %1480 = vmatprep.mubr.bf16.mxu0 0
  %1481 = vmatmul.mubr.bf16.gmra.mrb[0].mxu0 %v1326
  %v1482 = vpop.f32.mrb[0].mxu0
  %v1483 = vadd.f32 0.0, %v1482
  %v1484 = vpop.f32.mrb[0].mxu0
  %v1485 = vpop.f32.mrb[0].mxu0
  %v1486 = vadd.f32 0.0, %v1485
  %v1487 = vpop.f32.mrb[0].mxu0
  %1488 = vdwg.mxu0
  %v1489 = vadd.f32 %v1286, %v1427
  %v1490 = vadd.f32 %v1287, %v1430
  %v1491 = vadd.f32 %v1288, %v1435
  %v1492 = vadd.f32 %v1289, %v1438
  %v1493 = vadd.f32 %v1290, %v1443
  %v1494 = vadd.f32 %v1291, %v1446
  %v1495 = vadd.f32 %v1292, %v1451
  %v1496 = vadd.f32 %v1293, %v1454
  %v1497 = vadd.f32 %v1294, %v1459
  %v1498 = vadd.f32 %v1295, %v1462
  %v1499 = vadd.f32 %v1296, %v1467
  %v1500 = vadd.f32 %v1297, %v1470
  %v1501 = vadd.f32 %v1298, %v1475
  %v1502 = vadd.f32 %v1299, %v1478
  %v1503 = vadd.f32 %v1300, %v1483
  %v1504 = vadd.f32 %v1301, %v1486
  %v1505 = vld [vmem:[%s1302 + $0x1] sm:$0xff]
  %v1506 = vld [vmem:[%s1302 + $0x11] sm:$0xff]
  %v1507 = vld [vmem:[%s1302 + $0x21] sm:$0xff]
  %v1508 = vld [vmem:[%s1302 + $0x31] sm:$0xff]
  %v1509 = vld [vmem:[%s1302 + $0x41] sm:$0xff]
  %v1510 = vld [vmem:[%s1302 + $0x51] sm:$0xff]
  %v1511 = vld [vmem:[%s1302 + $0x61] sm:$0xff]
  %v1512 = vld [vmem:[%s1302 + $0x71] sm:$0xff]
  %v1513 = vld [vmem:[%s1302 + $0xa1] sm:$0xff]
  %v1514 = vld [vmem:[%s1302 + $0xb1] sm:$0xff]
  %v1515 = vld [vmem:[%s1302 + $0xc1] sm:$0xff]
  %v1516 = vld [vmem:[%s1302 + $0xd1] sm:$0xff]
  %v1517 = vld [vmem:[%s1302 + $0xe1] sm:$0xff]
  %v1518 = vld [vmem:[%s1302 + $0xf1] sm:$0xff]
  %v1519 = vld [vmem:[%s1302 + $0x101] sm:$0xff]
  %v1520 = vld [vmem:[%s1302 + $0x111] sm:$0xff]
  %v1521 = vpack.c.bf16 %v1506, %v1505
  %v1522 = vpack.c.bf16 %v1508, %v1507
  %v1523 = vpack.c.bf16 %v1510, %v1509
  %v1524 = vpack.c.bf16 %v1512, %v1511
  %v1525 = vpack.c.bf16 %v1514, %v1513
  %v1526 = vpack.c.bf16 %v1516, %v1515
  %v1527 = vpack.c.bf16 %v1518, %v1517
  %v1528 = vpack.c.bf16 %v1520, %v1519
  %s1529 = scalar_lea.vmem %s2, 448
  %v1530 = vld [vmem:[%s1529] sm:$0xf]
  %v1531 = vld [vmem:[%s1529 + $0x4] sm:$0xf]
  %v1532 = vld [vmem:[%s1529 + $0x8] sm:$0xf]
  %v1533 = vld [vmem:[%s1529 + $0xc] sm:$0xf]
  %v1534 = vld [vmem:[%s1529 + $0x10] sm:$0xf]
  %v1535 = vld [vmem:[%s1529 + $0x14] sm:$0xf]
  %v1536 = vld [vmem:[%s1529 + $0x18] sm:$0xf]
  %v1537 = vld [vmem:[%s1529 + $0x1c] sm:$0xf]
  %v1538 = vld [vmem:[%s1529 + $0x20] sm:$0xf]
  %v1539 = vld [vmem:[%s1529 + $0x24] sm:$0xf]
  %v1540 = vld [vmem:[%s1529 + $0x28] sm:$0xf]
  %v1541 = vld [vmem:[%s1529 + $0x2c] sm:$0xf]
  %v1542 = vld [vmem:[%s1529 + $0x30] sm:$0xf]
  %v1543 = vld [vmem:[%s1529 + $0x34] sm:$0xf]
  %v1544 = vld [vmem:[%s1529 + $0x38] sm:$0xf]
  %v1545 = vld [vmem:[%s1529 + $0x3c] sm:$0xf]
  %v1562 = vunpack.c.l.b16 %v1530
  %v1563 = vunpack.c.l.b16 %v1531
  %v1564 = vunpack.c.l.b16 %v1532
  %v1565 = vunpack.c.l.b16 %v1533
  %v1566 = vunpack.c.l.b16 %v1534
  %v1567 = vunpack.c.l.b16 %v1535
  %v1568 = vunpack.c.l.b16 %v1536
  %v1569 = vunpack.c.l.b16 %v1537
  %v1570 = vunpack.c.l.b16 %v1538
  %v1571 = vunpack.c.l.b16 %v1539
  %v1572 = vunpack.c.l.b16 %v1540
  %v1573 = vunpack.c.l.b16 %v1541
  %v1574 = vunpack.c.l.b16 %v1542
  %v1575 = vunpack.c.l.b16 %v1543
  %v1576 = vunpack.c.l.b16 %v1544
  %v1577 = vunpack.c.l.b16 %v1545
  %v1578 = vpack.c.b16 %v1563, %v1562
  %v1579 = vpack.c.b16 %v1565, %v1564
  %v1580 = vpack.c.b16 %v1567, %v1566
  %v1581 = vpack.c.b16 %v1569, %v1568
  %v1582 = vpack.c.b16 %v1571, %v1570
  %v1583 = vpack.c.b16 %v1573, %v1572
  %v1584 = vpack.c.b16 %v1575, %v1574
  %v1585 = vpack.c.b16 %v1577, %v1576
  %1594 = vmatprep.subr.bf16.mxu0 0
  %1595 = vmatpush1.bf16.msra.mxu0 %v1578
  %1596 = vmatprep.subr.bf16.mxu0 0
  %1597 = vmatpush1.bf16.msra.mxu0 %v1579
  %1598 = vmatprep.subr.bf16.mxu0 0
  %1599 = vmatpush1.bf16.msra.mxu0 %v1580
  %1600 = vmatprep.subr.bf16.mxu0 0
  %1601 = vmatpush1.bf16.msra.mxu0 %v1581
  %1602 = vmatprep.subr.bf16.mxu0 0
  %1603 = vmatpush1.bf16.msra.mxu0 %v1582
  %1604 = vmatprep.subr.bf16.mxu0 0
  %1605 = vmatpush1.bf16.msra.mxu0 %v1583
  %1606 = vmatprep.subr.bf16.mxu0 0
  %1607 = vmatpush1.bf16.msra.mxu0 %v1584
  %1608 = vmatprep.subr.bf16.mxu0 0
  %1609 = vmatpush1.bf16.msra.mxu0 %v1585
  %1610 = vmatprep.subr.bf16.mxu0 0
  %1611 = vmatpush1.bf16.msra.mxu0 0
  %1612 = vmatprep.subr.bf16.mxu0 0
  %1613 = vmatpush1.bf16.msra.mxu0 0
  %1614 = vmatprep.subr.bf16.mxu0 0
  %1615 = vmatpush1.bf16.msra.mxu0 0
  %1616 = vmatprep.subr.bf16.mxu0 0
  %1617 = vmatpush1.bf16.msra.mxu0 0
  %1618 = vmatprep.subr.bf16.mxu0 0
  %1619 = vmatpush1.bf16.msra.mxu0 0
  %1620 = vmatprep.subr.bf16.mxu0 0
  %1621 = vmatpush1.bf16.msra.mxu0 0
  %1622 = vmatprep.subr.bf16.mxu0 0
  %1623 = vmatpush1.bf16.msra.mxu0 0
  %1624 = vmatprep.subr.bf16.mxu0 0
  %1625 = vmatpush1.bf16.msra.mxu0 0
  %1626 = vmatprep.mubr.bf16.mxu0 0
  %1627 = vmatmul.mubr.bf16.gmra.mrb[0].mxu0 %v1521
  %v1628 = vpop.f32.mrb[0].mxu0
  %v1629 = vadd.f32 0.0, %v1628
  %v1630 = vpop.f32.mrb[0].mxu0
  %v1631 = vpop.f32.mrb[0].mxu0
  %v1632 = vadd.f32 0.0, %v1631
  %v1633 = vpop.f32.mrb[0].mxu0
  %1634 = vmatprep.mubr.bf16.mxu0 0
  %1635 = vmatmul.mubr.bf16.gmra.mrb[0].mxu0 %v1522
  %v1636 = vpop.f32.mrb[0].mxu0
  %v1637 = vadd.f32 0.0, %v1636
  %v1638 = vpop.f32.mrb[0].mxu0
  %v1639 = vpop.f32.mrb[0].mxu0
  %v1640 = vadd.f32 0.0, %v1639
  %v1641 = vpop.f32.mrb[0].mxu0
  %1642 = vmatprep.mubr.bf16.mxu0 0
  %1643 = vmatmul.mubr.bf16.gmra.mrb[0].mxu0 %v1523
  %v1644 = vpop.f32.mrb[0].mxu0
  %v1645 = vadd.f32 0.0, %v1644
  %v1646 = vpop.f32.mrb[0].mxu0
  %v1647 = vpop.f32.mrb[0].mxu0
  %v1648 = vadd.f32 0.0, %v1647
  %v1649 = vpop.f32.mrb[0].mxu0
  %1650 = vmatprep.mubr.bf16.mxu0 0
  %1651 = vmatmul.mubr.bf16.gmra.mrb[0].mxu0 %v1524
  %v1652 = vpop.f32.mrb[0].mxu0
  %v1653 = vadd.f32 0.0, %v1652
  %v1654 = vpop.f32.mrb[0].mxu0
  %v1655 = vpop.f32.mrb[0].mxu0
  %v1656 = vadd.f32 0.0, %v1655
  %v1657 = vpop.f32.mrb[0].mxu0
  %1658 = vmatprep.mubr.bf16.mxu0 0
  %1659 = vmatmul.mubr.bf16.gmra.mrb[0].mxu0 %v1525
  %v1660 = vpop.f32.mrb[0].mxu0
  %v1661 = vadd.f32 0.0, %v1660
  %v1662 = vpop.f32.mrb[0].mxu0
  %v1663 = vpop.f32.mrb[0].mxu0
  %v1664 = vadd.f32 0.0, %v1663
  %v1665 = vpop.f32.mrb[0].mxu0
  %1666 = vmatprep.mubr.bf16.mxu0 0
  %1667 = vmatmul.mubr.bf16.gmra.mrb[0].mxu0 %v1526
  %v1668 = vpop.f32.mrb[0].mxu0
  %v1669 = vadd.f32 0.0, %v1668
  %v1670 = vpop.f32.mrb[0].mxu0
  %v1671 = vpop.f32.mrb[0].mxu0
  %v1672 = vadd.f32 0.0, %v1671
  %v1673 = vpop.f32.mrb[0].mxu0
  %1674 = vmatprep.mubr.bf16.mxu0 0
  %1675 = vmatmul.mubr.bf16.gmra.mrb[0].mxu0 %v1527
  %v1676 = vpop.f32.mrb[0].mxu0
  %v1677 = vadd.f32 0.0, %v1676
  %v1678 = vpop.f32.mrb[0].mxu0
  %v1679 = vpop.f32.mrb[0].mxu0
  %v1680 = vadd.f32 0.0, %v1679
  %v1681 = vpop.f32.mrb[0].mxu0
  %1682 = vmatprep.mubr.bf16.mxu0 0
  %1683 = vmatmul.mubr.bf16.gmra.mrb[0].mxu0 %v1528
  %v1684 = vpop.f32.mrb[0].mxu0
  %v1685 = vadd.f32 0.0, %v1684
  %v1686 = vpop.f32.mrb[0].mxu0
  %v1687 = vpop.f32.mrb[0].mxu0
  %v1688 = vadd.f32 0.0, %v1687
  %v1689 = vpop.f32.mrb[0].mxu0
  %1690 = vdwg.mxu0
  %v1691 = vadd.f32 %v1489, %v1629
  %v1692 = vadd.f32 %v1490, %v1632
  %v1693 = vadd.f32 %v1491, %v1637
  %v1694 = vadd.f32 %v1492, %v1640
  %v1695 = vadd.f32 %v1493, %v1645
  %v1696 = vadd.f32 %v1494, %v1648
  %v1697 = vadd.f32 %v1495, %v1653
  %v1698 = vadd.f32 %v1496, %v1656
  %v1699 = vadd.f32 %v1497, %v1661
  %v1700 = vadd.f32 %v1498, %v1664
  %v1701 = vadd.f32 %v1499, %v1669
  %v1702 = vadd.f32 %v1500, %v1672
  %v1703 = vadd.f32 %v1501, %v1677
  %v1704 = vadd.f32 %v1502, %v1680
  %v1705 = vadd.f32 %v1503, %v1685
  %v1706 = vadd.f32 %v1504, %v1688
  %v1707 = vld [vmem:[%s1302 + $0x2] sm:$0xff]
  %v1708 = vld [vmem:[%s1302 + $0x12] sm:$0xff]
  %v1709 = vld [vmem:[%s1302 + $0x22] sm:$0xff]
  %v1710 = vld [vmem:[%s1302 + $0x32] sm:$0xff]
  %v1711 = vld [vmem:[%s1302 + $0x42] sm:$0xff]
  %v1712 = vld [vmem:[%s1302 + $0x52] sm:$0xff]
  %v1713 = vld [vmem:[%s1302 + $0x62] sm:$0xff]
  %v1714 = vld [vmem:[%s1302 + $0x72] sm:$0xff]
  %v1715 = vld [vmem:[%s1302 + $0xa2] sm:$0xff]
  %v1716 = vld [vmem:[%s1302 + $0xb2] sm:$0xff]
  %v1717 = vld [vmem:[%s1302 + $0xc2] sm:$0xff]
  %v1718 = vld [vmem:[%s1302 + $0xd2] sm:$0xff]
  %v1719 = vld [vmem:[%s1302 + $0xe2] sm:$0xff]
  %v1720 = vld [vmem:[%s1302 + $0xf2] sm:$0xff]
  %v1721 = vld [vmem:[%s1302 + $0x102] sm:$0xff]
  %v1722 = vld [vmem:[%s1302 + $0x112] sm:$0xff]
  %v1723 = vpack.c.bf16 %v1708, %v1707
  %v1724 = vpack.c.bf16 %v1710, %v1709
  %v1725 = vpack.c.bf16 %v1712, %v1711
  %v1726 = vpack.c.bf16 %v1714, %v1713
  %v1727 = vpack.c.bf16 %v1716, %v1715
  %v1728 = vpack.c.bf16 %v1718, %v1717
  %v1729 = vpack.c.bf16 %v1720, %v1719
  %v1730 = vpack.c.bf16 %v1722, %v1721
  %s1731 = scalar_lea.vmem %s2, 512
  %v1732 = vld [vmem:[%s1731] sm:$0xf]
  %v1733 = vld [vmem:[%s1731 + $0x4] sm:$0xf]
  %v1734 = vld [vmem:[%s1731 + $0x8] sm:$0xf]
  %v1735 = vld [vmem:[%s1731 + $0xc] sm:$0xf]
  %v1736 = vld [vmem:[%s1731 + $0x10] sm:$0xf]
  %v1737 = vld [vmem:[%s1731 + $0x14] sm:$0xf]
  %v1738 = vld [vmem:[%s1731 + $0x18] sm:$0xf]
  %v1739 = vld [vmem:[%s1731 + $0x1c] sm:$0xf]
  %v1740 = vld [vmem:[%s1731 + $0x20] sm:$0xf]
  %v1741 = vld [vmem:[%s1731 + $0x24] sm:$0xf]
  %v1742 = vld [vmem:[%s1731 + $0x28] sm:$0xf]
  %v1743 = vld [vmem:[%s1731 + $0x2c] sm:$0xf]
  %v1744 = vld [vmem:[%s1731 + $0x30] sm:$0xf]
  %v1745 = vld [vmem:[%s1731 + $0x34] sm:$0xf]
  %v1746 = vld [vmem:[%s1731 + $0x38] sm:$0xf]
  %v1747 = vld [vmem:[%s1731 + $0x3c] sm:$0xf]
  %v1764 = vunpack.c.l.b16 %v1732
  %v1765 = vunpack.c.l.b16 %v1733
  %v1766 = vunpack.c.l.b16 %v1734
  %v1767 = vunpack.c.l.b16 %v1735
  %v1768 = vunpack.c.l.b16 %v1736
  %v1769 = vunpack.c.l.b16 %v1737
  %v1770 = vunpack.c.l.b16 %v1738
  %v1771 = vunpack.c.l.b16 %v1739
  %v1772 = vunpack.c.l.b16 %v1740
  %v1773 = vunpack.c.l.b16 %v1741
  %v1774 = vunpack.c.l.b16 %v1742
  %v1775 = vunpack.c.l.b16 %v1743
  %v1776 = vunpack.c.l.b16 %v1744
  %v1777 = vunpack.c.l.b16 %v1745
  %v1778 = vunpack.c.l.b16 %v1746
  %v1779 = vunpack.c.l.b16 %v1747
  %v1780 = vpack.c.b16 %v1765, %v1764
  %v1781 = vpack.c.b16 %v1767, %v1766
  %v1782 = vpack.c.b16 %v1769, %v1768
  %v1783 = vpack.c.b16 %v1771, %v1770
  %v1784 = vpack.c.b16 %v1773, %v1772
  %v1785 = vpack.c.b16 %v1775, %v1774
  %v1786 = vpack.c.b16 %v1777, %v1776
  %v1787 = vpack.c.b16 %v1779, %v1778
  %1796 = vmatprep.subr.bf16.mxu0 0
  %1797 = vmatpush1.bf16.msra.mxu0 %v1780
  %1798 = vmatprep.subr.bf16.mxu0 0
  %1799 = vmatpush1.bf16.msra.mxu0 %v1781
  %1800 = vmatprep.subr.bf16.mxu0 0
  %1801 = vmatpush1.bf16.msra.mxu0 %v1782
  %1802 = vmatprep.subr.bf16.mxu0 0
  %1803 = vmatpush1.bf16.msra.mxu0 %v1783
  %1804 = vmatprep.subr.bf16.mxu0 0
  %1805 = vmatpush1.bf16.msra.mxu0 %v1784
  %1806 = vmatprep.subr.bf16.mxu0 0
  %1807 = vmatpush1.bf16.msra.mxu0 %v1785
  %1808 = vmatprep.subr.bf16.mxu0 0
  %1809 = vmatpush1.bf16.msra.mxu0 %v1786
  %1810 = vmatprep.subr.bf16.mxu0 0
  %1811 = vmatpush1.bf16.msra.mxu0 %v1787
  %1812 = vmatprep.subr.bf16.mxu0 0
  %1813 = vmatpush1.bf16.msra.mxu0 0
  %1814 = vmatprep.subr.bf16.mxu0 0
  %1815 = vmatpush1.bf16.msra.mxu0 0
  %1816 = vmatprep.subr.bf16.mxu0 0
  %1817 = vmatpush1.bf16.msra.mxu0 0
  %1818 = vmatprep.subr.bf16.mxu0 0
  %1819 = vmatpush1.bf16.msra.mxu0 0
  %1820 = vmatprep.subr.bf16.mxu0 0
  %1821 = vmatpush1.bf16.msra.mxu0 0
  %1822 = vmatprep.subr.bf16.mxu0 0
  %1823 = vmatpush1.bf16.msra.mxu0 0
  %1824 = vmatprep.subr.bf16.mxu0 0
  %1825 = vmatpush1.bf16.msra.mxu0 0
  %1826 = vmatprep.subr.bf16.mxu0 0
  %1827 = vmatpush1.bf16.msra.mxu0 0
  %1828 = vmatprep.mubr.bf16.mxu0 0
  %1829 = vmatmul.mubr.bf16.gmra.mrb[0].mxu0 %v1723
  %v1830 = vpop.f32.mrb[0].mxu0
  %v1831 = vadd.f32 0.0, %v1830
  %v1832 = vpop.f32.mrb[0].mxu0
  %v1833 = vpop.f32.mrb[0].mxu0
  %v1834 = vadd.f32 0.0, %v1833
  %v1835 = vpop.f32.mrb[0].mxu0
  %1836 = vmatprep.mubr.bf16.mxu0 0
  %1837 = vmatmul.mubr.bf16.gmra.mrb[0].mxu0 %v1724
  %v1838 = vpop.f32.mrb[0].mxu0
  %v1839 = vadd.f32 0.0, %v1838
  %v1840 = vpop.f32.mrb[0].mxu0
  %v1841 = vpop.f32.mrb[0].mxu0
  %v1842 = vadd.f32 0.0, %v1841
  %v1843 = vpop.f32.mrb[0].mxu0
  %1844 = vmatprep.mubr.bf16.mxu0 0
  %1845 = vmatmul.mubr.bf16.gmra.mrb[0].mxu0 %v1725
  %v1846 = vpop.f32.mrb[0].mxu0
  %v1847 = vadd.f32 0.0, %v1846
  %v1848 = vpop.f32.mrb[0].mxu0
  %v1849 = vpop.f32.mrb[0].mxu0
  %v1850 = vadd.f32 0.0, %v1849
  %v1851 = vpop.f32.mrb[0].mxu0
  %1852 = vmatprep.mubr.bf16.mxu0 0
  %1853 = vmatmul.mubr.bf16.gmra.mrb[0].mxu0 %v1726
  %v1854 = vpop.f32.mrb[0].mxu0
  %v1855 = vadd.f32 0.0, %v1854
  %v1856 = vpop.f32.mrb[0].mxu0
  %v1857 = vpop.f32.mrb[0].mxu0
  %v1858 = vadd.f32 0.0, %v1857
  %v1859 = vpop.f32.mrb[0].mxu0
  %1860 = vmatprep.mubr.bf16.mxu0 0
  %1861 = vmatmul.mubr.bf16.gmra.mrb[0].mxu0 %v1727
  %v1862 = vpop.f32.mrb[0].mxu0
  %v1863 = vadd.f32 0.0, %v1862
  %v1864 = vpop.f32.mrb[0].mxu0
  %v1865 = vpop.f32.mrb[0].mxu0
  %v1866 = vadd.f32 0.0, %v1865
  %v1867 = vpop.f32.mrb[0].mxu0
  %1868 = vmatprep.mubr.bf16.mxu0 0
  %1869 = vmatmul.mubr.bf16.gmra.mrb[0].mxu0 %v1728
  %v1870 = vpop.f32.mrb[0].mxu0
  %v1871 = vadd.f32 0.0, %v1870
  %v1872 = vpop.f32.mrb[0].mxu0
  %v1873 = vpop.f32.mrb[0].mxu0
  %v1874 = vadd.f32 0.0, %v1873
  %v1875 = vpop.f32.mrb[0].mxu0
  %1876 = vmatprep.mubr.bf16.mxu0 0
  %1877 = vmatmul.mubr.bf16.gmra.mrb[0].mxu0 %v1729
  %v1878 = vpop.f32.mrb[0].mxu0
  %v1879 = vadd.f32 0.0, %v1878
  %v1880 = vpop.f32.mrb[0].mxu0
  %v1881 = vpop.f32.mrb[0].mxu0
  %v1882 = vadd.f32 0.0, %v1881
  %v1883 = vpop.f32.mrb[0].mxu0
  %1884 = vmatprep.mubr.bf16.mxu0 0
  %1885 = vmatmul.mubr.bf16.gmra.mrb[0].mxu0 %v1730
  %v1886 = vpop.f32.mrb[0].mxu0
  %v1887 = vadd.f32 0.0, %v1886
  %v1888 = vpop.f32.mrb[0].mxu0
  %v1889 = vpop.f32.mrb[0].mxu0
  %v1890 = vadd.f32 0.0, %v1889
  %v1891 = vpop.f32.mrb[0].mxu0
  %1892 = vdwg.mxu0
  %v1893 = vadd.f32 %v1691, %v1831
  %v1894 = vadd.f32 %v1692, %v1834
  %v1895 = vadd.f32 %v1693, %v1839
  %v1896 = vadd.f32 %v1694, %v1842
  %v1897 = vadd.f32 %v1695, %v1847
  %v1898 = vadd.f32 %v1696, %v1850
  %v1899 = vadd.f32 %v1697, %v1855
  %v1900 = vadd.f32 %v1698, %v1858
  %v1901 = vadd.f32 %v1699, %v1863
  %v1902 = vadd.f32 %v1700, %v1866
  %v1903 = vadd.f32 %v1701, %v1871
  %v1904 = vadd.f32 %v1702, %v1874
  %v1905 = vadd.f32 %v1703, %v1879
  %v1906 = vadd.f32 %v1704, %v1882
  %v1907 = vadd.f32 %v1705, %v1887
  %v1908 = vadd.f32 %v1706, %v1890
  %v1909 = vadd.f32 %v1893, %v1894
  %v1910 = vadd.f32 %v1909, %v1895
  %v1911 = vadd.f32 %v1910, %v1896
  %v1912 = vadd.f32 %v1911, %v1897
  %v1913 = vadd.f32 %v1912, %v1898
  %v1914 = vadd.f32 %v1913, %v1899
  %v1915 = vadd.f32 %v1914, %v1900
  %v1916 = vadd.f32 %v1915, %v1901
  %v1917 = vadd.f32 %v1916, %v1902
  %v1918 = vadd.f32 %v1917, %v1903
  %v1919 = vadd.f32 %v1918, %v1904
  %v1920 = vadd.f32 %v1919, %v1905
  %v1921 = vadd.f32 %v1920, %v1906
  %v1922 = vadd.f32 %v1921, %v1907
  %v1923 = vadd.f32 %v1922, %v1908
  %v1924 = vrot.slane %v1923, 4
  %v1925 = vadd.f32 %v1923, %v1924
  %v1926 = vrot.slane %v1925, 2
  %v1927 = vadd.f32 %v1925, %v1926
  %v1928 = vrot.slane %v1927, 1
  %v1929 = vadd.f32 %v1927, %v1928
  %v1930 = vmul.f32 %v1929, 0.0078125
  %v1931 = vmul.f32 %v1893, %v1893
  %v1932 = vmul.f32 %v1894, %v1894
  %v1933 = vmul.f32 %v1895, %v1895
  %v1934 = vmul.f32 %v1896, %v1896
  %v1935 = vmul.f32 %v1897, %v1897
  %v1936 = vmul.f32 %v1898, %v1898
  %v1937 = vmul.f32 %v1899, %v1899
  %v1938 = vmul.f32 %v1900, %v1900
  %v1939 = vmul.f32 %v1901, %v1901
  %v1940 = vmul.f32 %v1902, %v1902
  %v1941 = vmul.f32 %v1903, %v1903
  %v1942 = vmul.f32 %v1904, %v1904
  %v1943 = vmul.f32 %v1905, %v1905
  %v1944 = vmul.f32 %v1906, %v1906
  %v1945 = vmul.f32 %v1907, %v1907
  %v1946 = vmul.f32 %v1908, %v1908
  %v1947 = vadd.f32 %v1931, %v1932
  %v1948 = vadd.f32 %v1947, %v1933
  %v1949 = vadd.f32 %v1948, %v1934
  %v1950 = vadd.f32 %v1949, %v1935
  %v1951 = vadd.f32 %v1950, %v1936
  %v1952 = vadd.f32 %v1951, %v1937
  %v1953 = vadd.f32 %v1952, %v1938
  %v1954 = vadd.f32 %v1953, %v1939
  %v1955 = vadd.f32 %v1954, %v1940
  %v1956 = vadd.f32 %v1955, %v1941
  %v1957 = vadd.f32 %v1956, %v1942
  %v1958 = vadd.f32 %v1957, %v1943
  %v1959 = vadd.f32 %v1958, %v1944
  %v1960 = vadd.f32 %v1959, %v1945
  %v1961 = vadd.f32 %v1960, %v1946
  %v1962 = vrot.slane %v1961, 4
  %v1963 = vadd.f32 %v1961, %v1962
  %v1964 = vrot.slane %v1963, 2
  %v1965 = vadd.f32 %v1963, %v1964
  %v1966 = vrot.slane %v1965, 1
  %v1967 = vadd.f32 %v1965, %v1966
  %v1968 = vmul.f32 %v1967, 0.0078125
  %v1969 = vmul.f32 %v1930, %v1930
  %v1970 = vsub.f32 %v1968, %v1969
  %v1971 = vmax.f32 %v1970, 0.0
  %v1972 = vsub.f32 %v1893, %v1930
  %v1973 = vsub.f32 %v1894, %v1930
  %v1974 = vsub.f32 %v1895, %v1930
  %v1975 = vsub.f32 %v1896, %v1930
  %v1976 = vsub.f32 %v1897, %v1930
  %v1977 = vsub.f32 %v1898, %v1930
  %v1978 = vsub.f32 %v1899, %v1930
  %v1979 = vsub.f32 %v1900, %v1930
  %v1980 = vsub.f32 %v1901, %v1930
  %v1981 = vsub.f32 %v1902, %v1930
  %v1982 = vsub.f32 %v1903, %v1930
  %v1983 = vsub.f32 %v1904, %v1930
  %v1984 = vsub.f32 %v1905, %v1930
  %v1985 = vsub.f32 %v1906, %v1930
  %v1986 = vsub.f32 %v1907, %v1930
  %v1987 = vsub.f32 %v1908, %v1930
  %v1988 = vadd.f32 %v1971, 1e-05
  %v1989 = vrsqrt.pop %v1988
  %v1990 = vmul.f32 %v1972, %v1989
  %v1991 = vmul.f32 %v1973, %v1989
  %v1992 = vmul.f32 %v1974, %v1989
  %v1993 = vmul.f32 %v1975, %v1989
  %v1994 = vmul.f32 %v1976, %v1989
  %v1995 = vmul.f32 %v1977, %v1989
  %v1996 = vmul.f32 %v1978, %v1989
  %v1997 = vmul.f32 %v1979, %v1989
  %v1998 = vmul.f32 %v1980, %v1989
  %v1999 = vmul.f32 %v1981, %v1989
  %v2000 = vmul.f32 %v1982, %v1989
  %v2001 = vmul.f32 %v1983, %v1989
  %v2002 = vmul.f32 %v1984, %v1989
  %v2003 = vmul.f32 %v1985, %v1989
  %v2004 = vmul.f32 %v1986, %v1989
  %v2005 = vmul.f32 %v1987, %v1989
  %v2006 = vld [vmem:[%s3] sm:$0x1]
  %v2008 = vlaneseq
  %v2009 = vshrl.u32 %v2008, 7
  %v2010 = vsub.s32 0, %v2009
  %v2011 = vrot.slane %v2006, %v2010
  %v2013 = vmul.f32 %v1990, %v2011
  %v2014 = vmul.f32 %v1991, %v2011
  %v2015 = vmul.f32 %v1992, %v2011
  %v2016 = vmul.f32 %v1993, %v2011
  %v2017 = vmul.f32 %v1994, %v2011
  %v2018 = vmul.f32 %v1995, %v2011
  %v2019 = vmul.f32 %v1996, %v2011
  %v2020 = vmul.f32 %v1997, %v2011
  %v2021 = vmul.f32 %v1998, %v2011
  %v2022 = vmul.f32 %v1999, %v2011
  %v2023 = vmul.f32 %v2000, %v2011
  %v2024 = vmul.f32 %v2001, %v2011
  %v2025 = vmul.f32 %v2002, %v2011
  %v2026 = vmul.f32 %v2003, %v2011
  %v2027 = vmul.f32 %v2004, %v2011
  %v2028 = vmul.f32 %v2005, %v2011
  %v2029 = vld [vmem:[%s4] sm:$0x1]
  %v2031 = vlaneseq
  %v2032 = vshrl.u32 %v2031, 7
  %v2033 = vsub.s32 0, %v2032
  %v2034 = vrot.slane %v2029, %v2033
  %v2036 = vadd.f32 %v2013, %v2034
  %v2037 = vadd.f32 %v2014, %v2034
  %v2038 = vadd.f32 %v2015, %v2034
  %v2039 = vadd.f32 %v2016, %v2034
  %v2040 = vadd.f32 %v2017, %v2034
  %v2041 = vadd.f32 %v2018, %v2034
  %v2042 = vadd.f32 %v2019, %v2034
  %v2043 = vadd.f32 %v2020, %v2034
  %v2044 = vadd.f32 %v2021, %v2034
  %v2045 = vadd.f32 %v2022, %v2034
  %v2046 = vadd.f32 %v2023, %v2034
  %v2047 = vadd.f32 %v2024, %v2034
  %v2048 = vadd.f32 %v2025, %v2034
  %v2049 = vadd.f32 %v2026, %v2034
  %v2050 = vadd.f32 %v2027, %v2034
  %v2051 = vadd.f32 %v2028, %v2034
  %v2052 = vmax.f32 %v2036, 0.0
  %v2053 = vmax.f32 %v2037, 0.0
  %v2054 = vmax.f32 %v2038, 0.0
  %v2055 = vmax.f32 %v2039, 0.0
  %v2056 = vmax.f32 %v2040, 0.0
  %v2057 = vmax.f32 %v2041, 0.0
  %v2058 = vmax.f32 %v2042, 0.0
  %v2059 = vmax.f32 %v2043, 0.0
  %v2060 = vmax.f32 %v2044, 0.0
  %v2061 = vmax.f32 %v2045, 0.0
  %v2062 = vmax.f32 %v2046, 0.0
  %v2063 = vmax.f32 %v2047, 0.0
  %v2064 = vmax.f32 %v2048, 0.0
  %v2065 = vmax.f32 %v2049, 0.0
  %v2066 = vmax.f32 %v2050, 0.0
  %v2067 = vmax.f32 %v2051, 0.0
  %2068 = vst [vmem:[%s106 + $0x1] sm:$0xff] %v2052
  %2069 = vst [vmem:[%s106 + $0x11] sm:$0xff] %v2053
  %2070 = vst [vmem:[%s106 + $0x21] sm:$0xff] %v2054
  %2071 = vst [vmem:[%s106 + $0x31] sm:$0xff] %v2055
  %2072 = vst [vmem:[%s106 + $0x41] sm:$0xff] %v2056
  %2073 = vst [vmem:[%s106 + $0x51] sm:$0xff] %v2057
  %2074 = vst [vmem:[%s106 + $0x61] sm:$0xff] %v2058
  %2075 = vst [vmem:[%s106 + $0x71] sm:$0xff] %v2059
  %2076 = vst [vmem:[%s106 + $0xa1] sm:$0xff] %v2060
  %2077 = vst [vmem:[%s106 + $0xb1] sm:$0xff] %v2061
  %2078 = vst [vmem:[%s106 + $0xc1] sm:$0xff] %v2062
  %2079 = vst [vmem:[%s106 + $0xd1] sm:$0xff] %v2063
  %2080 = vst [vmem:[%s106 + $0xe1] sm:$0xff] %v2064
  %2081 = vst [vmem:[%s106 + $0xf1] sm:$0xff] %v2065
  %2082 = vst [vmem:[%s106 + $0x101] sm:$0xff] %v2066
  %2083 = vst [vmem:[%s106 + $0x111] sm:$0xff] %v2067
  %v2084 = vld [vmem:[#allocation2] sm:$0xff]
  %v2085 = vld [vmem:[#allocation2 + $0x10] sm:$0xff]
  %v2086 = vld [vmem:[#allocation2 + $0x20] sm:$0xff]
  %v2087 = vld [vmem:[#allocation2 + $0x30] sm:$0xff]
  %v2088 = vld [vmem:[#allocation2 + $0x40] sm:$0xff]
  %v2089 = vld [vmem:[#allocation2 + $0x50] sm:$0xff]
  %v2090 = vld [vmem:[#allocation2 + $0x60] sm:$0xff]
  %v2091 = vld [vmem:[#allocation2 + $0x70] sm:$0xff]
  %v2092 = vld [vmem:[#allocation2 + $0xa0] sm:$0xff]
  %v2093 = vld [vmem:[#allocation2 + $0xb0] sm:$0xff]
  %v2094 = vld [vmem:[#allocation2 + $0xc0] sm:$0xff]
  %v2095 = vld [vmem:[#allocation2 + $0xd0] sm:$0xff]
  %v2096 = vld [vmem:[#allocation2 + $0xe0] sm:$0xff]
  %v2097 = vld [vmem:[#allocation2 + $0xf0] sm:$0xff]
  %v2098 = vld [vmem:[#allocation2 + $0x100] sm:$0xff]
  %v2099 = vld [vmem:[#allocation2 + $0x110] sm:$0xff]
  %v2100 = vpack.c.bf16 %v2085, %v2084
  %v2101 = vpack.c.bf16 %v2087, %v2086
  %v2102 = vpack.c.bf16 %v2089, %v2088
  %v2103 = vpack.c.bf16 %v2091, %v2090
  %v2104 = vpack.c.bf16 %v2093, %v2092
  %v2105 = vpack.c.bf16 %v2095, %v2094
  %v2106 = vpack.c.bf16 %v2097, %v2096
  %v2107 = vpack.c.bf16 %v2099, %v2098
  %v2108 = vld [vmem:[%s5] sm:$0xf]
  %v2109 = vld [vmem:[%s5 + $0x4] sm:$0xf]
  %v2110 = vld [vmem:[%s5 + $0x8] sm:$0xf]
  %v2111 = vld [vmem:[%s5 + $0xc] sm:$0xf]
  %v2112 = vld [vmem:[%s5 + $0x10] sm:$0xf]
  %v2113 = vld [vmem:[%s5 + $0x14] sm:$0xf]
  %v2114 = vld [vmem:[%s5 + $0x18] sm:$0xf]
  %v2115 = vld [vmem:[%s5 + $0x1c] sm:$0xf]
  %v2116 = vld [vmem:[%s5 + $0x20] sm:$0xf]
  %v2117 = vld [vmem:[%s5 + $0x24] sm:$0xf]
  %v2118 = vld [vmem:[%s5 + $0x28] sm:$0xf]
  %v2119 = vld [vmem:[%s5 + $0x2c] sm:$0xf]
  %v2120 = vld [vmem:[%s5 + $0x30] sm:$0xf]
  %v2121 = vld [vmem:[%s5 + $0x34] sm:$0xf]
  %v2122 = vld [vmem:[%s5 + $0x38] sm:$0xf]
  %v2123 = vld [vmem:[%s5 + $0x3c] sm:$0xf]
  %v2124 = vld [vmem:[#allocation2 + $0x1] sm:$0xff]
  %v2125 = vld [vmem:[#allocation2 + $0x11] sm:$0xff]
  %v2126 = vld [vmem:[#allocation2 + $0x21] sm:$0xff]
  %v2127 = vld [vmem:[#allocation2 + $0x31] sm:$0xff]
  %v2128 = vld [vmem:[#allocation2 + $0x41] sm:$0xff]
  %v2129 = vld [vmem:[#allocation2 + $0x51] sm:$0xff]
  %v2130 = vld [vmem:[#allocation2 + $0x61] sm:$0xff]
  %v2131 = vld [vmem:[#allocation2 + $0x71] sm:$0xff]
  %v2132 = vld [vmem:[#allocation2 + $0xa1] sm:$0xff]
  %v2133 = vld [vmem:[#allocation2 + $0xb1] sm:$0xff]
  %v2134 = vld [vmem:[#allocation2 + $0xc1] sm:$0xff]
  %v2135 = vld [vmem:[#allocation2 + $0xd1] sm:$0xff]
  %v2136 = vld [vmem:[#allocation2 + $0xe1] sm:$0xff]
  %v2137 = vld [vmem:[#allocation2 + $0xf1] sm:$0xff]
  %v2138 = vld [vmem:[#allocation2 + $0x101] sm:$0xff]
  %v2139 = vld [vmem:[#allocation2 + $0x111] sm:$0xff]
  %v2140 = vpack.c.bf16 %v2125, %v2124
  %v2141 = vpack.c.bf16 %v2127, %v2126
  %v2142 = vpack.c.bf16 %v2129, %v2128
  %v2143 = vpack.c.bf16 %v2131, %v2130
  %v2144 = vpack.c.bf16 %v2133, %v2132
  %v2145 = vpack.c.bf16 %v2135, %v2134
  %v2146 = vpack.c.bf16 %v2137, %v2136
  %v2147 = vpack.c.bf16 %v2139, %v2138
  %s2148 = scalar_lea.vmem %s5, 64
  %v2149 = vld [vmem:[%s2148] sm:$0xf]
  %v2150 = vld [vmem:[%s2148 + $0x4] sm:$0xf]
  %v2151 = vld [vmem:[%s2148 + $0x8] sm:$0xf]
  %v2152 = vld [vmem:[%s2148 + $0xc] sm:$0xf]
  %v2153 = vld [vmem:[%s2148 + $0x10] sm:$0xf]
  %v2154 = vld [vmem:[%s2148 + $0x14] sm:$0xf]
  %v2155 = vld [vmem:[%s2148 + $0x18] sm:$0xf]
  %v2156 = vld [vmem:[%s2148 + $0x1c] sm:$0xf]
  %v2157 = vld [vmem:[%s2148 + $0x20] sm:$0xf]
  %v2158 = vld [vmem:[%s2148 + $0x24] sm:$0xf]
  %v2159 = vld [vmem:[%s2148 + $0x28] sm:$0xf]
  %v2160 = vld [vmem:[%s2148 + $0x2c] sm:$0xf]
  %v2161 = vld [vmem:[%s2148 + $0x30] sm:$0xf]
  %v2162 = vld [vmem:[%s2148 + $0x34] sm:$0xf]
  %v2163 = vld [vmem:[%s2148 + $0x38] sm:$0xf]
  %v2164 = vld [vmem:[%s2148 + $0x3c] sm:$0xf]
  %v2181 = vunpack.c.l.b16 %v2149
  %v2182 = vunpack.c.l.b16 %v2150
  %v2183 = vunpack.c.l.b16 %v2151
  %v2184 = vunpack.c.l.b16 %v2152
  %v2185 = vunpack.c.l.b16 %v2153
  %v2186 = vunpack.c.l.b16 %v2154
  %v2187 = vunpack.c.l.b16 %v2155
  %v2188 = vunpack.c.l.b16 %v2156
  %v2189 = vunpack.c.l.b16 %v2157
  %v2190 = vunpack.c.l.b16 %v2158
  %v2191 = vunpack.c.l.b16 %v2159
  %v2192 = vunpack.c.l.b16 %v2160
  %v2193 = vunpack.c.l.b16 %v2161
  %v2194 = vunpack.c.l.b16 %v2162
  %v2195 = vunpack.c.l.b16 %v2163
  %v2196 = vunpack.c.l.b16 %v2164
  %v2197 = vpack.c.b16 %v2182, %v2181
  %v2198 = vpack.c.b16 %v2184, %v2183
  %v2199 = vpack.c.b16 %v2186, %v2185
  %v2200 = vpack.c.b16 %v2188, %v2187
  %v2201 = vpack.c.b16 %v2190, %v2189
  %v2202 = vpack.c.b16 %v2192, %v2191
  %v2203 = vpack.c.b16 %v2194, %v2193
  %v2204 = vpack.c.b16 %v2196, %v2195
  %2213 = vmatprep.subr.bf16.mxu0 0
  %2214 = vmatpush1.bf16.msra.mxu0 %v2197
  %2215 = vmatprep.subr.bf16.mxu0 0
  %2216 = vmatpush1.bf16.msra.mxu0 %v2198
  %2217 = vmatprep.subr.bf16.mxu0 0
  %2218 = vmatpush1.bf16.msra.mxu0 %v2199
  %2219 = vmatprep.subr.bf16.mxu0 0
  %2220 = vmatpush1.bf16.msra.mxu0 %v2200
  %2221 = vmatprep.subr.bf16.mxu0 0
  %2222 = vmatpush1.bf16.msra.mxu0 %v2201
  %2223 = vmatprep.subr.bf16.mxu0 0
  %2224 = vmatpush1.bf16.msra.mxu0 %v2202
  %2225 = vmatprep.subr.bf16.mxu0 0
  %2226 = vmatpush1.bf16.msra.mxu0 %v2203
  %2227 = vmatprep.subr.bf16.mxu0 0
  %2228 = vmatpush1.bf16.msra.mxu0 %v2204
  %2229 = vmatprep.subr.bf16.mxu0 0
  %2230 = vmatpush1.bf16.msra.mxu0 0
  %2231 = vmatprep.subr.bf16.mxu0 0
  %2232 = vmatpush1.bf16.msra.mxu0 0
  %2233 = vmatprep.subr.bf16.mxu0 0
  %2234 = vmatpush1.bf16.msra.mxu0 0
  %2235 = vmatprep.subr.bf16.mxu0 0
  %2236 = vmatpush1.bf16.msra.mxu0 0
  %2237 = vmatprep.subr.bf16.mxu0 0
  %2238 = vmatpush1.bf16.msra.mxu0 0
  %2239 = vmatprep.subr.bf16.mxu0 0
  %2240 = vmatpush1.bf16.msra.mxu0 0
  %2241 = vmatprep.subr.bf16.mxu0 0
  %2242 = vmatpush1.bf16.msra.mxu0 0
  %2243 = vmatprep.subr.bf16.mxu0 0
  %2244 = vmatpush1.bf16.msra.mxu0 0
  %2245 = vmatprep.mubr.bf16.mxu0 0
  %2246 = vmatmul.mubr.bf16.gmra.mrb[0].mxu0 %v2140
  %v2247 = vpop.f32.mrb[0].mxu0
  %v2248 = vadd.f32 0.0, %v2247
  %v2249 = vpop.f32.mrb[0].mxu0
  %v2250 = vpop.f32.mrb[0].mxu0
  %v2251 = vadd.f32 0.0, %v2250
  %v2252 = vpop.f32.mrb[0].mxu0
  %2253 = vmatprep.mubr.bf16.mxu0 0
  %2254 = vmatmul.mubr.bf16.gmra.mrb[0].mxu0 %v2141
  %v2255 = vpop.f32.mrb[0].mxu0
  %v2256 = vadd.f32 0.0, %v2255
  %v2257 = vpop.f32.mrb[0].mxu0
  %v2258 = vpop.f32.mrb[0].mxu0
  %v2259 = vadd.f32 0.0, %v2258
  %v2260 = vpop.f32.mrb[0].mxu0
  %2261 = vmatprep.mubr.bf16.mxu0 0
  %2262 = vmatmul.mubr.bf16.gmra.mrb[0].mxu0 %v2142
  %v2263 = vpop.f32.mrb[0].mxu0
  %v2264 = vadd.f32 0.0, %v2263
  %v2265 = vpop.f32.mrb[0].mxu0
  %v2266 = vpop.f32.mrb[0].mxu0
  %v2267 = vadd.f32 0.0, %v2266
  %v2268 = vpop.f32.mrb[0].mxu0
  %2269 = vmatprep.mubr.bf16.mxu0 0
  %2270 = vmatmul.mubr.bf16.gmra.mrb[0].mxu0 %v2143
  %v2271 = vpop.f32.mrb[0].mxu0
  %v2272 = vadd.f32 0.0, %v2271
  %v2273 = vpop.f32.mrb[0].mxu0
  %v2274 = vpop.f32.mrb[0].mxu0
  %v2275 = vadd.f32 0.0, %v2274
  %v2276 = vpop.f32.mrb[0].mxu0
  %2277 = vmatprep.mubr.bf16.mxu0 0
  %2278 = vmatmul.mubr.bf16.gmra.mrb[0].mxu0 %v2144
  %v2279 = vpop.f32.mrb[0].mxu0
  %v2280 = vadd.f32 0.0, %v2279
  %v2281 = vpop.f32.mrb[0].mxu0
  %v2282 = vpop.f32.mrb[0].mxu0
  %v2283 = vadd.f32 0.0, %v2282
  %v2284 = vpop.f32.mrb[0].mxu0
  %2285 = vmatprep.mubr.bf16.mxu0 0
  %2286 = vmatmul.mubr.bf16.gmra.mrb[0].mxu0 %v2145
  %v2287 = vpop.f32.mrb[0].mxu0
  %v2288 = vadd.f32 0.0, %v2287
  %v2289 = vpop.f32.mrb[0].mxu0
  %v2290 = vpop.f32.mrb[0].mxu0
  %v2291 = vadd.f32 0.0, %v2290
  %v2292 = vpop.f32.mrb[0].mxu0
  %2293 = vmatprep.mubr.bf16.mxu0 0
  %2294 = vmatmul.mubr.bf16.gmra.mrb[0].mxu0 %v2146
  %v2295 = vpop.f32.mrb[0].mxu0
  %v2296 = vadd.f32 0.0, %v2295
  %v2297 = vpop.f32.mrb[0].mxu0
  %v2298 = vpop.f32.mrb[0].mxu0
  %v2299 = vadd.f32 0.0, %v2298
  %v2300 = vpop.f32.mrb[0].mxu0
  %2301 = vmatprep.mubr.bf16.mxu0 0
  %2302 = vmatmul.mubr.bf16.gmra.mrb[0].mxu0 %v2147
  %v2303 = vpop.f32.mrb[0].mxu0
  %v2304 = vadd.f32 0.0, %v2303
  %v2305 = vpop.f32.mrb[0].mxu0
  %v2306 = vpop.f32.mrb[0].mxu0
  %v2307 = vadd.f32 0.0, %v2306
  %v2308 = vpop.f32.mrb[0].mxu0
  %2309 = vdwg.mxu0
  %v2326 = vunpack.c.l.b16 %v2108
  %v2327 = vunpack.c.l.b16 %v2109
  %v2328 = vunpack.c.l.b16 %v2110
  %v2329 = vunpack.c.l.b16 %v2111
  %v2330 = vunpack.c.l.b16 %v2112
  %v2331 = vunpack.c.l.b16 %v2113
  %v2332 = vunpack.c.l.b16 %v2114
  %v2333 = vunpack.c.l.b16 %v2115
  %v2334 = vunpack.c.l.b16 %v2116
  %v2335 = vunpack.c.l.b16 %v2117
  %v2336 = vunpack.c.l.b16 %v2118
  %v2337 = vunpack.c.l.b16 %v2119
  %v2338 = vunpack.c.l.b16 %v2120
  %v2339 = vunpack.c.l.b16 %v2121
  %v2340 = vunpack.c.l.b16 %v2122
  %v2341 = vunpack.c.l.b16 %v2123
  %v2342 = vpack.c.b16 %v2327, %v2326
  %v2343 = vpack.c.b16 %v2329, %v2328
  %v2344 = vpack.c.b16 %v2331, %v2330
  %v2345 = vpack.c.b16 %v2333, %v2332
  %v2346 = vpack.c.b16 %v2335, %v2334
  %v2347 = vpack.c.b16 %v2337, %v2336
  %v2348 = vpack.c.b16 %v2339, %v2338
  %v2349 = vpack.c.b16 %v2341, %v2340
  %2358 = vmatprep.subr.bf16.mxu0 0
  %2359 = vmatpush1.bf16.msra.mxu0 %v2342
  %2360 = vmatprep.subr.bf16.mxu0 0
  %2361 = vmatpush1.bf16.msra.mxu0 %v2343
  %2362 = vmatprep.subr.bf16.mxu0 0
  %2363 = vmatpush1.bf16.msra.mxu0 %v2344
  %2364 = vmatprep.subr.bf16.mxu0 0
  %2365 = vmatpush1.bf16.msra.mxu0 %v2345
  %2366 = vmatprep.subr.bf16.mxu0 0
  %2367 = vmatpush1.bf16.msra.mxu0 %v2346
  %2368 = vmatprep.subr.bf16.mxu0 0
  %2369 = vmatpush1.bf16.msra.mxu0 %v2347
  %2370 = vmatprep.subr.bf16.mxu0 0
  %2371 = vmatpush1.bf16.msra.mxu0 %v2348
  %2372 = vmatprep.subr.bf16.mxu0 0
  %2373 = vmatpush1.bf16.msra.mxu0 %v2349
  %2374 = vmatprep.subr.bf16.mxu0 0
  %2375 = vmatpush1.bf16.msra.mxu0 0
  %2376 = vmatprep.subr.bf16.mxu0 0
  %2377 = vmatpush1.bf16.msra.mxu0 0
  %2378 = vmatprep.subr.bf16.mxu0 0
  %2379 = vmatpush1.bf16.msra.mxu0 0
  %2380 = vmatprep.subr.bf16.mxu0 0
  %2381 = vmatpush1.bf16.msra.mxu0 0
  %2382 = vmatprep.subr.bf16.mxu0 0
  %2383 = vmatpush1.bf16.msra.mxu0 0
  %2384 = vmatprep.subr.bf16.mxu0 0
  %2385 = vmatpush1.bf16.msra.mxu0 0
  %2386 = vmatprep.subr.bf16.mxu0 0
  %2387 = vmatpush1.bf16.msra.mxu0 0
  %2388 = vmatprep.subr.bf16.mxu0 0
  %2389 = vmatpush1.bf16.msra.mxu0 0
  %2390 = vmatprep.mubr.bf16.mxu0 0
  %2391 = vmatmul.mubr.bf16.gmra.mrb[0].mxu0 %v2100
  %v2392 = vpop.f32.mrb[0].mxu0
  %v2393 = vadd.f32 %v2248, %v2392
  %v2394 = vpop.f32.mrb[0].mxu0
  %v2395 = vpop.f32.mrb[0].mxu0
  %v2396 = vadd.f32 %v2251, %v2395
  %v2397 = vpop.f32.mrb[0].mxu0
  %2398 = vmatprep.mubr.bf16.mxu0 0
  %2399 = vmatmul.mubr.bf16.gmra.mrb[0].mxu0 %v2101
  %v2400 = vpop.f32.mrb[0].mxu0
  %v2401 = vadd.f32 %v2256, %v2400
  %v2402 = vpop.f32.mrb[0].mxu0
  %v2403 = vpop.f32.mrb[0].mxu0
  %v2404 = vadd.f32 %v2259, %v2403
  %v2405 = vpop.f32.mrb[0].mxu0
  %2406 = vmatprep.mubr.bf16.mxu0 0
  %2407 = vmatmul.mubr.bf16.gmra.mrb[0].mxu0 %v2102
  %v2408 = vpop.f32.mrb[0].mxu0
  %v2409 = vadd.f32 %v2264, %v2408
  %v2410 = vpop.f32.mrb[0].mxu0
  %v2411 = vpop.f32.mrb[0].mxu0
  %v2412 = vadd.f32 %v2267, %v2411
  %v2413 = vpop.f32.mrb[0].mxu0
  %2414 = vmatprep.mubr.bf16.mxu0 0
  %2415 = vmatmul.mubr.bf16.gmra.mrb[0].mxu0 %v2103
  %v2416 = vpop.f32.mrb[0].mxu0
  %v2417 = vadd.f32 %v2272, %v2416
  %v2418 = vpop.f32.mrb[0].mxu0
  %v2419 = vpop.f32.mrb[0].mxu0
  %v2420 = vadd.f32 %v2275, %v2419
  %v2421 = vpop.f32.mrb[0].mxu0
  %2422 = vmatprep.mubr.bf16.mxu0 0
  %2423 = vmatmul.mubr.bf16.gmra.mrb[0].mxu0 %v2104
  %v2424 = vpop.f32.mrb[0].mxu0
  %v2425 = vadd.f32 %v2280, %v2424
  %v2426 = vpop.f32.mrb[0].mxu0
  %v2427 = vpop.f32.mrb[0].mxu0
  %v2428 = vadd.f32 %v2283, %v2427
  %v2429 = vpop.f32.mrb[0].mxu0
  %2430 = vmatprep.mubr.bf16.mxu0 0
  %2431 = vmatmul.mubr.bf16.gmra.mrb[0].mxu0 %v2105
  %v2432 = vpop.f32.mrb[0].mxu0
  %v2433 = vadd.f32 %v2288, %v2432
  %v2434 = vpop.f32.mrb[0].mxu0
  %v2435 = vpop.f32.mrb[0].mxu0
  %v2436 = vadd.f32 %v2291, %v2435
  %v2437 = vpop.f32.mrb[0].mxu0
  %2438 = vmatprep.mubr.bf16.mxu0 0
  %2439 = vmatmul.mubr.bf16.gmra.mrb[0].mxu0 %v2106
  %v2440 = vpop.f32.mrb[0].mxu0
  %v2441 = vadd.f32 %v2296, %v2440
  %v2442 = vpop.f32.mrb[0].mxu0
  %v2443 = vpop.f32.mrb[0].mxu0
  %v2444 = vadd.f32 %v2299, %v2443
  %v2445 = vpop.f32.mrb[0].mxu0
  %2446 = vmatprep.mubr.bf16.mxu0 0
  %2447 = vmatmul.mubr.bf16.gmra.mrb[0].mxu0 %v2107
  %v2448 = vpop.f32.mrb[0].mxu0
  %v2449 = vadd.f32 %v2304, %v2448
  %v2450 = vpop.f32.mrb[0].mxu0
  %v2451 = vpop.f32.mrb[0].mxu0
  %v2452 = vadd.f32 %v2307, %v2451
  %v2453 = vpop.f32.mrb[0].mxu0
  %2454 = vdwg.mxu0
  %v2455 = vld [vmem:[#allocation2 + $0x2] sm:$0xff]
  %v2456 = vld [vmem:[#allocation2 + $0x12] sm:$0xff]
  %v2457 = vld [vmem:[#allocation2 + $0x22] sm:$0xff]
  %v2458 = vld [vmem:[#allocation2 + $0x32] sm:$0xff]
  %v2459 = vld [vmem:[#allocation2 + $0x42] sm:$0xff]
  %v2460 = vld [vmem:[#allocation2 + $0x52] sm:$0xff]
  %v2461 = vld [vmem:[#allocation2 + $0x62] sm:$0xff]
  %v2462 = vld [vmem:[#allocation2 + $0x72] sm:$0xff]
  %v2463 = vld [vmem:[#allocation2 + $0xa2] sm:$0xff]
  %v2464 = vld [vmem:[#allocation2 + $0xb2] sm:$0xff]
  %v2465 = vld [vmem:[#allocation2 + $0xc2] sm:$0xff]
  %v2466 = vld [vmem:[#allocation2 + $0xd2] sm:$0xff]
  %v2467 = vld [vmem:[#allocation2 + $0xe2] sm:$0xff]
  %v2468 = vld [vmem:[#allocation2 + $0xf2] sm:$0xff]
  %v2469 = vld [vmem:[#allocation2 + $0x102] sm:$0xff]
  %v2470 = vld [vmem:[#allocation2 + $0x112] sm:$0xff]
  %v2471 = vpack.c.bf16 %v2456, %v2455
  %v2472 = vpack.c.bf16 %v2458, %v2457
  %v2473 = vpack.c.bf16 %v2460, %v2459
  %v2474 = vpack.c.bf16 %v2462, %v2461
  %v2475 = vpack.c.bf16 %v2464, %v2463
  %v2476 = vpack.c.bf16 %v2466, %v2465
  %v2477 = vpack.c.bf16 %v2468, %v2467
  %v2478 = vpack.c.bf16 %v2470, %v2469
  %s2479 = scalar_lea.vmem %s5, 128
  %v2480 = vld [vmem:[%s2479] sm:$0xf]
  %v2481 = vld [vmem:[%s2479 + $0x4] sm:$0xf]
  %v2482 = vld [vmem:[%s2479 + $0x8] sm:$0xf]
  %v2483 = vld [vmem:[%s2479 + $0xc] sm:$0xf]
  %v2484 = vld [vmem:[%s2479 + $0x10] sm:$0xf]
  %v2485 = vld [vmem:[%s2479 + $0x14] sm:$0xf]
  %v2486 = vld [vmem:[%s2479 + $0x18] sm:$0xf]
  %v2487 = vld [vmem:[%s2479 + $0x1c] sm:$0xf]
  %v2488 = vld [vmem:[%s2479 + $0x20] sm:$0xf]
  %v2489 = vld [vmem:[%s2479 + $0x24] sm:$0xf]
  %v2490 = vld [vmem:[%s2479 + $0x28] sm:$0xf]
  %v2491 = vld [vmem:[%s2479 + $0x2c] sm:$0xf]
  %v2492 = vld [vmem:[%s2479 + $0x30] sm:$0xf]
  %v2493 = vld [vmem:[%s2479 + $0x34] sm:$0xf]
  %v2494 = vld [vmem:[%s2479 + $0x38] sm:$0xf]
  %v2495 = vld [vmem:[%s2479 + $0x3c] sm:$0xf]
  %v2512 = vunpack.c.l.b16 %v2480
  %v2513 = vunpack.c.l.b16 %v2481
  %v2514 = vunpack.c.l.b16 %v2482
  %v2515 = vunpack.c.l.b16 %v2483
  %v2516 = vunpack.c.l.b16 %v2484
  %v2517 = vunpack.c.l.b16 %v2485
  %v2518 = vunpack.c.l.b16 %v2486
  %v2519 = vunpack.c.l.b16 %v2487
  %v2520 = vunpack.c.l.b16 %v2488
  %v2521 = vunpack.c.l.b16 %v2489
  %v2522 = vunpack.c.l.b16 %v2490
  %v2523 = vunpack.c.l.b16 %v2491
  %v2524 = vunpack.c.l.b16 %v2492
  %v2525 = vunpack.c.l.b16 %v2493
  %v2526 = vunpack.c.l.b16 %v2494
  %v2527 = vunpack.c.l.b16 %v2495
  %v2528 = vpack.c.b16 %v2513, %v2512
  %v2529 = vpack.c.b16 %v2515, %v2514
  %v2530 = vpack.c.b16 %v2517, %v2516
  %v2531 = vpack.c.b16 %v2519, %v2518
  %v2532 = vpack.c.b16 %v2521, %v2520
  %v2533 = vpack.c.b16 %v2523, %v2522
  %v2534 = vpack.c.b16 %v2525, %v2524
  %v2535 = vpack.c.b16 %v2527, %v2526
  %2544 = vmatprep.subr.bf16.mxu0 0
  %2545 = vmatpush1.bf16.msra.mxu0 %v2528
  %2546 = vmatprep.subr.bf16.mxu0 0
  %2547 = vmatpush1.bf16.msra.mxu0 %v2529
  %2548 = vmatprep.subr.bf16.mxu0 0
  %2549 = vmatpush1.bf16.msra.mxu0 %v2530
  %2550 = vmatprep.subr.bf16.mxu0 0
  %2551 = vmatpush1.bf16.msra.mxu0 %v2531
  %2552 = vmatprep.subr.bf16.mxu0 0
  %2553 = vmatpush1.bf16.msra.mxu0 %v2532
  %2554 = vmatprep.subr.bf16.mxu0 0
  %2555 = vmatpush1.bf16.msra.mxu0 %v2533
  %2556 = vmatprep.subr.bf16.mxu0 0
  %2557 = vmatpush1.bf16.msra.mxu0 %v2534
  %2558 = vmatprep.subr.bf16.mxu0 0
  %2559 = vmatpush1.bf16.msra.mxu0 %v2535
  %2560 = vmatprep.subr.bf16.mxu0 0
  %2561 = vmatpush1.bf16.msra.mxu0 0
  %2562 = vmatprep.subr.bf16.mxu0 0
  %2563 = vmatpush1.bf16.msra.mxu0 0
  %2564 = vmatprep.subr.bf16.mxu0 0
  %2565 = vmatpush1.bf16.msra.mxu0 0
  %2566 = vmatprep.subr.bf16.mxu0 0
  %2567 = vmatpush1.bf16.msra.mxu0 0
  %2568 = vmatprep.subr.bf16.mxu0 0
  %2569 = vmatpush1.bf16.msra.mxu0 0
  %2570 = vmatprep.subr.bf16.mxu0 0
  %2571 = vmatpush1.bf16.msra.mxu0 0
  %2572 = vmatprep.subr.bf16.mxu0 0
  %2573 = vmatpush1.bf16.msra.mxu0 0
  %2574 = vmatprep.subr.bf16.mxu0 0
  %2575 = vmatpush1.bf16.msra.mxu0 0
  %2576 = vmatprep.mubr.bf16.mxu0 0
  %2577 = vmatmul.mubr.bf16.gmra.mrb[0].mxu0 %v2471
  %v2578 = vpop.f32.mrb[0].mxu0
  %v2579 = vadd.f32 0.0, %v2578
  %v2580 = vpop.f32.mrb[0].mxu0
  %v2581 = vpop.f32.mrb[0].mxu0
  %v2582 = vadd.f32 0.0, %v2581
  %v2583 = vpop.f32.mrb[0].mxu0
  %2584 = vmatprep.mubr.bf16.mxu0 0
  %2585 = vmatmul.mubr.bf16.gmra.mrb[0].mxu0 %v2472
  %v2586 = vpop.f32.mrb[0].mxu0
  %v2587 = vadd.f32 0.0, %v2586
  %v2588 = vpop.f32.mrb[0].mxu0
  %v2589 = vpop.f32.mrb[0].mxu0
  %v2590 = vadd.f32 0.0, %v2589
  %v2591 = vpop.f32.mrb[0].mxu0
  %2592 = vmatprep.mubr.bf16.mxu0 0
  %2593 = vmatmul.mubr.bf16.gmra.mrb[0].mxu0 %v2473
  %v2594 = vpop.f32.mrb[0].mxu0
  %v2595 = vadd.f32 0.0, %v2594
  %v2596 = vpop.f32.mrb[0].mxu0
  %v2597 = vpop.f32.mrb[0].mxu0
  %v2598 = vadd.f32 0.0, %v2597
  %v2599 = vpop.f32.mrb[0].mxu0
  %2600 = vmatprep.mubr.bf16.mxu0 0
  %2601 = vmatmul.mubr.bf16.gmra.mrb[0].mxu0 %v2474
  %v2602 = vpop.f32.mrb[0].mxu0
  %v2603 = vadd.f32 0.0, %v2602
  %v2604 = vpop.f32.mrb[0].mxu0
  %v2605 = vpop.f32.mrb[0].mxu0
  %v2606 = vadd.f32 0.0, %v2605
  %v2607 = vpop.f32.mrb[0].mxu0
  %2608 = vmatprep.mubr.bf16.mxu0 0
  %2609 = vmatmul.mubr.bf16.gmra.mrb[0].mxu0 %v2475
  %v2610 = vpop.f32.mrb[0].mxu0
  %v2611 = vadd.f32 0.0, %v2610
  %v2612 = vpop.f32.mrb[0].mxu0
  %v2613 = vpop.f32.mrb[0].mxu0
  %v2614 = vadd.f32 0.0, %v2613
  %v2615 = vpop.f32.mrb[0].mxu0
  %2616 = vmatprep.mubr.bf16.mxu0 0
  %2617 = vmatmul.mubr.bf16.gmra.mrb[0].mxu0 %v2476
  %v2618 = vpop.f32.mrb[0].mxu0
  %v2619 = vadd.f32 0.0, %v2618
  %v2620 = vpop.f32.mrb[0].mxu0
  %v2621 = vpop.f32.mrb[0].mxu0
  %v2622 = vadd.f32 0.0, %v2621
  %v2623 = vpop.f32.mrb[0].mxu0
  %2624 = vmatprep.mubr.bf16.mxu0 0
  %2625 = vmatmul.mubr.bf16.gmra.mrb[0].mxu0 %v2477
  %v2626 = vpop.f32.mrb[0].mxu0
  %v2627 = vadd.f32 0.0, %v2626
  %v2628 = vpop.f32.mrb[0].mxu0
  %v2629 = vpop.f32.mrb[0].mxu0
  %v2630 = vadd.f32 0.0, %v2629
  %v2631 = vpop.f32.mrb[0].mxu0
  %2632 = vmatprep.mubr.bf16.mxu0 0
  %2633 = vmatmul.mubr.bf16.gmra.mrb[0].mxu0 %v2478
  %v2634 = vpop.f32.mrb[0].mxu0
  %v2635 = vadd.f32 0.0, %v2634
  %v2636 = vpop.f32.mrb[0].mxu0
  %v2637 = vpop.f32.mrb[0].mxu0
  %v2638 = vadd.f32 0.0, %v2637
  %v2639 = vpop.f32.mrb[0].mxu0
  %2640 = vdwg.mxu0
  %v2641 = vadd.f32 %v2393, %v2579
  %v2642 = vadd.f32 %v2396, %v2582
  %v2643 = vadd.f32 %v2401, %v2587
  %v2644 = vadd.f32 %v2404, %v2590
  %v2645 = vadd.f32 %v2409, %v2595
  %v2646 = vadd.f32 %v2412, %v2598
  %v2647 = vadd.f32 %v2417, %v2603
  %v2648 = vadd.f32 %v2420, %v2606
  %v2649 = vadd.f32 %v2425, %v2611
  %v2650 = vadd.f32 %v2428, %v2614
  %v2651 = vadd.f32 %v2433, %v2619
  %v2652 = vadd.f32 %v2436, %v2622
  %v2653 = vadd.f32 %v2441, %v2627
  %v2654 = vadd.f32 %v2444, %v2630
  %v2655 = vadd.f32 %v2449, %v2635
  %v2656 = vadd.f32 %v2452, %v2638
  %v2657 = vld [vmem:[%s106] sm:$0xff]
  %v2658 = vld [vmem:[%s106 + $0x10] sm:$0xff]
  %v2659 = vld [vmem:[%s106 + $0x20] sm:$0xff]
  %v2660 = vld [vmem:[%s106 + $0x30] sm:$0xff]
  %v2661 = vld [vmem:[%s106 + $0x40] sm:$0xff]
  %v2662 = vld [vmem:[%s106 + $0x50] sm:$0xff]
  %v2663 = vld [vmem:[%s106 + $0x60] sm:$0xff]
  %v2664 = vld [vmem:[%s106 + $0x70] sm:$0xff]
  %v2665 = vld [vmem:[%s106 + $0xa0] sm:$0xff]
  %v2666 = vld [vmem:[%s106 + $0xb0] sm:$0xff]
  %v2667 = vld [vmem:[%s106 + $0xc0] sm:$0xff]
  %v2668 = vld [vmem:[%s106 + $0xd0] sm:$0xff]
  %v2669 = vld [vmem:[%s106 + $0xe0] sm:$0xff]
  %v2670 = vld [vmem:[%s106 + $0xf0] sm:$0xff]
  %v2671 = vld [vmem:[%s106 + $0x100] sm:$0xff]
  %v2672 = vld [vmem:[%s106 + $0x110] sm:$0xff]
  %v2673 = vpack.c.bf16 %v2658, %v2657
  %v2674 = vpack.c.bf16 %v2660, %v2659
  %v2675 = vpack.c.bf16 %v2662, %v2661
  %v2676 = vpack.c.bf16 %v2664, %v2663
  %v2677 = vpack.c.bf16 %v2666, %v2665
  %v2678 = vpack.c.bf16 %v2668, %v2667
  %v2679 = vpack.c.bf16 %v2670, %v2669
  %v2680 = vpack.c.bf16 %v2672, %v2671
  %s2681 = scalar_lea.vmem %s5, 192
  %v2682 = vld [vmem:[%s2681] sm:$0xf]
  %v2683 = vld [vmem:[%s2681 + $0x4] sm:$0xf]
  %v2684 = vld [vmem:[%s2681 + $0x8] sm:$0xf]
  %v2685 = vld [vmem:[%s2681 + $0xc] sm:$0xf]
  %v2686 = vld [vmem:[%s2681 + $0x10] sm:$0xf]
  %v2687 = vld [vmem:[%s2681 + $0x14] sm:$0xf]
  %v2688 = vld [vmem:[%s2681 + $0x18] sm:$0xf]
  %v2689 = vld [vmem:[%s2681 + $0x1c] sm:$0xf]
  %v2690 = vld [vmem:[%s2681 + $0x20] sm:$0xf]
  %v2691 = vld [vmem:[%s2681 + $0x24] sm:$0xf]
  %v2692 = vld [vmem:[%s2681 + $0x28] sm:$0xf]
  %v2693 = vld [vmem:[%s2681 + $0x2c] sm:$0xf]
  %v2694 = vld [vmem:[%s2681 + $0x30] sm:$0xf]
  %v2695 = vld [vmem:[%s2681 + $0x34] sm:$0xf]
  %v2696 = vld [vmem:[%s2681 + $0x38] sm:$0xf]
  %v2697 = vld [vmem:[%s2681 + $0x3c] sm:$0xf]
  %v2714 = vunpack.c.l.b16 %v2682
  %v2715 = vunpack.c.l.b16 %v2683
  %v2716 = vunpack.c.l.b16 %v2684
  %v2717 = vunpack.c.l.b16 %v2685
  %v2718 = vunpack.c.l.b16 %v2686
  %v2719 = vunpack.c.l.b16 %v2687
  %v2720 = vunpack.c.l.b16 %v2688
  %v2721 = vunpack.c.l.b16 %v2689
  %v2722 = vunpack.c.l.b16 %v2690
  %v2723 = vunpack.c.l.b16 %v2691
  %v2724 = vunpack.c.l.b16 %v2692
  %v2725 = vunpack.c.l.b16 %v2693
  %v2726 = vunpack.c.l.b16 %v2694
  %v2727 = vunpack.c.l.b16 %v2695
  %v2728 = vunpack.c.l.b16 %v2696
  %v2729 = vunpack.c.l.b16 %v2697
  %v2730 = vpack.c.b16 %v2715, %v2714
  %v2731 = vpack.c.b16 %v2717, %v2716
  %v2732 = vpack.c.b16 %v2719, %v2718
  %v2733 = vpack.c.b16 %v2721, %v2720
  %v2734 = vpack.c.b16 %v2723, %v2722
  %v2735 = vpack.c.b16 %v2725, %v2724
  %v2736 = vpack.c.b16 %v2727, %v2726
  %v2737 = vpack.c.b16 %v2729, %v2728
  %2746 = vmatprep.subr.bf16.mxu0 0
  %2747 = vmatpush1.bf16.msra.mxu0 %v2730
  %2748 = vmatprep.subr.bf16.mxu0 0
  %2749 = vmatpush1.bf16.msra.mxu0 %v2731
  %2750 = vmatprep.subr.bf16.mxu0 0
  %2751 = vmatpush1.bf16.msra.mxu0 %v2732
  %2752 = vmatprep.subr.bf16.mxu0 0
  %2753 = vmatpush1.bf16.msra.mxu0 %v2733
  %2754 = vmatprep.subr.bf16.mxu0 0
  %2755 = vmatpush1.bf16.msra.mxu0 %v2734
  %2756 = vmatprep.subr.bf16.mxu0 0
  %2757 = vmatpush1.bf16.msra.mxu0 %v2735
  %2758 = vmatprep.subr.bf16.mxu0 0
  %2759 = vmatpush1.bf16.msra.mxu0 %v2736
  %2760 = vmatprep.subr.bf16.mxu0 0
  %2761 = vmatpush1.bf16.msra.mxu0 %v2737
  %2762 = vmatprep.subr.bf16.mxu0 0
  %2763 = vmatpush1.bf16.msra.mxu0 0
  %2764 = vmatprep.subr.bf16.mxu0 0
  %2765 = vmatpush1.bf16.msra.mxu0 0
  %2766 = vmatprep.subr.bf16.mxu0 0
  %2767 = vmatpush1.bf16.msra.mxu0 0
  %2768 = vmatprep.subr.bf16.mxu0 0
  %2769 = vmatpush1.bf16.msra.mxu0 0
  %2770 = vmatprep.subr.bf16.mxu0 0
  %2771 = vmatpush1.bf16.msra.mxu0 0
  %2772 = vmatprep.subr.bf16.mxu0 0
  %2773 = vmatpush1.bf16.msra.mxu0 0
  %2774 = vmatprep.subr.bf16.mxu0 0
  %2775 = vmatpush1.bf16.msra.mxu0 0
  %2776 = vmatprep.subr.bf16.mxu0 0
  %2777 = vmatpush1.bf16.msra.mxu0 0
  %2778 = vmatprep.mubr.bf16.mxu0 0
  %2779 = vmatmul.mubr.bf16.gmra.mrb[0].mxu0 %v2673
  %v2780 = vpop.f32.mrb[0].mxu0
  %v2781 = vadd.f32 0.0, %v2780
  %v2782 = vpop.f32.mrb[0].mxu0
  %v2783 = vpop.f32.mrb[0].mxu0
  %v2784 = vadd.f32 0.0, %v2783
  %v2785 = vpop.f32.mrb[0].mxu0
  %2786 = vmatprep.mubr.bf16.mxu0 0
  %2787 = vmatmul.mubr.bf16.gmra.mrb[0].mxu0 %v2674
  %v2788 = vpop.f32.mrb[0].mxu0
  %v2789 = vadd.f32 0.0, %v2788
  %v2790 = vpop.f32.mrb[0].mxu0
  %v2791 = vpop.f32.mrb[0].mxu0
  %v2792 = vadd.f32 0.0, %v2791
  %v2793 = vpop.f32.mrb[0].mxu0
  %2794 = vmatprep.mubr.bf16.mxu0 0
  %2795 = vmatmul.mubr.bf16.gmra.mrb[0].mxu0 %v2675
  %v2796 = vpop.f32.mrb[0].mxu0
  %v2797 = vadd.f32 0.0, %v2796
  %v2798 = vpop.f32.mrb[0].mxu0
  %v2799 = vpop.f32.mrb[0].mxu0
  %v2800 = vadd.f32 0.0, %v2799
  %v2801 = vpop.f32.mrb[0].mxu0
  %2802 = vmatprep.mubr.bf16.mxu0 0
  %2803 = vmatmul.mubr.bf16.gmra.mrb[0].mxu0 %v2676
  %v2804 = vpop.f32.mrb[0].mxu0
  %v2805 = vadd.f32 0.0, %v2804
  %v2806 = vpop.f32.mrb[0].mxu0
  %v2807 = vpop.f32.mrb[0].mxu0
  %v2808 = vadd.f32 0.0, %v2807
  %v2809 = vpop.f32.mrb[0].mxu0
  %2810 = vmatprep.mubr.bf16.mxu0 0
  %2811 = vmatmul.mubr.bf16.gmra.mrb[0].mxu0 %v2677
  %v2812 = vpop.f32.mrb[0].mxu0
  %v2813 = vadd.f32 0.0, %v2812
  %v2814 = vpop.f32.mrb[0].mxu0
  %v2815 = vpop.f32.mrb[0].mxu0
  %v2816 = vadd.f32 0.0, %v2815
  %v2817 = vpop.f32.mrb[0].mxu0
  %2818 = vmatprep.mubr.bf16.mxu0 0
  %2819 = vmatmul.mubr.bf16.gmra.mrb[0].mxu0 %v2678
  %v2820 = vpop.f32.mrb[0].mxu0
  %v2821 = vadd.f32 0.0, %v2820
  %v2822 = vpop.f32.mrb[0].mxu0
  %v2823 = vpop.f32.mrb[0].mxu0
  %v2824 = vadd.f32 0.0, %v2823
  %v2825 = vpop.f32.mrb[0].mxu0
  %2826 = vmatprep.mubr.bf16.mxu0 0
  %2827 = vmatmul.mubr.bf16.gmra.mrb[0].mxu0 %v2679
  %v2828 = vpop.f32.mrb[0].mxu0
  %v2829 = vadd.f32 0.0, %v2828
  %v2830 = vpop.f32.mrb[0].mxu0
  %v2831 = vpop.f32.mrb[0].mxu0
  %v2832 = vadd.f32 0.0, %v2831
  %v2833 = vpop.f32.mrb[0].mxu0
  %2834 = vmatprep.mubr.bf16.mxu0 0
  %2835 = vmatmul.mubr.bf16.gmra.mrb[0].mxu0 %v2680
  %v2836 = vpop.f32.mrb[0].mxu0
  %v2837 = vadd.f32 0.0, %v2836
  %v2838 = vpop.f32.mrb[0].mxu0
  %v2839 = vpop.f32.mrb[0].mxu0
  %v2840 = vadd.f32 0.0, %v2839
  %v2841 = vpop.f32.mrb[0].mxu0
  %2842 = vdwg.mxu0
  %v2843 = vadd.f32 %v2641, %v2781
  %v2844 = vadd.f32 %v2642, %v2784
  %v2845 = vadd.f32 %v2643, %v2789
  %v2846 = vadd.f32 %v2644, %v2792
  %v2847 = vadd.f32 %v2645, %v2797
  %v2848 = vadd.f32 %v2646, %v2800
  %v2849 = vadd.f32 %v2647, %v2805
  %v2850 = vadd.f32 %v2648, %v2808
  %v2851 = vadd.f32 %v2649, %v2813
  %v2852 = vadd.f32 %v2650, %v2816
  %v2853 = vadd.f32 %v2651, %v2821
  %v2854 = vadd.f32 %v2652, %v2824
  %v2855 = vadd.f32 %v2653, %v2829
  %v2856 = vadd.f32 %v2654, %v2832
  %v2857 = vadd.f32 %v2655, %v2837
  %v2858 = vadd.f32 %v2656, %v2840
  %v2859 = vld [vmem:[%s106 + $0x1] sm:$0xff]
  %v2860 = vld [vmem:[%s106 + $0x11] sm:$0xff]
  %v2861 = vld [vmem:[%s106 + $0x21] sm:$0xff]
  %v2862 = vld [vmem:[%s106 + $0x31] sm:$0xff]
  %v2863 = vld [vmem:[%s106 + $0x41] sm:$0xff]
  %v2864 = vld [vmem:[%s106 + $0x51] sm:$0xff]
  %v2865 = vld [vmem:[%s106 + $0x61] sm:$0xff]
  %v2866 = vld [vmem:[%s106 + $0x71] sm:$0xff]
  %v2867 = vld [vmem:[%s106 + $0xa1] sm:$0xff]
  %v2868 = vld [vmem:[%s106 + $0xb1] sm:$0xff]
  %v2869 = vld [vmem:[%s106 + $0xc1] sm:$0xff]
  %v2870 = vld [vmem:[%s106 + $0xd1] sm:$0xff]
  %v2871 = vld [vmem:[%s106 + $0xe1] sm:$0xff]
  %v2872 = vld [vmem:[%s106 + $0xf1] sm:$0xff]
  %v2873 = vld [vmem:[%s106 + $0x101] sm:$0xff]
  %v2874 = vld [vmem:[%s106 + $0x111] sm:$0xff]
  %v2875 = vpack.c.bf16 %v2860, %v2859
  %v2876 = vpack.c.bf16 %v2862, %v2861
  %v2877 = vpack.c.bf16 %v2864, %v2863
  %v2878 = vpack.c.bf16 %v2866, %v2865
  %v2879 = vpack.c.bf16 %v2868, %v2867
  %v2880 = vpack.c.bf16 %v2870, %v2869
  %v2881 = vpack.c.bf16 %v2872, %v2871
  %v2882 = vpack.c.bf16 %v2874, %v2873
  %s2883 = scalar_lea.vmem %s5, 256
  %v2884 = vld [vmem:[%s2883] sm:$0xf]
  %v2885 = vld [vmem:[%s2883 + $0x4] sm:$0xf]
  %v2886 = vld [vmem:[%s2883 + $0x8] sm:$0xf]
  %v2887 = vld [vmem:[%s2883 + $0xc] sm:$0xf]
  %v2888 = vld [vmem:[%s2883 + $0x10] sm:$0xf]
  %v2889 = vld [vmem:[%s2883 + $0x14] sm:$0xf]
  %v2890 = vld [vmem:[%s2883 + $0x18] sm:$0xf]
  %v2891 = vld [vmem:[%s2883 + $0x1c] sm:$0xf]
  %v2892 = vld [vmem:[%s2883 + $0x20] sm:$0xf]
  %v2893 = vld [vmem:[%s2883 + $0x24] sm:$0xf]
  %v2894 = vld [vmem:[%s2883 + $0x28] sm:$0xf]
  %v2895 = vld [vmem:[%s2883 + $0x2c] sm:$0xf]
  %v2896 = vld [vmem:[%s2883 + $0x30] sm:$0xf]
  %v2897 = vld [vmem:[%s2883 + $0x34] sm:$0xf]
  %v2898 = vld [vmem:[%s2883 + $0x38] sm:$0xf]
  %v2899 = vld [vmem:[%s2883 + $0x3c] sm:$0xf]
  %v2916 = vunpack.c.l.b16 %v2884
  %v2917 = vunpack.c.l.b16 %v2885
  %v2918 = vunpack.c.l.b16 %v2886
  %v2919 = vunpack.c.l.b16 %v2887
  %v2920 = vunpack.c.l.b16 %v2888
  %v2921 = vunpack.c.l.b16 %v2889
  %v2922 = vunpack.c.l.b16 %v2890
  %v2923 = vunpack.c.l.b16 %v2891
  %v2924 = vunpack.c.l.b16 %v2892
  %v2925 = vunpack.c.l.b16 %v2893
  %v2926 = vunpack.c.l.b16 %v2894
  %v2927 = vunpack.c.l.b16 %v2895
  %v2928 = vunpack.c.l.b16 %v2896
  %v2929 = vunpack.c.l.b16 %v2897
  %v2930 = vunpack.c.l.b16 %v2898
  %v2931 = vunpack.c.l.b16 %v2899
  %v2932 = vpack.c.b16 %v2917, %v2916
  %v2933 = vpack.c.b16 %v2919, %v2918
  %v2934 = vpack.c.b16 %v2921, %v2920
  %v2935 = vpack.c.b16 %v2923, %v2922
  %v2936 = vpack.c.b16 %v2925, %v2924
  %v2937 = vpack.c.b16 %v2927, %v2926
  %v2938 = vpack.c.b16 %v2929, %v2928
  %v2939 = vpack.c.b16 %v2931, %v2930
  %2948 = vmatprep.subr.bf16.mxu0 0
  %2949 = vmatpush1.bf16.msra.mxu0 %v2932
  %2950 = vmatprep.subr.bf16.mxu0 0
  %2951 = vmatpush1.bf16.msra.mxu0 %v2933
  %2952 = vmatprep.subr.bf16.mxu0 0
  %2953 = vmatpush1.bf16.msra.mxu0 %v2934
  %2954 = vmatprep.subr.bf16.mxu0 0
  %2955 = vmatpush1.bf16.msra.mxu0 %v2935
  %2956 = vmatprep.subr.bf16.mxu0 0
  %2957 = vmatpush1.bf16.msra.mxu0 %v2936
  %2958 = vmatprep.subr.bf16.mxu0 0
  %2959 = vmatpush1.bf16.msra.mxu0 %v2937
  %2960 = vmatprep.subr.bf16.mxu0 0
  %2961 = vmatpush1.bf16.msra.mxu0 %v2938
  %2962 = vmatprep.subr.bf16.mxu0 0
  %2963 = vmatpush1.bf16.msra.mxu0 %v2939
  %2964 = vmatprep.subr.bf16.mxu0 0
  %2965 = vmatpush1.bf16.msra.mxu0 0
  %2966 = vmatprep.subr.bf16.mxu0 0
  %2967 = vmatpush1.bf16.msra.mxu0 0
  %2968 = vmatprep.subr.bf16.mxu0 0
  %2969 = vmatpush1.bf16.msra.mxu0 0
  %2970 = vmatprep.subr.bf16.mxu0 0
  %2971 = vmatpush1.bf16.msra.mxu0 0
  %2972 = vmatprep.subr.bf16.mxu0 0
  %2973 = vmatpush1.bf16.msra.mxu0 0
  %2974 = vmatprep.subr.bf16.mxu0 0
  %2975 = vmatpush1.bf16.msra.mxu0 0
  %2976 = vmatprep.subr.bf16.mxu0 0
  %2977 = vmatpush1.bf16.msra.mxu0 0
  %2978 = vmatprep.subr.bf16.mxu0 0
  %2979 = vmatpush1.bf16.msra.mxu0 0
  %2980 = vmatprep.mubr.bf16.mxu0 0
  %2981 = vmatmul.mubr.bf16.gmra.mrb[0].mxu0 %v2875
  %v2982 = vpop.f32.mrb[0].mxu0
  %v2983 = vadd.f32 0.0, %v2982
  %v2984 = vpop.f32.mrb[0].mxu0
  %v2985 = vpop.f32.mrb[0].mxu0
  %v2986 = vadd.f32 0.0, %v2985
  %v2987 = vpop.f32.mrb[0].mxu0
  %2988 = vmatprep.mubr.bf16.mxu0 0
  %2989 = vmatmul.mubr.bf16.gmra.mrb[0].mxu0 %v2876
  %v2990 = vpop.f32.mrb[0].mxu0
  %v2991 = vadd.f32 0.0, %v2990
  %v2992 = vpop.f32.mrb[0].mxu0
  %v2993 = vpop.f32.mrb[0].mxu0
  %v2994 = vadd.f32 0.0, %v2993
  %v2995 = vpop.f32.mrb[0].mxu0
  %2996 = vmatprep.mubr.bf16.mxu0 0
  %2997 = vmatmul.mubr.bf16.gmra.mrb[0].mxu0 %v2877
  %v2998 = vpop.f32.mrb[0].mxu0
  %v2999 = vadd.f32 0.0, %v2998
  %v3000 = vpop.f32.mrb[0].mxu0
  %v3001 = vpop.f32.mrb[0].mxu0
  %v3002 = vadd.f32 0.0, %v3001
  %v3003 = vpop.f32.mrb[0].mxu0
  %3004 = vmatprep.mubr.bf16.mxu0 0
  %3005 = vmatmul.mubr.bf16.gmra.mrb[0].mxu0 %v2878
  %v3006 = vpop.f32.mrb[0].mxu0
  %v3007 = vadd.f32 0.0, %v3006
  %v3008 = vpop.f32.mrb[0].mxu0
  %v3009 = vpop.f32.mrb[0].mxu0
  %v3010 = vadd.f32 0.0, %v3009
  %v3011 = vpop.f32.mrb[0].mxu0
  %3012 = vmatprep.mubr.bf16.mxu0 0
  %3013 = vmatmul.mubr.bf16.gmra.mrb[0].mxu0 %v2879
  %v3014 = vpop.f32.mrb[0].mxu0
  %v3015 = vadd.f32 0.0, %v3014
  %v3016 = vpop.f32.mrb[0].mxu0
  %v3017 = vpop.f32.mrb[0].mxu0
  %v3018 = vadd.f32 0.0, %v3017
  %v3019 = vpop.f32.mrb[0].mxu0
  %3020 = vmatprep.mubr.bf16.mxu0 0
  %3021 = vmatmul.mubr.bf16.gmra.mrb[0].mxu0 %v2880
  %v3022 = vpop.f32.mrb[0].mxu0
  %v3023 = vadd.f32 0.0, %v3022
  %v3024 = vpop.f32.mrb[0].mxu0
  %v3025 = vpop.f32.mrb[0].mxu0
  %v3026 = vadd.f32 0.0, %v3025
  %v3027 = vpop.f32.mrb[0].mxu0
  %3028 = vmatprep.mubr.bf16.mxu0 0
  %3029 = vmatmul.mubr.bf16.gmra.mrb[0].mxu0 %v2881
  %v3030 = vpop.f32.mrb[0].mxu0
  %v3031 = vadd.f32 0.0, %v3030
  %v3032 = vpop.f32.mrb[0].mxu0
  %v3033 = vpop.f32.mrb[0].mxu0
  %v3034 = vadd.f32 0.0, %v3033
  %v3035 = vpop.f32.mrb[0].mxu0
  %3036 = vmatprep.mubr.bf16.mxu0 0
  %3037 = vmatmul.mubr.bf16.gmra.mrb[0].mxu0 %v2882
  %v3038 = vpop.f32.mrb[0].mxu0
  %v3039 = vadd.f32 0.0, %v3038
  %v3040 = vpop.f32.mrb[0].mxu0
  %v3041 = vpop.f32.mrb[0].mxu0
  %v3042 = vadd.f32 0.0, %v3041
  %v3043 = vpop.f32.mrb[0].mxu0
  %3044 = vdwg.mxu0
  %v3045 = vadd.f32 %v2843, %v2983
  %v3046 = vadd.f32 %v2844, %v2986
  %v3047 = vadd.f32 %v2845, %v2991
  %v3048 = vadd.f32 %v2846, %v2994
  %v3049 = vadd.f32 %v2847, %v2999
  %v3050 = vadd.f32 %v2848, %v3002
  %v3051 = vadd.f32 %v2849, %v3007
  %v3052 = vadd.f32 %v2850, %v3010
  %v3053 = vadd.f32 %v2851, %v3015
  %v3054 = vadd.f32 %v2852, %v3018
  %v3055 = vadd.f32 %v2853, %v3023
  %v3056 = vadd.f32 %v2854, %v3026
  %v3057 = vadd.f32 %v2855, %v3031
  %v3058 = vadd.f32 %v2856, %v3034
  %v3059 = vadd.f32 %v2857, %v3039
  %v3060 = vadd.f32 %v2858, %v3042
  %v3061 = vld [vmem:[%s106 + $0x2] sm:$0xff]
  %v3062 = vld [vmem:[%s106 + $0x12] sm:$0xff]
  %v3063 = vld [vmem:[%s106 + $0x22] sm:$0xff]
  %v3064 = vld [vmem:[%s106 + $0x32] sm:$0xff]
  %v3065 = vld [vmem:[%s106 + $0x42] sm:$0xff]
  %v3066 = vld [vmem:[%s106 + $0x52] sm:$0xff]
  %v3067 = vld [vmem:[%s106 + $0x62] sm:$0xff]
  %v3068 = vld [vmem:[%s106 + $0x72] sm:$0xff]
  %v3069 = vld [vmem:[%s106 + $0xa2] sm:$0xff]
  %v3070 = vld [vmem:[%s106 + $0xb2] sm:$0xff]
  %v3071 = vld [vmem:[%s106 + $0xc2] sm:$0xff]
  %v3072 = vld [vmem:[%s106 + $0xd2] sm:$0xff]
  %v3073 = vld [vmem:[%s106 + $0xe2] sm:$0xff]
  %v3074 = vld [vmem:[%s106 + $0xf2] sm:$0xff]
  %v3075 = vld [vmem:[%s106 + $0x102] sm:$0xff]
  %v3076 = vld [vmem:[%s106 + $0x112] sm:$0xff]
  %v3077 = vpack.c.bf16 %v3062, %v3061
  %v3078 = vpack.c.bf16 %v3064, %v3063
  %v3079 = vpack.c.bf16 %v3066, %v3065
  %v3080 = vpack.c.bf16 %v3068, %v3067
  %v3081 = vpack.c.bf16 %v3070, %v3069
  %v3082 = vpack.c.bf16 %v3072, %v3071
  %v3083 = vpack.c.bf16 %v3074, %v3073
  %v3084 = vpack.c.bf16 %v3076, %v3075
  %s3085 = scalar_lea.vmem %s5, 320
  %v3086 = vld [vmem:[%s3085] sm:$0xf]
  %v3087 = vld [vmem:[%s3085 + $0x4] sm:$0xf]
  %v3088 = vld [vmem:[%s3085 + $0x8] sm:$0xf]
  %v3089 = vld [vmem:[%s3085 + $0xc] sm:$0xf]
  %v3090 = vld [vmem:[%s3085 + $0x10] sm:$0xf]
  %v3091 = vld [vmem:[%s3085 + $0x14] sm:$0xf]
  %v3092 = vld [vmem:[%s3085 + $0x18] sm:$0xf]
  %v3093 = vld [vmem:[%s3085 + $0x1c] sm:$0xf]
  %v3094 = vld [vmem:[%s3085 + $0x20] sm:$0xf]
  %v3095 = vld [vmem:[%s3085 + $0x24] sm:$0xf]
  %v3096 = vld [vmem:[%s3085 + $0x28] sm:$0xf]
  %v3097 = vld [vmem:[%s3085 + $0x2c] sm:$0xf]
  %v3098 = vld [vmem:[%s3085 + $0x30] sm:$0xf]
  %v3099 = vld [vmem:[%s3085 + $0x34] sm:$0xf]
  %v3100 = vld [vmem:[%s3085 + $0x38] sm:$0xf]
  %v3101 = vld [vmem:[%s3085 + $0x3c] sm:$0xf]
  %v3118 = vunpack.c.l.b16 %v3086
  %v3119 = vunpack.c.l.b16 %v3087
  %v3120 = vunpack.c.l.b16 %v3088
  %v3121 = vunpack.c.l.b16 %v3089
  %v3122 = vunpack.c.l.b16 %v3090
  %v3123 = vunpack.c.l.b16 %v3091
  %v3124 = vunpack.c.l.b16 %v3092
  %v3125 = vunpack.c.l.b16 %v3093
  %v3126 = vunpack.c.l.b16 %v3094
  %v3127 = vunpack.c.l.b16 %v3095
  %v3128 = vunpack.c.l.b16 %v3096
  %v3129 = vunpack.c.l.b16 %v3097
  %v3130 = vunpack.c.l.b16 %v3098
  %v3131 = vunpack.c.l.b16 %v3099
  %v3132 = vunpack.c.l.b16 %v3100
  %v3133 = vunpack.c.l.b16 %v3101
  %v3134 = vpack.c.b16 %v3119, %v3118
  %v3135 = vpack.c.b16 %v3121, %v3120
  %v3136 = vpack.c.b16 %v3123, %v3122
  %v3137 = vpack.c.b16 %v3125, %v3124
  %v3138 = vpack.c.b16 %v3127, %v3126
  %v3139 = vpack.c.b16 %v3129, %v3128
  %v3140 = vpack.c.b16 %v3131, %v3130
  %v3141 = vpack.c.b16 %v3133, %v3132
  %3150 = vmatprep.subr.bf16.mxu0 0
  %3151 = vmatpush1.bf16.msra.mxu0 %v3134
  %3152 = vmatprep.subr.bf16.mxu0 0
  %3153 = vmatpush1.bf16.msra.mxu0 %v3135
  %3154 = vmatprep.subr.bf16.mxu0 0
  %3155 = vmatpush1.bf16.msra.mxu0 %v3136
  %3156 = vmatprep.subr.bf16.mxu0 0
  %3157 = vmatpush1.bf16.msra.mxu0 %v3137
  %3158 = vmatprep.subr.bf16.mxu0 0
  %3159 = vmatpush1.bf16.msra.mxu0 %v3138
  %3160 = vmatprep.subr.bf16.mxu0 0
  %3161 = vmatpush1.bf16.msra.mxu0 %v3139
  %3162 = vmatprep.subr.bf16.mxu0 0
  %3163 = vmatpush1.bf16.msra.mxu0 %v3140
  %3164 = vmatprep.subr.bf16.mxu0 0
  %3165 = vmatpush1.bf16.msra.mxu0 %v3141
  %3166 = vmatprep.subr.bf16.mxu0 0
  %3167 = vmatpush1.bf16.msra.mxu0 0
  %3168 = vmatprep.subr.bf16.mxu0 0
  %3169 = vmatpush1.bf16.msra.mxu0 0
  %3170 = vmatprep.subr.bf16.mxu0 0
  %3171 = vmatpush1.bf16.msra.mxu0 0
  %3172 = vmatprep.subr.bf16.mxu0 0
  %3173 = vmatpush1.bf16.msra.mxu0 0
  %3174 = vmatprep.subr.bf16.mxu0 0
  %3175 = vmatpush1.bf16.msra.mxu0 0
  %3176 = vmatprep.subr.bf16.mxu0 0
  %3177 = vmatpush1.bf16.msra.mxu0 0
  %3178 = vmatprep.subr.bf16.mxu0 0
  %3179 = vmatpush1.bf16.msra.mxu0 0
  %3180 = vmatprep.subr.bf16.mxu0 0
  %3181 = vmatpush1.bf16.msra.mxu0 0
  %3182 = vmatprep.mubr.bf16.mxu0 0
  %3183 = vmatmul.mubr.bf16.gmra.mrb[0].mxu0 %v3077
  %v3184 = vpop.f32.mrb[0].mxu0
  %v3185 = vadd.f32 0.0, %v3184
  %v3186 = vpop.f32.mrb[0].mxu0
  %v3187 = vpop.f32.mrb[0].mxu0
  %v3188 = vadd.f32 0.0, %v3187
  %v3189 = vpop.f32.mrb[0].mxu0
  %3190 = vmatprep.mubr.bf16.mxu0 0
  %3191 = vmatmul.mubr.bf16.gmra.mrb[0].mxu0 %v3078
  %v3192 = vpop.f32.mrb[0].mxu0
  %v3193 = vadd.f32 0.0, %v3192
  %v3194 = vpop.f32.mrb[0].mxu0
  %v3195 = vpop.f32.mrb[0].mxu0
  %v3196 = vadd.f32 0.0, %v3195
  %v3197 = vpop.f32.mrb[0].mxu0
  %3198 = vmatprep.mubr.bf16.mxu0 0
  %3199 = vmatmul.mubr.bf16.gmra.mrb[0].mxu0 %v3079
  %v3200 = vpop.f32.mrb[0].mxu0
  %v3201 = vadd.f32 0.0, %v3200
  %v3202 = vpop.f32.mrb[0].mxu0
  %v3203 = vpop.f32.mrb[0].mxu0
  %v3204 = vadd.f32 0.0, %v3203
  %v3205 = vpop.f32.mrb[0].mxu0
  %3206 = vmatprep.mubr.bf16.mxu0 0
  %3207 = vmatmul.mubr.bf16.gmra.mrb[0].mxu0 %v3080
  %v3208 = vpop.f32.mrb[0].mxu0
  %v3209 = vadd.f32 0.0, %v3208
  %v3210 = vpop.f32.mrb[0].mxu0
  %v3211 = vpop.f32.mrb[0].mxu0
  %v3212 = vadd.f32 0.0, %v3211
  %v3213 = vpop.f32.mrb[0].mxu0
  %3214 = vmatprep.mubr.bf16.mxu0 0
  %3215 = vmatmul.mubr.bf16.gmra.mrb[0].mxu0 %v3081
  %v3216 = vpop.f32.mrb[0].mxu0
  %v3217 = vadd.f32 0.0, %v3216
  %v3218 = vpop.f32.mrb[0].mxu0
  %v3219 = vpop.f32.mrb[0].mxu0
  %v3220 = vadd.f32 0.0, %v3219
  %v3221 = vpop.f32.mrb[0].mxu0
  %3222 = vmatprep.mubr.bf16.mxu0 0
  %3223 = vmatmul.mubr.bf16.gmra.mrb[0].mxu0 %v3082
  %v3224 = vpop.f32.mrb[0].mxu0
  %v3225 = vadd.f32 0.0, %v3224
  %v3226 = vpop.f32.mrb[0].mxu0
  %v3227 = vpop.f32.mrb[0].mxu0
  %v3228 = vadd.f32 0.0, %v3227
  %v3229 = vpop.f32.mrb[0].mxu0
  %3230 = vmatprep.mubr.bf16.mxu0 0
  %3231 = vmatmul.mubr.bf16.gmra.mrb[0].mxu0 %v3083
  %v3232 = vpop.f32.mrb[0].mxu0
  %v3233 = vadd.f32 0.0, %v3232
  %v3234 = vpop.f32.mrb[0].mxu0
  %v3235 = vpop.f32.mrb[0].mxu0
  %v3236 = vadd.f32 0.0, %v3235
  %v3237 = vpop.f32.mrb[0].mxu0
  %3238 = vmatprep.mubr.bf16.mxu0 0
  %3239 = vmatmul.mubr.bf16.gmra.mrb[0].mxu0 %v3084
  %v3240 = vpop.f32.mrb[0].mxu0
  %v3241 = vadd.f32 0.0, %v3240
  %v3242 = vpop.f32.mrb[0].mxu0
  %v3243 = vpop.f32.mrb[0].mxu0
  %v3244 = vadd.f32 0.0, %v3243
  %v3245 = vpop.f32.mrb[0].mxu0
  %3246 = vdwg.mxu0
  %v3247 = vadd.f32 %v3045, %v3185
  %v3248 = vadd.f32 %v3046, %v3188
  %v3249 = vadd.f32 %v3047, %v3193
  %v3250 = vadd.f32 %v3048, %v3196
  %v3251 = vadd.f32 %v3049, %v3201
  %v3252 = vadd.f32 %v3050, %v3204
  %v3253 = vadd.f32 %v3051, %v3209
  %v3254 = vadd.f32 %v3052, %v3212
  %v3255 = vadd.f32 %v3053, %v3217
  %v3256 = vadd.f32 %v3054, %v3220
  %v3257 = vadd.f32 %v3055, %v3225
  %v3258 = vadd.f32 %v3056, %v3228
  %v3259 = vadd.f32 %v3057, %v3233
  %v3260 = vadd.f32 %v3058, %v3236
  %v3261 = vadd.f32 %v3059, %v3241
  %v3262 = vadd.f32 %v3060, %v3244
  %v3263 = vld [vmem:[%s1302] sm:$0xff]
  %v3264 = vld [vmem:[%s1302 + $0x10] sm:$0xff]
  %v3265 = vld [vmem:[%s1302 + $0x20] sm:$0xff]
  %v3266 = vld [vmem:[%s1302 + $0x30] sm:$0xff]
  %v3267 = vld [vmem:[%s1302 + $0x40] sm:$0xff]
  %v3268 = vld [vmem:[%s1302 + $0x50] sm:$0xff]
  %v3269 = vld [vmem:[%s1302 + $0x60] sm:$0xff]
  %v3270 = vld [vmem:[%s1302 + $0x70] sm:$0xff]
  %v3271 = vld [vmem:[%s1302 + $0xa0] sm:$0xff]
  %v3272 = vld [vmem:[%s1302 + $0xb0] sm:$0xff]
  %v3273 = vld [vmem:[%s1302 + $0xc0] sm:$0xff]
  %v3274 = vld [vmem:[%s1302 + $0xd0] sm:$0xff]
  %v3275 = vld [vmem:[%s1302 + $0xe0] sm:$0xff]
  %v3276 = vld [vmem:[%s1302 + $0xf0] sm:$0xff]
  %v3277 = vld [vmem:[%s1302 + $0x100] sm:$0xff]
  %v3278 = vld [vmem:[%s1302 + $0x110] sm:$0xff]
  %v3279 = vpack.c.bf16 %v3264, %v3263
  %v3280 = vpack.c.bf16 %v3266, %v3265
  %v3281 = vpack.c.bf16 %v3268, %v3267
  %v3282 = vpack.c.bf16 %v3270, %v3269
  %v3283 = vpack.c.bf16 %v3272, %v3271
  %v3284 = vpack.c.bf16 %v3274, %v3273
  %v3285 = vpack.c.bf16 %v3276, %v3275
  %v3286 = vpack.c.bf16 %v3278, %v3277
  %s3287 = scalar_lea.vmem %s5, 384
  %v3288 = vld [vmem:[%s3287] sm:$0xf]
  %v3289 = vld [vmem:[%s3287 + $0x4] sm:$0xf]
  %v3290 = vld [vmem:[%s3287 + $0x8] sm:$0xf]
  %v3291 = vld [vmem:[%s3287 + $0xc] sm:$0xf]
  %v3292 = vld [vmem:[%s3287 + $0x10] sm:$0xf]
  %v3293 = vld [vmem:[%s3287 + $0x14] sm:$0xf]
  %v3294 = vld [vmem:[%s3287 + $0x18] sm:$0xf]
  %v3295 = vld [vmem:[%s3287 + $0x1c] sm:$0xf]
  %v3296 = vld [vmem:[%s3287 + $0x20] sm:$0xf]
  %v3297 = vld [vmem:[%s3287 + $0x24] sm:$0xf]
  %v3298 = vld [vmem:[%s3287 + $0x28] sm:$0xf]
  %v3299 = vld [vmem:[%s3287 + $0x2c] sm:$0xf]
  %v3300 = vld [vmem:[%s3287 + $0x30] sm:$0xf]
  %v3301 = vld [vmem:[%s3287 + $0x34] sm:$0xf]
  %v3302 = vld [vmem:[%s3287 + $0x38] sm:$0xf]
  %v3303 = vld [vmem:[%s3287 + $0x3c] sm:$0xf]
  %v3320 = vunpack.c.l.b16 %v3288
  %v3321 = vunpack.c.l.b16 %v3289
  %v3322 = vunpack.c.l.b16 %v3290
  %v3323 = vunpack.c.l.b16 %v3291
  %v3324 = vunpack.c.l.b16 %v3292
  %v3325 = vunpack.c.l.b16 %v3293
  %v3326 = vunpack.c.l.b16 %v3294
  %v3327 = vunpack.c.l.b16 %v3295
  %v3328 = vunpack.c.l.b16 %v3296
  %v3329 = vunpack.c.l.b16 %v3297
  %v3330 = vunpack.c.l.b16 %v3298
  %v3331 = vunpack.c.l.b16 %v3299
  %v3332 = vunpack.c.l.b16 %v3300
  %v3333 = vunpack.c.l.b16 %v3301
  %v3334 = vunpack.c.l.b16 %v3302
  %v3335 = vunpack.c.l.b16 %v3303
  %v3336 = vpack.c.b16 %v3321, %v3320
  %v3337 = vpack.c.b16 %v3323, %v3322
  %v3338 = vpack.c.b16 %v3325, %v3324
  %v3339 = vpack.c.b16 %v3327, %v3326
  %v3340 = vpack.c.b16 %v3329, %v3328
  %v3341 = vpack.c.b16 %v3331, %v3330
  %v3342 = vpack.c.b16 %v3333, %v3332
  %v3343 = vpack.c.b16 %v3335, %v3334
  %3352 = vmatprep.subr.bf16.mxu0 0
  %3353 = vmatpush1.bf16.msra.mxu0 %v3336
  %3354 = vmatprep.subr.bf16.mxu0 0
  %3355 = vmatpush1.bf16.msra.mxu0 %v3337
  %3356 = vmatprep.subr.bf16.mxu0 0
  %3357 = vmatpush1.bf16.msra.mxu0 %v3338
  %3358 = vmatprep.subr.bf16.mxu0 0
  %3359 = vmatpush1.bf16.msra.mxu0 %v3339
  %3360 = vmatprep.subr.bf16.mxu0 0
  %3361 = vmatpush1.bf16.msra.mxu0 %v3340
  %3362 = vmatprep.subr.bf16.mxu0 0
  %3363 = vmatpush1.bf16.msra.mxu0 %v3341
  %3364 = vmatprep.subr.bf16.mxu0 0
  %3365 = vmatpush1.bf16.msra.mxu0 %v3342
  %3366 = vmatprep.subr.bf16.mxu0 0
  %3367 = vmatpush1.bf16.msra.mxu0 %v3343
  %3368 = vmatprep.subr.bf16.mxu0 0
  %3369 = vmatpush1.bf16.msra.mxu0 0
  %3370 = vmatprep.subr.bf16.mxu0 0
  %3371 = vmatpush1.bf16.msra.mxu0 0
  %3372 = vmatprep.subr.bf16.mxu0 0
  %3373 = vmatpush1.bf16.msra.mxu0 0
  %3374 = vmatprep.subr.bf16.mxu0 0
  %3375 = vmatpush1.bf16.msra.mxu0 0
  %3376 = vmatprep.subr.bf16.mxu0 0
  %3377 = vmatpush1.bf16.msra.mxu0 0
  %3378 = vmatprep.subr.bf16.mxu0 0
  %3379 = vmatpush1.bf16.msra.mxu0 0
  %3380 = vmatprep.subr.bf16.mxu0 0
  %3381 = vmatpush1.bf16.msra.mxu0 0
  %3382 = vmatprep.subr.bf16.mxu0 0
  %3383 = vmatpush1.bf16.msra.mxu0 0
  %3384 = vmatprep.mubr.bf16.mxu0 0
  %3385 = vmatmul.mubr.bf16.gmra.mrb[0].mxu0 %v3279
  %v3386 = vpop.f32.mrb[0].mxu0
  %v3387 = vadd.f32 0.0, %v3386
  %v3388 = vpop.f32.mrb[0].mxu0
  %v3389 = vpop.f32.mrb[0].mxu0
  %v3390 = vadd.f32 0.0, %v3389
  %v3391 = vpop.f32.mrb[0].mxu0
  %3392 = vmatprep.mubr.bf16.mxu0 0
  %3393 = vmatmul.mubr.bf16.gmra.mrb[0].mxu0 %v3280
  %v3394 = vpop.f32.mrb[0].mxu0
  %v3395 = vadd.f32 0.0, %v3394
  %v3396 = vpop.f32.mrb[0].mxu0
  %v3397 = vpop.f32.mrb[0].mxu0
  %v3398 = vadd.f32 0.0, %v3397
  %v3399 = vpop.f32.mrb[0].mxu0
  %3400 = vmatprep.mubr.bf16.mxu0 0
  %3401 = vmatmul.mubr.bf16.gmra.mrb[0].mxu0 %v3281
  %v3402 = vpop.f32.mrb[0].mxu0
  %v3403 = vadd.f32 0.0, %v3402
  %v3404 = vpop.f32.mrb[0].mxu0
  %v3405 = vpop.f32.mrb[0].mxu0
  %v3406 = vadd.f32 0.0, %v3405
  %v3407 = vpop.f32.mrb[0].mxu0
  %3408 = vmatprep.mubr.bf16.mxu0 0
  %3409 = vmatmul.mubr.bf16.gmra.mrb[0].mxu0 %v3282
  %v3410 = vpop.f32.mrb[0].mxu0
  %v3411 = vadd.f32 0.0, %v3410
  %v3412 = vpop.f32.mrb[0].mxu0
  %v3413 = vpop.f32.mrb[0].mxu0
  %v3414 = vadd.f32 0.0, %v3413
  %v3415 = vpop.f32.mrb[0].mxu0
  %3416 = vmatprep.mubr.bf16.mxu0 0
  %3417 = vmatmul.mubr.bf16.gmra.mrb[0].mxu0 %v3283
  %v3418 = vpop.f32.mrb[0].mxu0
  %v3419 = vadd.f32 0.0, %v3418
  %v3420 = vpop.f32.mrb[0].mxu0
  %v3421 = vpop.f32.mrb[0].mxu0
  %v3422 = vadd.f32 0.0, %v3421
  %v3423 = vpop.f32.mrb[0].mxu0
  %3424 = vmatprep.mubr.bf16.mxu0 0
  %3425 = vmatmul.mubr.bf16.gmra.mrb[0].mxu0 %v3284
  %v3426 = vpop.f32.mrb[0].mxu0
  %v3427 = vadd.f32 0.0, %v3426
  %v3428 = vpop.f32.mrb[0].mxu0
  %v3429 = vpop.f32.mrb[0].mxu0
  %v3430 = vadd.f32 0.0, %v3429
  %v3431 = vpop.f32.mrb[0].mxu0
  %3432 = vmatprep.mubr.bf16.mxu0 0
  %3433 = vmatmul.mubr.bf16.gmra.mrb[0].mxu0 %v3285
  %v3434 = vpop.f32.mrb[0].mxu0
  %v3435 = vadd.f32 0.0, %v3434
  %v3436 = vpop.f32.mrb[0].mxu0
  %v3437 = vpop.f32.mrb[0].mxu0
  %v3438 = vadd.f32 0.0, %v3437
  %v3439 = vpop.f32.mrb[0].mxu0
  %3440 = vmatprep.mubr.bf16.mxu0 0
  %3441 = vmatmul.mubr.bf16.gmra.mrb[0].mxu0 %v3286
  %v3442 = vpop.f32.mrb[0].mxu0
  %v3443 = vadd.f32 0.0, %v3442
  %v3444 = vpop.f32.mrb[0].mxu0
  %v3445 = vpop.f32.mrb[0].mxu0
  %v3446 = vadd.f32 0.0, %v3445
  %v3447 = vpop.f32.mrb[0].mxu0
  %3448 = vdwg.mxu0
  %v3449 = vadd.f32 %v3247, %v3387
  %v3450 = vadd.f32 %v3248, %v3390
  %v3451 = vadd.f32 %v3249, %v3395
  %v3452 = vadd.f32 %v3250, %v3398
  %v3453 = vadd.f32 %v3251, %v3403
  %v3454 = vadd.f32 %v3252, %v3406
  %v3455 = vadd.f32 %v3253, %v3411
  %v3456 = vadd.f32 %v3254, %v3414
  %v3457 = vadd.f32 %v3255, %v3419
  %v3458 = vadd.f32 %v3256, %v3422
  %v3459 = vadd.f32 %v3257, %v3427
  %v3460 = vadd.f32 %v3258, %v3430
  %v3461 = vadd.f32 %v3259, %v3435
  %v3462 = vadd.f32 %v3260, %v3438
  %v3463 = vadd.f32 %v3261, %v3443
  %v3464 = vadd.f32 %v3262, %v3446
  %v3465 = vld [vmem:[%s1302 + $0x1] sm:$0xff]
  %v3466 = vld [vmem:[%s1302 + $0x11] sm:$0xff]
  %v3467 = vld [vmem:[%s1302 + $0x21] sm:$0xff]
  %v3468 = vld [vmem:[%s1302 + $0x31] sm:$0xff]
  %v3469 = vld [vmem:[%s1302 + $0x41] sm:$0xff]
  %v3470 = vld [vmem:[%s1302 + $0x51] sm:$0xff]
  %v3471 = vld [vmem:[%s1302 + $0x61] sm:$0xff]
  %v3472 = vld [vmem:[%s1302 + $0x71] sm:$0xff]
  %v3473 = vld [vmem:[%s1302 + $0xa1] sm:$0xff]
  %v3474 = vld [vmem:[%s1302 + $0xb1] sm:$0xff]
  %v3475 = vld [vmem:[%s1302 + $0xc1] sm:$0xff]
  %v3476 = vld [vmem:[%s1302 + $0xd1] sm:$0xff]
  %v3477 = vld [vmem:[%s1302 + $0xe1] sm:$0xff]
  %v3478 = vld [vmem:[%s1302 + $0xf1] sm:$0xff]
  %v3479 = vld [vmem:[%s1302 + $0x101] sm:$0xff]
  %v3480 = vld [vmem:[%s1302 + $0x111] sm:$0xff]
  %v3481 = vpack.c.bf16 %v3466, %v3465
  %v3482 = vpack.c.bf16 %v3468, %v3467
  %v3483 = vpack.c.bf16 %v3470, %v3469
  %v3484 = vpack.c.bf16 %v3472, %v3471
  %v3485 = vpack.c.bf16 %v3474, %v3473
  %v3486 = vpack.c.bf16 %v3476, %v3475
  %v3487 = vpack.c.bf16 %v3478, %v3477
  %v3488 = vpack.c.bf16 %v3480, %v3479
  %s3489 = scalar_lea.vmem %s5, 448
  %v3490 = vld [vmem:[%s3489] sm:$0xf]
  %v3491 = vld [vmem:[%s3489 + $0x4] sm:$0xf]
  %v3492 = vld [vmem:[%s3489 + $0x8] sm:$0xf]
  %v3493 = vld [vmem:[%s3489 + $0xc] sm:$0xf]
  %v3494 = vld [vmem:[%s3489 + $0x10] sm:$0xf]
  %v3495 = vld [vmem:[%s3489 + $0x14] sm:$0xf]
  %v3496 = vld [vmem:[%s3489 + $0x18] sm:$0xf]
  %v3497 = vld [vmem:[%s3489 + $0x1c] sm:$0xf]
  %v3498 = vld [vmem:[%s3489 + $0x20] sm:$0xf]
  %v3499 = vld [vmem:[%s3489 + $0x24] sm:$0xf]
  %v3500 = vld [vmem:[%s3489 + $0x28] sm:$0xf]
  %v3501 = vld [vmem:[%s3489 + $0x2c] sm:$0xf]
  %v3502 = vld [vmem:[%s3489 + $0x30] sm:$0xf]
  %v3503 = vld [vmem:[%s3489 + $0x34] sm:$0xf]
  %v3504 = vld [vmem:[%s3489 + $0x38] sm:$0xf]
  %v3505 = vld [vmem:[%s3489 + $0x3c] sm:$0xf]
  %v3522 = vunpack.c.l.b16 %v3490
  %v3523 = vunpack.c.l.b16 %v3491
  %v3524 = vunpack.c.l.b16 %v3492
  %v3525 = vunpack.c.l.b16 %v3493
  %v3526 = vunpack.c.l.b16 %v3494
  %v3527 = vunpack.c.l.b16 %v3495
  %v3528 = vunpack.c.l.b16 %v3496
  %v3529 = vunpack.c.l.b16 %v3497
  %v3530 = vunpack.c.l.b16 %v3498
  %v3531 = vunpack.c.l.b16 %v3499
  %v3532 = vunpack.c.l.b16 %v3500
  %v3533 = vunpack.c.l.b16 %v3501
  %v3534 = vunpack.c.l.b16 %v3502
  %v3535 = vunpack.c.l.b16 %v3503
  %v3536 = vunpack.c.l.b16 %v3504
  %v3537 = vunpack.c.l.b16 %v3505
  %v3538 = vpack.c.b16 %v3523, %v3522
  %v3539 = vpack.c.b16 %v3525, %v3524
  %v3540 = vpack.c.b16 %v3527, %v3526
  %v3541 = vpack.c.b16 %v3529, %v3528
  %v3542 = vpack.c.b16 %v3531, %v3530
  %v3543 = vpack.c.b16 %v3533, %v3532
  %v3544 = vpack.c.b16 %v3535, %v3534
  %v3545 = vpack.c.b16 %v3537, %v3536
  %3554 = vmatprep.subr.bf16.mxu0 0
  %3555 = vmatpush1.bf16.msra.mxu0 %v3538
  %3556 = vmatprep.subr.bf16.mxu0 0
  %3557 = vmatpush1.bf16.msra.mxu0 %v3539
  %3558 = vmatprep.subr.bf16.mxu0 0
  %3559 = vmatpush1.bf16.msra.mxu0 %v3540
  %3560 = vmatprep.subr.bf16.mxu0 0
  %3561 = vmatpush1.bf16.msra.mxu0 %v3541
  %3562 = vmatprep.subr.bf16.mxu0 0
  %3563 = vmatpush1.bf16.msra.mxu0 %v3542
  %3564 = vmatprep.subr.bf16.mxu0 0
  %3565 = vmatpush1.bf16.msra.mxu0 %v3543
  %3566 = vmatprep.subr.bf16.mxu0 0
  %3567 = vmatpush1.bf16.msra.mxu0 %v3544
  %3568 = vmatprep.subr.bf16.mxu0 0
  %3569 = vmatpush1.bf16.msra.mxu0 %v3545
  %3570 = vmatprep.subr.bf16.mxu0 0
  %3571 = vmatpush1.bf16.msra.mxu0 0
  %3572 = vmatprep.subr.bf16.mxu0 0
  %3573 = vmatpush1.bf16.msra.mxu0 0
  %3574 = vmatprep.subr.bf16.mxu0 0
  %3575 = vmatpush1.bf16.msra.mxu0 0
  %3576 = vmatprep.subr.bf16.mxu0 0
  %3577 = vmatpush1.bf16.msra.mxu0 0
  %3578 = vmatprep.subr.bf16.mxu0 0
  %3579 = vmatpush1.bf16.msra.mxu0 0
  %3580 = vmatprep.subr.bf16.mxu0 0
  %3581 = vmatpush1.bf16.msra.mxu0 0
  %3582 = vmatprep.subr.bf16.mxu0 0
  %3583 = vmatpush1.bf16.msra.mxu0 0
  %3584 = vmatprep.subr.bf16.mxu0 0
  %3585 = vmatpush1.bf16.msra.mxu0 0
  %3586 = vmatprep.mubr.bf16.mxu0 0
  %3587 = vmatmul.mubr.bf16.gmra.mrb[0].mxu0 %v3481
  %v3588 = vpop.f32.mrb[0].mxu0
  %v3589 = vadd.f32 0.0, %v3588
  %v3590 = vpop.f32.mrb[0].mxu0
  %v3591 = vpop.f32.mrb[0].mxu0
  %v3592 = vadd.f32 0.0, %v3591
  %v3593 = vpop.f32.mrb[0].mxu0
  %3594 = vmatprep.mubr.bf16.mxu0 0
  %3595 = vmatmul.mubr.bf16.gmra.mrb[0].mxu0 %v3482
  %v3596 = vpop.f32.mrb[0].mxu0
  %v3597 = vadd.f32 0.0, %v3596
  %v3598 = vpop.f32.mrb[0].mxu0
  %v3599 = vpop.f32.mrb[0].mxu0
  %v3600 = vadd.f32 0.0, %v3599
  %v3601 = vpop.f32.mrb[0].mxu0
  %3602 = vmatprep.mubr.bf16.mxu0 0
  %3603 = vmatmul.mubr.bf16.gmra.mrb[0].mxu0 %v3483
  %v3604 = vpop.f32.mrb[0].mxu0
  %v3605 = vadd.f32 0.0, %v3604
  %v3606 = vpop.f32.mrb[0].mxu0
  %v3607 = vpop.f32.mrb[0].mxu0
  %v3608 = vadd.f32 0.0, %v3607
  %v3609 = vpop.f32.mrb[0].mxu0
  %3610 = vmatprep.mubr.bf16.mxu0 0
  %3611 = vmatmul.mubr.bf16.gmra.mrb[0].mxu0 %v3484
  %v3612 = vpop.f32.mrb[0].mxu0
  %v3613 = vadd.f32 0.0, %v3612
  %v3614 = vpop.f32.mrb[0].mxu0
  %v3615 = vpop.f32.mrb[0].mxu0
  %v3616 = vadd.f32 0.0, %v3615
  %v3617 = vpop.f32.mrb[0].mxu0
  %3618 = vmatprep.mubr.bf16.mxu0 0
  %3619 = vmatmul.mubr.bf16.gmra.mrb[0].mxu0 %v3485
  %v3620 = vpop.f32.mrb[0].mxu0
  %v3621 = vadd.f32 0.0, %v3620
  %v3622 = vpop.f32.mrb[0].mxu0
  %v3623 = vpop.f32.mrb[0].mxu0
  %v3624 = vadd.f32 0.0, %v3623
  %v3625 = vpop.f32.mrb[0].mxu0
  %3626 = vmatprep.mubr.bf16.mxu0 0
  %3627 = vmatmul.mubr.bf16.gmra.mrb[0].mxu0 %v3486
  %v3628 = vpop.f32.mrb[0].mxu0
  %v3629 = vadd.f32 0.0, %v3628
  %v3630 = vpop.f32.mrb[0].mxu0
  %v3631 = vpop.f32.mrb[0].mxu0
  %v3632 = vadd.f32 0.0, %v3631
  %v3633 = vpop.f32.mrb[0].mxu0
  %3634 = vmatprep.mubr.bf16.mxu0 0
  %3635 = vmatmul.mubr.bf16.gmra.mrb[0].mxu0 %v3487
  %v3636 = vpop.f32.mrb[0].mxu0
  %v3637 = vadd.f32 0.0, %v3636
  %v3638 = vpop.f32.mrb[0].mxu0
  %v3639 = vpop.f32.mrb[0].mxu0
  %v3640 = vadd.f32 0.0, %v3639
  %v3641 = vpop.f32.mrb[0].mxu0
  %3642 = vmatprep.mubr.bf16.mxu0 0
  %3643 = vmatmul.mubr.bf16.gmra.mrb[0].mxu0 %v3488
  %v3644 = vpop.f32.mrb[0].mxu0
  %v3645 = vadd.f32 0.0, %v3644
  %v3646 = vpop.f32.mrb[0].mxu0
  %v3647 = vpop.f32.mrb[0].mxu0
  %v3648 = vadd.f32 0.0, %v3647
  %v3649 = vpop.f32.mrb[0].mxu0
  %3650 = vdwg.mxu0
  %v3651 = vadd.f32 %v3449, %v3589
  %v3652 = vadd.f32 %v3450, %v3592
  %v3653 = vadd.f32 %v3451, %v3597
  %v3654 = vadd.f32 %v3452, %v3600
  %v3655 = vadd.f32 %v3453, %v3605
  %v3656 = vadd.f32 %v3454, %v3608
  %v3657 = vadd.f32 %v3455, %v3613
  %v3658 = vadd.f32 %v3456, %v3616
  %v3659 = vadd.f32 %v3457, %v3621
  %v3660 = vadd.f32 %v3458, %v3624
  %v3661 = vadd.f32 %v3459, %v3629
  %v3662 = vadd.f32 %v3460, %v3632
  %v3663 = vadd.f32 %v3461, %v3637
  %v3664 = vadd.f32 %v3462, %v3640
  %v3665 = vadd.f32 %v3463, %v3645
  %v3666 = vadd.f32 %v3464, %v3648
  %v3667 = vld [vmem:[%s1302 + $0x2] sm:$0xff]
  %v3668 = vld [vmem:[%s1302 + $0x12] sm:$0xff]
  %v3669 = vld [vmem:[%s1302 + $0x22] sm:$0xff]
  %v3670 = vld [vmem:[%s1302 + $0x32] sm:$0xff]
  %v3671 = vld [vmem:[%s1302 + $0x42] sm:$0xff]
  %v3672 = vld [vmem:[%s1302 + $0x52] sm:$0xff]
  %v3673 = vld [vmem:[%s1302 + $0x62] sm:$0xff]
  %v3674 = vld [vmem:[%s1302 + $0x72] sm:$0xff]
  %v3675 = vld [vmem:[%s1302 + $0xa2] sm:$0xff]
  %v3676 = vld [vmem:[%s1302 + $0xb2] sm:$0xff]
  %v3677 = vld [vmem:[%s1302 + $0xc2] sm:$0xff]
  %v3678 = vld [vmem:[%s1302 + $0xd2] sm:$0xff]
  %v3679 = vld [vmem:[%s1302 + $0xe2] sm:$0xff]
  %v3680 = vld [vmem:[%s1302 + $0xf2] sm:$0xff]
  %v3681 = vld [vmem:[%s1302 + $0x102] sm:$0xff]
  %v3682 = vld [vmem:[%s1302 + $0x112] sm:$0xff]
  %v3683 = vpack.c.bf16 %v3668, %v3667
  %v3684 = vpack.c.bf16 %v3670, %v3669
  %v3685 = vpack.c.bf16 %v3672, %v3671
  %v3686 = vpack.c.bf16 %v3674, %v3673
  %v3687 = vpack.c.bf16 %v3676, %v3675
  %v3688 = vpack.c.bf16 %v3678, %v3677
  %v3689 = vpack.c.bf16 %v3680, %v3679
  %v3690 = vpack.c.bf16 %v3682, %v3681
  %s3691 = scalar_lea.vmem %s5, 512
  %v3692 = vld [vmem:[%s3691] sm:$0xf]
  %v3693 = vld [vmem:[%s3691 + $0x4] sm:$0xf]
  %v3694 = vld [vmem:[%s3691 + $0x8] sm:$0xf]
  %v3695 = vld [vmem:[%s3691 + $0xc] sm:$0xf]
  %v3696 = vld [vmem:[%s3691 + $0x10] sm:$0xf]
  %v3697 = vld [vmem:[%s3691 + $0x14] sm:$0xf]
  %v3698 = vld [vmem:[%s3691 + $0x18] sm:$0xf]
  %v3699 = vld [vmem:[%s3691 + $0x1c] sm:$0xf]
  %v3700 = vld [vmem:[%s3691 + $0x20] sm:$0xf]
  %v3701 = vld [vmem:[%s3691 + $0x24] sm:$0xf]
  %v3702 = vld [vmem:[%s3691 + $0x28] sm:$0xf]
  %v3703 = vld [vmem:[%s3691 + $0x2c] sm:$0xf]
  %v3704 = vld [vmem:[%s3691 + $0x30] sm:$0xf]
  %v3705 = vld [vmem:[%s3691 + $0x34] sm:$0xf]
  %v3706 = vld [vmem:[%s3691 + $0x38] sm:$0xf]
  %v3707 = vld [vmem:[%s3691 + $0x3c] sm:$0xf]
  %v3724 = vunpack.c.l.b16 %v3692
  %v3725 = vunpack.c.l.b16 %v3693
  %v3726 = vunpack.c.l.b16 %v3694
  %v3727 = vunpack.c.l.b16 %v3695
  %v3728 = vunpack.c.l.b16 %v3696
  %v3729 = vunpack.c.l.b16 %v3697
  %v3730 = vunpack.c.l.b16 %v3698
  %v3731 = vunpack.c.l.b16 %v3699
  %v3732 = vunpack.c.l.b16 %v3700
  %v3733 = vunpack.c.l.b16 %v3701
  %v3734 = vunpack.c.l.b16 %v3702
  %v3735 = vunpack.c.l.b16 %v3703
  %v3736 = vunpack.c.l.b16 %v3704
  %v3737 = vunpack.c.l.b16 %v3705
  %v3738 = vunpack.c.l.b16 %v3706
  %v3739 = vunpack.c.l.b16 %v3707
  %v3740 = vpack.c.b16 %v3725, %v3724
  %v3741 = vpack.c.b16 %v3727, %v3726
  %v3742 = vpack.c.b16 %v3729, %v3728
  %v3743 = vpack.c.b16 %v3731, %v3730
  %v3744 = vpack.c.b16 %v3733, %v3732
  %v3745 = vpack.c.b16 %v3735, %v3734
  %v3746 = vpack.c.b16 %v3737, %v3736
  %v3747 = vpack.c.b16 %v3739, %v3738
  %3756 = vmatprep.subr.bf16.mxu0 0
  %3757 = vmatpush1.bf16.msra.mxu0 %v3740
  %3758 = vmatprep.subr.bf16.mxu0 0
  %3759 = vmatpush1.bf16.msra.mxu0 %v3741
  %3760 = vmatprep.subr.bf16.mxu0 0
  %3761 = vmatpush1.bf16.msra.mxu0 %v3742
  %3762 = vmatprep.subr.bf16.mxu0 0
  %3763 = vmatpush1.bf16.msra.mxu0 %v3743
  %3764 = vmatprep.subr.bf16.mxu0 0
  %3765 = vmatpush1.bf16.msra.mxu0 %v3744
  %3766 = vmatprep.subr.bf16.mxu0 0
  %3767 = vmatpush1.bf16.msra.mxu0 %v3745
  %3768 = vmatprep.subr.bf16.mxu0 0
  %3769 = vmatpush1.bf16.msra.mxu0 %v3746
  %3770 = vmatprep.subr.bf16.mxu0 0
  %3771 = vmatpush1.bf16.msra.mxu0 %v3747
  %3772 = vmatprep.subr.bf16.mxu0 0
  %3773 = vmatpush1.bf16.msra.mxu0 0
  %3774 = vmatprep.subr.bf16.mxu0 0
  %3775 = vmatpush1.bf16.msra.mxu0 0
  %3776 = vmatprep.subr.bf16.mxu0 0
  %3777 = vmatpush1.bf16.msra.mxu0 0
  %3778 = vmatprep.subr.bf16.mxu0 0
  %3779 = vmatpush1.bf16.msra.mxu0 0
  %3780 = vmatprep.subr.bf16.mxu0 0
  %3781 = vmatpush1.bf16.msra.mxu0 0
  %3782 = vmatprep.subr.bf16.mxu0 0
  %3783 = vmatpush1.bf16.msra.mxu0 0
  %3784 = vmatprep.subr.bf16.mxu0 0
  %3785 = vmatpush1.bf16.msra.mxu0 0
  %3786 = vmatprep.subr.bf16.mxu0 0
  %3787 = vmatpush1.bf16.msra.mxu0 0
  %3788 = vmatprep.mubr.bf16.mxu0 0
  %3789 = vmatmul.mubr.bf16.gmra.mrb[0].mxu0 %v3683
  %v3790 = vpop.f32.mrb[0].mxu0
  %v3791 = vadd.f32 0.0, %v3790
  %v3792 = vpop.f32.mrb[0].mxu0
  %v3793 = vpop.f32.mrb[0].mxu0
  %v3794 = vadd.f32 0.0, %v3793
  %v3795 = vpop.f32.mrb[0].mxu0
  %3796 = vmatprep.mubr.bf16.mxu0 0
  %3797 = vmatmul.mubr.bf16.gmra.mrb[0].mxu0 %v3684
  %v3798 = vpop.f32.mrb[0].mxu0
  %v3799 = vadd.f32 0.0, %v3798
  %v3800 = vpop.f32.mrb[0].mxu0
  %v3801 = vpop.f32.mrb[0].mxu0
  %v3802 = vadd.f32 0.0, %v3801
  %v3803 = vpop.f32.mrb[0].mxu0
  %3804 = vmatprep.mubr.bf16.mxu0 0
  %3805 = vmatmul.mubr.bf16.gmra.mrb[0].mxu0 %v3685
  %v3806 = vpop.f32.mrb[0].mxu0
  %v3807 = vadd.f32 0.0, %v3806
  %v3808 = vpop.f32.mrb[0].mxu0
  %v3809 = vpop.f32.mrb[0].mxu0
  %v3810 = vadd.f32 0.0, %v3809
  %v3811 = vpop.f32.mrb[0].mxu0
  %3812 = vmatprep.mubr.bf16.mxu0 0
  %3813 = vmatmul.mubr.bf16.gmra.mrb[0].mxu0 %v3686
  %v3814 = vpop.f32.mrb[0].mxu0
  %v3815 = vadd.f32 0.0, %v3814
  %v3816 = vpop.f32.mrb[0].mxu0
  %v3817 = vpop.f32.mrb[0].mxu0
  %v3818 = vadd.f32 0.0, %v3817
  %v3819 = vpop.f32.mrb[0].mxu0
  %3820 = vmatprep.mubr.bf16.mxu0 0
  %3821 = vmatmul.mubr.bf16.gmra.mrb[0].mxu0 %v3687
  %v3822 = vpop.f32.mrb[0].mxu0
  %v3823 = vadd.f32 0.0, %v3822
  %v3824 = vpop.f32.mrb[0].mxu0
  %v3825 = vpop.f32.mrb[0].mxu0
  %v3826 = vadd.f32 0.0, %v3825
  %v3827 = vpop.f32.mrb[0].mxu0
  %3828 = vmatprep.mubr.bf16.mxu0 0
  %3829 = vmatmul.mubr.bf16.gmra.mrb[0].mxu0 %v3688
  %v3830 = vpop.f32.mrb[0].mxu0
  %v3831 = vadd.f32 0.0, %v3830
  %v3832 = vpop.f32.mrb[0].mxu0
  %v3833 = vpop.f32.mrb[0].mxu0
  %v3834 = vadd.f32 0.0, %v3833
  %v3835 = vpop.f32.mrb[0].mxu0
  %3836 = vmatprep.mubr.bf16.mxu0 0
  %3837 = vmatmul.mubr.bf16.gmra.mrb[0].mxu0 %v3689
  %v3838 = vpop.f32.mrb[0].mxu0
  %v3839 = vadd.f32 0.0, %v3838
  %v3840 = vpop.f32.mrb[0].mxu0
  %v3841 = vpop.f32.mrb[0].mxu0
  %v3842 = vadd.f32 0.0, %v3841
  %v3843 = vpop.f32.mrb[0].mxu0
  %3844 = vmatprep.mubr.bf16.mxu0 0
  %3845 = vmatmul.mubr.bf16.gmra.mrb[0].mxu0 %v3690
  %v3846 = vpop.f32.mrb[0].mxu0
  %v3847 = vadd.f32 0.0, %v3846
  %v3848 = vpop.f32.mrb[0].mxu0
  %v3849 = vpop.f32.mrb[0].mxu0
  %v3850 = vadd.f32 0.0, %v3849
  %v3851 = vpop.f32.mrb[0].mxu0
  %3852 = vdwg.mxu0
  %v3853 = vadd.f32 %v3651, %v3791
  %v3854 = vadd.f32 %v3652, %v3794
  %v3855 = vadd.f32 %v3653, %v3799
  %v3856 = vadd.f32 %v3654, %v3802
  %v3857 = vadd.f32 %v3655, %v3807
  %v3858 = vadd.f32 %v3656, %v3810
  %v3859 = vadd.f32 %v3657, %v3815
  %v3860 = vadd.f32 %v3658, %v3818
  %v3861 = vadd.f32 %v3659, %v3823
  %v3862 = vadd.f32 %v3660, %v3826
  %v3863 = vadd.f32 %v3661, %v3831
  %v3864 = vadd.f32 %v3662, %v3834
  %v3865 = vadd.f32 %v3663, %v3839
  %v3866 = vadd.f32 %v3664, %v3842
  %v3867 = vadd.f32 %v3665, %v3847
  %v3868 = vadd.f32 %v3666, %v3850
  %v3869 = vadd.f32 %v3853, %v3854
  %v3870 = vadd.f32 %v3869, %v3855
  %v3871 = vadd.f32 %v3870, %v3856
  %v3872 = vadd.f32 %v3871, %v3857
  %v3873 = vadd.f32 %v3872, %v3858
  %v3874 = vadd.f32 %v3873, %v3859
  %v3875 = vadd.f32 %v3874, %v3860
  %v3876 = vadd.f32 %v3875, %v3861
  %v3877 = vadd.f32 %v3876, %v3862
  %v3878 = vadd.f32 %v3877, %v3863
  %v3879 = vadd.f32 %v3878, %v3864
  %v3880 = vadd.f32 %v3879, %v3865
  %v3881 = vadd.f32 %v3880, %v3866
  %v3882 = vadd.f32 %v3881, %v3867
  %v3883 = vadd.f32 %v3882, %v3868
  %v3884 = vrot.slane %v3883, 4
  %v3885 = vadd.f32 %v3883, %v3884
  %v3886 = vrot.slane %v3885, 2
  %v3887 = vadd.f32 %v3885, %v3886
  %v3888 = vrot.slane %v3887, 1
  %v3889 = vadd.f32 %v3887, %v3888
  %v3890 = vmul.f32 %v3889, 0.0078125
  %v3891 = vmul.f32 %v3853, %v3853
  %v3892 = vmul.f32 %v3854, %v3854
  %v3893 = vmul.f32 %v3855, %v3855
  %v3894 = vmul.f32 %v3856, %v3856
  %v3895 = vmul.f32 %v3857, %v3857
  %v3896 = vmul.f32 %v3858, %v3858
  %v3897 = vmul.f32 %v3859, %v3859
  %v3898 = vmul.f32 %v3860, %v3860
  %v3899 = vmul.f32 %v3861, %v3861
  %v3900 = vmul.f32 %v3862, %v3862
  %v3901 = vmul.f32 %v3863, %v3863
  %v3902 = vmul.f32 %v3864, %v3864
  %v3903 = vmul.f32 %v3865, %v3865
  %v3904 = vmul.f32 %v3866, %v3866
  %v3905 = vmul.f32 %v3867, %v3867
  %v3906 = vmul.f32 %v3868, %v3868
  %v3907 = vadd.f32 %v3891, %v3892
  %v3908 = vadd.f32 %v3907, %v3893
  %v3909 = vadd.f32 %v3908, %v3894
  %v3910 = vadd.f32 %v3909, %v3895
  %v3911 = vadd.f32 %v3910, %v3896
  %v3912 = vadd.f32 %v3911, %v3897
  %v3913 = vadd.f32 %v3912, %v3898
  %v3914 = vadd.f32 %v3913, %v3899
  %v3915 = vadd.f32 %v3914, %v3900
  %v3916 = vadd.f32 %v3915, %v3901
  %v3917 = vadd.f32 %v3916, %v3902
  %v3918 = vadd.f32 %v3917, %v3903
  %v3919 = vadd.f32 %v3918, %v3904
  %v3920 = vadd.f32 %v3919, %v3905
  %v3921 = vadd.f32 %v3920, %v3906
  %v3922 = vrot.slane %v3921, 4
  %v3923 = vadd.f32 %v3921, %v3922
  %v3924 = vrot.slane %v3923, 2
  %v3925 = vadd.f32 %v3923, %v3924
  %v3926 = vrot.slane %v3925, 1
  %v3927 = vadd.f32 %v3925, %v3926
  %v3928 = vmul.f32 %v3927, 0.0078125
  %v3929 = vmul.f32 %v3890, %v3890
  %v3930 = vsub.f32 %v3928, %v3929
  %v3931 = vmax.f32 %v3930, 0.0
  %v3932 = vsub.f32 %v3853, %v3890
  %v3933 = vsub.f32 %v3854, %v3890
  %v3934 = vsub.f32 %v3855, %v3890
  %v3935 = vsub.f32 %v3856, %v3890
  %v3936 = vsub.f32 %v3857, %v3890
  %v3937 = vsub.f32 %v3858, %v3890
  %v3938 = vsub.f32 %v3859, %v3890
  %v3939 = vsub.f32 %v3860, %v3890
  %v3940 = vsub.f32 %v3861, %v3890
  %v3941 = vsub.f32 %v3862, %v3890
  %v3942 = vsub.f32 %v3863, %v3890
  %v3943 = vsub.f32 %v3864, %v3890
  %v3944 = vsub.f32 %v3865, %v3890
  %v3945 = vsub.f32 %v3866, %v3890
  %v3946 = vsub.f32 %v3867, %v3890
  %v3947 = vsub.f32 %v3868, %v3890
  %v3948 = vadd.f32 %v3931, 1e-05
  %v3949 = vrsqrt.pop %v3948
  %v3950 = vmul.f32 %v3932, %v3949
  %v3951 = vmul.f32 %v3933, %v3949
  %v3952 = vmul.f32 %v3934, %v3949
  %v3953 = vmul.f32 %v3935, %v3949
  %v3954 = vmul.f32 %v3936, %v3949
  %v3955 = vmul.f32 %v3937, %v3949
  %v3956 = vmul.f32 %v3938, %v3949
  %v3957 = vmul.f32 %v3939, %v3949
  %v3958 = vmul.f32 %v3940, %v3949
  %v3959 = vmul.f32 %v3941, %v3949
  %v3960 = vmul.f32 %v3942, %v3949
  %v3961 = vmul.f32 %v3943, %v3949
  %v3962 = vmul.f32 %v3944, %v3949
  %v3963 = vmul.f32 %v3945, %v3949
  %v3964 = vmul.f32 %v3946, %v3949
  %v3965 = vmul.f32 %v3947, %v3949
  %v3966 = vld [vmem:[%s6] sm:$0x1]
  %v3968 = vlaneseq
  %v3969 = vshrl.u32 %v3968, 7
  %v3970 = vsub.s32 0, %v3969
  %v3971 = vrot.slane %v3966, %v3970
  %v3973 = vmul.f32 %v3950, %v3971
  %v3974 = vmul.f32 %v3951, %v3971
  %v3975 = vmul.f32 %v3952, %v3971
  %v3976 = vmul.f32 %v3953, %v3971
  %v3977 = vmul.f32 %v3954, %v3971
  %v3978 = vmul.f32 %v3955, %v3971
  %v3979 = vmul.f32 %v3956, %v3971
  %v3980 = vmul.f32 %v3957, %v3971
  %v3981 = vmul.f32 %v3958, %v3971
  %v3982 = vmul.f32 %v3959, %v3971
  %v3983 = vmul.f32 %v3960, %v3971
  %v3984 = vmul.f32 %v3961, %v3971
  %v3985 = vmul.f32 %v3962, %v3971
  %v3986 = vmul.f32 %v3963, %v3971
  %v3987 = vmul.f32 %v3964, %v3971
  %v3988 = vmul.f32 %v3965, %v3971
  %v3989 = vld [vmem:[%s7] sm:$0x1]
  %v3991 = vlaneseq
  %v3992 = vshrl.u32 %v3991, 7
  %v3993 = vsub.s32 0, %v3992
  %v3994 = vrot.slane %v3989, %v3993
  %v3996 = vadd.f32 %v3973, %v3994
  %v3997 = vadd.f32 %v3974, %v3994
  %v3998 = vadd.f32 %v3975, %v3994
  %v3999 = vadd.f32 %v3976, %v3994
  %v4000 = vadd.f32 %v3977, %v3994
  %v4001 = vadd.f32 %v3978, %v3994
  %v4002 = vadd.f32 %v3979, %v3994
  %v4003 = vadd.f32 %v3980, %v3994
  %v4004 = vadd.f32 %v3981, %v3994
  %v4005 = vadd.f32 %v3982, %v3994
  %v4006 = vadd.f32 %v3983, %v3994
  %v4007 = vadd.f32 %v3984, %v3994
  %v4008 = vadd.f32 %v3985, %v3994
  %v4009 = vadd.f32 %v3986, %v3994
  %v4010 = vadd.f32 %v3987, %v3994
  %v4011 = vadd.f32 %v3988, %v3994
  %v4012 = vmax.f32 %v3996, 0.0
  %v4013 = vmax.f32 %v3997, 0.0
  %v4014 = vmax.f32 %v3998, 0.0
  %v4015 = vmax.f32 %v3999, 0.0
  %v4016 = vmax.f32 %v4000, 0.0
  %v4017 = vmax.f32 %v4001, 0.0
  %v4018 = vmax.f32 %v4002, 0.0
  %v4019 = vmax.f32 %v4003, 0.0
  %v4020 = vmax.f32 %v4004, 0.0
  %v4021 = vmax.f32 %v4005, 0.0
  %v4022 = vmax.f32 %v4006, 0.0
  %v4023 = vmax.f32 %v4007, 0.0
  %v4024 = vmax.f32 %v4008, 0.0
  %v4025 = vmax.f32 %v4009, 0.0
  %v4026 = vmax.f32 %v4010, 0.0
  %v4027 = vmax.f32 %v4011, 0.0
  %v4028 = vmax.f32 %v4012, %v4014
  %v4029 = vmax.f32 %v4013, %v4015
  %v4030 = vmax.f32 %v4028, %v4016
  %v4031 = vmax.f32 %v4029, %v4017
  %v4032 = vmax.f32 %v4030, %v4018
  %v4033 = vmax.f32 %v4031, %v4019
  %v4034 = vmax.f32 %v4032, %v4033
  %v4035 = vmax.f32 %v4020, %v4022
  %v4036 = vmax.f32 %v4021, %v4023
  %v4037 = vmax.f32 %v4035, %v4024
  %v4038 = vmax.f32 %v4036, %v4025
  %v4039 = vmax.f32 %v4037, %v4026
  %v4040 = vmax.f32 %v4038, %v4027
  %v4041 = vmax.f32 %v4039, %v4040
  %4042 = vst [vmem:[%s14] sm:$0xff] %v4034
  %4043 = vst [vmem:[%s14 + $0x8] sm:$0xff] %v4041
  %4044 = vst [vmem:[#allocation3] sm:$0xff] 0.0
  %4045 = vst [vmem:[#allocation3 + $0x8] sm:$0x3] 0.0
  %4046 = vst [vmem:[#allocation3 + $0x10] sm:$0xff] 0.0
  %4047 = vst [vmem:[#allocation3 + $0x18] sm:$0x3] 0.0
  %4048 = vst [vmem:[#allocation3 + $0x20] sm:$0xff] 0.0
  %4049 = vst [vmem:[#allocation3 + $0x28] sm:$0x3] 0.0
  %4050 = vst [vmem:[#allocation3 + $0x30] sm:$0xff] 0.0
  %4051 = vst [vmem:[#allocation3 + $0x38] sm:$0x3] 0.0
  %4052 = vst [vmem:[#allocation3 + $0x40] sm:$0xff] 0.0
  %4053 = vst [vmem:[#allocation3 + $0x48] sm:$0x3] 0.0
  %4054 = vst [vmem:[#allocation3 + $0x50] sm:$0xff] 0.0
  %4055 = vst [vmem:[#allocation3 + $0x58] sm:$0x3] 0.0
  %4056 = vst [vmem:[#allocation3 + $0x60] sm:$0xff] 0.0
  %4057 = vst [vmem:[#allocation3 + $0x68] sm:$0x3] 0.0
  %4058 = vst [vmem:[#allocation3 + $0x70] sm:$0xff] 0.0
  %4059 = vst [vmem:[#allocation3 + $0x78] sm:$0x3] 0.0
  %4060 = vst [vmem:[#allocation3 + $0x80] sm:$0xff] 0.0
  %4061 = vst [vmem:[#allocation3 + $0x88] sm:$0x3] 0.0
  %4062 = vst [vmem:[#allocation3 + $0x90] sm:$0xff] 0.0
  %4063 = vst [vmem:[#allocation3 + $0x98] sm:$0x3] 0.0
  %4064 = vst [vmem:[#allocation3 + $0xa0] sm:$0xff] 0.0
  %4065 = vst [vmem:[#allocation3 + $0xa8] sm:$0x3] 0.0
  %4066 = vst [vmem:[#allocation3 + $0xb0] sm:$0xff] 0.0
  %4067 = vst [vmem:[#allocation3 + $0xb8] sm:$0x3] 0.0
  %4068 = vst [vmem:[#allocation3 + $0xc0] sm:$0xff] 0.0
  %4069 = vst [vmem:[#allocation3 + $0xc8] sm:$0x3] 0.0
  %4070 = vst [vmem:[#allocation3 + $0xd0] sm:$0xff] 0.0
  %4071 = vst [vmem:[#allocation3 + $0xd8] sm:$0x3] 0.0
  %4072 = vst [vmem:[#allocation3 + $0xe0] sm:$0xff] 0.0
  %4073 = vst [vmem:[#allocation3 + $0xe8] sm:$0x3] 0.0
  %4074 = vst [vmem:[#allocation3 + $0xf0] sm:$0xff] 0.0
  %4075 = vst [vmem:[#allocation3 + $0xf8] sm:$0x3] 0.0
  %4076 = vst [vmem:[#allocation3 + $0x100] sm:$0xff] 0.0
  %4077 = vst [vmem:[#allocation3 + $0x108] sm:$0x3] 0.0
  %4078 = vst [vmem:[#allocation3 + $0x110] sm:$0xff] 0.0
  %4079 = vst [vmem:[#allocation3 + $0x118] sm:$0x3] 0.0
  %4080 = vst [vmem:[#allocation3 + $0x120] sm:$0xff] 0.0
  %4081 = vst [vmem:[#allocation3 + $0x128] sm:$0x3] 0.0
  %4082 = vst [vmem:[#allocation3 + $0x130] sm:$0xff] 0.0
  %4083 = vst [vmem:[#allocation3 + $0x138] sm:$0x3] 0.0
  %4084 = vst [vmem:[#allocation3 + $0x140] sm:$0xff] 0.0
  %4085 = vst [vmem:[#allocation3 + $0x148] sm:$0x3] 0.0
  %4086 = vst [vmem:[#allocation3 + $0x150] sm:$0xff] 0.0
  %4087 = vst [vmem:[#allocation3 + $0x158] sm:$0x3] 0.0
  %4088 = vst [vmem:[#allocation3 + $0x160] sm:$0xff] 0.0
  %4089 = vst [vmem:[#allocation3 + $0x168] sm:$0x3] 0.0
  %4090 = vst [vmem:[#allocation3 + $0x170] sm:$0xff] 0.0
  %4091 = vst [vmem:[#allocation3 + $0x178] sm:$0x3] 0.0
  %4092 = vst [vmem:[#allocation3 + $0x180] sm:$0xff] 0.0
  %4093 = vst [vmem:[#allocation3 + $0x188] sm:$0x3] 0.0
  %4094 = vst [vmem:[#allocation3 + $0x190] sm:$0xff] 0.0
  %4095 = vst [vmem:[#allocation3 + $0x198] sm:$0x3] 0.0
  %4096 = vst [vmem:[#allocation3 + $0x1a0] sm:$0xff] 0.0
  %4097 = vst [vmem:[#allocation3 + $0x1a8] sm:$0x3] 0.0
  %4098 = vst [vmem:[#allocation3 + $0x1b0] sm:$0xff] 0.0
  %4099 = vst [vmem:[#allocation3 + $0x1b8] sm:$0x3] 0.0
  %4100 = vst [vmem:[#allocation3 + $0x1c0] sm:$0xff] 0.0
  %4101 = vst [vmem:[#allocation3 + $0x1c8] sm:$0x3] 0.0
  %4102 = vst [vmem:[#allocation3 + $0x1d0] sm:$0xff] 0.0
  %4103 = vst [vmem:[#allocation3 + $0x1d8] sm:$0x3] 0.0
  %4104 = vst [vmem:[#allocation3 + $0x1e0] sm:$0xff] 0.0
  %4105 = vst [vmem:[#allocation3 + $0x1e8] sm:$0x3] 0.0
  %4106 = vst [vmem:[#allocation3 + $0x1f0] sm:$0xff] 0.0
  %4107 = vst [vmem:[#allocation3 + $0x1f8] sm:$0x3] 0.0
  %4108 = vst [vmem:[#allocation3 + $0x200] sm:$0xff] 0.0
  %4109 = vst [vmem:[#allocation3 + $0x208] sm:$0x3] 0.0
  %4110 = vst [vmem:[#allocation3 + $0x210] sm:$0xff] 0.0
  %4111 = vst [vmem:[#allocation3 + $0x218] sm:$0x3] 0.0
  %4112 = vst [vmem:[#allocation3 + $0x220] sm:$0xff] 0.0
  %4113 = vst [vmem:[#allocation3 + $0x228] sm:$0x3] 0.0
  %4114 = vst [vmem:[#allocation3 + $0x230] sm:$0xff] 0.0
  %4115 = vst [vmem:[#allocation3 + $0x238] sm:$0x3] 0.0
  %v4116 = vld [vmem:[%s1] sm:$0xff]
  %v4117 = vld [vmem:[%s1 + $0x8] sm:$0xff]
  %v4118 = vld [vmem:[%s1 + $0x10] sm:$0xff]
  %v4119 = vld [vmem:[%s1 + $0x18] sm:$0xff]
  %v4120 = vld [vmem:[%s1 + $0x20] sm:$0xff]
  %v4121 = vld [vmem:[%s1 + $0x28] sm:$0xff]
  %v4122 = vld [vmem:[%s1 + $0x30] sm:$0xff]
  %v4123 = vld [vmem:[%s1 + $0x38] sm:$0xff]
  %v4124 = vld [vmem:[%s1 + $0x40] sm:$0xff]
  %v4125 = vld [vmem:[%s1 + $0x48] sm:$0xff]
  %v4126 = vld [vmem:[%s1 + $0x50] sm:$0xff]
  %v4127 = vld [vmem:[%s1 + $0x58] sm:$0xff]
  %v4128 = vld [vmem:[%s1 + $0x60] sm:$0xff]
  %v4129 = vld [vmem:[%s1 + $0x68] sm:$0xff]
  %v4130 = vld [vmem:[%s1 + $0x70] sm:$0xff]
  %v4131 = vld [vmem:[%s1 + $0x78] sm:$0xff]
  %v4132 = vld [vmem:[%s1 + $0x80] sm:$0xff]
  %v4133 = vld [vmem:[%s1 + $0x88] sm:$0xff]
  %v4134 = vld [vmem:[%s1 + $0x90] sm:$0xff]
  %v4135 = vld [vmem:[%s1 + $0x98] sm:$0xff]
  %v4136 = vld [vmem:[%s1 + $0xa0] sm:$0xff]
  %v4137 = vld [vmem:[%s1 + $0xa8] sm:$0xff]
  %v4138 = vld [vmem:[%s1 + $0xb0] sm:$0xff]
  %v4139 = vld [vmem:[%s1 + $0xb8] sm:$0xff]
  %v4140 = vld [vmem:[%s1 + $0xc0] sm:$0xff]
  %v4141 = vld [vmem:[%s1 + $0xc8] sm:$0xff]
  %v4142 = vld [vmem:[%s1 + $0xd0] sm:$0xff]
  %v4143 = vld [vmem:[%s1 + $0xd8] sm:$0xff]
  %v4144 = vld [vmem:[%s1 + $0xe0] sm:$0xff]
  %v4145 = vld [vmem:[%s1 + $0xe8] sm:$0xff]
  %v4146 = vld [vmem:[%s1 + $0xf0] sm:$0xff]
  %v4147 = vld [vmem:[%s1 + $0xf8] sm:$0xff]
  %s4148 = scalar_lea.vmem [#allocation3], 16
  %4149 = vst [vmem:[%s4148 + $0x1] sm:$0xff] %v4116
  %4150 = vst [vmem:[%s4148 + $0x11] sm:$0xff] %v4117
  %4151 = vst [vmem:[%s4148 + $0x21] sm:$0xff] %v4118
  %4152 = vst [vmem:[%s4148 + $0x31] sm:$0xff] %v4119
  %4153 = vst [vmem:[%s4148 + $0x41] sm:$0xff] %v4120
  %4154 = vst [vmem:[%s4148 + $0x51] sm:$0xff] %v4121
  %4155 = vst [vmem:[%s4148 + $0x61] sm:$0xff] %v4122
  %4156 = vst [vmem:[%s4148 + $0x71] sm:$0xff] %v4123
  %4157 = vst [vmem:[%s4148 + $0x81] sm:$0xff] %v4124
  %4158 = vst [vmem:[%s4148 + $0x91] sm:$0xff] %v4125
  %4159 = vst [vmem:[%s4148 + $0xa1] sm:$0xff] %v4126
  %4160 = vst [vmem:[%s4148 + $0xb1] sm:$0xff] %v4127
  %4161 = vst [vmem:[%s4148 + $0xc1] sm:$0xff] %v4128
  %4162 = vst [vmem:[%s4148 + $0xd1] sm:$0xff] %v4129
  %4163 = vst [vmem:[%s4148 + $0xe1] sm:$0xff] %v4130
  %4164 = vst [vmem:[%s4148 + $0xf1] sm:$0xff] %v4131
  %4165 = vst [vmem:[%s4148 + $0x121] sm:$0xff] %v4132
  %4166 = vst [vmem:[%s4148 + $0x131] sm:$0xff] %v4133
  %4167 = vst [vmem:[%s4148 + $0x141] sm:$0xff] %v4134
  %4168 = vst [vmem:[%s4148 + $0x151] sm:$0xff] %v4135
  %4169 = vst [vmem:[%s4148 + $0x161] sm:$0xff] %v4136
  %4170 = vst [vmem:[%s4148 + $0x171] sm:$0xff] %v4137
  %4171 = vst [vmem:[%s4148 + $0x181] sm:$0xff] %v4138
  %4172 = vst [vmem:[%s4148 + $0x191] sm:$0xff] %v4139
  %4173 = vst [vmem:[%s4148 + $0x1a1] sm:$0xff] %v4140
  %4174 = vst [vmem:[%s4148 + $0x1b1] sm:$0xff] %v4141
  %4175 = vst [vmem:[%s4148 + $0x1c1] sm:$0xff] %v4142
  %4176 = vst [vmem:[%s4148 + $0x1d1] sm:$0xff] %v4143
  %4177 = vst [vmem:[%s4148 + $0x1e1] sm:$0xff] %v4144
  %4178 = vst [vmem:[%s4148 + $0x1f1] sm:$0xff] %v4145
  %4179 = vst [vmem:[%s4148 + $0x201] sm:$0xff] %v4146
  %4180 = vst [vmem:[%s4148 + $0x211] sm:$0xff] %v4147
  %v4181 = vld [vmem:[#allocation3] sm:$0xff]
  %v4182 = vld [vmem:[#allocation3 + $0x10] sm:$0xff]
  %v4183 = vld [vmem:[#allocation3 + $0x20] sm:$0xff]
  %v4184 = vld [vmem:[#allocation3 + $0x30] sm:$0xff]
  %v4185 = vld [vmem:[#allocation3 + $0x40] sm:$0xff]
  %v4186 = vld [vmem:[#allocation3 + $0x50] sm:$0xff]
  %v4187 = vld [vmem:[#allocation3 + $0x60] sm:$0xff]
  %v4188 = vld [vmem:[#allocation3 + $0x70] sm:$0xff]
  %v4189 = vld [vmem:[#allocation3 + $0x80] sm:$0xff]
  %v4190 = vld [vmem:[#allocation3 + $0x90] sm:$0xff]
  %v4191 = vld [vmem:[#allocation3 + $0xa0] sm:$0xff]
  %v4192 = vld [vmem:[#allocation3 + $0xb0] sm:$0xff]
  %v4193 = vld [vmem:[#allocation3 + $0xc0] sm:$0xff]
  %v4194 = vld [vmem:[#allocation3 + $0xd0] sm:$0xff]
  %v4195 = vld [vmem:[#allocation3 + $0xe0] sm:$0xff]
  %v4196 = vld [vmem:[#allocation3 + $0xf0] sm:$0xff]
  %v4197 = vld [vmem:[#allocation3 + $0x120] sm:$0xff]
  %v4198 = vld [vmem:[#allocation3 + $0x130] sm:$0xff]
  %v4199 = vld [vmem:[#allocation3 + $0x140] sm:$0xff]
  %v4200 = vld [vmem:[#allocation3 + $0x150] sm:$0xff]
  %v4201 = vld [vmem:[#allocation3 + $0x160] sm:$0xff]
  %v4202 = vld [vmem:[#allocation3 + $0x170] sm:$0xff]
  %v4203 = vld [vmem:[#allocation3 + $0x180] sm:$0xff]
  %v4204 = vld [vmem:[#allocation3 + $0x190] sm:$0xff]
  %v4205 = vld [vmem:[#allocation3 + $0x1a0] sm:$0xff]
  %v4206 = vld [vmem:[#allocation3 + $0x1b0] sm:$0xff]
  %v4207 = vld [vmem:[#allocation3 + $0x1c0] sm:$0xff]
  %v4208 = vld [vmem:[#allocation3 + $0x1d0] sm:$0xff]
  %v4209 = vld [vmem:[#allocation3 + $0x1e0] sm:$0xff]
  %v4210 = vld [vmem:[#allocation3 + $0x1f0] sm:$0xff]
  %v4211 = vld [vmem:[#allocation3 + $0x200] sm:$0xff]
  %v4212 = vld [vmem:[#allocation3 + $0x210] sm:$0xff]
  %v4213 = vpack.c.bf16 %v4182, %v4181
  %v4214 = vpack.c.bf16 %v4184, %v4183
  %v4215 = vpack.c.bf16 %v4186, %v4185
  %v4216 = vpack.c.bf16 %v4188, %v4187
  %v4217 = vpack.c.bf16 %v4190, %v4189
  %v4218 = vpack.c.bf16 %v4192, %v4191
  %v4219 = vpack.c.bf16 %v4194, %v4193
  %v4220 = vpack.c.bf16 %v4196, %v4195
  %v4221 = vpack.c.bf16 %v4198, %v4197
  %v4222 = vpack.c.bf16 %v4200, %v4199
  %v4223 = vpack.c.bf16 %v4202, %v4201
  %v4224 = vpack.c.bf16 %v4204, %v4203
  %v4225 = vpack.c.bf16 %v4206, %v4205
  %v4226 = vpack.c.bf16 %v4208, %v4207
  %v4227 = vpack.c.bf16 %v4210, %v4209
  %v4228 = vpack.c.bf16 %v4212, %v4211
  %v4229 = vld [vmem:[%s8] sm:$0xf]
  %v4230 = vld [vmem:[%s8 + $0x4] sm:$0xf]
  %v4231 = vld [vmem:[%s8 + $0x8] sm:$0xf]
  %v4232 = vld [vmem:[%s8 + $0xc] sm:$0xf]
  %v4233 = vld [vmem:[%s8 + $0x10] sm:$0xf]
  %v4234 = vld [vmem:[%s8 + $0x14] sm:$0xf]
  %v4235 = vld [vmem:[%s8 + $0x18] sm:$0xf]
  %v4236 = vld [vmem:[%s8 + $0x1c] sm:$0xf]
  %v4237 = vld [vmem:[%s8 + $0x20] sm:$0xf]
  %v4238 = vld [vmem:[%s8 + $0x24] sm:$0xf]
  %v4239 = vld [vmem:[%s8 + $0x28] sm:$0xf]
  %v4240 = vld [vmem:[%s8 + $0x2c] sm:$0xf]
  %v4241 = vld [vmem:[%s8 + $0x30] sm:$0xf]
  %v4242 = vld [vmem:[%s8 + $0x34] sm:$0xf]
  %v4243 = vld [vmem:[%s8 + $0x38] sm:$0xf]
  %v4244 = vld [vmem:[%s8 + $0x3c] sm:$0xf]
  %v4245 = vld [vmem:[#allocation3 + $0x1] sm:$0xff]
  %v4246 = vld [vmem:[#allocation3 + $0x11] sm:$0xff]
  %v4247 = vld [vmem:[#allocation3 + $0x21] sm:$0xff]
  %v4248 = vld [vmem:[#allocation3 + $0x31] sm:$0xff]
  %v4249 = vld [vmem:[#allocation3 + $0x41] sm:$0xff]
  %v4250 = vld [vmem:[#allocation3 + $0x51] sm:$0xff]
  %v4251 = vld [vmem:[#allocation3 + $0x61] sm:$0xff]
  %v4252 = vld [vmem:[#allocation3 + $0x71] sm:$0xff]
  %v4253 = vld [vmem:[#allocation3 + $0x81] sm:$0xff]
  %v4254 = vld [vmem:[#allocation3 + $0x91] sm:$0xff]
  %v4255 = vld [vmem:[#allocation3 + $0xa1] sm:$0xff]
  %v4256 = vld [vmem:[#allocation3 + $0xb1] sm:$0xff]
  %v4257 = vld [vmem:[#allocation3 + $0xc1] sm:$0xff]
  %v4258 = vld [vmem:[#allocation3 + $0xd1] sm:$0xff]
  %v4259 = vld [vmem:[#allocation3 + $0xe1] sm:$0xff]
  %v4260 = vld [vmem:[#allocation3 + $0xf1] sm:$0xff]
  %v4261 = vld [vmem:[#allocation3 + $0x121] sm:$0xff]
  %v4262 = vld [vmem:[#allocation3 + $0x131] sm:$0xff]
  %v4263 = vld [vmem:[#allocation3 + $0x141] sm:$0xff]
  %v4264 = vld [vmem:[#allocation3 + $0x151] sm:$0xff]
  %v4265 = vld [vmem:[#allocation3 + $0x161] sm:$0xff]
  %v4266 = vld [vmem:[#allocation3 + $0x171] sm:$0xff]
  %v4267 = vld [vmem:[#allocation3 + $0x181] sm:$0xff]
  %v4268 = vld [vmem:[#allocation3 + $0x191] sm:$0xff]
  %v4269 = vld [vmem:[#allocation3 + $0x1a1] sm:$0xff]
  %v4270 = vld [vmem:[#allocation3 + $0x1b1] sm:$0xff]
  %v4271 = vld [vmem:[#allocation3 + $0x1c1] sm:$0xff]
  %v4272 = vld [vmem:[#allocation3 + $0x1d1] sm:$0xff]
  %v4273 = vld [vmem:[#allocation3 + $0x1e1] sm:$0xff]
  %v4274 = vld [vmem:[#allocation3 + $0x1f1] sm:$0xff]
  %v4275 = vld [vmem:[#allocation3 + $0x201] sm:$0xff]
  %v4276 = vld [vmem:[#allocation3 + $0x211] sm:$0xff]
  %v4277 = vpack.c.bf16 %v4246, %v4245
  %v4278 = vpack.c.bf16 %v4248, %v4247
  %v4279 = vpack.c.bf16 %v4250, %v4249
  %v4280 = vpack.c.bf16 %v4252, %v4251
  %v4281 = vpack.c.bf16 %v4254, %v4253
  %v4282 = vpack.c.bf16 %v4256, %v4255
  %v4283 = vpack.c.bf16 %v4258, %v4257
  %v4284 = vpack.c.bf16 %v4260, %v4259
  %v4285 = vpack.c.bf16 %v4262, %v4261
  %v4286 = vpack.c.bf16 %v4264, %v4263
  %v4287 = vpack.c.bf16 %v4266, %v4265
  %v4288 = vpack.c.bf16 %v4268, %v4267
  %v4289 = vpack.c.bf16 %v4270, %v4269
  %v4290 = vpack.c.bf16 %v4272, %v4271
  %v4291 = vpack.c.bf16 %v4274, %v4273
  %v4292 = vpack.c.bf16 %v4276, %v4275
  %s4293 = scalar_lea.vmem %s8, 64
  %v4294 = vld [vmem:[%s4293] sm:$0xf]
  %v4295 = vld [vmem:[%s4293 + $0x4] sm:$0xf]
  %v4296 = vld [vmem:[%s4293 + $0x8] sm:$0xf]
  %v4297 = vld [vmem:[%s4293 + $0xc] sm:$0xf]
  %v4298 = vld [vmem:[%s4293 + $0x10] sm:$0xf]
  %v4299 = vld [vmem:[%s4293 + $0x14] sm:$0xf]
  %v4300 = vld [vmem:[%s4293 + $0x18] sm:$0xf]
  %v4301 = vld [vmem:[%s4293 + $0x1c] sm:$0xf]
  %v4302 = vld [vmem:[%s4293 + $0x20] sm:$0xf]
  %v4303 = vld [vmem:[%s4293 + $0x24] sm:$0xf]
  %v4304 = vld [vmem:[%s4293 + $0x28] sm:$0xf]
  %v4305 = vld [vmem:[%s4293 + $0x2c] sm:$0xf]
  %v4306 = vld [vmem:[%s4293 + $0x30] sm:$0xf]
  %v4307 = vld [vmem:[%s4293 + $0x34] sm:$0xf]
  %v4308 = vld [vmem:[%s4293 + $0x38] sm:$0xf]
  %v4309 = vld [vmem:[%s4293 + $0x3c] sm:$0xf]
  %v4326 = vunpack.c.l.b16 %v4294
  %v4327 = vunpack.c.l.b16 %v4295
  %v4328 = vunpack.c.l.b16 %v4296
  %v4329 = vunpack.c.l.b16 %v4297
  %v4330 = vunpack.c.l.b16 %v4298
  %v4331 = vunpack.c.l.b16 %v4299
  %v4332 = vunpack.c.l.b16 %v4300
  %v4333 = vunpack.c.l.b16 %v4301
  %v4334 = vunpack.c.l.b16 %v4302
  %v4335 = vunpack.c.l.b16 %v4303
  %v4336 = vunpack.c.l.b16 %v4304
  %v4337 = vunpack.c.l.b16 %v4305
  %v4338 = vunpack.c.l.b16 %v4306
  %v4339 = vunpack.c.l.b16 %v4307
  %v4340 = vunpack.c.l.b16 %v4308
  %v4341 = vunpack.c.l.b16 %v4309
  %v4342 = vpack.c.b16 %v4327, %v4326
  %v4343 = vpack.c.b16 %v4329, %v4328
  %v4344 = vpack.c.b16 %v4331, %v4330
  %v4345 = vpack.c.b16 %v4333, %v4332
  %v4346 = vpack.c.b16 %v4335, %v4334
  %v4347 = vpack.c.b16 %v4337, %v4336
  %v4348 = vpack.c.b16 %v4339, %v4338
  %v4349 = vpack.c.b16 %v4341, %v4340
  %4358 = vmatprep.subr.bf16.mxu0 0
  %4359 = vmatpush1.bf16.msra.mxu0 %v4342
  %4360 = vmatprep.subr.bf16.mxu0 0
  %4361 = vmatpush1.bf16.msra.mxu0 %v4343
  %4362 = vmatprep.subr.bf16.mxu0 0
  %4363 = vmatpush1.bf16.msra.mxu0 %v4344
  %4364 = vmatprep.subr.bf16.mxu0 0
  %4365 = vmatpush1.bf16.msra.mxu0 %v4345
  %4366 = vmatprep.subr.bf16.mxu0 0
  %4367 = vmatpush1.bf16.msra.mxu0 %v4346
  %4368 = vmatprep.subr.bf16.mxu0 0
  %4369 = vmatpush1.bf16.msra.mxu0 %v4347
  %4370 = vmatprep.subr.bf16.mxu0 0
  %4371 = vmatpush1.bf16.msra.mxu0 %v4348
  %4372 = vmatprep.subr.bf16.mxu0 0
  %4373 = vmatpush1.bf16.msra.mxu0 %v4349
  %4374 = vmatprep.subr.bf16.mxu0 0
  %4375 = vmatpush1.bf16.msra.mxu0 0
  %4376 = vmatprep.subr.bf16.mxu0 0
  %4377 = vmatpush1.bf16.msra.mxu0 0
  %4378 = vmatprep.subr.bf16.mxu0 0
  %4379 = vmatpush1.bf16.msra.mxu0 0
  %4380 = vmatprep.subr.bf16.mxu0 0
  %4381 = vmatpush1.bf16.msra.mxu0 0
  %4382 = vmatprep.subr.bf16.mxu0 0
  %4383 = vmatpush1.bf16.msra.mxu0 0
  %4384 = vmatprep.subr.bf16.mxu0 0
  %4385 = vmatpush1.bf16.msra.mxu0 0
  %4386 = vmatprep.subr.bf16.mxu0 0
  %4387 = vmatpush1.bf16.msra.mxu0 0
  %4388 = vmatprep.subr.bf16.mxu0 0
  %4389 = vmatpush1.bf16.msra.mxu0 0
  %4390 = vmatprep.mubr.bf16.mxu0 0
  %4391 = vmatmul.mubr.bf16.gmra.mrb[0].mxu0 %v4277
  %v4392 = vpop.f32.mrb[0].mxu0
  %v4393 = vadd.f32 0.0, %v4392
  %v4394 = vpop.f32.mrb[0].mxu0
  %v4395 = vpop.f32.mrb[0].mxu0
  %v4396 = vadd.f32 0.0, %v4395
  %v4397 = vpop.f32.mrb[0].mxu0
  %4398 = vmatprep.mubr.bf16.mxu0 0
  %4399 = vmatmul.mubr.bf16.gmra.mrb[0].mxu0 %v4278
  %v4400 = vpop.f32.mrb[0].mxu0
  %v4401 = vadd.f32 0.0, %v4400
  %v4402 = vpop.f32.mrb[0].mxu0
  %v4403 = vpop.f32.mrb[0].mxu0
  %v4404 = vadd.f32 0.0, %v4403
  %v4405 = vpop.f32.mrb[0].mxu0
  %4406 = vmatprep.mubr.bf16.mxu0 0
  %4407 = vmatmul.mubr.bf16.gmra.mrb[0].mxu0 %v4279
  %v4408 = vpop.f32.mrb[0].mxu0
  %v4409 = vadd.f32 0.0, %v4408
  %v4410 = vpop.f32.mrb[0].mxu0
  %v4411 = vpop.f32.mrb[0].mxu0
  %v4412 = vadd.f32 0.0, %v4411
  %v4413 = vpop.f32.mrb[0].mxu0
  %4414 = vmatprep.mubr.bf16.mxu0 0
  %4415 = vmatmul.mubr.bf16.gmra.mrb[0].mxu0 %v4280
  %v4416 = vpop.f32.mrb[0].mxu0
  %v4417 = vadd.f32 0.0, %v4416
  %v4418 = vpop.f32.mrb[0].mxu0
  %v4419 = vpop.f32.mrb[0].mxu0
  %v4420 = vadd.f32 0.0, %v4419
  %v4421 = vpop.f32.mrb[0].mxu0
  %4422 = vmatprep.mubr.bf16.mxu0 0
  %4423 = vmatmul.mubr.bf16.gmra.mrb[0].mxu0 %v4281
  %v4424 = vpop.f32.mrb[0].mxu0
  %v4425 = vadd.f32 0.0, %v4424
  %v4426 = vpop.f32.mrb[0].mxu0
  %v4427 = vpop.f32.mrb[0].mxu0
  %v4428 = vadd.f32 0.0, %v4427
  %v4429 = vpop.f32.mrb[0].mxu0
  %4430 = vmatprep.mubr.bf16.mxu0 0
  %4431 = vmatmul.mubr.bf16.gmra.mrb[0].mxu0 %v4282
  %v4432 = vpop.f32.mrb[0].mxu0
  %v4433 = vadd.f32 0.0, %v4432
  %v4434 = vpop.f32.mrb[0].mxu0
  %v4435 = vpop.f32.mrb[0].mxu0
  %v4436 = vadd.f32 0.0, %v4435
  %v4437 = vpop.f32.mrb[0].mxu0
  %4438 = vmatprep.mubr.bf16.mxu0 0
  %4439 = vmatmul.mubr.bf16.gmra.mrb[0].mxu0 %v4283
  %v4440 = vpop.f32.mrb[0].mxu0
  %v4441 = vadd.f32 0.0, %v4440
  %v4442 = vpop.f32.mrb[0].mxu0
  %v4443 = vpop.f32.mrb[0].mxu0
  %v4444 = vadd.f32 0.0, %v4443
  %v4445 = vpop.f32.mrb[0].mxu0
  %4446 = vmatprep.mubr.bf16.mxu0 0
  %4447 = vmatmul.mubr.bf16.gmra.mrb[0].mxu0 %v4284
  %v4448 = vpop.f32.mrb[0].mxu0
  %v4449 = vadd.f32 0.0, %v4448
  %v4450 = vpop.f32.mrb[0].mxu0
  %v4451 = vpop.f32.mrb[0].mxu0
  %v4452 = vadd.f32 0.0, %v4451
  %v4453 = vpop.f32.mrb[0].mxu0
  %4454 = vmatprep.mubr.bf16.mxu0 0
  %4455 = vmatmul.mubr.bf16.gmra.mrb[0].mxu0 %v4285
  %v4456 = vpop.f32.mrb[0].mxu0
  %v4457 = vadd.f32 0.0, %v4456
  %v4458 = vpop.f32.mrb[0].mxu0
  %v4459 = vpop.f32.mrb[0].mxu0
  %v4460 = vadd.f32 0.0, %v4459
  %v4461 = vpop.f32.mrb[0].mxu0
  %4462 = vmatprep.mubr.bf16.mxu0 0
  %4463 = vmatmul.mubr.bf16.gmra.mrb[0].mxu0 %v4286
  %v4464 = vpop.f32.mrb[0].mxu0
  %v4465 = vadd.f32 0.0, %v4464
  %v4466 = vpop.f32.mrb[0].mxu0
  %v4467 = vpop.f32.mrb[0].mxu0
  %v4468 = vadd.f32 0.0, %v4467
  %v4469 = vpop.f32.mrb[0].mxu0
  %4470 = vmatprep.mubr.bf16.mxu0 0
  %4471 = vmatmul.mubr.bf16.gmra.mrb[0].mxu0 %v4287
  %v4472 = vpop.f32.mrb[0].mxu0
  %v4473 = vadd.f32 0.0, %v4472
  %v4474 = vpop.f32.mrb[0].mxu0
  %v4475 = vpop.f32.mrb[0].mxu0
  %v4476 = vadd.f32 0.0, %v4475
  %v4477 = vpop.f32.mrb[0].mxu0
  %4478 = vmatprep.mubr.bf16.mxu0 0
  %4479 = vmatmul.mubr.bf16.gmra.mrb[0].mxu0 %v4288
  %v4480 = vpop.f32.mrb[0].mxu0
  %v4481 = vadd.f32 0.0, %v4480
  %v4482 = vpop.f32.mrb[0].mxu0
  %v4483 = vpop.f32.mrb[0].mxu0
  %v4484 = vadd.f32 0.0, %v4483
  %v4485 = vpop.f32.mrb[0].mxu0
  %4486 = vmatprep.mubr.bf16.mxu0 0
  %4487 = vmatmul.mubr.bf16.gmra.mrb[0].mxu0 %v4289
  %v4488 = vpop.f32.mrb[0].mxu0
  %v4489 = vadd.f32 0.0, %v4488
  %v4490 = vpop.f32.mrb[0].mxu0
  %v4491 = vpop.f32.mrb[0].mxu0
  %v4492 = vadd.f32 0.0, %v4491
  %v4493 = vpop.f32.mrb[0].mxu0
  %4494 = vmatprep.mubr.bf16.mxu0 0
  %4495 = vmatmul.mubr.bf16.gmra.mrb[0].mxu0 %v4290
  %v4496 = vpop.f32.mrb[0].mxu0
  %v4497 = vadd.f32 0.0, %v4496
  %v4498 = vpop.f32.mrb[0].mxu0
  %v4499 = vpop.f32.mrb[0].mxu0
  %v4500 = vadd.f32 0.0, %v4499
  %v4501 = vpop.f32.mrb[0].mxu0
  %4502 = vmatprep.mubr.bf16.mxu0 0
  %4503 = vmatmul.mubr.bf16.gmra.mrb[0].mxu0 %v4291
  %v4504 = vpop.f32.mrb[0].mxu0
  %v4505 = vadd.f32 0.0, %v4504
  %v4506 = vpop.f32.mrb[0].mxu0
  %v4507 = vpop.f32.mrb[0].mxu0
  %v4508 = vadd.f32 0.0, %v4507
  %v4509 = vpop.f32.mrb[0].mxu0
  %4510 = vmatprep.mubr.bf16.mxu0 0
  %4511 = vmatmul.mubr.bf16.gmra.mrb[0].mxu0 %v4292
  %v4512 = vpop.f32.mrb[0].mxu0
  %v4513 = vadd.f32 0.0, %v4512
  %v4514 = vpop.f32.mrb[0].mxu0
  %v4515 = vpop.f32.mrb[0].mxu0
  %v4516 = vadd.f32 0.0, %v4515
  %v4517 = vpop.f32.mrb[0].mxu0
  %4518 = vdwg.mxu0
  %v4535 = vunpack.c.l.b16 %v4229
  %v4536 = vunpack.c.l.b16 %v4230
  %v4537 = vunpack.c.l.b16 %v4231
  %v4538 = vunpack.c.l.b16 %v4232
  %v4539 = vunpack.c.l.b16 %v4233
  %v4540 = vunpack.c.l.b16 %v4234
  %v4541 = vunpack.c.l.b16 %v4235
  %v4542 = vunpack.c.l.b16 %v4236
  %v4543 = vunpack.c.l.b16 %v4237
  %v4544 = vunpack.c.l.b16 %v4238
  %v4545 = vunpack.c.l.b16 %v4239
  %v4546 = vunpack.c.l.b16 %v4240
  %v4547 = vunpack.c.l.b16 %v4241
  %v4548 = vunpack.c.l.b16 %v4242
  %v4549 = vunpack.c.l.b16 %v4243
  %v4550 = vunpack.c.l.b16 %v4244
  %v4551 = vpack.c.b16 %v4536, %v4535
  %v4552 = vpack.c.b16 %v4538, %v4537
  %v4553 = vpack.c.b16 %v4540, %v4539
  %v4554 = vpack.c.b16 %v4542, %v4541
  %v4555 = vpack.c.b16 %v4544, %v4543
  %v4556 = vpack.c.b16 %v4546, %v4545
  %v4557 = vpack.c.b16 %v4548, %v4547
  %v4558 = vpack.c.b16 %v4550, %v4549
  %4567 = vmatprep.subr.bf16.mxu0 0
  %4568 = vmatpush1.bf16.msra.mxu0 %v4551
  %4569 = vmatprep.subr.bf16.mxu0 0
  %4570 = vmatpush1.bf16.msra.mxu0 %v4552
  %4571 = vmatprep.subr.bf16.mxu0 0
  %4572 = vmatpush1.bf16.msra.mxu0 %v4553
  %4573 = vmatprep.subr.bf16.mxu0 0
  %4574 = vmatpush1.bf16.msra.mxu0 %v4554
  %4575 = vmatprep.subr.bf16.mxu0 0
  %4576 = vmatpush1.bf16.msra.mxu0 %v4555
  %4577 = vmatprep.subr.bf16.mxu0 0
  %4578 = vmatpush1.bf16.msra.mxu0 %v4556
  %4579 = vmatprep.subr.bf16.mxu0 0
  %4580 = vmatpush1.bf16.msra.mxu0 %v4557
  %4581 = vmatprep.subr.bf16.mxu0 0
  %4582 = vmatpush1.bf16.msra.mxu0 %v4558
  %4583 = vmatprep.subr.bf16.mxu0 0
  %4584 = vmatpush1.bf16.msra.mxu0 0
  %4585 = vmatprep.subr.bf16.mxu0 0
  %4586 = vmatpush1.bf16.msra.mxu0 0
  %4587 = vmatprep.subr.bf16.mxu0 0
  %4588 = vmatpush1.bf16.msra.mxu0 0
  %4589 = vmatprep.subr.bf16.mxu0 0
  %4590 = vmatpush1.bf16.msra.mxu0 0
  %4591 = vmatprep.subr.bf16.mxu0 0
  %4592 = vmatpush1.bf16.msra.mxu0 0
  %4593 = vmatprep.subr.bf16.mxu0 0
  %4594 = vmatpush1.bf16.msra.mxu0 0
  %4595 = vmatprep.subr.bf16.mxu0 0
  %4596 = vmatpush1.bf16.msra.mxu0 0
  %4597 = vmatprep.subr.bf16.mxu0 0
  %4598 = vmatpush1.bf16.msra.mxu0 0
  %4599 = vmatprep.mubr.bf16.mxu0 0
  %4600 = vmatmul.mubr.bf16.gmra.mrb[0].mxu0 %v4213
  %v4601 = vpop.f32.mrb[0].mxu0
  %v4602 = vadd.f32 %v4393, %v4601
  %v4603 = vpop.f32.mrb[0].mxu0
  %v4604 = vpop.f32.mrb[0].mxu0
  %v4605 = vadd.f32 %v4396, %v4604
  %v4606 = vpop.f32.mrb[0].mxu0
  %4607 = vmatprep.mubr.bf16.mxu0 0
  %4608 = vmatmul.mubr.bf16.gmra.mrb[0].mxu0 %v4214
  %v4609 = vpop.f32.mrb[0].mxu0
  %v4610 = vadd.f32 %v4401, %v4609
  %v4611 = vpop.f32.mrb[0].mxu0
  %v4612 = vpop.f32.mrb[0].mxu0
  %v4613 = vadd.f32 %v4404, %v4612
  %v4614 = vpop.f32.mrb[0].mxu0
  %4615 = vmatprep.mubr.bf16.mxu0 0
  %4616 = vmatmul.mubr.bf16.gmra.mrb[0].mxu0 %v4215
  %v4617 = vpop.f32.mrb[0].mxu0
  %v4618 = vadd.f32 %v4409, %v4617
  %v4619 = vpop.f32.mrb[0].mxu0
  %v4620 = vpop.f32.mrb[0].mxu0
  %v4621 = vadd.f32 %v4412, %v4620
  %v4622 = vpop.f32.mrb[0].mxu0
  %4623 = vmatprep.mubr.bf16.mxu0 0
  %4624 = vmatmul.mubr.bf16.gmra.mrb[0].mxu0 %v4216
  %v4625 = vpop.f32.mrb[0].mxu0
  %v4626 = vadd.f32 %v4417, %v4625
  %v4627 = vpop.f32.mrb[0].mxu0
  %v4628 = vpop.f32.mrb[0].mxu0
  %v4629 = vadd.f32 %v4420, %v4628
  %v4630 = vpop.f32.mrb[0].mxu0
  %4631 = vmatprep.mubr.bf16.mxu0 0
  %4632 = vmatmul.mubr.bf16.gmra.mrb[0].mxu0 %v4217
  %v4633 = vpop.f32.mrb[0].mxu0
  %v4634 = vadd.f32 %v4425, %v4633
  %v4635 = vpop.f32.mrb[0].mxu0
  %v4636 = vpop.f32.mrb[0].mxu0
  %v4637 = vadd.f32 %v4428, %v4636
  %v4638 = vpop.f32.mrb[0].mxu0
  %4639 = vmatprep.mubr.bf16.mxu0 0
  %4640 = vmatmul.mubr.bf16.gmra.mrb[0].mxu0 %v4218
  %v4641 = vpop.f32.mrb[0].mxu0
  %v4642 = vadd.f32 %v4433, %v4641
  %v4643 = vpop.f32.mrb[0].mxu0
  %v4644 = vpop.f32.mrb[0].mxu0
  %v4645 = vadd.f32 %v4436, %v4644
  %v4646 = vpop.f32.mrb[0].mxu0
  %4647 = vmatprep.mubr.bf16.mxu0 0
  %4648 = vmatmul.mubr.bf16.gmra.mrb[0].mxu0 %v4219
  %v4649 = vpop.f32.mrb[0].mxu0
  %v4650 = vadd.f32 %v4441, %v4649
  %v4651 = vpop.f32.mrb[0].mxu0
  %v4652 = vpop.f32.mrb[0].mxu0
  %v4653 = vadd.f32 %v4444, %v4652
  %v4654 = vpop.f32.mrb[0].mxu0
  %4655 = vmatprep.mubr.bf16.mxu0 0
  %4656 = vmatmul.mubr.bf16.gmra.mrb[0].mxu0 %v4220
  %v4657 = vpop.f32.mrb[0].mxu0
  %v4658 = vadd.f32 %v4449, %v4657
  %v4659 = vpop.f32.mrb[0].mxu0
  %v4660 = vpop.f32.mrb[0].mxu0
  %v4661 = vadd.f32 %v4452, %v4660
  %v4662 = vpop.f32.mrb[0].mxu0
  %4663 = vmatprep.mubr.bf16.mxu0 0
  %4664 = vmatmul.mubr.bf16.gmra.mrb[0].mxu0 %v4221
  %v4665 = vpop.f32.mrb[0].mxu0
  %v4666 = vadd.f32 %v4457, %v4665
  %v4667 = vpop.f32.mrb[0].mxu0
  %v4668 = vpop.f32.mrb[0].mxu0
  %v4669 = vadd.f32 %v4460, %v4668
  %v4670 = vpop.f32.mrb[0].mxu0
  %4671 = vmatprep.mubr.bf16.mxu0 0
  %4672 = vmatmul.mubr.bf16.gmra.mrb[0].mxu0 %v4222
  %v4673 = vpop.f32.mrb[0].mxu0
  %v4674 = vadd.f32 %v4465, %v4673
  %v4675 = vpop.f32.mrb[0].mxu0
  %v4676 = vpop.f32.mrb[0].mxu0
  %v4677 = vadd.f32 %v4468, %v4676
  %v4678 = vpop.f32.mrb[0].mxu0
  %4679 = vmatprep.mubr.bf16.mxu0 0
  %4680 = vmatmul.mubr.bf16.gmra.mrb[0].mxu0 %v4223
  %v4681 = vpop.f32.mrb[0].mxu0
  %v4682 = vadd.f32 %v4473, %v4681
  %v4683 = vpop.f32.mrb[0].mxu0
  %v4684 = vpop.f32.mrb[0].mxu0
  %v4685 = vadd.f32 %v4476, %v4684
  %v4686 = vpop.f32.mrb[0].mxu0
  %4687 = vmatprep.mubr.bf16.mxu0 0
  %4688 = vmatmul.mubr.bf16.gmra.mrb[0].mxu0 %v4224
  %v4689 = vpop.f32.mrb[0].mxu0
  %v4690 = vadd.f32 %v4481, %v4689
  %v4691 = vpop.f32.mrb[0].mxu0
  %v4692 = vpop.f32.mrb[0].mxu0
  %v4693 = vadd.f32 %v4484, %v4692
  %v4694 = vpop.f32.mrb[0].mxu0
  %4695 = vmatprep.mubr.bf16.mxu0 0
  %4696 = vmatmul.mubr.bf16.gmra.mrb[0].mxu0 %v4225
  %v4697 = vpop.f32.mrb[0].mxu0
  %v4698 = vadd.f32 %v4489, %v4697
  %v4699 = vpop.f32.mrb[0].mxu0
  %v4700 = vpop.f32.mrb[0].mxu0
  %v4701 = vadd.f32 %v4492, %v4700
  %v4702 = vpop.f32.mrb[0].mxu0
  %4703 = vmatprep.mubr.bf16.mxu0 0
  %4704 = vmatmul.mubr.bf16.gmra.mrb[0].mxu0 %v4226
  %v4705 = vpop.f32.mrb[0].mxu0
  %v4706 = vadd.f32 %v4497, %v4705
  %v4707 = vpop.f32.mrb[0].mxu0
  %v4708 = vpop.f32.mrb[0].mxu0
  %v4709 = vadd.f32 %v4500, %v4708
  %v4710 = vpop.f32.mrb[0].mxu0
  %4711 = vmatprep.mubr.bf16.mxu0 0
  %4712 = vmatmul.mubr.bf16.gmra.mrb[0].mxu0 %v4227
  %v4713 = vpop.f32.mrb[0].mxu0
  %v4714 = vadd.f32 %v4505, %v4713
  %v4715 = vpop.f32.mrb[0].mxu0
  %v4716 = vpop.f32.mrb[0].mxu0
  %v4717 = vadd.f32 %v4508, %v4716
  %v4718 = vpop.f32.mrb[0].mxu0
  %4719 = vmatprep.mubr.bf16.mxu0 0
  %4720 = vmatmul.mubr.bf16.gmra.mrb[0].mxu0 %v4228
  %v4721 = vpop.f32.mrb[0].mxu0
  %v4722 = vadd.f32 %v4513, %v4721
  %v4723 = vpop.f32.mrb[0].mxu0
  %v4724 = vpop.f32.mrb[0].mxu0
  %v4725 = vadd.f32 %v4516, %v4724
  %v4726 = vpop.f32.mrb[0].mxu0
  %4727 = vdwg.mxu0
  %v4728 = vld [vmem:[#allocation3 + $0x2] sm:$0xff]
  %v4729 = vld [vmem:[#allocation3 + $0x12] sm:$0xff]
  %v4730 = vld [vmem:[#allocation3 + $0x22] sm:$0xff]
  %v4731 = vld [vmem:[#allocation3 + $0x32] sm:$0xff]
  %v4732 = vld [vmem:[#allocation3 + $0x42] sm:$0xff]
  %v4733 = vld [vmem:[#allocation3 + $0x52] sm:$0xff]
  %v4734 = vld [vmem:[#allocation3 + $0x62] sm:$0xff]
  %v4735 = vld [vmem:[#allocation3 + $0x72] sm:$0xff]
  %v4736 = vld [vmem:[#allocation3 + $0x82] sm:$0xff]
  %v4737 = vld [vmem:[#allocation3 + $0x92] sm:$0xff]
  %v4738 = vld [vmem:[#allocation3 + $0xa2] sm:$0xff]
  %v4739 = vld [vmem:[#allocation3 + $0xb2] sm:$0xff]
  %v4740 = vld [vmem:[#allocation3 + $0xc2] sm:$0xff]
  %v4741 = vld [vmem:[#allocation3 + $0xd2] sm:$0xff]
  %v4742 = vld [vmem:[#allocation3 + $0xe2] sm:$0xff]
  %v4743 = vld [vmem:[#allocation3 + $0xf2] sm:$0xff]
  %v4744 = vld [vmem:[#allocation3 + $0x122] sm:$0xff]
  %v4745 = vld [vmem:[#allocation3 + $0x132] sm:$0xff]
  %v4746 = vld [vmem:[#allocation3 + $0x142] sm:$0xff]
  %v4747 = vld [vmem:[#allocation3 + $0x152] sm:$0xff]
  %v4748 = vld [vmem:[#allocation3 + $0x162] sm:$0xff]
  %v4749 = vld [vmem:[#allocation3 + $0x172] sm:$0xff]
  %v4750 = vld [vmem:[#allocation3 + $0x182] sm:$0xff]
  %v4751 = vld [vmem:[#allocation3 + $0x192] sm:$0xff]
  %v4752 = vld [vmem:[#allocation3 + $0x1a2] sm:$0xff]
  %v4753 = vld [vmem:[#allocation3 + $0x1b2] sm:$0xff]
  %v4754 = vld [vmem:[#allocation3 + $0x1c2] sm:$0xff]
  %v4755 = vld [vmem:[#allocation3 + $0x1d2] sm:$0xff]
  %v4756 = vld [vmem:[#allocation3 + $0x1e2] sm:$0xff]
  %v4757 = vld [vmem:[#allocation3 + $0x1f2] sm:$0xff]
  %v4758 = vld [vmem:[#allocation3 + $0x202] sm:$0xff]
  %v4759 = vld [vmem:[#allocation3 + $0x212] sm:$0xff]
  %v4760 = vpack.c.bf16 %v4729, %v4728
  %v4761 = vpack.c.bf16 %v4731, %v4730
  %v4762 = vpack.c.bf16 %v4733, %v4732
  %v4763 = vpack.c.bf16 %v4735, %v4734
  %v4764 = vpack.c.bf16 %v4737, %v4736
  %v4765 = vpack.c.bf16 %v4739, %v4738
  %v4766 = vpack.c.bf16 %v4741, %v4740
  %v4767 = vpack.c.bf16 %v4743, %v4742
  %v4768 = vpack.c.bf16 %v4745, %v4744
  %v4769 = vpack.c.bf16 %v4747, %v4746
  %v4770 = vpack.c.bf16 %v4749, %v4748
  %v4771 = vpack.c.bf16 %v4751, %v4750
  %v4772 = vpack.c.bf16 %v4753, %v4752
  %v4773 = vpack.c.bf16 %v4755, %v4754
  %v4774 = vpack.c.bf16 %v4757, %v4756
  %v4775 = vpack.c.bf16 %v4759, %v4758
  %s4776 = scalar_lea.vmem %s8, 128
  %v4777 = vld [vmem:[%s4776] sm:$0xf]
  %v4778 = vld [vmem:[%s4776 + $0x4] sm:$0xf]
  %v4779 = vld [vmem:[%s4776 + $0x8] sm:$0xf]
  %v4780 = vld [vmem:[%s4776 + $0xc] sm:$0xf]
  %v4781 = vld [vmem:[%s4776 + $0x10] sm:$0xf]
  %v4782 = vld [vmem:[%s4776 + $0x14] sm:$0xf]
  %v4783 = vld [vmem:[%s4776 + $0x18] sm:$0xf]
  %v4784 = vld [vmem:[%s4776 + $0x1c] sm:$0xf]
  %v4785 = vld [vmem:[%s4776 + $0x20] sm:$0xf]
  %v4786 = vld [vmem:[%s4776 + $0x24] sm:$0xf]
  %v4787 = vld [vmem:[%s4776 + $0x28] sm:$0xf]
  %v4788 = vld [vmem:[%s4776 + $0x2c] sm:$0xf]
  %v4789 = vld [vmem:[%s4776 + $0x30] sm:$0xf]
  %v4790 = vld [vmem:[%s4776 + $0x34] sm:$0xf]
  %v4791 = vld [vmem:[%s4776 + $0x38] sm:$0xf]
  %v4792 = vld [vmem:[%s4776 + $0x3c] sm:$0xf]
  %v4809 = vunpack.c.l.b16 %v4777
  %v4810 = vunpack.c.l.b16 %v4778
  %v4811 = vunpack.c.l.b16 %v4779
  %v4812 = vunpack.c.l.b16 %v4780
  %v4813 = vunpack.c.l.b16 %v4781
  %v4814 = vunpack.c.l.b16 %v4782
  %v4815 = vunpack.c.l.b16 %v4783
  %v4816 = vunpack.c.l.b16 %v4784
  %v4817 = vunpack.c.l.b16 %v4785
  %v4818 = vunpack.c.l.b16 %v4786
  %v4819 = vunpack.c.l.b16 %v4787
  %v4820 = vunpack.c.l.b16 %v4788
  %v4821 = vunpack.c.l.b16 %v4789
  %v4822 = vunpack.c.l.b16 %v4790
  %v4823 = vunpack.c.l.b16 %v4791
  %v4824 = vunpack.c.l.b16 %v4792
  %v4825 = vpack.c.b16 %v4810, %v4809
  %v4826 = vpack.c.b16 %v4812, %v4811
  %v4827 = vpack.c.b16 %v4814, %v4813
  %v4828 = vpack.c.b16 %v4816, %v4815
  %v4829 = vpack.c.b16 %v4818, %v4817
  %v4830 = vpack.c.b16 %v4820, %v4819
  %v4831 = vpack.c.b16 %v4822, %v4821
  %v4832 = vpack.c.b16 %v4824, %v4823
  %4841 = vmatprep.subr.bf16.mxu0 0
  %4842 = vmatpush1.bf16.msra.mxu0 %v4825
  %4843 = vmatprep.subr.bf16.mxu0 0
  %4844 = vmatpush1.bf16.msra.mxu0 %v4826
  %4845 = vmatprep.subr.bf16.mxu0 0
  %4846 = vmatpush1.bf16.msra.mxu0 %v4827
  %4847 = vmatprep.subr.bf16.mxu0 0
  %4848 = vmatpush1.bf16.msra.mxu0 %v4828
  %4849 = vmatprep.subr.bf16.mxu0 0
  %4850 = vmatpush1.bf16.msra.mxu0 %v4829
  %4851 = vmatprep.subr.bf16.mxu0 0
  %4852 = vmatpush1.bf16.msra.mxu0 %v4830
  %4853 = vmatprep.subr.bf16.mxu0 0
  %4854 = vmatpush1.bf16.msra.mxu0 %v4831
  %4855 = vmatprep.subr.bf16.mxu0 0
  %4856 = vmatpush1.bf16.msra.mxu0 %v4832
  %4857 = vmatprep.subr.bf16.mxu0 0
  %4858 = vmatpush1.bf16.msra.mxu0 0
  %4859 = vmatprep.subr.bf16.mxu0 0
  %4860 = vmatpush1.bf16.msra.mxu0 0
  %4861 = vmatprep.subr.bf16.mxu0 0
  %4862 = vmatpush1.bf16.msra.mxu0 0
  %4863 = vmatprep.subr.bf16.mxu0 0
  %4864 = vmatpush1.bf16.msra.mxu0 0
  %4865 = vmatprep.subr.bf16.mxu0 0
  %4866 = vmatpush1.bf16.msra.mxu0 0
  %4867 = vmatprep.subr.bf16.mxu0 0
  %4868 = vmatpush1.bf16.msra.mxu0 0
  %4869 = vmatprep.subr.bf16.mxu0 0
  %4870 = vmatpush1.bf16.msra.mxu0 0
  %4871 = vmatprep.subr.bf16.mxu0 0
  %4872 = vmatpush1.bf16.msra.mxu0 0
  %4873 = vmatprep.mubr.bf16.mxu0 0
  %4874 = vmatmul.mubr.bf16.gmra.mrb[0].mxu0 %v4760
  %v4875 = vpop.f32.mrb[0].mxu0
  %v4876 = vadd.f32 0.0, %v4875
  %v4877 = vpop.f32.mrb[0].mxu0
  %v4878 = vpop.f32.mrb[0].mxu0
  %v4879 = vadd.f32 0.0, %v4878
  %v4880 = vpop.f32.mrb[0].mxu0
  %4881 = vmatprep.mubr.bf16.mxu0 0
  %4882 = vmatmul.mubr.bf16.gmra.mrb[0].mxu0 %v4761
  %v4883 = vpop.f32.mrb[0].mxu0
  %v4884 = vadd.f32 0.0, %v4883
  %v4885 = vpop.f32.mrb[0].mxu0
  %v4886 = vpop.f32.mrb[0].mxu0
  %v4887 = vadd.f32 0.0, %v4886
  %v4888 = vpop.f32.mrb[0].mxu0
  %4889 = vmatprep.mubr.bf16.mxu0 0
  %4890 = vmatmul.mubr.bf16.gmra.mrb[0].mxu0 %v4762
  %v4891 = vpop.f32.mrb[0].mxu0
  %v4892 = vadd.f32 0.0, %v4891
  %v4893 = vpop.f32.mrb[0].mxu0
  %v4894 = vpop.f32.mrb[0].mxu0
  %v4895 = vadd.f32 0.0, %v4894
  %v4896 = vpop.f32.mrb[0].mxu0
  %4897 = vmatprep.mubr.bf16.mxu0 0
  %4898 = vmatmul.mubr.bf16.gmra.mrb[0].mxu0 %v4763
  %v4899 = vpop.f32.mrb[0].mxu0
  %v4900 = vadd.f32 0.0, %v4899
  %v4901 = vpop.f32.mrb[0].mxu0
  %v4902 = vpop.f32.mrb[0].mxu0
  %v4903 = vadd.f32 0.0, %v4902
  %v4904 = vpop.f32.mrb[0].mxu0
  %4905 = vmatprep.mubr.bf16.mxu0 0
  %4906 = vmatmul.mubr.bf16.gmra.mrb[0].mxu0 %v4764
  %v4907 = vpop.f32.mrb[0].mxu0
  %v4908 = vadd.f32 0.0, %v4907
  %v4909 = vpop.f32.mrb[0].mxu0
  %v4910 = vpop.f32.mrb[0].mxu0
  %v4911 = vadd.f32 0.0, %v4910
  %v4912 = vpop.f32.mrb[0].mxu0
  %4913 = vmatprep.mubr.bf16.mxu0 0
  %4914 = vmatmul.mubr.bf16.gmra.mrb[0].mxu0 %v4765
  %v4915 = vpop.f32.mrb[0].mxu0
  %v4916 = vadd.f32 0.0, %v4915
  %v4917 = vpop.f32.mrb[0].mxu0
  %v4918 = vpop.f32.mrb[0].mxu0
  %v4919 = vadd.f32 0.0, %v4918
  %v4920 = vpop.f32.mrb[0].mxu0
  %4921 = vmatprep.mubr.bf16.mxu0 0
  %4922 = vmatmul.mubr.bf16.gmra.mrb[0].mxu0 %v4766
  %v4923 = vpop.f32.mrb[0].mxu0
  %v4924 = vadd.f32 0.0, %v4923
  %v4925 = vpop.f32.mrb[0].mxu0
  %v4926 = vpop.f32.mrb[0].mxu0
  %v4927 = vadd.f32 0.0, %v4926
  %v4928 = vpop.f32.mrb[0].mxu0
  %4929 = vmatprep.mubr.bf16.mxu0 0
  %4930 = vmatmul.mubr.bf16.gmra.mrb[0].mxu0 %v4767
  %v4931 = vpop.f32.mrb[0].mxu0
  %v4932 = vadd.f32 0.0, %v4931
  %v4933 = vpop.f32.mrb[0].mxu0
  %v4934 = vpop.f32.mrb[0].mxu0
  %v4935 = vadd.f32 0.0, %v4934
  %v4936 = vpop.f32.mrb[0].mxu0
  %4937 = vmatprep.mubr.bf16.mxu0 0
  %4938 = vmatmul.mubr.bf16.gmra.mrb[0].mxu0 %v4768
  %v4939 = vpop.f32.mrb[0].mxu0
  %v4940 = vadd.f32 0.0, %v4939
  %v4941 = vpop.f32.mrb[0].mxu0
  %v4942 = vpop.f32.mrb[0].mxu0
  %v4943 = vadd.f32 0.0, %v4942
  %v4944 = vpop.f32.mrb[0].mxu0
  %4945 = vmatprep.mubr.bf16.mxu0 0
  %4946 = vmatmul.mubr.bf16.gmra.mrb[0].mxu0 %v4769
  %v4947 = vpop.f32.mrb[0].mxu0
  %v4948 = vadd.f32 0.0, %v4947
  %v4949 = vpop.f32.mrb[0].mxu0
  %v4950 = vpop.f32.mrb[0].mxu0
  %v4951 = vadd.f32 0.0, %v4950
  %v4952 = vpop.f32.mrb[0].mxu0
  %4953 = vmatprep.mubr.bf16.mxu0 0
  %4954 = vmatmul.mubr.bf16.gmra.mrb[0].mxu0 %v4770
  %v4955 = vpop.f32.mrb[0].mxu0
  %v4956 = vadd.f32 0.0, %v4955
  %v4957 = vpop.f32.mrb[0].mxu0
  %v4958 = vpop.f32.mrb[0].mxu0
  %v4959 = vadd.f32 0.0, %v4958
  %v4960 = vpop.f32.mrb[0].mxu0
  %4961 = vmatprep.mubr.bf16.mxu0 0
  %4962 = vmatmul.mubr.bf16.gmra.mrb[0].mxu0 %v4771
  %v4963 = vpop.f32.mrb[0].mxu0
  %v4964 = vadd.f32 0.0, %v4963
  %v4965 = vpop.f32.mrb[0].mxu0
  %v4966 = vpop.f32.mrb[0].mxu0
  %v4967 = vadd.f32 0.0, %v4966
  %v4968 = vpop.f32.mrb[0].mxu0
  %4969 = vmatprep.mubr.bf16.mxu0 0
  %4970 = vmatmul.mubr.bf16.gmra.mrb[0].mxu0 %v4772
  %v4971 = vpop.f32.mrb[0].mxu0
  %v4972 = vadd.f32 0.0, %v4971
  %v4973 = vpop.f32.mrb[0].mxu0
  %v4974 = vpop.f32.mrb[0].mxu0
  %v4975 = vadd.f32 0.0, %v4974
  %v4976 = vpop.f32.mrb[0].mxu0
  %4977 = vmatprep.mubr.bf16.mxu0 0
  %4978 = vmatmul.mubr.bf16.gmra.mrb[0].mxu0 %v4773
  %v4979 = vpop.f32.mrb[0].mxu0
  %v4980 = vadd.f32 0.0, %v4979
  %v4981 = vpop.f32.mrb[0].mxu0
  %v4982 = vpop.f32.mrb[0].mxu0
  %v4983 = vadd.f32 0.0, %v4982
  %v4984 = vpop.f32.mrb[0].mxu0
  %4985 = vmatprep.mubr.bf16.mxu0 0
  %4986 = vmatmul.mubr.bf16.gmra.mrb[0].mxu0 %v4774
  %v4987 = vpop.f32.mrb[0].mxu0
  %v4988 = vadd.f32 0.0, %v4987
  %v4989 = vpop.f32.mrb[0].mxu0
  %v4990 = vpop.f32.mrb[0].mxu0
  %v4991 = vadd.f32 0.0, %v4990
  %v4992 = vpop.f32.mrb[0].mxu0
  %4993 = vmatprep.mubr.bf16.mxu0 0
  %4994 = vmatmul.mubr.bf16.gmra.mrb[0].mxu0 %v4775
  %v4995 = vpop.f32.mrb[0].mxu0
  %v4996 = vadd.f32 0.0, %v4995
  %v4997 = vpop.f32.mrb[0].mxu0
  %v4998 = vpop.f32.mrb[0].mxu0
  %v4999 = vadd.f32 0.0, %v4998
  %v5000 = vpop.f32.mrb[0].mxu0
  %5001 = vdwg.mxu0
  %v5002 = vadd.f32 %v4602, %v4876
  %v5003 = vadd.f32 %v4605, %v4879
  %v5004 = vadd.f32 %v4610, %v4884
  %v5005 = vadd.f32 %v4613, %v4887
  %v5006 = vadd.f32 %v4618, %v4892
  %v5007 = vadd.f32 %v4621, %v4895
  %v5008 = vadd.f32 %v4626, %v4900
  %v5009 = vadd.f32 %v4629, %v4903
  %v5010 = vadd.f32 %v4634, %v4908
  %v5011 = vadd.f32 %v4637, %v4911
  %v5012 = vadd.f32 %v4642, %v4916
  %v5013 = vadd.f32 %v4645, %v4919
  %v5014 = vadd.f32 %v4650, %v4924
  %v5015 = vadd.f32 %v4653, %v4927
  %v5016 = vadd.f32 %v4658, %v4932
  %v5017 = vadd.f32 %v4661, %v4935
  %v5018 = vadd.f32 %v4666, %v4940
  %v5019 = vadd.f32 %v4669, %v4943
  %v5020 = vadd.f32 %v4674, %v4948
  %v5021 = vadd.f32 %v4677, %v4951
  %v5022 = vadd.f32 %v4682, %v4956
  %v5023 = vadd.f32 %v4685, %v4959
  %v5024 = vadd.f32 %v4690, %v4964
  %v5025 = vadd.f32 %v4693, %v4967
  %v5026 = vadd.f32 %v4698, %v4972
  %v5027 = vadd.f32 %v4701, %v4975
  %v5028 = vadd.f32 %v4706, %v4980
  %v5029 = vadd.f32 %v4709, %v4983
  %v5030 = vadd.f32 %v4714, %v4988
  %v5031 = vadd.f32 %v4717, %v4991
  %v5032 = vadd.f32 %v4722, %v4996
  %v5033 = vadd.f32 %v4725, %v4999
  %v5034 = vld [vmem:[%s4148] sm:$0xff]
  %v5035 = vld [vmem:[%s4148 + $0x10] sm:$0xff]
  %v5036 = vld [vmem:[%s4148 + $0x20] sm:$0xff]
  %v5037 = vld [vmem:[%s4148 + $0x30] sm:$0xff]
  %v5038 = vld [vmem:[%s4148 + $0x40] sm:$0xff]
  %v5039 = vld [vmem:[%s4148 + $0x50] sm:$0xff]
  %v5040 = vld [vmem:[%s4148 + $0x60] sm:$0xff]
  %v5041 = vld [vmem:[%s4148 + $0x70] sm:$0xff]
  %v5042 = vld [vmem:[%s4148 + $0x80] sm:$0xff]
  %v5043 = vld [vmem:[%s4148 + $0x90] sm:$0xff]
  %v5044 = vld [vmem:[%s4148 + $0xa0] sm:$0xff]
  %v5045 = vld [vmem:[%s4148 + $0xb0] sm:$0xff]
  %v5046 = vld [vmem:[%s4148 + $0xc0] sm:$0xff]
  %v5047 = vld [vmem:[%s4148 + $0xd0] sm:$0xff]
  %v5048 = vld [vmem:[%s4148 + $0xe0] sm:$0xff]
  %v5049 = vld [vmem:[%s4148 + $0xf0] sm:$0xff]
  %v5050 = vld [vmem:[%s4148 + $0x120] sm:$0xff]
  %v5051 = vld [vmem:[%s4148 + $0x130] sm:$0xff]
  %v5052 = vld [vmem:[%s4148 + $0x140] sm:$0xff]
  %v5053 = vld [vmem:[%s4148 + $0x150] sm:$0xff]
  %v5054 = vld [vmem:[%s4148 + $0x160] sm:$0xff]
  %v5055 = vld [vmem:[%s4148 + $0x170] sm:$0xff]
  %v5056 = vld [vmem:[%s4148 + $0x180] sm:$0xff]
  %v5057 = vld [vmem:[%s4148 + $0x190] sm:$0xff]
  %v5058 = vld [vmem:[%s4148 + $0x1a0] sm:$0xff]
  %v5059 = vld [vmem:[%s4148 + $0x1b0] sm:$0xff]
  %v5060 = vld [vmem:[%s4148 + $0x1c0] sm:$0xff]
  %v5061 = vld [vmem:[%s4148 + $0x1d0] sm:$0xff]
  %v5062 = vld [vmem:[%s4148 + $0x1e0] sm:$0xff]
  %v5063 = vld [vmem:[%s4148 + $0x1f0] sm:$0xff]
  %v5064 = vld [vmem:[%s4148 + $0x200] sm:$0xff]
  %v5065 = vld [vmem:[%s4148 + $0x210] sm:$0xff]
  %v5066 = vpack.c.bf16 %v5035, %v5034
  %v5067 = vpack.c.bf16 %v5037, %v5036
  %v5068 = vpack.c.bf16 %v5039, %v5038
  %v5069 = vpack.c.bf16 %v5041, %v5040
  %v5070 = vpack.c.bf16 %v5043, %v5042
  %v5071 = vpack.c.bf16 %v5045, %v5044
  %v5072 = vpack.c.bf16 %v5047, %v5046
  %v5073 = vpack.c.bf16 %v5049, %v5048
  %v5074 = vpack.c.bf16 %v5051, %v5050
  %v5075 = vpack.c.bf16 %v5053, %v5052
  %v5076 = vpack.c.bf16 %v5055, %v5054
  %v5077 = vpack.c.bf16 %v5057, %v5056
  %v5078 = vpack.c.bf16 %v5059, %v5058
  %v5079 = vpack.c.bf16 %v5061, %v5060
  %v5080 = vpack.c.bf16 %v5063, %v5062
  %v5081 = vpack.c.bf16 %v5065, %v5064
  %s5082 = scalar_lea.vmem %s8, 192
  %v5083 = vld [vmem:[%s5082] sm:$0xf]
  %v5084 = vld [vmem:[%s5082 + $0x4] sm:$0xf]
  %v5085 = vld [vmem:[%s5082 + $0x8] sm:$0xf]
  %v5086 = vld [vmem:[%s5082 + $0xc] sm:$0xf]
  %v5087 = vld [vmem:[%s5082 + $0x10] sm:$0xf]
  %v5088 = vld [vmem:[%s5082 + $0x14] sm:$0xf]
  %v5089 = vld [vmem:[%s5082 + $0x18] sm:$0xf]
  %v5090 = vld [vmem:[%s5082 + $0x1c] sm:$0xf]
  %v5091 = vld [vmem:[%s5082 + $0x20] sm:$0xf]
  %v5092 = vld [vmem:[%s5082 + $0x24] sm:$0xf]
  %v5093 = vld [vmem:[%s5082 + $0x28] sm:$0xf]
  %v5094 = vld [vmem:[%s5082 + $0x2c] sm:$0xf]
  %v5095 = vld [vmem:[%s5082 + $0x30] sm:$0xf]
  %v5096 = vld [vmem:[%s5082 + $0x34] sm:$0xf]
  %v5097 = vld [vmem:[%s5082 + $0x38] sm:$0xf]
  %v5098 = vld [vmem:[%s5082 + $0x3c] sm:$0xf]
  %v5115 = vunpack.c.l.b16 %v5083
  %v5116 = vunpack.c.l.b16 %v5084
  %v5117 = vunpack.c.l.b16 %v5085
  %v5118 = vunpack.c.l.b16 %v5086
  %v5119 = vunpack.c.l.b16 %v5087
  %v5120 = vunpack.c.l.b16 %v5088
  %v5121 = vunpack.c.l.b16 %v5089
  %v5122 = vunpack.c.l.b16 %v5090
  %v5123 = vunpack.c.l.b16 %v5091
  %v5124 = vunpack.c.l.b16 %v5092
  %v5125 = vunpack.c.l.b16 %v5093
  %v5126 = vunpack.c.l.b16 %v5094
  %v5127 = vunpack.c.l.b16 %v5095
  %v5128 = vunpack.c.l.b16 %v5096
  %v5129 = vunpack.c.l.b16 %v5097
  %v5130 = vunpack.c.l.b16 %v5098
  %v5131 = vpack.c.b16 %v5116, %v5115
  %v5132 = vpack.c.b16 %v5118, %v5117
  %v5133 = vpack.c.b16 %v5120, %v5119
  %v5134 = vpack.c.b16 %v5122, %v5121
  %v5135 = vpack.c.b16 %v5124, %v5123
  %v5136 = vpack.c.b16 %v5126, %v5125
  %v5137 = vpack.c.b16 %v5128, %v5127
  %v5138 = vpack.c.b16 %v5130, %v5129
  %5147 = vmatprep.subr.bf16.mxu0 0
  %5148 = vmatpush1.bf16.msra.mxu0 %v5131
  %5149 = vmatprep.subr.bf16.mxu0 0
  %5150 = vmatpush1.bf16.msra.mxu0 %v5132
  %5151 = vmatprep.subr.bf16.mxu0 0
  %5152 = vmatpush1.bf16.msra.mxu0 %v5133
  %5153 = vmatprep.subr.bf16.mxu0 0
  %5154 = vmatpush1.bf16.msra.mxu0 %v5134
  %5155 = vmatprep.subr.bf16.mxu0 0
  %5156 = vmatpush1.bf16.msra.mxu0 %v5135
  %5157 = vmatprep.subr.bf16.mxu0 0
  %5158 = vmatpush1.bf16.msra.mxu0 %v5136
  %5159 = vmatprep.subr.bf16.mxu0 0
  %5160 = vmatpush1.bf16.msra.mxu0 %v5137
  %5161 = vmatprep.subr.bf16.mxu0 0
  %5162 = vmatpush1.bf16.msra.mxu0 %v5138
  %5163 = vmatprep.subr.bf16.mxu0 0
  %5164 = vmatpush1.bf16.msra.mxu0 0
  %5165 = vmatprep.subr.bf16.mxu0 0
  %5166 = vmatpush1.bf16.msra.mxu0 0
  %5167 = vmatprep.subr.bf16.mxu0 0
  %5168 = vmatpush1.bf16.msra.mxu0 0
  %5169 = vmatprep.subr.bf16.mxu0 0
  %5170 = vmatpush1.bf16.msra.mxu0 0
  %5171 = vmatprep.subr.bf16.mxu0 0
  %5172 = vmatpush1.bf16.msra.mxu0 0
  %5173 = vmatprep.subr.bf16.mxu0 0
  %5174 = vmatpush1.bf16.msra.mxu0 0
  %5175 = vmatprep.subr.bf16.mxu0 0
  %5176 = vmatpush1.bf16.msra.mxu0 0
  %5177 = vmatprep.subr.bf16.mxu0 0
  %5178 = vmatpush1.bf16.msra.mxu0 0
  %5179 = vmatprep.mubr.bf16.mxu0 0
  %5180 = vmatmul.mubr.bf16.gmra.mrb[0].mxu0 %v5066
  %v5181 = vpop.f32.mrb[0].mxu0
  %v5182 = vadd.f32 0.0, %v5181
  %v5183 = vpop.f32.mrb[0].mxu0
  %v5184 = vpop.f32.mrb[0].mxu0
  %v5185 = vadd.f32 0.0, %v5184
  %v5186 = vpop.f32.mrb[0].mxu0
  %5187 = vmatprep.mubr.bf16.mxu0 0
  %5188 = vmatmul.mubr.bf16.gmra.mrb[0].mxu0 %v5067
  %v5189 = vpop.f32.mrb[0].mxu0
  %v5190 = vadd.f32 0.0, %v5189
  %v5191 = vpop.f32.mrb[0].mxu0
  %v5192 = vpop.f32.mrb[0].mxu0
  %v5193 = vadd.f32 0.0, %v5192
  %v5194 = vpop.f32.mrb[0].mxu0
  %5195 = vmatprep.mubr.bf16.mxu0 0
  %5196 = vmatmul.mubr.bf16.gmra.mrb[0].mxu0 %v5068
  %v5197 = vpop.f32.mrb[0].mxu0
  %v5198 = vadd.f32 0.0, %v5197
  %v5199 = vpop.f32.mrb[0].mxu0
  %v5200 = vpop.f32.mrb[0].mxu0
  %v5201 = vadd.f32 0.0, %v5200
  %v5202 = vpop.f32.mrb[0].mxu0
  %5203 = vmatprep.mubr.bf16.mxu0 0
  %5204 = vmatmul.mubr.bf16.gmra.mrb[0].mxu0 %v5069
  %v5205 = vpop.f32.mrb[0].mxu0
  %v5206 = vadd.f32 0.0, %v5205
  %v5207 = vpop.f32.mrb[0].mxu0
  %v5208 = vpop.f32.mrb[0].mxu0
  %v5209 = vadd.f32 0.0, %v5208
  %v5210 = vpop.f32.mrb[0].mxu0
  %5211 = vmatprep.mubr.bf16.mxu0 0
  %5212 = vmatmul.mubr.bf16.gmra.mrb[0].mxu0 %v5070
  %v5213 = vpop.f32.mrb[0].mxu0
  %v5214 = vadd.f32 0.0, %v5213
  %v5215 = vpop.f32.mrb[0].mxu0
  %v5216 = vpop.f32.mrb[0].mxu0
  %v5217 = vadd.f32 0.0, %v5216
  %v5218 = vpop.f32.mrb[0].mxu0
  %5219 = vmatprep.mubr.bf16.mxu0 0
  %5220 = vmatmul.mubr.bf16.gmra.mrb[0].mxu0 %v5071
  %v5221 = vpop.f32.mrb[0].mxu0
  %v5222 = vadd.f32 0.0, %v5221
  %v5223 = vpop.f32.mrb[0].mxu0
  %v5224 = vpop.f32.mrb[0].mxu0
  %v5225 = vadd.f32 0.0, %v5224
  %v5226 = vpop.f32.mrb[0].mxu0
  %5227 = vmatprep.mubr.bf16.mxu0 0
  %5228 = vmatmul.mubr.bf16.gmra.mrb[0].mxu0 %v5072
  %v5229 = vpop.f32.mrb[0].mxu0
  %v5230 = vadd.f32 0.0, %v5229
  %v5231 = vpop.f32.mrb[0].mxu0
  %v5232 = vpop.f32.mrb[0].mxu0
  %v5233 = vadd.f32 0.0, %v5232
  %v5234 = vpop.f32.mrb[0].mxu0
  %5235 = vmatprep.mubr.bf16.mxu0 0
  %5236 = vmatmul.mubr.bf16.gmra.mrb[0].mxu0 %v5073
  %v5237 = vpop.f32.mrb[0].mxu0
  %v5238 = vadd.f32 0.0, %v5237
  %v5239 = vpop.f32.mrb[0].mxu0
  %v5240 = vpop.f32.mrb[0].mxu0
  %v5241 = vadd.f32 0.0, %v5240
  %v5242 = vpop.f32.mrb[0].mxu0
  %5243 = vmatprep.mubr.bf16.mxu0 0
  %5244 = vmatmul.mubr.bf16.gmra.mrb[0].mxu0 %v5074
  %v5245 = vpop.f32.mrb[0].mxu0
  %v5246 = vadd.f32 0.0, %v5245
  %v5247 = vpop.f32.mrb[0].mxu0
  %v5248 = vpop.f32.mrb[0].mxu0
  %v5249 = vadd.f32 0.0, %v5248
  %v5250 = vpop.f32.mrb[0].mxu0
  %5251 = vmatprep.mubr.bf16.mxu0 0
  %5252 = vmatmul.mubr.bf16.gmra.mrb[0].mxu0 %v5075
  %v5253 = vpop.f32.mrb[0].mxu0
  %v5254 = vadd.f32 0.0, %v5253
  %v5255 = vpop.f32.mrb[0].mxu0
  %v5256 = vpop.f32.mrb[0].mxu0
  %v5257 = vadd.f32 0.0, %v5256
  %v5258 = vpop.f32.mrb[0].mxu0
  %5259 = vmatprep.mubr.bf16.mxu0 0
  %5260 = vmatmul.mubr.bf16.gmra.mrb[0].mxu0 %v5076
  %v5261 = vpop.f32.mrb[0].mxu0
  %v5262 = vadd.f32 0.0, %v5261
  %v5263 = vpop.f32.mrb[0].mxu0
  %v5264 = vpop.f32.mrb[0].mxu0
  %v5265 = vadd.f32 0.0, %v5264
  %v5266 = vpop.f32.mrb[0].mxu0
  %5267 = vmatprep.mubr.bf16.mxu0 0
  %5268 = vmatmul.mubr.bf16.gmra.mrb[0].mxu0 %v5077
  %v5269 = vpop.f32.mrb[0].mxu0
  %v5270 = vadd.f32 0.0, %v5269
  %v5271 = vpop.f32.mrb[0].mxu0
  %v5272 = vpop.f32.mrb[0].mxu0
  %v5273 = vadd.f32 0.0, %v5272
  %v5274 = vpop.f32.mrb[0].mxu0
  %5275 = vmatprep.mubr.bf16.mxu0 0
  %5276 = vmatmul.mubr.bf16.gmra.mrb[0].mxu0 %v5078
  %v5277 = vpop.f32.mrb[0].mxu0
  %v5278 = vadd.f32 0.0, %v5277
  %v5279 = vpop.f32.mrb[0].mxu0
  %v5280 = vpop.f32.mrb[0].mxu0
  %v5281 = vadd.f32 0.0, %v5280
  %v5282 = vpop.f32.mrb[0].mxu0
  %5283 = vmatprep.mubr.bf16.mxu0 0
  %5284 = vmatmul.mubr.bf16.gmra.mrb[0].mxu0 %v5079
  %v5285 = vpop.f32.mrb[0].mxu0
  %v5286 = vadd.f32 0.0, %v5285
  %v5287 = vpop.f32.mrb[0].mxu0
  %v5288 = vpop.f32.mrb[0].mxu0
  %v5289 = vadd.f32 0.0, %v5288
  %v5290 = vpop.f32.mrb[0].mxu0
  %5291 = vmatprep.mubr.bf16.mxu0 0
  %5292 = vmatmul.mubr.bf16.gmra.mrb[0].mxu0 %v5080
  %v5293 = vpop.f32.mrb[0].mxu0
  %v5294 = vadd.f32 0.0, %v5293
  %v5295 = vpop.f32.mrb[0].mxu0
  %v5296 = vpop.f32.mrb[0].mxu0
  %v5297 = vadd.f32 0.0, %v5296
  %v5298 = vpop.f32.mrb[0].mxu0
  %5299 = vmatprep.mubr.bf16.mxu0 0
  %5300 = vmatmul.mubr.bf16.gmra.mrb[0].mxu0 %v5081
  %v5301 = vpop.f32.mrb[0].mxu0
  %v5302 = vadd.f32 0.0, %v5301
  %v5303 = vpop.f32.mrb[0].mxu0
  %v5304 = vpop.f32.mrb[0].mxu0
  %v5305 = vadd.f32 0.0, %v5304
  %v5306 = vpop.f32.mrb[0].mxu0
  %5307 = vdwg.mxu0
  %v5308 = vadd.f32 %v5002, %v5182
  %v5309 = vadd.f32 %v5003, %v5185
  %v5310 = vadd.f32 %v5004, %v5190
  %v5311 = vadd.f32 %v5005, %v5193
  %v5312 = vadd.f32 %v5006, %v5198
  %v5313 = vadd.f32 %v5007, %v5201
  %v5314 = vadd.f32 %v5008, %v5206
  %v5315 = vadd.f32 %v5009, %v5209
  %v5316 = vadd.f32 %v5010, %v5214
  %v5317 = vadd.f32 %v5011, %v5217
  %v5318 = vadd.f32 %v5012, %v5222
  %v5319 = vadd.f32 %v5013, %v5225
  %v5320 = vadd.f32 %v5014, %v5230
  %v5321 = vadd.f32 %v5015, %v5233
  %v5322 = vadd.f32 %v5016, %v5238
  %v5323 = vadd.f32 %v5017, %v5241
  %v5324 = vadd.f32 %v5018, %v5246
  %v5325 = vadd.f32 %v5019, %v5249
  %v5326 = vadd.f32 %v5020, %v5254
  %v5327 = vadd.f32 %v5021, %v5257
  %v5328 = vadd.f32 %v5022, %v5262
  %v5329 = vadd.f32 %v5023, %v5265
  %v5330 = vadd.f32 %v5024, %v5270
  %v5331 = vadd.f32 %v5025, %v5273
  %v5332 = vadd.f32 %v5026, %v5278
  %v5333 = vadd.f32 %v5027, %v5281
  %v5334 = vadd.f32 %v5028, %v5286
  %v5335 = vadd.f32 %v5029, %v5289
  %v5336 = vadd.f32 %v5030, %v5294
  %v5337 = vadd.f32 %v5031, %v5297
  %v5338 = vadd.f32 %v5032, %v5302
  %v5339 = vadd.f32 %v5033, %v5305
  %v5340 = vld [vmem:[%s4148 + $0x1] sm:$0xff]
  %v5341 = vld [vmem:[%s4148 + $0x11] sm:$0xff]
  %v5342 = vld [vmem:[%s4148 + $0x21] sm:$0xff]
  %v5343 = vld [vmem:[%s4148 + $0x31] sm:$0xff]
  %v5344 = vld [vmem:[%s4148 + $0x41] sm:$0xff]
  %v5345 = vld [vmem:[%s4148 + $0x51] sm:$0xff]
  %v5346 = vld [vmem:[%s4148 + $0x61] sm:$0xff]
  %v5347 = vld [vmem:[%s4148 + $0x71] sm:$0xff]
  %v5348 = vld [vmem:[%s4148 + $0x81] sm:$0xff]
  %v5349 = vld [vmem:[%s4148 + $0x91] sm:$0xff]
  %v5350 = vld [vmem:[%s4148 + $0xa1] sm:$0xff]
  %v5351 = vld [vmem:[%s4148 + $0xb1] sm:$0xff]
  %v5352 = vld [vmem:[%s4148 + $0xc1] sm:$0xff]
  %v5353 = vld [vmem:[%s4148 + $0xd1] sm:$0xff]
  %v5354 = vld [vmem:[%s4148 + $0xe1] sm:$0xff]
  %v5355 = vld [vmem:[%s4148 + $0xf1] sm:$0xff]
  %v5356 = vld [vmem:[%s4148 + $0x121] sm:$0xff]
  %v5357 = vld [vmem:[%s4148 + $0x131] sm:$0xff]
  %v5358 = vld [vmem:[%s4148 + $0x141] sm:$0xff]
  %v5359 = vld [vmem:[%s4148 + $0x151] sm:$0xff]
  %v5360 = vld [vmem:[%s4148 + $0x161] sm:$0xff]
  %v5361 = vld [vmem:[%s4148 + $0x171] sm:$0xff]
  %v5362 = vld [vmem:[%s4148 + $0x181] sm:$0xff]
  %v5363 = vld [vmem:[%s4148 + $0x191] sm:$0xff]
  %v5364 = vld [vmem:[%s4148 + $0x1a1] sm:$0xff]
  %v5365 = vld [vmem:[%s4148 + $0x1b1] sm:$0xff]
  %v5366 = vld [vmem:[%s4148 + $0x1c1] sm:$0xff]
  %v5367 = vld [vmem:[%s4148 + $0x1d1] sm:$0xff]
  %v5368 = vld [vmem:[%s4148 + $0x1e1] sm:$0xff]
  %v5369 = vld [vmem:[%s4148 + $0x1f1] sm:$0xff]
  %v5370 = vld [vmem:[%s4148 + $0x201] sm:$0xff]
  %v5371 = vld [vmem:[%s4148 + $0x211] sm:$0xff]
  %v5372 = vpack.c.bf16 %v5341, %v5340
  %v5373 = vpack.c.bf16 %v5343, %v5342
  %v5374 = vpack.c.bf16 %v5345, %v5344
  %v5375 = vpack.c.bf16 %v5347, %v5346
  %v5376 = vpack.c.bf16 %v5349, %v5348
  %v5377 = vpack.c.bf16 %v5351, %v5350
  %v5378 = vpack.c.bf16 %v5353, %v5352
  %v5379 = vpack.c.bf16 %v5355, %v5354
  %v5380 = vpack.c.bf16 %v5357, %v5356
  %v5381 = vpack.c.bf16 %v5359, %v5358
  %v5382 = vpack.c.bf16 %v5361, %v5360
  %v5383 = vpack.c.bf16 %v5363, %v5362
  %v5384 = vpack.c.bf16 %v5365, %v5364
  %v5385 = vpack.c.bf16 %v5367, %v5366
  %v5386 = vpack.c.bf16 %v5369, %v5368
  %v5387 = vpack.c.bf16 %v5371, %v5370
  %s5388 = scalar_lea.vmem %s8, 256
  %v5389 = vld [vmem:[%s5388] sm:$0xf]
  %v5390 = vld [vmem:[%s5388 + $0x4] sm:$0xf]
  %v5391 = vld [vmem:[%s5388 + $0x8] sm:$0xf]
  %v5392 = vld [vmem:[%s5388 + $0xc] sm:$0xf]
  %v5393 = vld [vmem:[%s5388 + $0x10] sm:$0xf]
  %v5394 = vld [vmem:[%s5388 + $0x14] sm:$0xf]
  %v5395 = vld [vmem:[%s5388 + $0x18] sm:$0xf]
  %v5396 = vld [vmem:[%s5388 + $0x1c] sm:$0xf]
  %v5397 = vld [vmem:[%s5388 + $0x20] sm:$0xf]
  %v5398 = vld [vmem:[%s5388 + $0x24] sm:$0xf]
  %v5399 = vld [vmem:[%s5388 + $0x28] sm:$0xf]
  %v5400 = vld [vmem:[%s5388 + $0x2c] sm:$0xf]
  %v5401 = vld [vmem:[%s5388 + $0x30] sm:$0xf]
  %v5402 = vld [vmem:[%s5388 + $0x34] sm:$0xf]
  %v5403 = vld [vmem:[%s5388 + $0x38] sm:$0xf]
  %v5404 = vld [vmem:[%s5388 + $0x3c] sm:$0xf]
  %v5421 = vunpack.c.l.b16 %v5389
  %v5422 = vunpack.c.l.b16 %v5390
  %v5423 = vunpack.c.l.b16 %v5391
  %v5424 = vunpack.c.l.b16 %v5392
  %v5425 = vunpack.c.l.b16 %v5393
  %v5426 = vunpack.c.l.b16 %v5394
  %v5427 = vunpack.c.l.b16 %v5395
  %v5428 = vunpack.c.l.b16 %v5396
  %v5429 = vunpack.c.l.b16 %v5397
  %v5430 = vunpack.c.l.b16 %v5398
  %v5431 = vunpack.c.l.b16 %v5399
  %v5432 = vunpack.c.l.b16 %v5400
  %v5433 = vunpack.c.l.b16 %v5401
  %v5434 = vunpack.c.l.b16 %v5402
  %v5435 = vunpack.c.l.b16 %v5403
  %v5436 = vunpack.c.l.b16 %v5404
  %v5437 = vpack.c.b16 %v5422, %v5421
  %v5438 = vpack.c.b16 %v5424, %v5423
  %v5439 = vpack.c.b16 %v5426, %v5425
  %v5440 = vpack.c.b16 %v5428, %v5427
  %v5441 = vpack.c.b16 %v5430, %v5429
  %v5442 = vpack.c.b16 %v5432, %v5431
  %v5443 = vpack.c.b16 %v5434, %v5433
  %v5444 = vpack.c.b16 %v5436, %v5435
  %5453 = vmatprep.subr.bf16.mxu0 0
  %5454 = vmatpush1.bf16.msra.mxu0 %v5437
  %5455 = vmatprep.subr.bf16.mxu0 0
  %5456 = vmatpush1.bf16.msra.mxu0 %v5438
  %5457 = vmatprep.subr.bf16.mxu0 0
  %5458 = vmatpush1.bf16.msra.mxu0 %v5439
  %5459 = vmatprep.subr.bf16.mxu0 0
  %5460 = vmatpush1.bf16.msra.mxu0 %v5440
  %5461 = vmatprep.subr.bf16.mxu0 0
  %5462 = vmatpush1.bf16.msra.mxu0 %v5441
  %5463 = vmatprep.subr.bf16.mxu0 0
  %5464 = vmatpush1.bf16.msra.mxu0 %v5442
  %5465 = vmatprep.subr.bf16.mxu0 0
  %5466 = vmatpush1.bf16.msra.mxu0 %v5443
  %5467 = vmatprep.subr.bf16.mxu0 0
  %5468 = vmatpush1.bf16.msra.mxu0 %v5444
  %5469 = vmatprep.subr.bf16.mxu0 0
  %5470 = vmatpush1.bf16.msra.mxu0 0
  %5471 = vmatprep.subr.bf16.mxu0 0
  %5472 = vmatpush1.bf16.msra.mxu0 0
  %5473 = vmatprep.subr.bf16.mxu0 0
  %5474 = vmatpush1.bf16.msra.mxu0 0
  %5475 = vmatprep.subr.bf16.mxu0 0
  %5476 = vmatpush1.bf16.msra.mxu0 0
  %5477 = vmatprep.subr.bf16.mxu0 0
  %5478 = vmatpush1.bf16.msra.mxu0 0
  %5479 = vmatprep.subr.bf16.mxu0 0
  %5480 = vmatpush1.bf16.msra.mxu0 0
  %5481 = vmatprep.subr.bf16.mxu0 0
  %5482 = vmatpush1.bf16.msra.mxu0 0
  %5483 = vmatprep.subr.bf16.mxu0 0
  %5484 = vmatpush1.bf16.msra.mxu0 0
  %5485 = vmatprep.mubr.bf16.mxu0 0
  %5486 = vmatmul.mubr.bf16.gmra.mrb[0].mxu0 %v5372
  %v5487 = vpop.f32.mrb[0].mxu0
  %v5488 = vadd.f32 0.0, %v5487
  %v5489 = vpop.f32.mrb[0].mxu0
  %v5490 = vpop.f32.mrb[0].mxu0
  %v5491 = vadd.f32 0.0, %v5490
  %v5492 = vpop.f32.mrb[0].mxu0
  %5493 = vmatprep.mubr.bf16.mxu0 0
  %5494 = vmatmul.mubr.bf16.gmra.mrb[0].mxu0 %v5373
  %v5495 = vpop.f32.mrb[0].mxu0
  %v5496 = vadd.f32 0.0, %v5495
  %v5497 = vpop.f32.mrb[0].mxu0
  %v5498 = vpop.f32.mrb[0].mxu0
  %v5499 = vadd.f32 0.0, %v5498
  %v5500 = vpop.f32.mrb[0].mxu0
  %5501 = vmatprep.mubr.bf16.mxu0 0
  %5502 = vmatmul.mubr.bf16.gmra.mrb[0].mxu0 %v5374
  %v5503 = vpop.f32.mrb[0].mxu0
  %v5504 = vadd.f32 0.0, %v5503
  %v5505 = vpop.f32.mrb[0].mxu0
  %v5506 = vpop.f32.mrb[0].mxu0
  %v5507 = vadd.f32 0.0, %v5506
  %v5508 = vpop.f32.mrb[0].mxu0
  %5509 = vmatprep.mubr.bf16.mxu0 0
  %5510 = vmatmul.mubr.bf16.gmra.mrb[0].mxu0 %v5375
  %v5511 = vpop.f32.mrb[0].mxu0
  %v5512 = vadd.f32 0.0, %v5511
  %v5513 = vpop.f32.mrb[0].mxu0
  %v5514 = vpop.f32.mrb[0].mxu0
  %v5515 = vadd.f32 0.0, %v5514
  %v5516 = vpop.f32.mrb[0].mxu0
  %5517 = vmatprep.mubr.bf16.mxu0 0
  %5518 = vmatmul.mubr.bf16.gmra.mrb[0].mxu0 %v5376
  %v5519 = vpop.f32.mrb[0].mxu0
  %v5520 = vadd.f32 0.0, %v5519
  %v5521 = vpop.f32.mrb[0].mxu0
  %v5522 = vpop.f32.mrb[0].mxu0
  %v5523 = vadd.f32 0.0, %v5522
  %v5524 = vpop.f32.mrb[0].mxu0
  %5525 = vmatprep.mubr.bf16.mxu0 0
  %5526 = vmatmul.mubr.bf16.gmra.mrb[0].mxu0 %v5377
  %v5527 = vpop.f32.mrb[0].mxu0
  %v5528 = vadd.f32 0.0, %v5527
  %v5529 = vpop.f32.mrb[0].mxu0
  %v5530 = vpop.f32.mrb[0].mxu0
  %v5531 = vadd.f32 0.0, %v5530
  %v5532 = vpop.f32.mrb[0].mxu0
  %5533 = vmatprep.mubr.bf16.mxu0 0
  %5534 = vmatmul.mubr.bf16.gmra.mrb[0].mxu0 %v5378
  %v5535 = vpop.f32.mrb[0].mxu0
  %v5536 = vadd.f32 0.0, %v5535
  %v5537 = vpop.f32.mrb[0].mxu0
  %v5538 = vpop.f32.mrb[0].mxu0
  %v5539 = vadd.f32 0.0, %v5538
  %v5540 = vpop.f32.mrb[0].mxu0
  %5541 = vmatprep.mubr.bf16.mxu0 0
  %5542 = vmatmul.mubr.bf16.gmra.mrb[0].mxu0 %v5379
  %v5543 = vpop.f32.mrb[0].mxu0
  %v5544 = vadd.f32 0.0, %v5543
  %v5545 = vpop.f32.mrb[0].mxu0
  %v5546 = vpop.f32.mrb[0].mxu0
  %v5547 = vadd.f32 0.0, %v5546
  %v5548 = vpop.f32.mrb[0].mxu0
  %5549 = vmatprep.mubr.bf16.mxu0 0
  %5550 = vmatmul.mubr.bf16.gmra.mrb[0].mxu0 %v5380
  %v5551 = vpop.f32.mrb[0].mxu0
  %v5552 = vadd.f32 0.0, %v5551
  %v5553 = vpop.f32.mrb[0].mxu0
  %v5554 = vpop.f32.mrb[0].mxu0
  %v5555 = vadd.f32 0.0, %v5554
  %v5556 = vpop.f32.mrb[0].mxu0
  %5557 = vmatprep.mubr.bf16.mxu0 0
  %5558 = vmatmul.mubr.bf16.gmra.mrb[0].mxu0 %v5381
  %v5559 = vpop.f32.mrb[0].mxu0
  %v5560 = vadd.f32 0.0, %v5559
  %v5561 = vpop.f32.mrb[0].mxu0
  %v5562 = vpop.f32.mrb[0].mxu0
  %v5563 = vadd.f32 0.0, %v5562
  %v5564 = vpop.f32.mrb[0].mxu0
  %5565 = vmatprep.mubr.bf16.mxu0 0
  %5566 = vmatmul.mubr.bf16.gmra.mrb[0].mxu0 %v5382
  %v5567 = vpop.f32.mrb[0].mxu0
  %v5568 = vadd.f32 0.0, %v5567
  %v5569 = vpop.f32.mrb[0].mxu0
  %v5570 = vpop.f32.mrb[0].mxu0
  %v5571 = vadd.f32 0.0, %v5570
  %v5572 = vpop.f32.mrb[0].mxu0
  %5573 = vmatprep.mubr.bf16.mxu0 0
  %5574 = vmatmul.mubr.bf16.gmra.mrb[0].mxu0 %v5383
  %v5575 = vpop.f32.mrb[0].mxu0
  %v5576 = vadd.f32 0.0, %v5575
  %v5577 = vpop.f32.mrb[0].mxu0
  %v5578 = vpop.f32.mrb[0].mxu0
  %v5579 = vadd.f32 0.0, %v5578
  %v5580 = vpop.f32.mrb[0].mxu0
  %5581 = vmatprep.mubr.bf16.mxu0 0
  %5582 = vmatmul.mubr.bf16.gmra.mrb[0].mxu0 %v5384
  %v5583 = vpop.f32.mrb[0].mxu0
  %v5584 = vadd.f32 0.0, %v5583
  %v5585 = vpop.f32.mrb[0].mxu0
  %v5586 = vpop.f32.mrb[0].mxu0
  %v5587 = vadd.f32 0.0, %v5586
  %v5588 = vpop.f32.mrb[0].mxu0
  %5589 = vmatprep.mubr.bf16.mxu0 0
  %5590 = vmatmul.mubr.bf16.gmra.mrb[0].mxu0 %v5385
  %v5591 = vpop.f32.mrb[0].mxu0
  %v5592 = vadd.f32 0.0, %v5591
  %v5593 = vpop.f32.mrb[0].mxu0
  %v5594 = vpop.f32.mrb[0].mxu0
  %v5595 = vadd.f32 0.0, %v5594
  %v5596 = vpop.f32.mrb[0].mxu0
  %5597 = vmatprep.mubr.bf16.mxu0 0
  %5598 = vmatmul.mubr.bf16.gmra.mrb[0].mxu0 %v5386
  %v5599 = vpop.f32.mrb[0].mxu0
  %v5600 = vadd.f32 0.0, %v5599
  %v5601 = vpop.f32.mrb[0].mxu0
  %v5602 = vpop.f32.mrb[0].mxu0
  %v5603 = vadd.f32 0.0, %v5602
  %v5604 = vpop.f32.mrb[0].mxu0
  %5605 = vmatprep.mubr.bf16.mxu0 0
  %5606 = vmatmul.mubr.bf16.gmra.mrb[0].mxu0 %v5387
  %v5607 = vpop.f32.mrb[0].mxu0
  %v5608 = vadd.f32 0.0, %v5607
  %v5609 = vpop.f32.mrb[0].mxu0
  %v5610 = vpop.f32.mrb[0].mxu0
  %v5611 = vadd.f32 0.0, %v5610
  %v5612 = vpop.f32.mrb[0].mxu0
  %5613 = vdwg.mxu0
  %v5614 = vadd.f32 %v5308, %v5488
  %v5615 = vadd.f32 %v5309, %v5491
  %v5616 = vadd.f32 %v5310, %v5496
  %v5617 = vadd.f32 %v5311, %v5499
  %v5618 = vadd.f32 %v5312, %v5504
  %v5619 = vadd.f32 %v5313, %v5507
  %v5620 = vadd.f32 %v5314, %v5512
  %v5621 = vadd.f32 %v5315, %v5515
  %v5622 = vadd.f32 %v5316, %v5520
  %v5623 = vadd.f32 %v5317, %v5523
  %v5624 = vadd.f32 %v5318, %v5528
  %v5625 = vadd.f32 %v5319, %v5531
  %v5626 = vadd.f32 %v5320, %v5536
  %v5627 = vadd.f32 %v5321, %v5539
  %v5628 = vadd.f32 %v5322, %v5544
  %v5629 = vadd.f32 %v5323, %v5547
  %v5630 = vadd.f32 %v5324, %v5552
  %v5631 = vadd.f32 %v5325, %v5555
  %v5632 = vadd.f32 %v5326, %v5560
  %v5633 = vadd.f32 %v5327, %v5563
  %v5634 = vadd.f32 %v5328, %v5568
  %v5635 = vadd.f32 %v5329, %v5571
  %v5636 = vadd.f32 %v5330, %v5576
  %v5637 = vadd.f32 %v5331, %v5579
  %v5638 = vadd.f32 %v5332, %v5584
  %v5639 = vadd.f32 %v5333, %v5587
  %v5640 = vadd.f32 %v5334, %v5592
  %v5641 = vadd.f32 %v5335, %v5595
  %v5642 = vadd.f32 %v5336, %v5600
  %v5643 = vadd.f32 %v5337, %v5603
  %v5644 = vadd.f32 %v5338, %v5608
  %v5645 = vadd.f32 %v5339, %v5611
  %v5646 = vld [vmem:[%s4148 + $0x2] sm:$0xff]
  %v5647 = vld [vmem:[%s4148 + $0x12] sm:$0xff]
  %v5648 = vld [vmem:[%s4148 + $0x22] sm:$0xff]
  %v5649 = vld [vmem:[%s4148 + $0x32] sm:$0xff]
  %v5650 = vld [vmem:[%s4148 + $0x42] sm:$0xff]
  %v5651 = vld [vmem:[%s4148 + $0x52] sm:$0xff]
  %v5652 = vld [vmem:[%s4148 + $0x62] sm:$0xff]
  %v5653 = vld [vmem:[%s4148 + $0x72] sm:$0xff]
  %v5654 = vld [vmem:[%s4148 + $0x82] sm:$0xff]
  %v5655 = vld [vmem:[%s4148 + $0x92] sm:$0xff]
  %v5656 = vld [vmem:[%s4148 + $0xa2] sm:$0xff]
  %v5657 = vld [vmem:[%s4148 + $0xb2] sm:$0xff]
  %v5658 = vld [vmem:[%s4148 + $0xc2] sm:$0xff]
  %v5659 = vld [vmem:[%s4148 + $0xd2] sm:$0xff]
  %v5660 = vld [vmem:[%s4148 + $0xe2] sm:$0xff]
  %v5661 = vld [vmem:[%s4148 + $0xf2] sm:$0xff]
  %v5662 = vld [vmem:[%s4148 + $0x122] sm:$0xff]
  %v5663 = vld [vmem:[%s4148 + $0x132] sm:$0xff]
  %v5664 = vld [vmem:[%s4148 + $0x142] sm:$0xff]
  %v5665 = vld [vmem:[%s4148 + $0x152] sm:$0xff]
  %v5666 = vld [vmem:[%s4148 + $0x162] sm:$0xff]
  %v5667 = vld [vmem:[%s4148 + $0x172] sm:$0xff]
  %v5668 = vld [vmem:[%s4148 + $0x182] sm:$0xff]
  %v5669 = vld [vmem:[%s4148 + $0x192] sm:$0xff]
  %v5670 = vld [vmem:[%s4148 + $0x1a2] sm:$0xff]
  %v5671 = vld [vmem:[%s4148 + $0x1b2] sm:$0xff]
  %v5672 = vld [vmem:[%s4148 + $0x1c2] sm:$0xff]
  %v5673 = vld [vmem:[%s4148 + $0x1d2] sm:$0xff]
  %v5674 = vld [vmem:[%s4148 + $0x1e2] sm:$0xff]
  %v5675 = vld [vmem:[%s4148 + $0x1f2] sm:$0xff]
  %v5676 = vld [vmem:[%s4148 + $0x202] sm:$0xff]
  %v5677 = vld [vmem:[%s4148 + $0x212] sm:$0xff]
  %v5678 = vpack.c.bf16 %v5647, %v5646
  %v5679 = vpack.c.bf16 %v5649, %v5648
  %v5680 = vpack.c.bf16 %v5651, %v5650
  %v5681 = vpack.c.bf16 %v5653, %v5652
  %v5682 = vpack.c.bf16 %v5655, %v5654
  %v5683 = vpack.c.bf16 %v5657, %v5656
  %v5684 = vpack.c.bf16 %v5659, %v5658
  %v5685 = vpack.c.bf16 %v5661, %v5660
  %v5686 = vpack.c.bf16 %v5663, %v5662
  %v5687 = vpack.c.bf16 %v5665, %v5664
  %v5688 = vpack.c.bf16 %v5667, %v5666
  %v5689 = vpack.c.bf16 %v5669, %v5668
  %v5690 = vpack.c.bf16 %v5671, %v5670
  %v5691 = vpack.c.bf16 %v5673, %v5672
  %v5692 = vpack.c.bf16 %v5675, %v5674
  %v5693 = vpack.c.bf16 %v5677, %v5676
  %s5694 = scalar_lea.vmem %s8, 320
  %v5695 = vld [vmem:[%s5694] sm:$0xf]
  %v5696 = vld [vmem:[%s5694 + $0x4] sm:$0xf]
  %v5697 = vld [vmem:[%s5694 + $0x8] sm:$0xf]
  %v5698 = vld [vmem:[%s5694 + $0xc] sm:$0xf]
  %v5699 = vld [vmem:[%s5694 + $0x10] sm:$0xf]
  %v5700 = vld [vmem:[%s5694 + $0x14] sm:$0xf]
  %v5701 = vld [vmem:[%s5694 + $0x18] sm:$0xf]
  %v5702 = vld [vmem:[%s5694 + $0x1c] sm:$0xf]
  %v5703 = vld [vmem:[%s5694 + $0x20] sm:$0xf]
  %v5704 = vld [vmem:[%s5694 + $0x24] sm:$0xf]
  %v5705 = vld [vmem:[%s5694 + $0x28] sm:$0xf]
  %v5706 = vld [vmem:[%s5694 + $0x2c] sm:$0xf]
  %v5707 = vld [vmem:[%s5694 + $0x30] sm:$0xf]
  %v5708 = vld [vmem:[%s5694 + $0x34] sm:$0xf]
  %v5709 = vld [vmem:[%s5694 + $0x38] sm:$0xf]
  %v5710 = vld [vmem:[%s5694 + $0x3c] sm:$0xf]
  %v5727 = vunpack.c.l.b16 %v5695
  %v5728 = vunpack.c.l.b16 %v5696
  %v5729 = vunpack.c.l.b16 %v5697
  %v5730 = vunpack.c.l.b16 %v5698
  %v5731 = vunpack.c.l.b16 %v5699
  %v5732 = vunpack.c.l.b16 %v5700
  %v5733 = vunpack.c.l.b16 %v5701
  %v5734 = vunpack.c.l.b16 %v5702
  %v5735 = vunpack.c.l.b16 %v5703
  %v5736 = vunpack.c.l.b16 %v5704
  %v5737 = vunpack.c.l.b16 %v5705
  %v5738 = vunpack.c.l.b16 %v5706
  %v5739 = vunpack.c.l.b16 %v5707
  %v5740 = vunpack.c.l.b16 %v5708
  %v5741 = vunpack.c.l.b16 %v5709
  %v5742 = vunpack.c.l.b16 %v5710
  %v5743 = vpack.c.b16 %v5728, %v5727
  %v5744 = vpack.c.b16 %v5730, %v5729
  %v5745 = vpack.c.b16 %v5732, %v5731
  %v5746 = vpack.c.b16 %v5734, %v5733
  %v5747 = vpack.c.b16 %v5736, %v5735
  %v5748 = vpack.c.b16 %v5738, %v5737
  %v5749 = vpack.c.b16 %v5740, %v5739
  %v5750 = vpack.c.b16 %v5742, %v5741
  %5759 = vmatprep.subr.bf16.mxu0 0
  %5760 = vmatpush1.bf16.msra.mxu0 %v5743
  %5761 = vmatprep.subr.bf16.mxu0 0
  %5762 = vmatpush1.bf16.msra.mxu0 %v5744
  %5763 = vmatprep.subr.bf16.mxu0 0
  %5764 = vmatpush1.bf16.msra.mxu0 %v5745
  %5765 = vmatprep.subr.bf16.mxu0 0
  %5766 = vmatpush1.bf16.msra.mxu0 %v5746
  %5767 = vmatprep.subr.bf16.mxu0 0
  %5768 = vmatpush1.bf16.msra.mxu0 %v5747
  %5769 = vmatprep.subr.bf16.mxu0 0
  %5770 = vmatpush1.bf16.msra.mxu0 %v5748
  %5771 = vmatprep.subr.bf16.mxu0 0
  %5772 = vmatpush1.bf16.msra.mxu0 %v5749
  %5773 = vmatprep.subr.bf16.mxu0 0
  %5774 = vmatpush1.bf16.msra.mxu0 %v5750
  %5775 = vmatprep.subr.bf16.mxu0 0
  %5776 = vmatpush1.bf16.msra.mxu0 0
  %5777 = vmatprep.subr.bf16.mxu0 0
  %5778 = vmatpush1.bf16.msra.mxu0 0
  %5779 = vmatprep.subr.bf16.mxu0 0
  %5780 = vmatpush1.bf16.msra.mxu0 0
  %5781 = vmatprep.subr.bf16.mxu0 0
  %5782 = vmatpush1.bf16.msra.mxu0 0
  %5783 = vmatprep.subr.bf16.mxu0 0
  %5784 = vmatpush1.bf16.msra.mxu0 0
  %5785 = vmatprep.subr.bf16.mxu0 0
  %5786 = vmatpush1.bf16.msra.mxu0 0
  %5787 = vmatprep.subr.bf16.mxu0 0
  %5788 = vmatpush1.bf16.msra.mxu0 0
  %5789 = vmatprep.subr.bf16.mxu0 0
  %5790 = vmatpush1.bf16.msra.mxu0 0
  %5791 = vmatprep.mubr.bf16.mxu0 0
  %5792 = vmatmul.mubr.bf16.gmra.mrb[0].mxu0 %v5678
  %v5793 = vpop.f32.mrb[0].mxu0
  %v5794 = vadd.f32 0.0, %v5793
  %v5795 = vpop.f32.mrb[0].mxu0
  %v5796 = vpop.f32.mrb[0].mxu0
  %v5797 = vadd.f32 0.0, %v5796
  %v5798 = vpop.f32.mrb[0].mxu0
  %5799 = vmatprep.mubr.bf16.mxu0 0
  %5800 = vmatmul.mubr.bf16.gmra.mrb[0].mxu0 %v5679
  %v5801 = vpop.f32.mrb[0].mxu0
  %v5802 = vadd.f32 0.0, %v5801
  %v5803 = vpop.f32.mrb[0].mxu0
  %v5804 = vpop.f32.mrb[0].mxu0
  %v5805 = vadd.f32 0.0, %v5804
  %v5806 = vpop.f32.mrb[0].mxu0
  %5807 = vmatprep.mubr.bf16.mxu0 0
  %5808 = vmatmul.mubr.bf16.gmra.mrb[0].mxu0 %v5680
  %v5809 = vpop.f32.mrb[0].mxu0
  %v5810 = vadd.f32 0.0, %v5809
  %v5811 = vpop.f32.mrb[0].mxu0
  %v5812 = vpop.f32.mrb[0].mxu0
  %v5813 = vadd.f32 0.0, %v5812
  %v5814 = vpop.f32.mrb[0].mxu0
  %5815 = vmatprep.mubr.bf16.mxu0 0
  %5816 = vmatmul.mubr.bf16.gmra.mrb[0].mxu0 %v5681
  %v5817 = vpop.f32.mrb[0].mxu0
  %v5818 = vadd.f32 0.0, %v5817
  %v5819 = vpop.f32.mrb[0].mxu0
  %v5820 = vpop.f32.mrb[0].mxu0
  %v5821 = vadd.f32 0.0, %v5820
  %v5822 = vpop.f32.mrb[0].mxu0
  %5823 = vmatprep.mubr.bf16.mxu0 0
  %5824 = vmatmul.mubr.bf16.gmra.mrb[0].mxu0 %v5682
  %v5825 = vpop.f32.mrb[0].mxu0
  %v5826 = vadd.f32 0.0, %v5825
  %v5827 = vpop.f32.mrb[0].mxu0
  %v5828 = vpop.f32.mrb[0].mxu0
  %v5829 = vadd.f32 0.0, %v5828
  %v5830 = vpop.f32.mrb[0].mxu0
  %5831 = vmatprep.mubr.bf16.mxu0 0
  %5832 = vmatmul.mubr.bf16.gmra.mrb[0].mxu0 %v5683
  %v5833 = vpop.f32.mrb[0].mxu0
  %v5834 = vadd.f32 0.0, %v5833
  %v5835 = vpop.f32.mrb[0].mxu0
  %v5836 = vpop.f32.mrb[0].mxu0
  %v5837 = vadd.f32 0.0, %v5836
  %v5838 = vpop.f32.mrb[0].mxu0
  %5839 = vmatprep.mubr.bf16.mxu0 0
  %5840 = vmatmul.mubr.bf16.gmra.mrb[0].mxu0 %v5684
  %v5841 = vpop.f32.mrb[0].mxu0
  %v5842 = vadd.f32 0.0, %v5841
  %v5843 = vpop.f32.mrb[0].mxu0
  %v5844 = vpop.f32.mrb[0].mxu0
  %v5845 = vadd.f32 0.0, %v5844
  %v5846 = vpop.f32.mrb[0].mxu0
  %5847 = vmatprep.mubr.bf16.mxu0 0
  %5848 = vmatmul.mubr.bf16.gmra.mrb[0].mxu0 %v5685
  %v5849 = vpop.f32.mrb[0].mxu0
  %v5850 = vadd.f32 0.0, %v5849
  %v5851 = vpop.f32.mrb[0].mxu0
  %v5852 = vpop.f32.mrb[0].mxu0
  %v5853 = vadd.f32 0.0, %v5852
  %v5854 = vpop.f32.mrb[0].mxu0
  %5855 = vmatprep.mubr.bf16.mxu0 0
  %5856 = vmatmul.mubr.bf16.gmra.mrb[0].mxu0 %v5686
  %v5857 = vpop.f32.mrb[0].mxu0
  %v5858 = vadd.f32 0.0, %v5857
  %v5859 = vpop.f32.mrb[0].mxu0
  %v5860 = vpop.f32.mrb[0].mxu0
  %v5861 = vadd.f32 0.0, %v5860
  %v5862 = vpop.f32.mrb[0].mxu0
  %5863 = vmatprep.mubr.bf16.mxu0 0
  %5864 = vmatmul.mubr.bf16.gmra.mrb[0].mxu0 %v5687
  %v5865 = vpop.f32.mrb[0].mxu0
  %v5866 = vadd.f32 0.0, %v5865
  %v5867 = vpop.f32.mrb[0].mxu0
  %v5868 = vpop.f32.mrb[0].mxu0
  %v5869 = vadd.f32 0.0, %v5868
  %v5870 = vpop.f32.mrb[0].mxu0
  %5871 = vmatprep.mubr.bf16.mxu0 0
  %5872 = vmatmul.mubr.bf16.gmra.mrb[0].mxu0 %v5688
  %v5873 = vpop.f32.mrb[0].mxu0
  %v5874 = vadd.f32 0.0, %v5873
  %v5875 = vpop.f32.mrb[0].mxu0
  %v5876 = vpop.f32.mrb[0].mxu0
  %v5877 = vadd.f32 0.0, %v5876
  %v5878 = vpop.f32.mrb[0].mxu0
  %5879 = vmatprep.mubr.bf16.mxu0 0
  %5880 = vmatmul.mubr.bf16.gmra.mrb[0].mxu0 %v5689
  %v5881 = vpop.f32.mrb[0].mxu0
  %v5882 = vadd.f32 0.0, %v5881
  %v5883 = vpop.f32.mrb[0].mxu0
  %v5884 = vpop.f32.mrb[0].mxu0
  %v5885 = vadd.f32 0.0, %v5884
  %v5886 = vpop.f32.mrb[0].mxu0
  %5887 = vmatprep.mubr.bf16.mxu0 0
  %5888 = vmatmul.mubr.bf16.gmra.mrb[0].mxu0 %v5690
  %v5889 = vpop.f32.mrb[0].mxu0
  %v5890 = vadd.f32 0.0, %v5889
  %v5891 = vpop.f32.mrb[0].mxu0
  %v5892 = vpop.f32.mrb[0].mxu0
  %v5893 = vadd.f32 0.0, %v5892
  %v5894 = vpop.f32.mrb[0].mxu0
  %5895 = vmatprep.mubr.bf16.mxu0 0
  %5896 = vmatmul.mubr.bf16.gmra.mrb[0].mxu0 %v5691
  %v5897 = vpop.f32.mrb[0].mxu0
  %v5898 = vadd.f32 0.0, %v5897
  %v5899 = vpop.f32.mrb[0].mxu0
  %v5900 = vpop.f32.mrb[0].mxu0
  %v5901 = vadd.f32 0.0, %v5900
  %v5902 = vpop.f32.mrb[0].mxu0
  %5903 = vmatprep.mubr.bf16.mxu0 0
  %5904 = vmatmul.mubr.bf16.gmra.mrb[0].mxu0 %v5692
  %v5905 = vpop.f32.mrb[0].mxu0
  %v5906 = vadd.f32 0.0, %v5905
  %v5907 = vpop.f32.mrb[0].mxu0
  %v5908 = vpop.f32.mrb[0].mxu0
  %v5909 = vadd.f32 0.0, %v5908
  %v5910 = vpop.f32.mrb[0].mxu0
  %5911 = vmatprep.mubr.bf16.mxu0 0
  %5912 = vmatmul.mubr.bf16.gmra.mrb[0].mxu0 %v5693
  %v5913 = vpop.f32.mrb[0].mxu0
  %v5914 = vadd.f32 0.0, %v5913
  %v5915 = vpop.f32.mrb[0].mxu0
  %v5916 = vpop.f32.mrb[0].mxu0
  %v5917 = vadd.f32 0.0, %v5916
  %v5918 = vpop.f32.mrb[0].mxu0
  %5919 = vdwg.mxu0
  %v5920 = vadd.f32 %v5614, %v5794
  %v5921 = vadd.f32 %v5615, %v5797
  %v5922 = vadd.f32 %v5616, %v5802
  %v5923 = vadd.f32 %v5617, %v5805
  %v5924 = vadd.f32 %v5618, %v5810
  %v5925 = vadd.f32 %v5619, %v5813
  %v5926 = vadd.f32 %v5620, %v5818
  %v5927 = vadd.f32 %v5621, %v5821
  %v5928 = vadd.f32 %v5622, %v5826
  %v5929 = vadd.f32 %v5623, %v5829
  %v5930 = vadd.f32 %v5624, %v5834
  %v5931 = vadd.f32 %v5625, %v5837
  %v5932 = vadd.f32 %v5626, %v5842
  %v5933 = vadd.f32 %v5627, %v5845
  %v5934 = vadd.f32 %v5628, %v5850
  %v5935 = vadd.f32 %v5629, %v5853
  %v5936 = vadd.f32 %v5630, %v5858
  %v5937 = vadd.f32 %v5631, %v5861
  %v5938 = vadd.f32 %v5632, %v5866
  %v5939 = vadd.f32 %v5633, %v5869
  %v5940 = vadd.f32 %v5634, %v5874
  %v5941 = vadd.f32 %v5635, %v5877
  %v5942 = vadd.f32 %v5636, %v5882
  %v5943 = vadd.f32 %v5637, %v5885
  %v5944 = vadd.f32 %v5638, %v5890
  %v5945 = vadd.f32 %v5639, %v5893
  %v5946 = vadd.f32 %v5640, %v5898
  %v5947 = vadd.f32 %v5641, %v5901
  %v5948 = vadd.f32 %v5642, %v5906
  %v5949 = vadd.f32 %v5643, %v5909
  %v5950 = vadd.f32 %v5644, %v5914
  %v5951 = vadd.f32 %v5645, %v5917
  %s5952 = scalar_lea.vmem [#allocation3], 32
  %v5953 = vld [vmem:[%s5952] sm:$0xff]
  %v5954 = vld [vmem:[%s5952 + $0x10] sm:$0xff]
  %v5955 = vld [vmem:[%s5952 + $0x20] sm:$0xff]
  %v5956 = vld [vmem:[%s5952 + $0x30] sm:$0xff]
  %v5957 = vld [vmem:[%s5952 + $0x40] sm:$0xff]
  %v5958 = vld [vmem:[%s5952 + $0x50] sm:$0xff]
  %v5959 = vld [vmem:[%s5952 + $0x60] sm:$0xff]
  %v5960 = vld [vmem:[%s5952 + $0x70] sm:$0xff]
  %v5961 = vld [vmem:[%s5952 + $0x80] sm:$0xff]
  %v5962 = vld [vmem:[%s5952 + $0x90] sm:$0xff]
  %v5963 = vld [vmem:[%s5952 + $0xa0] sm:$0xff]
  %v5964 = vld [vmem:[%s5952 + $0xb0] sm:$0xff]
  %v5965 = vld [vmem:[%s5952 + $0xc0] sm:$0xff]
  %v5966 = vld [vmem:[%s5952 + $0xd0] sm:$0xff]
  %v5967 = vld [vmem:[%s5952 + $0xe0] sm:$0xff]
  %v5968 = vld [vmem:[%s5952 + $0xf0] sm:$0xff]
  %v5969 = vld [vmem:[%s5952 + $0x120] sm:$0xff]
  %v5970 = vld [vmem:[%s5952 + $0x130] sm:$0xff]
  %v5971 = vld [vmem:[%s5952 + $0x140] sm:$0xff]
  %v5972 = vld [vmem:[%s5952 + $0x150] sm:$0xff]
  %v5973 = vld [vmem:[%s5952 + $0x160] sm:$0xff]
  %v5974 = vld [vmem:[%s5952 + $0x170] sm:$0xff]
  %v5975 = vld [vmem:[%s5952 + $0x180] sm:$0xff]
  %v5976 = vld [vmem:[%s5952 + $0x190] sm:$0xff]
  %v5977 = vld [vmem:[%s5952 + $0x1a0] sm:$0xff]
  %v5978 = vld [vmem:[%s5952 + $0x1b0] sm:$0xff]
  %v5979 = vld [vmem:[%s5952 + $0x1c0] sm:$0xff]
  %v5980 = vld [vmem:[%s5952 + $0x1d0] sm:$0xff]
  %v5981 = vld [vmem:[%s5952 + $0x1e0] sm:$0xff]
  %v5982 = vld [vmem:[%s5952 + $0x1f0] sm:$0xff]
  %v5983 = vld [vmem:[%s5952 + $0x200] sm:$0xff]
  %v5984 = vld [vmem:[%s5952 + $0x210] sm:$0xff]
  %v5985 = vpack.c.bf16 %v5954, %v5953
  %v5986 = vpack.c.bf16 %v5956, %v5955
  %v5987 = vpack.c.bf16 %v5958, %v5957
  %v5988 = vpack.c.bf16 %v5960, %v5959
  %v5989 = vpack.c.bf16 %v5962, %v5961
  %v5990 = vpack.c.bf16 %v5964, %v5963
  %v5991 = vpack.c.bf16 %v5966, %v5965
  %v5992 = vpack.c.bf16 %v5968, %v5967
  %v5993 = vpack.c.bf16 %v5970, %v5969
  %v5994 = vpack.c.bf16 %v5972, %v5971
  %v5995 = vpack.c.bf16 %v5974, %v5973
  %v5996 = vpack.c.bf16 %v5976, %v5975
  %v5997 = vpack.c.bf16 %v5978, %v5977
  %v5998 = vpack.c.bf16 %v5980, %v5979
  %v5999 = vpack.c.bf16 %v5982, %v5981
  %v6000 = vpack.c.bf16 %v5984, %v5983
  %s6001 = scalar_lea.vmem %s8, 384
  %v6002 = vld [vmem:[%s6001] sm:$0xf]
  %v6003 = vld [vmem:[%s6001 + $0x4] sm:$0xf]
  %v6004 = vld [vmem:[%s6001 + $0x8] sm:$0xf]
  %v6005 = vld [vmem:[%s6001 + $0xc] sm:$0xf]
  %v6006 = vld [vmem:[%s6001 + $0x10] sm:$0xf]
  %v6007 = vld [vmem:[%s6001 + $0x14] sm:$0xf]
  %v6008 = vld [vmem:[%s6001 + $0x18] sm:$0xf]
  %v6009 = vld [vmem:[%s6001 + $0x1c] sm:$0xf]
  %v6010 = vld [vmem:[%s6001 + $0x20] sm:$0xf]
  %v6011 = vld [vmem:[%s6001 + $0x24] sm:$0xf]
  %v6012 = vld [vmem:[%s6001 + $0x28] sm:$0xf]
  %v6013 = vld [vmem:[%s6001 + $0x2c] sm:$0xf]
  %v6014 = vld [vmem:[%s6001 + $0x30] sm:$0xf]
  %v6015 = vld [vmem:[%s6001 + $0x34] sm:$0xf]
  %v6016 = vld [vmem:[%s6001 + $0x38] sm:$0xf]
  %v6017 = vld [vmem:[%s6001 + $0x3c] sm:$0xf]
  %v6034 = vunpack.c.l.b16 %v6002
  %v6035 = vunpack.c.l.b16 %v6003
  %v6036 = vunpack.c.l.b16 %v6004
  %v6037 = vunpack.c.l.b16 %v6005
  %v6038 = vunpack.c.l.b16 %v6006
  %v6039 = vunpack.c.l.b16 %v6007
  %v6040 = vunpack.c.l.b16 %v6008
  %v6041 = vunpack.c.l.b16 %v6009
  %v6042 = vunpack.c.l.b16 %v6010
  %v6043 = vunpack.c.l.b16 %v6011
  %v6044 = vunpack.c.l.b16 %v6012
  %v6045 = vunpack.c.l.b16 %v6013
  %v6046 = vunpack.c.l.b16 %v6014
  %v6047 = vunpack.c.l.b16 %v6015
  %v6048 = vunpack.c.l.b16 %v6016
  %v6049 = vunpack.c.l.b16 %v6017
  %v6050 = vpack.c.b16 %v6035, %v6034
  %v6051 = vpack.c.b16 %v6037, %v6036
  %v6052 = vpack.c.b16 %v6039, %v6038
  %v6053 = vpack.c.b16 %v6041, %v6040
  %v6054 = vpack.c.b16 %v6043, %v6042
  %v6055 = vpack.c.b16 %v6045, %v6044
  %v6056 = vpack.c.b16 %v6047, %v6046
  %v6057 = vpack.c.b16 %v6049, %v6048
  %6066 = vmatprep.subr.bf16.mxu0 0
  %6067 = vmatpush1.bf16.msra.mxu0 %v6050
  %6068 = vmatprep.subr.bf16.mxu0 0
  %6069 = vmatpush1.bf16.msra.mxu0 %v6051
  %6070 = vmatprep.subr.bf16.mxu0 0
  %6071 = vmatpush1.bf16.msra.mxu0 %v6052
  %6072 = vmatprep.subr.bf16.mxu0 0
  %6073 = vmatpush1.bf16.msra.mxu0 %v6053
  %6074 = vmatprep.subr.bf16.mxu0 0
  %6075 = vmatpush1.bf16.msra.mxu0 %v6054
  %6076 = vmatprep.subr.bf16.mxu0 0
  %6077 = vmatpush1.bf16.msra.mxu0 %v6055
  %6078 = vmatprep.subr.bf16.mxu0 0
  %6079 = vmatpush1.bf16.msra.mxu0 %v6056
  %6080 = vmatprep.subr.bf16.mxu0 0
  %6081 = vmatpush1.bf16.msra.mxu0 %v6057
  %6082 = vmatprep.subr.bf16.mxu0 0
  %6083 = vmatpush1.bf16.msra.mxu0 0
  %6084 = vmatprep.subr.bf16.mxu0 0
  %6085 = vmatpush1.bf16.msra.mxu0 0
  %6086 = vmatprep.subr.bf16.mxu0 0
  %6087 = vmatpush1.bf16.msra.mxu0 0
  %6088 = vmatprep.subr.bf16.mxu0 0
  %6089 = vmatpush1.bf16.msra.mxu0 0
  %6090 = vmatprep.subr.bf16.mxu0 0
  %6091 = vmatpush1.bf16.msra.mxu0 0
  %6092 = vmatprep.subr.bf16.mxu0 0
  %6093 = vmatpush1.bf16.msra.mxu0 0
  %6094 = vmatprep.subr.bf16.mxu0 0
  %6095 = vmatpush1.bf16.msra.mxu0 0
  %6096 = vmatprep.subr.bf16.mxu0 0
  %6097 = vmatpush1.bf16.msra.mxu0 0
  %6098 = vmatprep.mubr.bf16.mxu0 0
  %6099 = vmatmul.mubr.bf16.gmra.mrb[0].mxu0 %v5985
  %v6100 = vpop.f32.mrb[0].mxu0
  %v6101 = vadd.f32 0.0, %v6100
  %v6102 = vpop.f32.mrb[0].mxu0
  %v6103 = vpop.f32.mrb[0].mxu0
  %v6104 = vadd.f32 0.0, %v6103
  %v6105 = vpop.f32.mrb[0].mxu0
  %6106 = vmatprep.mubr.bf16.mxu0 0
  %6107 = vmatmul.mubr.bf16.gmra.mrb[0].mxu0 %v5986
  %v6108 = vpop.f32.mrb[0].mxu0
  %v6109 = vadd.f32 0.0, %v6108
  %v6110 = vpop.f32.mrb[0].mxu0
  %v6111 = vpop.f32.mrb[0].mxu0
  %v6112 = vadd.f32 0.0, %v6111
  %v6113 = vpop.f32.mrb[0].mxu0
  %6114 = vmatprep.mubr.bf16.mxu0 0
  %6115 = vmatmul.mubr.bf16.gmra.mrb[0].mxu0 %v5987
  %v6116 = vpop.f32.mrb[0].mxu0
  %v6117 = vadd.f32 0.0, %v6116
  %v6118 = vpop.f32.mrb[0].mxu0
  %v6119 = vpop.f32.mrb[0].mxu0
  %v6120 = vadd.f32 0.0, %v6119
  %v6121 = vpop.f32.mrb[0].mxu0
  %6122 = vmatprep.mubr.bf16.mxu0 0
  %6123 = vmatmul.mubr.bf16.gmra.mrb[0].mxu0 %v5988
  %v6124 = vpop.f32.mrb[0].mxu0
  %v6125 = vadd.f32 0.0, %v6124
  %v6126 = vpop.f32.mrb[0].mxu0
  %v6127 = vpop.f32.mrb[0].mxu0
  %v6128 = vadd.f32 0.0, %v6127
  %v6129 = vpop.f32.mrb[0].mxu0
  %6130 = vmatprep.mubr.bf16.mxu0 0
  %6131 = vmatmul.mubr.bf16.gmra.mrb[0].mxu0 %v5989
  %v6132 = vpop.f32.mrb[0].mxu0
  %v6133 = vadd.f32 0.0, %v6132
  %v6134 = vpop.f32.mrb[0].mxu0
  %v6135 = vpop.f32.mrb[0].mxu0
  %v6136 = vadd.f32 0.0, %v6135
  %v6137 = vpop.f32.mrb[0].mxu0
  %6138 = vmatprep.mubr.bf16.mxu0 0
  %6139 = vmatmul.mubr.bf16.gmra.mrb[0].mxu0 %v5990
  %v6140 = vpop.f32.mrb[0].mxu0
  %v6141 = vadd.f32 0.0, %v6140
  %v6142 = vpop.f32.mrb[0].mxu0
  %v6143 = vpop.f32.mrb[0].mxu0
  %v6144 = vadd.f32 0.0, %v6143
  %v6145 = vpop.f32.mrb[0].mxu0
  %6146 = vmatprep.mubr.bf16.mxu0 0
  %6147 = vmatmul.mubr.bf16.gmra.mrb[0].mxu0 %v5991
  %v6148 = vpop.f32.mrb[0].mxu0
  %v6149 = vadd.f32 0.0, %v6148
  %v6150 = vpop.f32.mrb[0].mxu0
  %v6151 = vpop.f32.mrb[0].mxu0
  %v6152 = vadd.f32 0.0, %v6151
  %v6153 = vpop.f32.mrb[0].mxu0
  %6154 = vmatprep.mubr.bf16.mxu0 0
  %6155 = vmatmul.mubr.bf16.gmra.mrb[0].mxu0 %v5992
  %v6156 = vpop.f32.mrb[0].mxu0
  %v6157 = vadd.f32 0.0, %v6156
  %v6158 = vpop.f32.mrb[0].mxu0
  %v6159 = vpop.f32.mrb[0].mxu0
  %v6160 = vadd.f32 0.0, %v6159
  %v6161 = vpop.f32.mrb[0].mxu0
  %6162 = vmatprep.mubr.bf16.mxu0 0
  %6163 = vmatmul.mubr.bf16.gmra.mrb[0].mxu0 %v5993
  %v6164 = vpop.f32.mrb[0].mxu0
  %v6165 = vadd.f32 0.0, %v6164
  %v6166 = vpop.f32.mrb[0].mxu0
  %v6167 = vpop.f32.mrb[0].mxu0
  %v6168 = vadd.f32 0.0, %v6167
  %v6169 = vpop.f32.mrb[0].mxu0
  %6170 = vmatprep.mubr.bf16.mxu0 0
  %6171 = vmatmul.mubr.bf16.gmra.mrb[0].mxu0 %v5994
  %v6172 = vpop.f32.mrb[0].mxu0
  %v6173 = vadd.f32 0.0, %v6172
  %v6174 = vpop.f32.mrb[0].mxu0
  %v6175 = vpop.f32.mrb[0].mxu0
  %v6176 = vadd.f32 0.0, %v6175
  %v6177 = vpop.f32.mrb[0].mxu0
  %6178 = vmatprep.mubr.bf16.mxu0 0
  %6179 = vmatmul.mubr.bf16.gmra.mrb[0].mxu0 %v5995
  %v6180 = vpop.f32.mrb[0].mxu0
  %v6181 = vadd.f32 0.0, %v6180
  %v6182 = vpop.f32.mrb[0].mxu0
  %v6183 = vpop.f32.mrb[0].mxu0
  %v6184 = vadd.f32 0.0, %v6183
  %v6185 = vpop.f32.mrb[0].mxu0
  %6186 = vmatprep.mubr.bf16.mxu0 0
  %6187 = vmatmul.mubr.bf16.gmra.mrb[0].mxu0 %v5996
  %v6188 = vpop.f32.mrb[0].mxu0
  %v6189 = vadd.f32 0.0, %v6188
  %v6190 = vpop.f32.mrb[0].mxu0
  %v6191 = vpop.f32.mrb[0].mxu0
  %v6192 = vadd.f32 0.0, %v6191
  %v6193 = vpop.f32.mrb[0].mxu0
  %6194 = vmatprep.mubr.bf16.mxu0 0
  %6195 = vmatmul.mubr.bf16.gmra.mrb[0].mxu0 %v5997
  %v6196 = vpop.f32.mrb[0].mxu0
  %v6197 = vadd.f32 0.0, %v6196
  %v6198 = vpop.f32.mrb[0].mxu0
  %v6199 = vpop.f32.mrb[0].mxu0
  %v6200 = vadd.f32 0.0, %v6199
  %v6201 = vpop.f32.mrb[0].mxu0
  %6202 = vmatprep.mubr.bf16.mxu0 0
  %6203 = vmatmul.mubr.bf16.gmra.mrb[0].mxu0 %v5998
  %v6204 = vpop.f32.mrb[0].mxu0
  %v6205 = vadd.f32 0.0, %v6204
  %v6206 = vpop.f32.mrb[0].mxu0
  %v6207 = vpop.f32.mrb[0].mxu0
  %v6208 = vadd.f32 0.0, %v6207
  %v6209 = vpop.f32.mrb[0].mxu0
  %6210 = vmatprep.mubr.bf16.mxu0 0
  %6211 = vmatmul.mubr.bf16.gmra.mrb[0].mxu0 %v5999
  %v6212 = vpop.f32.mrb[0].mxu0
  %v6213 = vadd.f32 0.0, %v6212
  %v6214 = vpop.f32.mrb[0].mxu0
  %v6215 = vpop.f32.mrb[0].mxu0
  %v6216 = vadd.f32 0.0, %v6215
  %v6217 = vpop.f32.mrb[0].mxu0
  %6218 = vmatprep.mubr.bf16.mxu0 0
  %6219 = vmatmul.mubr.bf16.gmra.mrb[0].mxu0 %v6000
  %v6220 = vpop.f32.mrb[0].mxu0
  %v6221 = vadd.f32 0.0, %v6220
  %v6222 = vpop.f32.mrb[0].mxu0
  %v6223 = vpop.f32.mrb[0].mxu0
  %v6224 = vadd.f32 0.0, %v6223
  %v6225 = vpop.f32.mrb[0].mxu0
  %6226 = vdwg.mxu0
  %v6227 = vadd.f32 %v5920, %v6101
  %v6228 = vadd.f32 %v5921, %v6104
  %v6229 = vadd.f32 %v5922, %v6109
  %v6230 = vadd.f32 %v5923, %v6112
  %v6231 = vadd.f32 %v5924, %v6117
  %v6232 = vadd.f32 %v5925, %v6120
  %v6233 = vadd.f32 %v5926, %v6125
  %v6234 = vadd.f32 %v5927, %v6128
  %v6235 = vadd.f32 %v5928, %v6133
  %v6236 = vadd.f32 %v5929, %v6136
  %v6237 = vadd.f32 %v5930, %v6141
  %v6238 = vadd.f32 %v5931, %v6144
  %v6239 = vadd.f32 %v5932, %v6149
  %v6240 = vadd.f32 %v5933, %v6152
  %v6241 = vadd.f32 %v5934, %v6157
  %v6242 = vadd.f32 %v5935, %v6160
  %v6243 = vadd.f32 %v5936, %v6165
  %v6244 = vadd.f32 %v5937, %v6168
  %v6245 = vadd.f32 %v5938, %v6173
  %v6246 = vadd.f32 %v5939, %v6176
  %v6247 = vadd.f32 %v5940, %v6181
  %v6248 = vadd.f32 %v5941, %v6184
  %v6249 = vadd.f32 %v5942, %v6189
  %v6250 = vadd.f32 %v5943, %v6192
  %v6251 = vadd.f32 %v5944, %v6197
  %v6252 = vadd.f32 %v5945, %v6200
  %v6253 = vadd.f32 %v5946, %v6205
  %v6254 = vadd.f32 %v5947, %v6208
  %v6255 = vadd.f32 %v5948, %v6213
  %v6256 = vadd.f32 %v5949, %v6216
  %v6257 = vadd.f32 %v5950, %v6221
  %v6258 = vadd.f32 %v5951, %v6224
  %v6259 = vld [vmem:[%s5952 + $0x1] sm:$0xff]
  %v6260 = vld [vmem:[%s5952 + $0x11] sm:$0xff]
  %v6261 = vld [vmem:[%s5952 + $0x21] sm:$0xff]
  %v6262 = vld [vmem:[%s5952 + $0x31] sm:$0xff]
  %v6263 = vld [vmem:[%s5952 + $0x41] sm:$0xff]
  %v6264 = vld [vmem:[%s5952 + $0x51] sm:$0xff]
  %v6265 = vld [vmem:[%s5952 + $0x61] sm:$0xff]
  %v6266 = vld [vmem:[%s5952 + $0x71] sm:$0xff]
  %v6267 = vld [vmem:[%s5952 + $0x81] sm:$0xff]
  %v6268 = vld [vmem:[%s5952 + $0x91] sm:$0xff]
  %v6269 = vld [vmem:[%s5952 + $0xa1] sm:$0xff]
  %v6270 = vld [vmem:[%s5952 + $0xb1] sm:$0xff]
  %v6271 = vld [vmem:[%s5952 + $0xc1] sm:$0xff]
  %v6272 = vld [vmem:[%s5952 + $0xd1] sm:$0xff]
  %v6273 = vld [vmem:[%s5952 + $0xe1] sm:$0xff]
  %v6274 = vld [vmem:[%s5952 + $0xf1] sm:$0xff]
  %v6275 = vld [vmem:[%s5952 + $0x121] sm:$0xff]
  %v6276 = vld [vmem:[%s5952 + $0x131] sm:$0xff]
  %v6277 = vld [vmem:[%s5952 + $0x141] sm:$0xff]
  %v6278 = vld [vmem:[%s5952 + $0x151] sm:$0xff]
  %v6279 = vld [vmem:[%s5952 + $0x161] sm:$0xff]
  %v6280 = vld [vmem:[%s5952 + $0x171] sm:$0xff]
  %v6281 = vld [vmem:[%s5952 + $0x181] sm:$0xff]
  %v6282 = vld [vmem:[%s5952 + $0x191] sm:$0xff]
  %v6283 = vld [vmem:[%s5952 + $0x1a1] sm:$0xff]
  %v6284 = vld [vmem:[%s5952 + $0x1b1] sm:$0xff]
  %v6285 = vld [vmem:[%s5952 + $0x1c1] sm:$0xff]
  %v6286 = vld [vmem:[%s5952 + $0x1d1] sm:$0xff]
  %v6287 = vld [vmem:[%s5952 + $0x1e1] sm:$0xff]
  %v6288 = vld [vmem:[%s5952 + $0x1f1] sm:$0xff]
  %v6289 = vld [vmem:[%s5952 + $0x201] sm:$0xff]
  %v6290 = vld [vmem:[%s5952 + $0x211] sm:$0xff]
  %v6291 = vpack.c.bf16 %v6260, %v6259
  %v6292 = vpack.c.bf16 %v6262, %v6261
  %v6293 = vpack.c.bf16 %v6264, %v6263
  %v6294 = vpack.c.bf16 %v6266, %v6265
  %v6295 = vpack.c.bf16 %v6268, %v6267
  %v6296 = vpack.c.bf16 %v6270, %v6269
  %v6297 = vpack.c.bf16 %v6272, %v6271
  %v6298 = vpack.c.bf16 %v6274, %v6273
  %v6299 = vpack.c.bf16 %v6276, %v6275
  %v6300 = vpack.c.bf16 %v6278, %v6277
  %v6301 = vpack.c.bf16 %v6280, %v6279
  %v6302 = vpack.c.bf16 %v6282, %v6281
  %v6303 = vpack.c.bf16 %v6284, %v6283
  %v6304 = vpack.c.bf16 %v6286, %v6285
  %v6305 = vpack.c.bf16 %v6288, %v6287
  %v6306 = vpack.c.bf16 %v6290, %v6289
  %s6307 = scalar_lea.vmem %s8, 448
  %v6308 = vld [vmem:[%s6307] sm:$0xf]
  %v6309 = vld [vmem:[%s6307 + $0x4] sm:$0xf]
  %v6310 = vld [vmem:[%s6307 + $0x8] sm:$0xf]
  %v6311 = vld [vmem:[%s6307 + $0xc] sm:$0xf]
  %v6312 = vld [vmem:[%s6307 + $0x10] sm:$0xf]
  %v6313 = vld [vmem:[%s6307 + $0x14] sm:$0xf]
  %v6314 = vld [vmem:[%s6307 + $0x18] sm:$0xf]
  %v6315 = vld [vmem:[%s6307 + $0x1c] sm:$0xf]
  %v6316 = vld [vmem:[%s6307 + $0x20] sm:$0xf]
  %v6317 = vld [vmem:[%s6307 + $0x24] sm:$0xf]
  %v6318 = vld [vmem:[%s6307 + $0x28] sm:$0xf]
  %v6319 = vld [vmem:[%s6307 + $0x2c] sm:$0xf]
  %v6320 = vld [vmem:[%s6307 + $0x30] sm:$0xf]
  %v6321 = vld [vmem:[%s6307 + $0x34] sm:$0xf]
  %v6322 = vld [vmem:[%s6307 + $0x38] sm:$0xf]
  %v6323 = vld [vmem:[%s6307 + $0x3c] sm:$0xf]
  %v6340 = vunpack.c.l.b16 %v6308
  %v6341 = vunpack.c.l.b16 %v6309
  %v6342 = vunpack.c.l.b16 %v6310
  %v6343 = vunpack.c.l.b16 %v6311
  %v6344 = vunpack.c.l.b16 %v6312
  %v6345 = vunpack.c.l.b16 %v6313
  %v6346 = vunpack.c.l.b16 %v6314
  %v6347 = vunpack.c.l.b16 %v6315
  %v6348 = vunpack.c.l.b16 %v6316
  %v6349 = vunpack.c.l.b16 %v6317
  %v6350 = vunpack.c.l.b16 %v6318
  %v6351 = vunpack.c.l.b16 %v6319
  %v6352 = vunpack.c.l.b16 %v6320
  %v6353 = vunpack.c.l.b16 %v6321
  %v6354 = vunpack.c.l.b16 %v6322
  %v6355 = vunpack.c.l.b16 %v6323
  %v6356 = vpack.c.b16 %v6341, %v6340
  %v6357 = vpack.c.b16 %v6343, %v6342
  %v6358 = vpack.c.b16 %v6345, %v6344
  %v6359 = vpack.c.b16 %v6347, %v6346
  %v6360 = vpack.c.b16 %v6349, %v6348
  %v6361 = vpack.c.b16 %v6351, %v6350
  %v6362 = vpack.c.b16 %v6353, %v6352
  %v6363 = vpack.c.b16 %v6355, %v6354
  %6372 = vmatprep.subr.bf16.mxu0 0
  %6373 = vmatpush1.bf16.msra.mxu0 %v6356
  %6374 = vmatprep.subr.bf16.mxu0 0
  %6375 = vmatpush1.bf16.msra.mxu0 %v6357
  %6376 = vmatprep.subr.bf16.mxu0 0
  %6377 = vmatpush1.bf16.msra.mxu0 %v6358
  %6378 = vmatprep.subr.bf16.mxu0 0
  %6379 = vmatpush1.bf16.msra.mxu0 %v6359
  %6380 = vmatprep.subr.bf16.mxu0 0
  %6381 = vmatpush1.bf16.msra.mxu0 %v6360
  %6382 = vmatprep.subr.bf16.mxu0 0
  %6383 = vmatpush1.bf16.msra.mxu0 %v6361
  %6384 = vmatprep.subr.bf16.mxu0 0
  %6385 = vmatpush1.bf16.msra.mxu0 %v6362
  %6386 = vmatprep.subr.bf16.mxu0 0
  %6387 = vmatpush1.bf16.msra.mxu0 %v6363
  %6388 = vmatprep.subr.bf16.mxu0 0
  %6389 = vmatpush1.bf16.msra.mxu0 0
  %6390 = vmatprep.subr.bf16.mxu0 0
  %6391 = vmatpush1.bf16.msra.mxu0 0
  %6392 = vmatprep.subr.bf16.mxu0 0
  %6393 = vmatpush1.bf16.msra.mxu0 0
  %6394 = vmatprep.subr.bf16.mxu0 0
  %6395 = vmatpush1.bf16.msra.mxu0 0
  %6396 = vmatprep.subr.bf16.mxu0 0
  %6397 = vmatpush1.bf16.msra.mxu0 0
  %6398 = vmatprep.subr.bf16.mxu0 0
  %6399 = vmatpush1.bf16.msra.mxu0 0
  %6400 = vmatprep.subr.bf16.mxu0 0
  %6401 = vmatpush1.bf16.msra.mxu0 0
  %6402 = vmatprep.subr.bf16.mxu0 0
  %6403 = vmatpush1.bf16.msra.mxu0 0
  %6404 = vmatprep.mubr.bf16.mxu0 0
  %6405 = vmatmul.mubr.bf16.gmra.mrb[0].mxu0 %v6291
  %v6406 = vpop.f32.mrb[0].mxu0
  %v6407 = vadd.f32 0.0, %v6406
  %v6408 = vpop.f32.mrb[0].mxu0
  %v6409 = vpop.f32.mrb[0].mxu0
  %v6410 = vadd.f32 0.0, %v6409
  %v6411 = vpop.f32.mrb[0].mxu0
  %6412 = vmatprep.mubr.bf16.mxu0 0
  %6413 = vmatmul.mubr.bf16.gmra.mrb[0].mxu0 %v6292
  %v6414 = vpop.f32.mrb[0].mxu0
  %v6415 = vadd.f32 0.0, %v6414
  %v6416 = vpop.f32.mrb[0].mxu0
  %v6417 = vpop.f32.mrb[0].mxu0
  %v6418 = vadd.f32 0.0, %v6417
  %v6419 = vpop.f32.mrb[0].mxu0
  %6420 = vmatprep.mubr.bf16.mxu0 0
  %6421 = vmatmul.mubr.bf16.gmra.mrb[0].mxu0 %v6293
  %v6422 = vpop.f32.mrb[0].mxu0
  %v6423 = vadd.f32 0.0, %v6422
  %v6424 = vpop.f32.mrb[0].mxu0
  %v6425 = vpop.f32.mrb[0].mxu0
  %v6426 = vadd.f32 0.0, %v6425
  %v6427 = vpop.f32.mrb[0].mxu0
  %6428 = vmatprep.mubr.bf16.mxu0 0
  %6429 = vmatmul.mubr.bf16.gmra.mrb[0].mxu0 %v6294
  %v6430 = vpop.f32.mrb[0].mxu0
  %v6431 = vadd.f32 0.0, %v6430
  %v6432 = vpop.f32.mrb[0].mxu0
  %v6433 = vpop.f32.mrb[0].mxu0
  %v6434 = vadd.f32 0.0, %v6433
  %v6435 = vpop.f32.mrb[0].mxu0
  %6436 = vmatprep.mubr.bf16.mxu0 0
  %6437 = vmatmul.mubr.bf16.gmra.mrb[0].mxu0 %v6295
  %v6438 = vpop.f32.mrb[0].mxu0
  %v6439 = vadd.f32 0.0, %v6438
  %v6440 = vpop.f32.mrb[0].mxu0
  %v6441 = vpop.f32.mrb[0].mxu0
  %v6442 = vadd.f32 0.0, %v6441
  %v6443 = vpop.f32.mrb[0].mxu0
  %6444 = vmatprep.mubr.bf16.mxu0 0
  %6445 = vmatmul.mubr.bf16.gmra.mrb[0].mxu0 %v6296
  %v6446 = vpop.f32.mrb[0].mxu0
  %v6447 = vadd.f32 0.0, %v6446
  %v6448 = vpop.f32.mrb[0].mxu0
  %v6449 = vpop.f32.mrb[0].mxu0
  %v6450 = vadd.f32 0.0, %v6449
  %v6451 = vpop.f32.mrb[0].mxu0
  %6452 = vmatprep.mubr.bf16.mxu0 0
  %6453 = vmatmul.mubr.bf16.gmra.mrb[0].mxu0 %v6297
  %v6454 = vpop.f32.mrb[0].mxu0
  %v6455 = vadd.f32 0.0, %v6454
  %v6456 = vpop.f32.mrb[0].mxu0
  %v6457 = vpop.f32.mrb[0].mxu0
  %v6458 = vadd.f32 0.0, %v6457
  %v6459 = vpop.f32.mrb[0].mxu0
  %6460 = vmatprep.mubr.bf16.mxu0 0
  %6461 = vmatmul.mubr.bf16.gmra.mrb[0].mxu0 %v6298
  %v6462 = vpop.f32.mrb[0].mxu0
  %v6463 = vadd.f32 0.0, %v6462
  %v6464 = vpop.f32.mrb[0].mxu0
  %v6465 = vpop.f32.mrb[0].mxu0
  %v6466 = vadd.f32 0.0, %v6465
  %v6467 = vpop.f32.mrb[0].mxu0
  %6468 = vmatprep.mubr.bf16.mxu0 0
  %6469 = vmatmul.mubr.bf16.gmra.mrb[0].mxu0 %v6299
  %v6470 = vpop.f32.mrb[0].mxu0
  %v6471 = vadd.f32 0.0, %v6470
  %v6472 = vpop.f32.mrb[0].mxu0
  %v6473 = vpop.f32.mrb[0].mxu0
  %v6474 = vadd.f32 0.0, %v6473
  %v6475 = vpop.f32.mrb[0].mxu0
  %6476 = vmatprep.mubr.bf16.mxu0 0
  %6477 = vmatmul.mubr.bf16.gmra.mrb[0].mxu0 %v6300
  %v6478 = vpop.f32.mrb[0].mxu0
  %v6479 = vadd.f32 0.0, %v6478
  %v6480 = vpop.f32.mrb[0].mxu0
  %v6481 = vpop.f32.mrb[0].mxu0
  %v6482 = vadd.f32 0.0, %v6481
  %v6483 = vpop.f32.mrb[0].mxu0
  %6484 = vmatprep.mubr.bf16.mxu0 0
  %6485 = vmatmul.mubr.bf16.gmra.mrb[0].mxu0 %v6301
  %v6486 = vpop.f32.mrb[0].mxu0
  %v6487 = vadd.f32 0.0, %v6486
  %v6488 = vpop.f32.mrb[0].mxu0
  %v6489 = vpop.f32.mrb[0].mxu0
  %v6490 = vadd.f32 0.0, %v6489
  %v6491 = vpop.f32.mrb[0].mxu0
  %6492 = vmatprep.mubr.bf16.mxu0 0
  %6493 = vmatmul.mubr.bf16.gmra.mrb[0].mxu0 %v6302
  %v6494 = vpop.f32.mrb[0].mxu0
  %v6495 = vadd.f32 0.0, %v6494
  %v6496 = vpop.f32.mrb[0].mxu0
  %v6497 = vpop.f32.mrb[0].mxu0
  %v6498 = vadd.f32 0.0, %v6497
  %v6499 = vpop.f32.mrb[0].mxu0
  %6500 = vmatprep.mubr.bf16.mxu0 0
  %6501 = vmatmul.mubr.bf16.gmra.mrb[0].mxu0 %v6303
  %v6502 = vpop.f32.mrb[0].mxu0
  %v6503 = vadd.f32 0.0, %v6502
  %v6504 = vpop.f32.mrb[0].mxu0
  %v6505 = vpop.f32.mrb[0].mxu0
  %v6506 = vadd.f32 0.0, %v6505
  %v6507 = vpop.f32.mrb[0].mxu0
  %6508 = vmatprep.mubr.bf16.mxu0 0
  %6509 = vmatmul.mubr.bf16.gmra.mrb[0].mxu0 %v6304
  %v6510 = vpop.f32.mrb[0].mxu0
  %v6511 = vadd.f32 0.0, %v6510
  %v6512 = vpop.f32.mrb[0].mxu0
  %v6513 = vpop.f32.mrb[0].mxu0
  %v6514 = vadd.f32 0.0, %v6513
  %v6515 = vpop.f32.mrb[0].mxu0
  %6516 = vmatprep.mubr.bf16.mxu0 0
  %6517 = vmatmul.mubr.bf16.gmra.mrb[0].mxu0 %v6305
  %v6518 = vpop.f32.mrb[0].mxu0
  %v6519 = vadd.f32 0.0, %v6518
  %v6520 = vpop.f32.mrb[0].mxu0
  %v6521 = vpop.f32.mrb[0].mxu0
  %v6522 = vadd.f32 0.0, %v6521
  %v6523 = vpop.f32.mrb[0].mxu0
  %6524 = vmatprep.mubr.bf16.mxu0 0
  %6525 = vmatmul.mubr.bf16.gmra.mrb[0].mxu0 %v6306
  %v6526 = vpop.f32.mrb[0].mxu0
  %v6527 = vadd.f32 0.0, %v6526
  %v6528 = vpop.f32.mrb[0].mxu0
  %v6529 = vpop.f32.mrb[0].mxu0
  %v6530 = vadd.f32 0.0, %v6529
  %v6531 = vpop.f32.mrb[0].mxu0
  %6532 = vdwg.mxu0
  %v6533 = vadd.f32 %v6227, %v6407
  %v6534 = vadd.f32 %v6228, %v6410
  %v6535 = vadd.f32 %v6229, %v6415
  %v6536 = vadd.f32 %v6230, %v6418
  %v6537 = vadd.f32 %v6231, %v6423
  %v6538 = vadd.f32 %v6232, %v6426
  %v6539 = vadd.f32 %v6233, %v6431
  %v6540 = vadd.f32 %v6234, %v6434
  %v6541 = vadd.f32 %v6235, %v6439
  %v6542 = vadd.f32 %v6236, %v6442
  %v6543 = vadd.f32 %v6237, %v6447
  %v6544 = vadd.f32 %v6238, %v6450
  %v6545 = vadd.f32 %v6239, %v6455
  %v6546 = vadd.f32 %v6240, %v6458
  %v6547 = vadd.f32 %v6241, %v6463
  %v6548 = vadd.f32 %v6242, %v6466
  %v6549 = vadd.f32 %v6243, %v6471
  %v6550 = vadd.f32 %v6244, %v6474
  %v6551 = vadd.f32 %v6245, %v6479
  %v6552 = vadd.f32 %v6246, %v6482
  %v6553 = vadd.f32 %v6247, %v6487
  %v6554 = vadd.f32 %v6248, %v6490
  %v6555 = vadd.f32 %v6249, %v6495
  %v6556 = vadd.f32 %v6250, %v6498
  %v6557 = vadd.f32 %v6251, %v6503
  %v6558 = vadd.f32 %v6252, %v6506
  %v6559 = vadd.f32 %v6253, %v6511
  %v6560 = vadd.f32 %v6254, %v6514
  %v6561 = vadd.f32 %v6255, %v6519
  %v6562 = vadd.f32 %v6256, %v6522
  %v6563 = vadd.f32 %v6257, %v6527
  %v6564 = vadd.f32 %v6258, %v6530
  %v6565 = vld [vmem:[%s5952 + $0x2] sm:$0xff]
  %v6566 = vld [vmem:[%s5952 + $0x12] sm:$0xff]
  %v6567 = vld [vmem:[%s5952 + $0x22] sm:$0xff]
  %v6568 = vld [vmem:[%s5952 + $0x32] sm:$0xff]
  %v6569 = vld [vmem:[%s5952 + $0x42] sm:$0xff]
  %v6570 = vld [vmem:[%s5952 + $0x52] sm:$0xff]
  %v6571 = vld [vmem:[%s5952 + $0x62] sm:$0xff]
  %v6572 = vld [vmem:[%s5952 + $0x72] sm:$0xff]
  %v6573 = vld [vmem:[%s5952 + $0x82] sm:$0xff]
  %v6574 = vld [vmem:[%s5952 + $0x92] sm:$0xff]
  %v6575 = vld [vmem:[%s5952 + $0xa2] sm:$0xff]
  %v6576 = vld [vmem:[%s5952 + $0xb2] sm:$0xff]
  %v6577 = vld [vmem:[%s5952 + $0xc2] sm:$0xff]
  %v6578 = vld [vmem:[%s5952 + $0xd2] sm:$0xff]
  %v6579 = vld [vmem:[%s5952 + $0xe2] sm:$0xff]
  %v6580 = vld [vmem:[%s5952 + $0xf2] sm:$0xff]
  %v6581 = vld [vmem:[%s5952 + $0x122] sm:$0xff]
  %v6582 = vld [vmem:[%s5952 + $0x132] sm:$0xff]
  %v6583 = vld [vmem:[%s5952 + $0x142] sm:$0xff]
  %v6584 = vld [vmem:[%s5952 + $0x152] sm:$0xff]
  %v6585 = vld [vmem:[%s5952 + $0x162] sm:$0xff]
  %v6586 = vld [vmem:[%s5952 + $0x172] sm:$0xff]
  %v6587 = vld [vmem:[%s5952 + $0x182] sm:$0xff]
  %v6588 = vld [vmem:[%s5952 + $0x192] sm:$0xff]
  %v6589 = vld [vmem:[%s5952 + $0x1a2] sm:$0xff]
  %v6590 = vld [vmem:[%s5952 + $0x1b2] sm:$0xff]
  %v6591 = vld [vmem:[%s5952 + $0x1c2] sm:$0xff]
  %v6592 = vld [vmem:[%s5952 + $0x1d2] sm:$0xff]
  %v6593 = vld [vmem:[%s5952 + $0x1e2] sm:$0xff]
  %v6594 = vld [vmem:[%s5952 + $0x1f2] sm:$0xff]
  %v6595 = vld [vmem:[%s5952 + $0x202] sm:$0xff]
  %v6596 = vld [vmem:[%s5952 + $0x212] sm:$0xff]
  %v6597 = vpack.c.bf16 %v6566, %v6565
  %v6598 = vpack.c.bf16 %v6568, %v6567
  %v6599 = vpack.c.bf16 %v6570, %v6569
  %v6600 = vpack.c.bf16 %v6572, %v6571
  %v6601 = vpack.c.bf16 %v6574, %v6573
  %v6602 = vpack.c.bf16 %v6576, %v6575
  %v6603 = vpack.c.bf16 %v6578, %v6577
  %v6604 = vpack.c.bf16 %v6580, %v6579
  %v6605 = vpack.c.bf16 %v6582, %v6581
  %v6606 = vpack.c.bf16 %v6584, %v6583
  %v6607 = vpack.c.bf16 %v6586, %v6585
  %v6608 = vpack.c.bf16 %v6588, %v6587
  %v6609 = vpack.c.bf16 %v6590, %v6589
  %v6610 = vpack.c.bf16 %v6592, %v6591
  %v6611 = vpack.c.bf16 %v6594, %v6593
  %v6612 = vpack.c.bf16 %v6596, %v6595
  %s6613 = scalar_lea.vmem %s8, 512
  %v6614 = vld [vmem:[%s6613] sm:$0xf]
  %v6615 = vld [vmem:[%s6613 + $0x4] sm:$0xf]
  %v6616 = vld [vmem:[%s6613 + $0x8] sm:$0xf]
  %v6617 = vld [vmem:[%s6613 + $0xc] sm:$0xf]
  %v6618 = vld [vmem:[%s6613 + $0x10] sm:$0xf]
  %v6619 = vld [vmem:[%s6613 + $0x14] sm:$0xf]
  %v6620 = vld [vmem:[%s6613 + $0x18] sm:$0xf]
  %v6621 = vld [vmem:[%s6613 + $0x1c] sm:$0xf]
  %v6622 = vld [vmem:[%s6613 + $0x20] sm:$0xf]
  %v6623 = vld [vmem:[%s6613 + $0x24] sm:$0xf]
  %v6624 = vld [vmem:[%s6613 + $0x28] sm:$0xf]
  %v6625 = vld [vmem:[%s6613 + $0x2c] sm:$0xf]
  %v6626 = vld [vmem:[%s6613 + $0x30] sm:$0xf]
  %v6627 = vld [vmem:[%s6613 + $0x34] sm:$0xf]
  %v6628 = vld [vmem:[%s6613 + $0x38] sm:$0xf]
  %v6629 = vld [vmem:[%s6613 + $0x3c] sm:$0xf]
  %v6646 = vunpack.c.l.b16 %v6614
  %v6647 = vunpack.c.l.b16 %v6615
  %v6648 = vunpack.c.l.b16 %v6616
  %v6649 = vunpack.c.l.b16 %v6617
  %v6650 = vunpack.c.l.b16 %v6618
  %v6651 = vunpack.c.l.b16 %v6619
  %v6652 = vunpack.c.l.b16 %v6620
  %v6653 = vunpack.c.l.b16 %v6621
  %v6654 = vunpack.c.l.b16 %v6622
  %v6655 = vunpack.c.l.b16 %v6623
  %v6656 = vunpack.c.l.b16 %v6624
  %v6657 = vunpack.c.l.b16 %v6625
  %v6658 = vunpack.c.l.b16 %v6626
  %v6659 = vunpack.c.l.b16 %v6627
  %v6660 = vunpack.c.l.b16 %v6628
  %v6661 = vunpack.c.l.b16 %v6629
  %v6662 = vpack.c.b16 %v6647, %v6646
  %v6663 = vpack.c.b16 %v6649, %v6648
  %v6664 = vpack.c.b16 %v6651, %v6650
  %v6665 = vpack.c.b16 %v6653, %v6652
  %v6666 = vpack.c.b16 %v6655, %v6654
  %v6667 = vpack.c.b16 %v6657, %v6656
  %v6668 = vpack.c.b16 %v6659, %v6658
  %v6669 = vpack.c.b16 %v6661, %v6660
  %6678 = vmatprep.subr.bf16.mxu0 0
  %6679 = vmatpush1.bf16.msra.mxu0 %v6662
  %6680 = vmatprep.subr.bf16.mxu0 0
  %6681 = vmatpush1.bf16.msra.mxu0 %v6663
  %6682 = vmatprep.subr.bf16.mxu0 0
  %6683 = vmatpush1.bf16.msra.mxu0 %v6664
  %6684 = vmatprep.subr.bf16.mxu0 0
  %6685 = vmatpush1.bf16.msra.mxu0 %v6665
  %6686 = vmatprep.subr.bf16.mxu0 0
  %6687 = vmatpush1.bf16.msra.mxu0 %v6666
  %6688 = vmatprep.subr.bf16.mxu0 0
  %6689 = vmatpush1.bf16.msra.mxu0 %v6667
  %6690 = vmatprep.subr.bf16.mxu0 0
  %6691 = vmatpush1.bf16.msra.mxu0 %v6668
  %6692 = vmatprep.subr.bf16.mxu0 0
  %6693 = vmatpush1.bf16.msra.mxu0 %v6669
  %6694 = vmatprep.subr.bf16.mxu0 0
  %6695 = vmatpush1.bf16.msra.mxu0 0
  %6696 = vmatprep.subr.bf16.mxu0 0
  %6697 = vmatpush1.bf16.msra.mxu0 0
  %6698 = vmatprep.subr.bf16.mxu0 0
  %6699 = vmatpush1.bf16.msra.mxu0 0
  %6700 = vmatprep.subr.bf16.mxu0 0
  %6701 = vmatpush1.bf16.msra.mxu0 0
  %6702 = vmatprep.subr.bf16.mxu0 0
  %6703 = vmatpush1.bf16.msra.mxu0 0
  %6704 = vmatprep.subr.bf16.mxu0 0
  %6705 = vmatpush1.bf16.msra.mxu0 0
  %6706 = vmatprep.subr.bf16.mxu0 0
  %6707 = vmatpush1.bf16.msra.mxu0 0
  %6708 = vmatprep.subr.bf16.mxu0 0
  %6709 = vmatpush1.bf16.msra.mxu0 0
  %6710 = vmatprep.mubr.bf16.mxu0 0
  %6711 = vmatmul.mubr.bf16.gmra.mrb[0].mxu0 %v6597
  %v6712 = vpop.f32.mrb[0].mxu0
  %v6713 = vadd.f32 0.0, %v6712
  %v6714 = vpop.f32.mrb[0].mxu0
  %v6715 = vpop.f32.mrb[0].mxu0
  %v6716 = vadd.f32 0.0, %v6715
  %v6717 = vpop.f32.mrb[0].mxu0
  %6718 = vmatprep.mubr.bf16.mxu0 0
  %6719 = vmatmul.mubr.bf16.gmra.mrb[0].mxu0 %v6598
  %v6720 = vpop.f32.mrb[0].mxu0
  %v6721 = vadd.f32 0.0, %v6720
  %v6722 = vpop.f32.mrb[0].mxu0
  %v6723 = vpop.f32.mrb[0].mxu0
  %v6724 = vadd.f32 0.0, %v6723
  %v6725 = vpop.f32.mrb[0].mxu0
  %6726 = vmatprep.mubr.bf16.mxu0 0
  %6727 = vmatmul.mubr.bf16.gmra.mrb[0].mxu0 %v6599
  %v6728 = vpop.f32.mrb[0].mxu0
  %v6729 = vadd.f32 0.0, %v6728
  %v6730 = vpop.f32.mrb[0].mxu0
  %v6731 = vpop.f32.mrb[0].mxu0
  %v6732 = vadd.f32 0.0, %v6731
  %v6733 = vpop.f32.mrb[0].mxu0
  %6734 = vmatprep.mubr.bf16.mxu0 0
  %6735 = vmatmul.mubr.bf16.gmra.mrb[0].mxu0 %v6600
  %v6736 = vpop.f32.mrb[0].mxu0
  %v6737 = vadd.f32 0.0, %v6736
  %v6738 = vpop.f32.mrb[0].mxu0
  %v6739 = vpop.f32.mrb[0].mxu0
  %v6740 = vadd.f32 0.0, %v6739
  %v6741 = vpop.f32.mrb[0].mxu0
  %6742 = vmatprep.mubr.bf16.mxu0 0
  %6743 = vmatmul.mubr.bf16.gmra.mrb[0].mxu0 %v6601
  %v6744 = vpop.f32.mrb[0].mxu0
  %v6745 = vadd.f32 0.0, %v6744
  %v6746 = vpop.f32.mrb[0].mxu0
  %v6747 = vpop.f32.mrb[0].mxu0
  %v6748 = vadd.f32 0.0, %v6747
  %v6749 = vpop.f32.mrb[0].mxu0
  %6750 = vmatprep.mubr.bf16.mxu0 0
  %6751 = vmatmul.mubr.bf16.gmra.mrb[0].mxu0 %v6602
  %v6752 = vpop.f32.mrb[0].mxu0
  %v6753 = vadd.f32 0.0, %v6752
  %v6754 = vpop.f32.mrb[0].mxu0
  %v6755 = vpop.f32.mrb[0].mxu0
  %v6756 = vadd.f32 0.0, %v6755
  %v6757 = vpop.f32.mrb[0].mxu0
  %6758 = vmatprep.mubr.bf16.mxu0 0
  %6759 = vmatmul.mubr.bf16.gmra.mrb[0].mxu0 %v6603
  %v6760 = vpop.f32.mrb[0].mxu0
  %v6761 = vadd.f32 0.0, %v6760
  %v6762 = vpop.f32.mrb[0].mxu0
  %v6763 = vpop.f32.mrb[0].mxu0
  %v6764 = vadd.f32 0.0, %v6763
  %v6765 = vpop.f32.mrb[0].mxu0
  %6766 = vmatprep.mubr.bf16.mxu0 0
  %6767 = vmatmul.mubr.bf16.gmra.mrb[0].mxu0 %v6604
  %v6768 = vpop.f32.mrb[0].mxu0
  %v6769 = vadd.f32 0.0, %v6768
  %v6770 = vpop.f32.mrb[0].mxu0
  %v6771 = vpop.f32.mrb[0].mxu0
  %v6772 = vadd.f32 0.0, %v6771
  %v6773 = vpop.f32.mrb[0].mxu0
  %6774 = vmatprep.mubr.bf16.mxu0 0
  %6775 = vmatmul.mubr.bf16.gmra.mrb[0].mxu0 %v6605
  %v6776 = vpop.f32.mrb[0].mxu0
  %v6777 = vadd.f32 0.0, %v6776
  %v6778 = vpop.f32.mrb[0].mxu0
  %v6779 = vpop.f32.mrb[0].mxu0
  %v6780 = vadd.f32 0.0, %v6779
  %v6781 = vpop.f32.mrb[0].mxu0
  %6782 = vmatprep.mubr.bf16.mxu0 0
  %6783 = vmatmul.mubr.bf16.gmra.mrb[0].mxu0 %v6606
  %v6784 = vpop.f32.mrb[0].mxu0
  %v6785 = vadd.f32 0.0, %v6784
  %v6786 = vpop.f32.mrb[0].mxu0
  %v6787 = vpop.f32.mrb[0].mxu0
  %v6788 = vadd.f32 0.0, %v6787
  %v6789 = vpop.f32.mrb[0].mxu0
  %6790 = vmatprep.mubr.bf16.mxu0 0
  %6791 = vmatmul.mubr.bf16.gmra.mrb[0].mxu0 %v6607
  %v6792 = vpop.f32.mrb[0].mxu0
  %v6793 = vadd.f32 0.0, %v6792
  %v6794 = vpop.f32.mrb[0].mxu0
  %v6795 = vpop.f32.mrb[0].mxu0
  %v6796 = vadd.f32 0.0, %v6795
  %v6797 = vpop.f32.mrb[0].mxu0
  %6798 = vmatprep.mubr.bf16.mxu0 0
  %6799 = vmatmul.mubr.bf16.gmra.mrb[0].mxu0 %v6608
  %v6800 = vpop.f32.mrb[0].mxu0
  %v6801 = vadd.f32 0.0, %v6800
  %v6802 = vpop.f32.mrb[0].mxu0
  %v6803 = vpop.f32.mrb[0].mxu0
  %v6804 = vadd.f32 0.0, %v6803
  %v6805 = vpop.f32.mrb[0].mxu0
  %6806 = vmatprep.mubr.bf16.mxu0 0
  %6807 = vmatmul.mubr.bf16.gmra.mrb[0].mxu0 %v6609
  %v6808 = vpop.f32.mrb[0].mxu0
  %v6809 = vadd.f32 0.0, %v6808
  %v6810 = vpop.f32.mrb[0].mxu0
  %v6811 = vpop.f32.mrb[0].mxu0
  %v6812 = vadd.f32 0.0, %v6811
  %v6813 = vpop.f32.mrb[0].mxu0
  %6814 = vmatprep.mubr.bf16.mxu0 0
  %6815 = vmatmul.mubr.bf16.gmra.mrb[0].mxu0 %v6610
  %v6816 = vpop.f32.mrb[0].mxu0
  %v6817 = vadd.f32 0.0, %v6816
  %v6818 = vpop.f32.mrb[0].mxu0
  %v6819 = vpop.f32.mrb[0].mxu0
  %v6820 = vadd.f32 0.0, %v6819
  %v6821 = vpop.f32.mrb[0].mxu0
  %6822 = vmatprep.mubr.bf16.mxu0 0
  %6823 = vmatmul.mubr.bf16.gmra.mrb[0].mxu0 %v6611
  %v6824 = vpop.f32.mrb[0].mxu0
  %v6825 = vadd.f32 0.0, %v6824
  %v6826 = vpop.f32.mrb[0].mxu0
  %v6827 = vpop.f32.mrb[0].mxu0
  %v6828 = vadd.f32 0.0, %v6827
  %v6829 = vpop.f32.mrb[0].mxu0
  %6830 = vmatprep.mubr.bf16.mxu0 0
  %6831 = vmatmul.mubr.bf16.gmra.mrb[0].mxu0 %v6612
  %v6832 = vpop.f32.mrb[0].mxu0
  %v6833 = vadd.f32 0.0, %v6832
  %v6834 = vpop.f32.mrb[0].mxu0
  %v6835 = vpop.f32.mrb[0].mxu0
  %v6836 = vadd.f32 0.0, %v6835
  %v6837 = vpop.f32.mrb[0].mxu0
  %6838 = vdwg.mxu0
  %v6839 = vadd.f32 %v6533, %v6713
  %v6840 = vadd.f32 %v6534, %v6716
  %v6841 = vadd.f32 %v6535, %v6721
  %v6842 = vadd.f32 %v6536, %v6724
  %v6843 = vadd.f32 %v6537, %v6729
  %v6844 = vadd.f32 %v6538, %v6732
  %v6845 = vadd.f32 %v6539, %v6737
  %v6846 = vadd.f32 %v6540, %v6740
  %v6847 = vadd.f32 %v6541, %v6745
  %v6848 = vadd.f32 %v6542, %v6748
  %v6849 = vadd.f32 %v6543, %v6753
  %v6850 = vadd.f32 %v6544, %v6756
  %v6851 = vadd.f32 %v6545, %v6761
  %v6852 = vadd.f32 %v6546, %v6764
  %v6853 = vadd.f32 %v6547, %v6769
  %v6854 = vadd.f32 %v6548, %v6772
  %v6855 = vadd.f32 %v6549, %v6777
  %v6856 = vadd.f32 %v6550, %v6780
  %v6857 = vadd.f32 %v6551, %v6785
  %v6858 = vadd.f32 %v6552, %v6788
  %v6859 = vadd.f32 %v6553, %v6793
  %v6860 = vadd.f32 %v6554, %v6796
  %v6861 = vadd.f32 %v6555, %v6801
  %v6862 = vadd.f32 %v6556, %v6804
  %v6863 = vadd.f32 %v6557, %v6809
  %v6864 = vadd.f32 %v6558, %v6812
  %v6865 = vadd.f32 %v6559, %v6817
  %v6866 = vadd.f32 %v6560, %v6820
  %v6867 = vadd.f32 %v6561, %v6825
  %v6868 = vadd.f32 %v6562, %v6828
  %v6869 = vadd.f32 %v6563, %v6833
  %v6870 = vadd.f32 %v6564, %v6836
  %v6871 = vadd.f32 %v6839, %v6840
  %v6872 = vadd.f32 %v6871, %v6841
  %v6873 = vadd.f32 %v6872, %v6842
  %v6874 = vadd.f32 %v6873, %v6843
  %v6875 = vadd.f32 %v6874, %v6844
  %v6876 = vadd.f32 %v6875, %v6845
  %v6877 = vadd.f32 %v6876, %v6846
  %v6878 = vadd.f32 %v6877, %v6847
  %v6879 = vadd.f32 %v6878, %v6848
  %v6880 = vadd.f32 %v6879, %v6849
  %v6881 = vadd.f32 %v6880, %v6850
  %v6882 = vadd.f32 %v6881, %v6851
  %v6883 = vadd.f32 %v6882, %v6852
  %v6884 = vadd.f32 %v6883, %v6853
  %v6885 = vadd.f32 %v6884, %v6854
  %v6886 = vadd.f32 %v6885, %v6855
  %v6887 = vadd.f32 %v6886, %v6856
  %v6888 = vadd.f32 %v6887, %v6857
  %v6889 = vadd.f32 %v6888, %v6858
  %v6890 = vadd.f32 %v6889, %v6859
  %v6891 = vadd.f32 %v6890, %v6860
  %v6892 = vadd.f32 %v6891, %v6861
  %v6893 = vadd.f32 %v6892, %v6862
  %v6894 = vadd.f32 %v6893, %v6863
  %v6895 = vadd.f32 %v6894, %v6864
  %v6896 = vadd.f32 %v6895, %v6865
  %v6897 = vadd.f32 %v6896, %v6866
  %v6898 = vadd.f32 %v6897, %v6867
  %v6899 = vadd.f32 %v6898, %v6868
  %v6900 = vadd.f32 %v6899, %v6869
  %v6901 = vadd.f32 %v6900, %v6870
  %v6902 = vrot.slane %v6901, 4
  %v6903 = vadd.f32 %v6901, %v6902
  %v6904 = vrot.slane %v6903, 2
  %v6905 = vadd.f32 %v6903, %v6904
  %v6906 = vrot.slane %v6905, 1
  %v6907 = vadd.f32 %v6905, %v6906
  %v6908 = vmul.f32 %v6907, 0.00390625
  %v6909 = vmul.f32 %v6839, %v6839
  %v6910 = vmul.f32 %v6840, %v6840
  %v6911 = vmul.f32 %v6841, %v6841
  %v6912 = vmul.f32 %v6842, %v6842
  %v6913 = vmul.f32 %v6843, %v6843
  %v6914 = vmul.f32 %v6844, %v6844
  %v6915 = vmul.f32 %v6845, %v6845
  %v6916 = vmul.f32 %v6846, %v6846
  %v6917 = vmul.f32 %v6847, %v6847
  %v6918 = vmul.f32 %v6848, %v6848
  %v6919 = vmul.f32 %v6849, %v6849
  %v6920 = vmul.f32 %v6850, %v6850
  %v6921 = vmul.f32 %v6851, %v6851
  %v6922 = vmul.f32 %v6852, %v6852
  %v6923 = vmul.f32 %v6853, %v6853
  %v6924 = vmul.f32 %v6854, %v6854
  %v6925 = vmul.f32 %v6855, %v6855
  %v6926 = vmul.f32 %v6856, %v6856
  %v6927 = vmul.f32 %v6857, %v6857
  %v6928 = vmul.f32 %v6858, %v6858
  %v6929 = vmul.f32 %v6859, %v6859
  %v6930 = vmul.f32 %v6860, %v6860
  %v6931 = vmul.f32 %v6861, %v6861
  %v6932 = vmul.f32 %v6862, %v6862
  %v6933 = vmul.f32 %v6863, %v6863
  %v6934 = vmul.f32 %v6864, %v6864
  %v6935 = vmul.f32 %v6865, %v6865
  %v6936 = vmul.f32 %v6866, %v6866
  %v6937 = vmul.f32 %v6867, %v6867
  %v6938 = vmul.f32 %v6868, %v6868
  %v6939 = vmul.f32 %v6869, %v6869
  %v6940 = vmul.f32 %v6870, %v6870
  %v6941 = vadd.f32 %v6909, %v6910
  %v6942 = vadd.f32 %v6941, %v6911
  %v6943 = vadd.f32 %v6942, %v6912
  %v6944 = vadd.f32 %v6943, %v6913
  %v6945 = vadd.f32 %v6944, %v6914
  %v6946 = vadd.f32 %v6945, %v6915
  %v6947 = vadd.f32 %v6946, %v6916
  %v6948 = vadd.f32 %v6947, %v6917
  %v6949 = vadd.f32 %v6948, %v6918
  %v6950 = vadd.f32 %v6949, %v6919
  %v6951 = vadd.f32 %v6950, %v6920
  %v6952 = vadd.f32 %v6951, %v6921
  %v6953 = vadd.f32 %v6952, %v6922
  %v6954 = vadd.f32 %v6953, %v6923
  %v6955 = vadd.f32 %v6954, %v6924
  %v6956 = vadd.f32 %v6955, %v6925
  %v6957 = vadd.f32 %v6956, %v6926
  %v6958 = vadd.f32 %v6957, %v6927
  %v6959 = vadd.f32 %v6958, %v6928
  %v6960 = vadd.f32 %v6959, %v6929
  %v6961 = vadd.f32 %v6960, %v6930
  %v6962 = vadd.f32 %v6961, %v6931
  %v6963 = vadd.f32 %v6962, %v6932
  %v6964 = vadd.f32 %v6963, %v6933
  %v6965 = vadd.f32 %v6964, %v6934
  %v6966 = vadd.f32 %v6965, %v6935
  %v6967 = vadd.f32 %v6966, %v6936
  %v6968 = vadd.f32 %v6967, %v6937
  %v6969 = vadd.f32 %v6968, %v6938
  %v6970 = vadd.f32 %v6969, %v6939
  %v6971 = vadd.f32 %v6970, %v6940
  %v6972 = vrot.slane %v6971, 4
  %v6973 = vadd.f32 %v6971, %v6972
  %v6974 = vrot.slane %v6973, 2
  %v6975 = vadd.f32 %v6973, %v6974
  %v6976 = vrot.slane %v6975, 1
  %v6977 = vadd.f32 %v6975, %v6976
  %v6978 = vmul.f32 %v6977, 0.00390625
  %v6979 = vmul.f32 %v6908, %v6908
  %v6980 = vsub.f32 %v6978, %v6979
  %v6981 = vmax.f32 %v6980, 0.0
  %v6982 = vsub.f32 %v6839, %v6908
  %v6983 = vsub.f32 %v6840, %v6908
  %v6984 = vsub.f32 %v6841, %v6908
  %v6985 = vsub.f32 %v6842, %v6908
  %v6986 = vsub.f32 %v6843, %v6908
  %v6987 = vsub.f32 %v6844, %v6908
  %v6988 = vsub.f32 %v6845, %v6908
  %v6989 = vsub.f32 %v6846, %v6908
  %v6990 = vsub.f32 %v6847, %v6908
  %v6991 = vsub.f32 %v6848, %v6908
  %v6992 = vsub.f32 %v6849, %v6908
  %v6993 = vsub.f32 %v6850, %v6908
  %v6994 = vsub.f32 %v6851, %v6908
  %v6995 = vsub.f32 %v6852, %v6908
  %v6996 = vsub.f32 %v6853, %v6908
  %v6997 = vsub.f32 %v6854, %v6908
  %v6998 = vsub.f32 %v6855, %v6908
  %v6999 = vsub.f32 %v6856, %v6908
  %v7000 = vsub.f32 %v6857, %v6908
  %v7001 = vsub.f32 %v6858, %v6908
  %v7002 = vsub.f32 %v6859, %v6908
  %v7003 = vsub.f32 %v6860, %v6908
  %v7004 = vsub.f32 %v6861, %v6908
  %v7005 = vsub.f32 %v6862, %v6908
  %v7006 = vsub.f32 %v6863, %v6908
  %v7007 = vsub.f32 %v6864, %v6908
  %v7008 = vsub.f32 %v6865, %v6908
  %v7009 = vsub.f32 %v6866, %v6908
  %v7010 = vsub.f32 %v6867, %v6908
  %v7011 = vsub.f32 %v6868, %v6908
  %v7012 = vsub.f32 %v6869, %v6908
  %v7013 = vsub.f32 %v6870, %v6908
  %v7014 = vadd.f32 %v6981, 1e-05
  %v7015 = vrsqrt.pop %v7014
  %v7016 = vmul.f32 %v6982, %v7015
  %v7017 = vmul.f32 %v6983, %v7015
  %v7018 = vmul.f32 %v6984, %v7015
  %v7019 = vmul.f32 %v6985, %v7015
  %v7020 = vmul.f32 %v6986, %v7015
  %v7021 = vmul.f32 %v6987, %v7015
  %v7022 = vmul.f32 %v6988, %v7015
  %v7023 = vmul.f32 %v6989, %v7015
  %v7024 = vmul.f32 %v6990, %v7015
  %v7025 = vmul.f32 %v6991, %v7015
  %v7026 = vmul.f32 %v6992, %v7015
  %v7027 = vmul.f32 %v6993, %v7015
  %v7028 = vmul.f32 %v6994, %v7015
  %v7029 = vmul.f32 %v6995, %v7015
  %v7030 = vmul.f32 %v6996, %v7015
  %v7031 = vmul.f32 %v6997, %v7015
  %v7032 = vmul.f32 %v6998, %v7015
  %v7033 = vmul.f32 %v6999, %v7015
  %v7034 = vmul.f32 %v7000, %v7015
  %v7035 = vmul.f32 %v7001, %v7015
  %v7036 = vmul.f32 %v7002, %v7015
  %v7037 = vmul.f32 %v7003, %v7015
  %v7038 = vmul.f32 %v7004, %v7015
  %v7039 = vmul.f32 %v7005, %v7015
  %v7040 = vmul.f32 %v7006, %v7015
  %v7041 = vmul.f32 %v7007, %v7015
  %v7042 = vmul.f32 %v7008, %v7015
  %v7043 = vmul.f32 %v7009, %v7015
  %v7044 = vmul.f32 %v7010, %v7015
  %v7045 = vmul.f32 %v7011, %v7015
  %v7046 = vmul.f32 %v7012, %v7015
  %v7047 = vmul.f32 %v7013, %v7015
  %v7048 = vld [vmem:[%s9] sm:$0x1]
  %v7050 = vlaneseq
  %v7051 = vshrl.u32 %v7050, 7
  %v7052 = vsub.s32 0, %v7051
  %v7053 = vrot.slane %v7048, %v7052
  %v7055 = vmul.f32 %v7016, %v7053
  %v7056 = vmul.f32 %v7017, %v7053
  %v7057 = vmul.f32 %v7018, %v7053
  %v7058 = vmul.f32 %v7019, %v7053
  %v7059 = vmul.f32 %v7020, %v7053
  %v7060 = vmul.f32 %v7021, %v7053
  %v7061 = vmul.f32 %v7022, %v7053
  %v7062 = vmul.f32 %v7023, %v7053
  %v7063 = vmul.f32 %v7024, %v7053
  %v7064 = vmul.f32 %v7025, %v7053
  %v7065 = vmul.f32 %v7026, %v7053
  %v7066 = vmul.f32 %v7027, %v7053
  %v7067 = vmul.f32 %v7028, %v7053
  %v7068 = vmul.f32 %v7029, %v7053
  %v7069 = vmul.f32 %v7030, %v7053
  %v7070 = vmul.f32 %v7031, %v7053
  %v7071 = vmul.f32 %v7032, %v7053
  %v7072 = vmul.f32 %v7033, %v7053
  %v7073 = vmul.f32 %v7034, %v7053
  %v7074 = vmul.f32 %v7035, %v7053
  %v7075 = vmul.f32 %v7036, %v7053
  %v7076 = vmul.f32 %v7037, %v7053
  %v7077 = vmul.f32 %v7038, %v7053
  %v7078 = vmul.f32 %v7039, %v7053
  %v7079 = vmul.f32 %v7040, %v7053
  %v7080 = vmul.f32 %v7041, %v7053
  %v7081 = vmul.f32 %v7042, %v7053
  %v7082 = vmul.f32 %v7043, %v7053
  %v7083 = vmul.f32 %v7044, %v7053
  %v7084 = vmul.f32 %v7045, %v7053
  %v7085 = vmul.f32 %v7046, %v7053
  %v7086 = vmul.f32 %v7047, %v7053
  %v7087 = vld [vmem:[%s10] sm:$0x1]
  %v7089 = vlaneseq
  %v7090 = vshrl.u32 %v7089, 7
  %v7091 = vsub.s32 0, %v7090
  %v7092 = vrot.slane %v7087, %v7091
  %v7094 = vadd.f32 %v7055, %v7092
  %v7095 = vadd.f32 %v7056, %v7092
  %v7096 = vadd.f32 %v7057, %v7092
  %v7097 = vadd.f32 %v7058, %v7092
  %v7098 = vadd.f32 %v7059, %v7092
  %v7099 = vadd.f32 %v7060, %v7092
  %v7100 = vadd.f32 %v7061, %v7092
  %v7101 = vadd.f32 %v7062, %v7092
  %v7102 = vadd.f32 %v7063, %v7092
  %v7103 = vadd.f32 %v7064, %v7092
  %v7104 = vadd.f32 %v7065, %v7092
  %v7105 = vadd.f32 %v7066, %v7092
  %v7106 = vadd.f32 %v7067, %v7092
  %v7107 = vadd.f32 %v7068, %v7092
  %v7108 = vadd.f32 %v7069, %v7092
  %v7109 = vadd.f32 %v7070, %v7092
  %v7110 = vadd.f32 %v7071, %v7092
  %v7111 = vadd.f32 %v7072, %v7092
  %v7112 = vadd.f32 %v7073, %v7092
  %v7113 = vadd.f32 %v7074, %v7092
  %v7114 = vadd.f32 %v7075, %v7092
  %v7115 = vadd.f32 %v7076, %v7092
  %v7116 = vadd.f32 %v7077, %v7092
  %v7117 = vadd.f32 %v7078, %v7092
  %v7118 = vadd.f32 %v7079, %v7092
  %v7119 = vadd.f32 %v7080, %v7092
  %v7120 = vadd.f32 %v7081, %v7092
  %v7121 = vadd.f32 %v7082, %v7092
  %v7122 = vadd.f32 %v7083, %v7092
  %v7123 = vadd.f32 %v7084, %v7092
  %v7124 = vadd.f32 %v7085, %v7092
  %v7125 = vadd.f32 %v7086, %v7092
  %v7126 = vmax.f32 %v7094, 0.0
  %v7127 = vmax.f32 %v7095, 0.0
  %v7128 = vmax.f32 %v7096, 0.0
  %v7129 = vmax.f32 %v7097, 0.0
  %v7130 = vmax.f32 %v7098, 0.0
  %v7131 = vmax.f32 %v7099, 0.0
  %v7132 = vmax.f32 %v7100, 0.0
  %v7133 = vmax.f32 %v7101, 0.0
  %v7134 = vmax.f32 %v7102, 0.0
  %v7135 = vmax.f32 %v7103, 0.0
  %v7136 = vmax.f32 %v7104, 0.0
  %v7137 = vmax.f32 %v7105, 0.0
  %v7138 = vmax.f32 %v7106, 0.0
  %v7139 = vmax.f32 %v7107, 0.0
  %v7140 = vmax.f32 %v7108, 0.0
  %v7141 = vmax.f32 %v7109, 0.0
  %v7142 = vmax.f32 %v7110, 0.0
  %v7143 = vmax.f32 %v7111, 0.0
  %v7144 = vmax.f32 %v7112, 0.0
  %v7145 = vmax.f32 %v7113, 0.0
  %v7146 = vmax.f32 %v7114, 0.0
  %v7147 = vmax.f32 %v7115, 0.0
  %v7148 = vmax.f32 %v7116, 0.0
  %v7149 = vmax.f32 %v7117, 0.0
  %v7150 = vmax.f32 %v7118, 0.0
  %v7151 = vmax.f32 %v7119, 0.0
  %v7152 = vmax.f32 %v7120, 0.0
  %v7153 = vmax.f32 %v7121, 0.0
  %v7154 = vmax.f32 %v7122, 0.0
  %v7155 = vmax.f32 %v7123, 0.0
  %v7156 = vmax.f32 %v7124, 0.0
  %v7157 = vmax.f32 %v7125, 0.0
  %7158 = vst [vmem:[%s4148 + $0x1] sm:$0xff] %v7126
  %7159 = vst [vmem:[%s4148 + $0x11] sm:$0xff] %v7127
  %7160 = vst [vmem:[%s4148 + $0x21] sm:$0xff] %v7128
  %7161 = vst [vmem:[%s4148 + $0x31] sm:$0xff] %v7129
  %7162 = vst [vmem:[%s4148 + $0x41] sm:$0xff] %v7130
  %7163 = vst [vmem:[%s4148 + $0x51] sm:$0xff] %v7131
  %7164 = vst [vmem:[%s4148 + $0x61] sm:$0xff] %v7132
  %7165 = vst [vmem:[%s4148 + $0x71] sm:$0xff] %v7133
  %7166 = vst [vmem:[%s4148 + $0x81] sm:$0xff] %v7134
  %7167 = vst [vmem:[%s4148 + $0x91] sm:$0xff] %v7135
  %7168 = vst [vmem:[%s4148 + $0xa1] sm:$0xff] %v7136
  %7169 = vst [vmem:[%s4148 + $0xb1] sm:$0xff] %v7137
  %7170 = vst [vmem:[%s4148 + $0xc1] sm:$0xff] %v7138
  %7171 = vst [vmem:[%s4148 + $0xd1] sm:$0xff] %v7139
  %7172 = vst [vmem:[%s4148 + $0xe1] sm:$0xff] %v7140
  %7173 = vst [vmem:[%s4148 + $0xf1] sm:$0xff] %v7141
  %7174 = vst [vmem:[%s4148 + $0x121] sm:$0xff] %v7142
  %7175 = vst [vmem:[%s4148 + $0x131] sm:$0xff] %v7143
  %7176 = vst [vmem:[%s4148 + $0x141] sm:$0xff] %v7144
  %7177 = vst [vmem:[%s4148 + $0x151] sm:$0xff] %v7145
  %7178 = vst [vmem:[%s4148 + $0x161] sm:$0xff] %v7146
  %7179 = vst [vmem:[%s4148 + $0x171] sm:$0xff] %v7147
  %7180 = vst [vmem:[%s4148 + $0x181] sm:$0xff] %v7148
  %7181 = vst [vmem:[%s4148 + $0x191] sm:$0xff] %v7149
  %7182 = vst [vmem:[%s4148 + $0x1a1] sm:$0xff] %v7150
  %7183 = vst [vmem:[%s4148 + $0x1b1] sm:$0xff] %v7151
  %7184 = vst [vmem:[%s4148 + $0x1c1] sm:$0xff] %v7152
  %7185 = vst [vmem:[%s4148 + $0x1d1] sm:$0xff] %v7153
  %7186 = vst [vmem:[%s4148 + $0x1e1] sm:$0xff] %v7154
  %7187 = vst [vmem:[%s4148 + $0x1f1] sm:$0xff] %v7155
  %7188 = vst [vmem:[%s4148 + $0x201] sm:$0xff] %v7156
  %7189 = vst [vmem:[%s4148 + $0x211] sm:$0xff] %v7157
  %v7190 = vld [vmem:[#allocation3] sm:$0xff]
  %v7191 = vld [vmem:[#allocation3 + $0x10] sm:$0xff]
  %v7192 = vld [vmem:[#allocation3 + $0x20] sm:$0xff]
  %v7193 = vld [vmem:[#allocation3 + $0x30] sm:$0xff]
  %v7194 = vld [vmem:[#allocation3 + $0x40] sm:$0xff]
  %v7195 = vld [vmem:[#allocation3 + $0x50] sm:$0xff]
  %v7196 = vld [vmem:[#allocation3 + $0x60] sm:$0xff]
  %v7197 = vld [vmem:[#allocation3 + $0x70] sm:$0xff]
  %v7198 = vld [vmem:[#allocation3 + $0x80] sm:$0xff]
  %v7199 = vld [vmem:[#allocation3 + $0x90] sm:$0xff]
  %v7200 = vld [vmem:[#allocation3 + $0xa0] sm:$0xff]
  %v7201 = vld [vmem:[#allocation3 + $0xb0] sm:$0xff]
  %v7202 = vld [vmem:[#allocation3 + $0xc0] sm:$0xff]
  %v7203 = vld [vmem:[#allocation3 + $0xd0] sm:$0xff]
  %v7204 = vld [vmem:[#allocation3 + $0xe0] sm:$0xff]
  %v7205 = vld [vmem:[#allocation3 + $0xf0] sm:$0xff]
  %v7206 = vld [vmem:[#allocation3 + $0x120] sm:$0xff]
  %v7207 = vld [vmem:[#allocation3 + $0x130] sm:$0xff]
  %v7208 = vld [vmem:[#allocation3 + $0x140] sm:$0xff]
  %v7209 = vld [vmem:[#allocation3 + $0x150] sm:$0xff]
  %v7210 = vld [vmem:[#allocation3 + $0x160] sm:$0xff]
  %v7211 = vld [vmem:[#allocation3 + $0x170] sm:$0xff]
  %v7212 = vld [vmem:[#allocation3 + $0x180] sm:$0xff]
  %v7213 = vld [vmem:[#allocation3 + $0x190] sm:$0xff]
  %v7214 = vld [vmem:[#allocation3 + $0x1a0] sm:$0xff]
  %v7215 = vld [vmem:[#allocation3 + $0x1b0] sm:$0xff]
  %v7216 = vld [vmem:[#allocation3 + $0x1c0] sm:$0xff]
  %v7217 = vld [vmem:[#allocation3 + $0x1d0] sm:$0xff]
  %v7218 = vld [vmem:[#allocation3 + $0x1e0] sm:$0xff]
  %v7219 = vld [vmem:[#allocation3 + $0x1f0] sm:$0xff]
  %v7220 = vld [vmem:[#allocation3 + $0x200] sm:$0xff]
  %v7221 = vld [vmem:[#allocation3 + $0x210] sm:$0xff]
  %v7222 = vpack.c.bf16 %v7191, %v7190
  %v7223 = vpack.c.bf16 %v7193, %v7192
  %v7224 = vpack.c.bf16 %v7195, %v7194
  %v7225 = vpack.c.bf16 %v7197, %v7196
  %v7226 = vpack.c.bf16 %v7199, %v7198
  %v7227 = vpack.c.bf16 %v7201, %v7200
  %v7228 = vpack.c.bf16 %v7203, %v7202
  %v7229 = vpack.c.bf16 %v7205, %v7204
  %v7230 = vpack.c.bf16 %v7207, %v7206
  %v7231 = vpack.c.bf16 %v7209, %v7208
  %v7232 = vpack.c.bf16 %v7211, %v7210
  %v7233 = vpack.c.bf16 %v7213, %v7212
  %v7234 = vpack.c.bf16 %v7215, %v7214
  %v7235 = vpack.c.bf16 %v7217, %v7216
  %v7236 = vpack.c.bf16 %v7219, %v7218
  %v7237 = vpack.c.bf16 %v7221, %v7220
  %v7238 = vld [vmem:[%s11] sm:$0xf]
  %v7239 = vld [vmem:[%s11 + $0x4] sm:$0xf]
  %v7240 = vld [vmem:[%s11 + $0x8] sm:$0xf]
  %v7241 = vld [vmem:[%s11 + $0xc] sm:$0xf]
  %v7242 = vld [vmem:[%s11 + $0x10] sm:$0xf]
  %v7243 = vld [vmem:[%s11 + $0x14] sm:$0xf]
  %v7244 = vld [vmem:[%s11 + $0x18] sm:$0xf]
  %v7245 = vld [vmem:[%s11 + $0x1c] sm:$0xf]
  %v7246 = vld [vmem:[%s11 + $0x20] sm:$0xf]
  %v7247 = vld [vmem:[%s11 + $0x24] sm:$0xf]
  %v7248 = vld [vmem:[%s11 + $0x28] sm:$0xf]
  %v7249 = vld [vmem:[%s11 + $0x2c] sm:$0xf]
  %v7250 = vld [vmem:[%s11 + $0x30] sm:$0xf]
  %v7251 = vld [vmem:[%s11 + $0x34] sm:$0xf]
  %v7252 = vld [vmem:[%s11 + $0x38] sm:$0xf]
  %v7253 = vld [vmem:[%s11 + $0x3c] sm:$0xf]
  %v7254 = vld [vmem:[#allocation3 + $0x1] sm:$0xff]
  %v7255 = vld [vmem:[#allocation3 + $0x11] sm:$0xff]
  %v7256 = vld [vmem:[#allocation3 + $0x21] sm:$0xff]
  %v7257 = vld [vmem:[#allocation3 + $0x31] sm:$0xff]
  %v7258 = vld [vmem:[#allocation3 + $0x41] sm:$0xff]
  %v7259 = vld [vmem:[#allocation3 + $0x51] sm:$0xff]
  %v7260 = vld [vmem:[#allocation3 + $0x61] sm:$0xff]
  %v7261 = vld [vmem:[#allocation3 + $0x71] sm:$0xff]
  %v7262 = vld [vmem:[#allocation3 + $0x81] sm:$0xff]
  %v7263 = vld [vmem:[#allocation3 + $0x91] sm:$0xff]
  %v7264 = vld [vmem:[#allocation3 + $0xa1] sm:$0xff]
  %v7265 = vld [vmem:[#allocation3 + $0xb1] sm:$0xff]
  %v7266 = vld [vmem:[#allocation3 + $0xc1] sm:$0xff]
  %v7267 = vld [vmem:[#allocation3 + $0xd1] sm:$0xff]
  %v7268 = vld [vmem:[#allocation3 + $0xe1] sm:$0xff]
  %v7269 = vld [vmem:[#allocation3 + $0xf1] sm:$0xff]
  %v7270 = vld [vmem:[#allocation3 + $0x121] sm:$0xff]
  %v7271 = vld [vmem:[#allocation3 + $0x131] sm:$0xff]
  %v7272 = vld [vmem:[#allocation3 + $0x141] sm:$0xff]
  %v7273 = vld [vmem:[#allocation3 + $0x151] sm:$0xff]
  %v7274 = vld [vmem:[#allocation3 + $0x161] sm:$0xff]
  %v7275 = vld [vmem:[#allocation3 + $0x171] sm:$0xff]
  %v7276 = vld [vmem:[#allocation3 + $0x181] sm:$0xff]
  %v7277 = vld [vmem:[#allocation3 + $0x191] sm:$0xff]
  %v7278 = vld [vmem:[#allocation3 + $0x1a1] sm:$0xff]
  %v7279 = vld [vmem:[#allocation3 + $0x1b1] sm:$0xff]
  %v7280 = vld [vmem:[#allocation3 + $0x1c1] sm:$0xff]
  %v7281 = vld [vmem:[#allocation3 + $0x1d1] sm:$0xff]
  %v7282 = vld [vmem:[#allocation3 + $0x1e1] sm:$0xff]
  %v7283 = vld [vmem:[#allocation3 + $0x1f1] sm:$0xff]
  %v7284 = vld [vmem:[#allocation3 + $0x201] sm:$0xff]
  %v7285 = vld [vmem:[#allocation3 + $0x211] sm:$0xff]
  %v7286 = vpack.c.bf16 %v7255, %v7254
  %v7287 = vpack.c.bf16 %v7257, %v7256
  %v7288 = vpack.c.bf16 %v7259, %v7258
  %v7289 = vpack.c.bf16 %v7261, %v7260
  %v7290 = vpack.c.bf16 %v7263, %v7262
  %v7291 = vpack.c.bf16 %v7265, %v7264
  %v7292 = vpack.c.bf16 %v7267, %v7266
  %v7293 = vpack.c.bf16 %v7269, %v7268
  %v7294 = vpack.c.bf16 %v7271, %v7270
  %v7295 = vpack.c.bf16 %v7273, %v7272
  %v7296 = vpack.c.bf16 %v7275, %v7274
  %v7297 = vpack.c.bf16 %v7277, %v7276
  %v7298 = vpack.c.bf16 %v7279, %v7278
  %v7299 = vpack.c.bf16 %v7281, %v7280
  %v7300 = vpack.c.bf16 %v7283, %v7282
  %v7301 = vpack.c.bf16 %v7285, %v7284
  %s7302 = scalar_lea.vmem %s11, 64
  %v7303 = vld [vmem:[%s7302] sm:$0xf]
  %v7304 = vld [vmem:[%s7302 + $0x4] sm:$0xf]
  %v7305 = vld [vmem:[%s7302 + $0x8] sm:$0xf]
  %v7306 = vld [vmem:[%s7302 + $0xc] sm:$0xf]
  %v7307 = vld [vmem:[%s7302 + $0x10] sm:$0xf]
  %v7308 = vld [vmem:[%s7302 + $0x14] sm:$0xf]
  %v7309 = vld [vmem:[%s7302 + $0x18] sm:$0xf]
  %v7310 = vld [vmem:[%s7302 + $0x1c] sm:$0xf]
  %v7311 = vld [vmem:[%s7302 + $0x20] sm:$0xf]
  %v7312 = vld [vmem:[%s7302 + $0x24] sm:$0xf]
  %v7313 = vld [vmem:[%s7302 + $0x28] sm:$0xf]
  %v7314 = vld [vmem:[%s7302 + $0x2c] sm:$0xf]
  %v7315 = vld [vmem:[%s7302 + $0x30] sm:$0xf]
  %v7316 = vld [vmem:[%s7302 + $0x34] sm:$0xf]
  %v7317 = vld [vmem:[%s7302 + $0x38] sm:$0xf]
  %v7318 = vld [vmem:[%s7302 + $0x3c] sm:$0xf]
  %v7335 = vunpack.c.l.b16 %v7303
  %v7336 = vunpack.c.l.b16 %v7304
  %v7337 = vunpack.c.l.b16 %v7305
  %v7338 = vunpack.c.l.b16 %v7306
  %v7339 = vunpack.c.l.b16 %v7307
  %v7340 = vunpack.c.l.b16 %v7308
  %v7341 = vunpack.c.l.b16 %v7309
  %v7342 = vunpack.c.l.b16 %v7310
  %v7343 = vunpack.c.l.b16 %v7311
  %v7344 = vunpack.c.l.b16 %v7312
  %v7345 = vunpack.c.l.b16 %v7313
  %v7346 = vunpack.c.l.b16 %v7314
  %v7347 = vunpack.c.l.b16 %v7315
  %v7348 = vunpack.c.l.b16 %v7316
  %v7349 = vunpack.c.l.b16 %v7317
  %v7350 = vunpack.c.l.b16 %v7318
  %v7351 = vpack.c.b16 %v7336, %v7335
  %v7352 = vpack.c.b16 %v7338, %v7337
  %v7353 = vpack.c.b16 %v7340, %v7339
  %v7354 = vpack.c.b16 %v7342, %v7341
  %v7355 = vpack.c.b16 %v7344, %v7343
  %v7356 = vpack.c.b16 %v7346, %v7345
  %v7357 = vpack.c.b16 %v7348, %v7347
  %v7358 = vpack.c.b16 %v7350, %v7349
  %7367 = vmatprep.subr.bf16.mxu0 0
  %7368 = vmatpush1.bf16.msra.mxu0 %v7351
  %7369 = vmatprep.subr.bf16.mxu0 0
  %7370 = vmatpush1.bf16.msra.mxu0 %v7352
  %7371 = vmatprep.subr.bf16.mxu0 0
  %7372 = vmatpush1.bf16.msra.mxu0 %v7353
  %7373 = vmatprep.subr.bf16.mxu0 0
  %7374 = vmatpush1.bf16.msra.mxu0 %v7354
  %7375 = vmatprep.subr.bf16.mxu0 0
  %7376 = vmatpush1.bf16.msra.mxu0 %v7355
  %7377 = vmatprep.subr.bf16.mxu0 0
  %7378 = vmatpush1.bf16.msra.mxu0 %v7356
  %7379 = vmatprep.subr.bf16.mxu0 0
  %7380 = vmatpush1.bf16.msra.mxu0 %v7357
  %7381 = vmatprep.subr.bf16.mxu0 0
  %7382 = vmatpush1.bf16.msra.mxu0 %v7358
  %7383 = vmatprep.subr.bf16.mxu0 0
  %7384 = vmatpush1.bf16.msra.mxu0 0
  %7385 = vmatprep.subr.bf16.mxu0 0
  %7386 = vmatpush1.bf16.msra.mxu0 0
  %7387 = vmatprep.subr.bf16.mxu0 0
  %7388 = vmatpush1.bf16.msra.mxu0 0
  %7389 = vmatprep.subr.bf16.mxu0 0
  %7390 = vmatpush1.bf16.msra.mxu0 0
  %7391 = vmatprep.subr.bf16.mxu0 0
  %7392 = vmatpush1.bf16.msra.mxu0 0
  %7393 = vmatprep.subr.bf16.mxu0 0
  %7394 = vmatpush1.bf16.msra.mxu0 0
  %7395 = vmatprep.subr.bf16.mxu0 0
  %7396 = vmatpush1.bf16.msra.mxu0 0
  %7397 = vmatprep.subr.bf16.mxu0 0
  %7398 = vmatpush1.bf16.msra.mxu0 0
  %7399 = vmatprep.mubr.bf16.mxu0 0
  %7400 = vmatmul.mubr.bf16.gmra.mrb[0].mxu0 %v7286
  %v7401 = vpop.f32.mrb[0].mxu0
  %v7402 = vadd.f32 0.0, %v7401
  %v7403 = vpop.f32.mrb[0].mxu0
  %v7404 = vpop.f32.mrb[0].mxu0
  %v7405 = vadd.f32 0.0, %v7404
  %v7406 = vpop.f32.mrb[0].mxu0
  %7407 = vmatprep.mubr.bf16.mxu0 0
  %7408 = vmatmul.mubr.bf16.gmra.mrb[0].mxu0 %v7287
  %v7409 = vpop.f32.mrb[0].mxu0
  %v7410 = vadd.f32 0.0, %v7409
  %v7411 = vpop.f32.mrb[0].mxu0
  %v7412 = vpop.f32.mrb[0].mxu0
  %v7413 = vadd.f32 0.0, %v7412
  %v7414 = vpop.f32.mrb[0].mxu0
  %7415 = vmatprep.mubr.bf16.mxu0 0
  %7416 = vmatmul.mubr.bf16.gmra.mrb[0].mxu0 %v7288
  %v7417 = vpop.f32.mrb[0].mxu0
  %v7418 = vadd.f32 0.0, %v7417
  %v7419 = vpop.f32.mrb[0].mxu0
  %v7420 = vpop.f32.mrb[0].mxu0
  %v7421 = vadd.f32 0.0, %v7420
  %v7422 = vpop.f32.mrb[0].mxu0
  %7423 = vmatprep.mubr.bf16.mxu0 0
  %7424 = vmatmul.mubr.bf16.gmra.mrb[0].mxu0 %v7289
  %v7425 = vpop.f32.mrb[0].mxu0
  %v7426 = vadd.f32 0.0, %v7425
  %v7427 = vpop.f32.mrb[0].mxu0
  %v7428 = vpop.f32.mrb[0].mxu0
  %v7429 = vadd.f32 0.0, %v7428
  %v7430 = vpop.f32.mrb[0].mxu0
  %7431 = vmatprep.mubr.bf16.mxu0 0
  %7432 = vmatmul.mubr.bf16.gmra.mrb[0].mxu0 %v7290
  %v7433 = vpop.f32.mrb[0].mxu0
  %v7434 = vadd.f32 0.0, %v7433
  %v7435 = vpop.f32.mrb[0].mxu0
  %v7436 = vpop.f32.mrb[0].mxu0
  %v7437 = vadd.f32 0.0, %v7436
  %v7438 = vpop.f32.mrb[0].mxu0
  %7439 = vmatprep.mubr.bf16.mxu0 0
  %7440 = vmatmul.mubr.bf16.gmra.mrb[0].mxu0 %v7291
  %v7441 = vpop.f32.mrb[0].mxu0
  %v7442 = vadd.f32 0.0, %v7441
  %v7443 = vpop.f32.mrb[0].mxu0
  %v7444 = vpop.f32.mrb[0].mxu0
  %v7445 = vadd.f32 0.0, %v7444
  %v7446 = vpop.f32.mrb[0].mxu0
  %7447 = vmatprep.mubr.bf16.mxu0 0
  %7448 = vmatmul.mubr.bf16.gmra.mrb[0].mxu0 %v7292
  %v7449 = vpop.f32.mrb[0].mxu0
  %v7450 = vadd.f32 0.0, %v7449
  %v7451 = vpop.f32.mrb[0].mxu0
  %v7452 = vpop.f32.mrb[0].mxu0
  %v7453 = vadd.f32 0.0, %v7452
  %v7454 = vpop.f32.mrb[0].mxu0
  %7455 = vmatprep.mubr.bf16.mxu0 0
  %7456 = vmatmul.mubr.bf16.gmra.mrb[0].mxu0 %v7293
  %v7457 = vpop.f32.mrb[0].mxu0
  %v7458 = vadd.f32 0.0, %v7457
  %v7459 = vpop.f32.mrb[0].mxu0
  %v7460 = vpop.f32.mrb[0].mxu0
  %v7461 = vadd.f32 0.0, %v7460
  %v7462 = vpop.f32.mrb[0].mxu0
  %7463 = vmatprep.mubr.bf16.mxu0 0
  %7464 = vmatmul.mubr.bf16.gmra.mrb[0].mxu0 %v7294
  %v7465 = vpop.f32.mrb[0].mxu0
  %v7466 = vadd.f32 0.0, %v7465
  %v7467 = vpop.f32.mrb[0].mxu0
  %v7468 = vpop.f32.mrb[0].mxu0
  %v7469 = vadd.f32 0.0, %v7468
  %v7470 = vpop.f32.mrb[0].mxu0
  %7471 = vmatprep.mubr.bf16.mxu0 0
  %7472 = vmatmul.mubr.bf16.gmra.mrb[0].mxu0 %v7295
  %v7473 = vpop.f32.mrb[0].mxu0
  %v7474 = vadd.f32 0.0, %v7473
  %v7475 = vpop.f32.mrb[0].mxu0
  %v7476 = vpop.f32.mrb[0].mxu0
  %v7477 = vadd.f32 0.0, %v7476
  %v7478 = vpop.f32.mrb[0].mxu0
  %7479 = vmatprep.mubr.bf16.mxu0 0
  %7480 = vmatmul.mubr.bf16.gmra.mrb[0].mxu0 %v7296
  %v7481 = vpop.f32.mrb[0].mxu0
  %v7482 = vadd.f32 0.0, %v7481
  %v7483 = vpop.f32.mrb[0].mxu0
  %v7484 = vpop.f32.mrb[0].mxu0
  %v7485 = vadd.f32 0.0, %v7484
  %v7486 = vpop.f32.mrb[0].mxu0
  %7487 = vmatprep.mubr.bf16.mxu0 0
  %7488 = vmatmul.mubr.bf16.gmra.mrb[0].mxu0 %v7297
  %v7489 = vpop.f32.mrb[0].mxu0
  %v7490 = vadd.f32 0.0, %v7489
  %v7491 = vpop.f32.mrb[0].mxu0
  %v7492 = vpop.f32.mrb[0].mxu0
  %v7493 = vadd.f32 0.0, %v7492
  %v7494 = vpop.f32.mrb[0].mxu0
  %7495 = vmatprep.mubr.bf16.mxu0 0
  %7496 = vmatmul.mubr.bf16.gmra.mrb[0].mxu0 %v7298
  %v7497 = vpop.f32.mrb[0].mxu0
  %v7498 = vadd.f32 0.0, %v7497
  %v7499 = vpop.f32.mrb[0].mxu0
  %v7500 = vpop.f32.mrb[0].mxu0
  %v7501 = vadd.f32 0.0, %v7500
  %v7502 = vpop.f32.mrb[0].mxu0
  %7503 = vmatprep.mubr.bf16.mxu0 0
  %7504 = vmatmul.mubr.bf16.gmra.mrb[0].mxu0 %v7299
  %v7505 = vpop.f32.mrb[0].mxu0
  %v7506 = vadd.f32 0.0, %v7505
  %v7507 = vpop.f32.mrb[0].mxu0
  %v7508 = vpop.f32.mrb[0].mxu0
  %v7509 = vadd.f32 0.0, %v7508
  %v7510 = vpop.f32.mrb[0].mxu0
  %7511 = vmatprep.mubr.bf16.mxu0 0
  %7512 = vmatmul.mubr.bf16.gmra.mrb[0].mxu0 %v7300
  %v7513 = vpop.f32.mrb[0].mxu0
  %v7514 = vadd.f32 0.0, %v7513
  %v7515 = vpop.f32.mrb[0].mxu0
  %v7516 = vpop.f32.mrb[0].mxu0
  %v7517 = vadd.f32 0.0, %v7516
  %v7518 = vpop.f32.mrb[0].mxu0
  %7519 = vmatprep.mubr.bf16.mxu0 0
  %7520 = vmatmul.mubr.bf16.gmra.mrb[0].mxu0 %v7301
  %v7521 = vpop.f32.mrb[0].mxu0
  %v7522 = vadd.f32 0.0, %v7521
  %v7523 = vpop.f32.mrb[0].mxu0
  %v7524 = vpop.f32.mrb[0].mxu0
  %v7525 = vadd.f32 0.0, %v7524
  %v7526 = vpop.f32.mrb[0].mxu0
  %7527 = vdwg.mxu0
  %v7544 = vunpack.c.l.b16 %v7238
  %v7545 = vunpack.c.l.b16 %v7239
  %v7546 = vunpack.c.l.b16 %v7240
  %v7547 = vunpack.c.l.b16 %v7241
  %v7548 = vunpack.c.l.b16 %v7242
  %v7549 = vunpack.c.l.b16 %v7243
  %v7550 = vunpack.c.l.b16 %v7244
  %v7551 = vunpack.c.l.b16 %v7245
  %v7552 = vunpack.c.l.b16 %v7246
  %v7553 = vunpack.c.l.b16 %v7247
  %v7554 = vunpack.c.l.b16 %v7248
  %v7555 = vunpack.c.l.b16 %v7249
  %v7556 = vunpack.c.l.b16 %v7250
  %v7557 = vunpack.c.l.b16 %v7251
  %v7558 = vunpack.c.l.b16 %v7252
  %v7559 = vunpack.c.l.b16 %v7253
  %v7560 = vpack.c.b16 %v7545, %v7544
  %v7561 = vpack.c.b16 %v7547, %v7546
  %v7562 = vpack.c.b16 %v7549, %v7548
  %v7563 = vpack.c.b16 %v7551, %v7550
  %v7564 = vpack.c.b16 %v7553, %v7552
  %v7565 = vpack.c.b16 %v7555, %v7554
  %v7566 = vpack.c.b16 %v7557, %v7556
  %v7567 = vpack.c.b16 %v7559, %v7558
  %7576 = vmatprep.subr.bf16.mxu0 0
  %7577 = vmatpush1.bf16.msra.mxu0 %v7560
  %7578 = vmatprep.subr.bf16.mxu0 0
  %7579 = vmatpush1.bf16.msra.mxu0 %v7561
  %7580 = vmatprep.subr.bf16.mxu0 0
  %7581 = vmatpush1.bf16.msra.mxu0 %v7562
  %7582 = vmatprep.subr.bf16.mxu0 0
  %7583 = vmatpush1.bf16.msra.mxu0 %v7563
  %7584 = vmatprep.subr.bf16.mxu0 0
  %7585 = vmatpush1.bf16.msra.mxu0 %v7564
  %7586 = vmatprep.subr.bf16.mxu0 0
  %7587 = vmatpush1.bf16.msra.mxu0 %v7565
  %7588 = vmatprep.subr.bf16.mxu0 0
  %7589 = vmatpush1.bf16.msra.mxu0 %v7566
  %7590 = vmatprep.subr.bf16.mxu0 0
  %7591 = vmatpush1.bf16.msra.mxu0 %v7567
  %7592 = vmatprep.subr.bf16.mxu0 0
  %7593 = vmatpush1.bf16.msra.mxu0 0
  %7594 = vmatprep.subr.bf16.mxu0 0
  %7595 = vmatpush1.bf16.msra.mxu0 0
  %7596 = vmatprep.subr.bf16.mxu0 0
  %7597 = vmatpush1.bf16.msra.mxu0 0
  %7598 = vmatprep.subr.bf16.mxu0 0
  %7599 = vmatpush1.bf16.msra.mxu0 0
  %7600 = vmatprep.subr.bf16.mxu0 0
  %7601 = vmatpush1.bf16.msra.mxu0 0
  %7602 = vmatprep.subr.bf16.mxu0 0
  %7603 = vmatpush1.bf16.msra.mxu0 0
  %7604 = vmatprep.subr.bf16.mxu0 0
  %7605 = vmatpush1.bf16.msra.mxu0 0
  %7606 = vmatprep.subr.bf16.mxu0 0
  %7607 = vmatpush1.bf16.msra.mxu0 0
  %7608 = vmatprep.mubr.bf16.mxu0 0
  %7609 = vmatmul.mubr.bf16.gmra.mrb[0].mxu0 %v7222
  %v7610 = vpop.f32.mrb[0].mxu0
  %v7611 = vadd.f32 %v7402, %v7610
  %v7612 = vpop.f32.mrb[0].mxu0
  %v7613 = vpop.f32.mrb[0].mxu0
  %v7614 = vadd.f32 %v7405, %v7613
  %v7615 = vpop.f32.mrb[0].mxu0
  %7616 = vmatprep.mubr.bf16.mxu0 0
  %7617 = vmatmul.mubr.bf16.gmra.mrb[0].mxu0 %v7223
  %v7618 = vpop.f32.mrb[0].mxu0
  %v7619 = vadd.f32 %v7410, %v7618
  %v7620 = vpop.f32.mrb[0].mxu0
  %v7621 = vpop.f32.mrb[0].mxu0
  %v7622 = vadd.f32 %v7413, %v7621
  %v7623 = vpop.f32.mrb[0].mxu0
  %7624 = vmatprep.mubr.bf16.mxu0 0
  %7625 = vmatmul.mubr.bf16.gmra.mrb[0].mxu0 %v7224
  %v7626 = vpop.f32.mrb[0].mxu0
  %v7627 = vadd.f32 %v7418, %v7626
  %v7628 = vpop.f32.mrb[0].mxu0
  %v7629 = vpop.f32.mrb[0].mxu0
  %v7630 = vadd.f32 %v7421, %v7629
  %v7631 = vpop.f32.mrb[0].mxu0
  %7632 = vmatprep.mubr.bf16.mxu0 0
  %7633 = vmatmul.mubr.bf16.gmra.mrb[0].mxu0 %v7225
  %v7634 = vpop.f32.mrb[0].mxu0
  %v7635 = vadd.f32 %v7426, %v7634
  %v7636 = vpop.f32.mrb[0].mxu0
  %v7637 = vpop.f32.mrb[0].mxu0
  %v7638 = vadd.f32 %v7429, %v7637
  %v7639 = vpop.f32.mrb[0].mxu0
  %7640 = vmatprep.mubr.bf16.mxu0 0
  %7641 = vmatmul.mubr.bf16.gmra.mrb[0].mxu0 %v7226
  %v7642 = vpop.f32.mrb[0].mxu0
  %v7643 = vadd.f32 %v7434, %v7642
  %v7644 = vpop.f32.mrb[0].mxu0
  %v7645 = vpop.f32.mrb[0].mxu0
  %v7646 = vadd.f32 %v7437, %v7645
  %v7647 = vpop.f32.mrb[0].mxu0
  %7648 = vmatprep.mubr.bf16.mxu0 0
  %7649 = vmatmul.mubr.bf16.gmra.mrb[0].mxu0 %v7227
  %v7650 = vpop.f32.mrb[0].mxu0
  %v7651 = vadd.f32 %v7442, %v7650
  %v7652 = vpop.f32.mrb[0].mxu0
  %v7653 = vpop.f32.mrb[0].mxu0
  %v7654 = vadd.f32 %v7445, %v7653
  %v7655 = vpop.f32.mrb[0].mxu0
  %7656 = vmatprep.mubr.bf16.mxu0 0
  %7657 = vmatmul.mubr.bf16.gmra.mrb[0].mxu0 %v7228
  %v7658 = vpop.f32.mrb[0].mxu0
  %v7659 = vadd.f32 %v7450, %v7658
  %v7660 = vpop.f32.mrb[0].mxu0
  %v7661 = vpop.f32.mrb[0].mxu0
  %v7662 = vadd.f32 %v7453, %v7661
  %v7663 = vpop.f32.mrb[0].mxu0
  %7664 = vmatprep.mubr.bf16.mxu0 0
  %7665 = vmatmul.mubr.bf16.gmra.mrb[0].mxu0 %v7229
  %v7666 = vpop.f32.mrb[0].mxu0
  %v7667 = vadd.f32 %v7458, %v7666
  %v7668 = vpop.f32.mrb[0].mxu0
  %v7669 = vpop.f32.mrb[0].mxu0
  %v7670 = vadd.f32 %v7461, %v7669
  %v7671 = vpop.f32.mrb[0].mxu0
  %7672 = vmatprep.mubr.bf16.mxu0 0
  %7673 = vmatmul.mubr.bf16.gmra.mrb[0].mxu0 %v7230
  %v7674 = vpop.f32.mrb[0].mxu0
  %v7675 = vadd.f32 %v7466, %v7674
  %v7676 = vpop.f32.mrb[0].mxu0
  %v7677 = vpop.f32.mrb[0].mxu0
  %v7678 = vadd.f32 %v7469, %v7677
  %v7679 = vpop.f32.mrb[0].mxu0
  %7680 = vmatprep.mubr.bf16.mxu0 0
  %7681 = vmatmul.mubr.bf16.gmra.mrb[0].mxu0 %v7231
  %v7682 = vpop.f32.mrb[0].mxu0
  %v7683 = vadd.f32 %v7474, %v7682
  %v7684 = vpop.f32.mrb[0].mxu0
  %v7685 = vpop.f32.mrb[0].mxu0
  %v7686 = vadd.f32 %v7477, %v7685
  %v7687 = vpop.f32.mrb[0].mxu0
  %7688 = vmatprep.mubr.bf16.mxu0 0
  %7689 = vmatmul.mubr.bf16.gmra.mrb[0].mxu0 %v7232
  %v7690 = vpop.f32.mrb[0].mxu0
  %v7691 = vadd.f32 %v7482, %v7690
  %v7692 = vpop.f32.mrb[0].mxu0
  %v7693 = vpop.f32.mrb[0].mxu0
  %v7694 = vadd.f32 %v7485, %v7693
  %v7695 = vpop.f32.mrb[0].mxu0
  %7696 = vmatprep.mubr.bf16.mxu0 0
  %7697 = vmatmul.mubr.bf16.gmra.mrb[0].mxu0 %v7233
  %v7698 = vpop.f32.mrb[0].mxu0
  %v7699 = vadd.f32 %v7490, %v7698
  %v7700 = vpop.f32.mrb[0].mxu0
  %v7701 = vpop.f32.mrb[0].mxu0
  %v7702 = vadd.f32 %v7493, %v7701
  %v7703 = vpop.f32.mrb[0].mxu0
  %7704 = vmatprep.mubr.bf16.mxu0 0
  %7705 = vmatmul.mubr.bf16.gmra.mrb[0].mxu0 %v7234
  %v7706 = vpop.f32.mrb[0].mxu0
  %v7707 = vadd.f32 %v7498, %v7706
  %v7708 = vpop.f32.mrb[0].mxu0
  %v7709 = vpop.f32.mrb[0].mxu0
  %v7710 = vadd.f32 %v7501, %v7709
  %v7711 = vpop.f32.mrb[0].mxu0
  %7712 = vmatprep.mubr.bf16.mxu0 0
  %7713 = vmatmul.mubr.bf16.gmra.mrb[0].mxu0 %v7235
  %v7714 = vpop.f32.mrb[0].mxu0
  %v7715 = vadd.f32 %v7506, %v7714
  %v7716 = vpop.f32.mrb[0].mxu0
  %v7717 = vpop.f32.mrb[0].mxu0
  %v7718 = vadd.f32 %v7509, %v7717
  %v7719 = vpop.f32.mrb[0].mxu0
  %7720 = vmatprep.mubr.bf16.mxu0 0
  %7721 = vmatmul.mubr.bf16.gmra.mrb[0].mxu0 %v7236
  %v7722 = vpop.f32.mrb[0].mxu0
  %v7723 = vadd.f32 %v7514, %v7722
  %v7724 = vpop.f32.mrb[0].mxu0
  %v7725 = vpop.f32.mrb[0].mxu0
  %v7726 = vadd.f32 %v7517, %v7725
  %v7727 = vpop.f32.mrb[0].mxu0
  %7728 = vmatprep.mubr.bf16.mxu0 0
  %7729 = vmatmul.mubr.bf16.gmra.mrb[0].mxu0 %v7237
  %v7730 = vpop.f32.mrb[0].mxu0
  %v7731 = vadd.f32 %v7522, %v7730
  %v7732 = vpop.f32.mrb[0].mxu0
  %v7733 = vpop.f32.mrb[0].mxu0
  %v7734 = vadd.f32 %v7525, %v7733
  %v7735 = vpop.f32.mrb[0].mxu0
  %7736 = vdwg.mxu0
  %v7737 = vld [vmem:[#allocation3 + $0x2] sm:$0xff]
  %v7738 = vld [vmem:[#allocation3 + $0x12] sm:$0xff]
  %v7739 = vld [vmem:[#allocation3 + $0x22] sm:$0xff]
  %v7740 = vld [vmem:[#allocation3 + $0x32] sm:$0xff]
  %v7741 = vld [vmem:[#allocation3 + $0x42] sm:$0xff]
  %v7742 = vld [vmem:[#allocation3 + $0x52] sm:$0xff]
  %v7743 = vld [vmem:[#allocation3 + $0x62] sm:$0xff]
  %v7744 = vld [vmem:[#allocation3 + $0x72] sm:$0xff]
  %v7745 = vld [vmem:[#allocation3 + $0x82] sm:$0xff]
  %v7746 = vld [vmem:[#allocation3 + $0x92] sm:$0xff]
  %v7747 = vld [vmem:[#allocation3 + $0xa2] sm:$0xff]
  %v7748 = vld [vmem:[#allocation3 + $0xb2] sm:$0xff]
  %v7749 = vld [vmem:[#allocation3 + $0xc2] sm:$0xff]
  %v7750 = vld [vmem:[#allocation3 + $0xd2] sm:$0xff]
  %v7751 = vld [vmem:[#allocation3 + $0xe2] sm:$0xff]
  %v7752 = vld [vmem:[#allocation3 + $0xf2] sm:$0xff]
  %v7753 = vld [vmem:[#allocation3 + $0x122] sm:$0xff]
  %v7754 = vld [vmem:[#allocation3 + $0x132] sm:$0xff]
  %v7755 = vld [vmem:[#allocation3 + $0x142] sm:$0xff]
  %v7756 = vld [vmem:[#allocation3 + $0x152] sm:$0xff]
  %v7757 = vld [vmem:[#allocation3 + $0x162] sm:$0xff]
  %v7758 = vld [vmem:[#allocation3 + $0x172] sm:$0xff]
  %v7759 = vld [vmem:[#allocation3 + $0x182] sm:$0xff]
  %v7760 = vld [vmem:[#allocation3 + $0x192] sm:$0xff]
  %v7761 = vld [vmem:[#allocation3 + $0x1a2] sm:$0xff]
  %v7762 = vld [vmem:[#allocation3 + $0x1b2] sm:$0xff]
  %v7763 = vld [vmem:[#allocation3 + $0x1c2] sm:$0xff]
  %v7764 = vld [vmem:[#allocation3 + $0x1d2] sm:$0xff]
  %v7765 = vld [vmem:[#allocation3 + $0x1e2] sm:$0xff]
  %v7766 = vld [vmem:[#allocation3 + $0x1f2] sm:$0xff]
  %v7767 = vld [vmem:[#allocation3 + $0x202] sm:$0xff]
  %v7768 = vld [vmem:[#allocation3 + $0x212] sm:$0xff]
  %v7769 = vpack.c.bf16 %v7738, %v7737
  %v7770 = vpack.c.bf16 %v7740, %v7739
  %v7771 = vpack.c.bf16 %v7742, %v7741
  %v7772 = vpack.c.bf16 %v7744, %v7743
  %v7773 = vpack.c.bf16 %v7746, %v7745
  %v7774 = vpack.c.bf16 %v7748, %v7747
  %v7775 = vpack.c.bf16 %v7750, %v7749
  %v7776 = vpack.c.bf16 %v7752, %v7751
  %v7777 = vpack.c.bf16 %v7754, %v7753
  %v7778 = vpack.c.bf16 %v7756, %v7755
  %v7779 = vpack.c.bf16 %v7758, %v7757
  %v7780 = vpack.c.bf16 %v7760, %v7759
  %v7781 = vpack.c.bf16 %v7762, %v7761
  %v7782 = vpack.c.bf16 %v7764, %v7763
  %v7783 = vpack.c.bf16 %v7766, %v7765
  %v7784 = vpack.c.bf16 %v7768, %v7767
  %s7785 = scalar_lea.vmem %s11, 128
  %v7786 = vld [vmem:[%s7785] sm:$0xf]
  %v7787 = vld [vmem:[%s7785 + $0x4] sm:$0xf]
  %v7788 = vld [vmem:[%s7785 + $0x8] sm:$0xf]
  %v7789 = vld [vmem:[%s7785 + $0xc] sm:$0xf]
  %v7790 = vld [vmem:[%s7785 + $0x10] sm:$0xf]
  %v7791 = vld [vmem:[%s7785 + $0x14] sm:$0xf]
  %v7792 = vld [vmem:[%s7785 + $0x18] sm:$0xf]
  %v7793 = vld [vmem:[%s7785 + $0x1c] sm:$0xf]
  %v7794 = vld [vmem:[%s7785 + $0x20] sm:$0xf]
  %v7795 = vld [vmem:[%s7785 + $0x24] sm:$0xf]
  %v7796 = vld [vmem:[%s7785 + $0x28] sm:$0xf]
  %v7797 = vld [vmem:[%s7785 + $0x2c] sm:$0xf]
  %v7798 = vld [vmem:[%s7785 + $0x30] sm:$0xf]
  %v7799 = vld [vmem:[%s7785 + $0x34] sm:$0xf]
  %v7800 = vld [vmem:[%s7785 + $0x38] sm:$0xf]
  %v7801 = vld [vmem:[%s7785 + $0x3c] sm:$0xf]
  %v7818 = vunpack.c.l.b16 %v7786
  %v7819 = vunpack.c.l.b16 %v7787
  %v7820 = vunpack.c.l.b16 %v7788
  %v7821 = vunpack.c.l.b16 %v7789
  %v7822 = vunpack.c.l.b16 %v7790
  %v7823 = vunpack.c.l.b16 %v7791
  %v7824 = vunpack.c.l.b16 %v7792
  %v7825 = vunpack.c.l.b16 %v7793
  %v7826 = vunpack.c.l.b16 %v7794
  %v7827 = vunpack.c.l.b16 %v7795
  %v7828 = vunpack.c.l.b16 %v7796
  %v7829 = vunpack.c.l.b16 %v7797
  %v7830 = vunpack.c.l.b16 %v7798
  %v7831 = vunpack.c.l.b16 %v7799
  %v7832 = vunpack.c.l.b16 %v7800
  %v7833 = vunpack.c.l.b16 %v7801
  %v7834 = vpack.c.b16 %v7819, %v7818
  %v7835 = vpack.c.b16 %v7821, %v7820
  %v7836 = vpack.c.b16 %v7823, %v7822
  %v7837 = vpack.c.b16 %v7825, %v7824
  %v7838 = vpack.c.b16 %v7827, %v7826
  %v7839 = vpack.c.b16 %v7829, %v7828
  %v7840 = vpack.c.b16 %v7831, %v7830
  %v7841 = vpack.c.b16 %v7833, %v7832
  %7850 = vmatprep.subr.bf16.mxu0 0
  %7851 = vmatpush1.bf16.msra.mxu0 %v7834
  %7852 = vmatprep.subr.bf16.mxu0 0
  %7853 = vmatpush1.bf16.msra.mxu0 %v7835
  %7854 = vmatprep.subr.bf16.mxu0 0
  %7855 = vmatpush1.bf16.msra.mxu0 %v7836
  %7856 = vmatprep.subr.bf16.mxu0 0
  %7857 = vmatpush1.bf16.msra.mxu0 %v7837
  %7858 = vmatprep.subr.bf16.mxu0 0
  %7859 = vmatpush1.bf16.msra.mxu0 %v7838
  %7860 = vmatprep.subr.bf16.mxu0 0
  %7861 = vmatpush1.bf16.msra.mxu0 %v7839
  %7862 = vmatprep.subr.bf16.mxu0 0
  %7863 = vmatpush1.bf16.msra.mxu0 %v7840
  %7864 = vmatprep.subr.bf16.mxu0 0
  %7865 = vmatpush1.bf16.msra.mxu0 %v7841
  %7866 = vmatprep.subr.bf16.mxu0 0
  %7867 = vmatpush1.bf16.msra.mxu0 0
  %7868 = vmatprep.subr.bf16.mxu0 0
  %7869 = vmatpush1.bf16.msra.mxu0 0
  %7870 = vmatprep.subr.bf16.mxu0 0
  %7871 = vmatpush1.bf16.msra.mxu0 0
  %7872 = vmatprep.subr.bf16.mxu0 0
  %7873 = vmatpush1.bf16.msra.mxu0 0
  %7874 = vmatprep.subr.bf16.mxu0 0
  %7875 = vmatpush1.bf16.msra.mxu0 0
  %7876 = vmatprep.subr.bf16.mxu0 0
  %7877 = vmatpush1.bf16.msra.mxu0 0
  %7878 = vmatprep.subr.bf16.mxu0 0
  %7879 = vmatpush1.bf16.msra.mxu0 0
  %7880 = vmatprep.subr.bf16.mxu0 0
  %7881 = vmatpush1.bf16.msra.mxu0 0
  %7882 = vmatprep.mubr.bf16.mxu0 0
  %7883 = vmatmul.mubr.bf16.gmra.mrb[0].mxu0 %v7769
  %v7884 = vpop.f32.mrb[0].mxu0
  %v7885 = vadd.f32 0.0, %v7884
  %v7886 = vpop.f32.mrb[0].mxu0
  %v7887 = vpop.f32.mrb[0].mxu0
  %v7888 = vadd.f32 0.0, %v7887
  %v7889 = vpop.f32.mrb[0].mxu0
  %7890 = vmatprep.mubr.bf16.mxu0 0
  %7891 = vmatmul.mubr.bf16.gmra.mrb[0].mxu0 %v7770
  %v7892 = vpop.f32.mrb[0].mxu0
  %v7893 = vadd.f32 0.0, %v7892
  %v7894 = vpop.f32.mrb[0].mxu0
  %v7895 = vpop.f32.mrb[0].mxu0
  %v7896 = vadd.f32 0.0, %v7895
  %v7897 = vpop.f32.mrb[0].mxu0
  %7898 = vmatprep.mubr.bf16.mxu0 0
  %7899 = vmatmul.mubr.bf16.gmra.mrb[0].mxu0 %v7771
  %v7900 = vpop.f32.mrb[0].mxu0
  %v7901 = vadd.f32 0.0, %v7900
  %v7902 = vpop.f32.mrb[0].mxu0
  %v7903 = vpop.f32.mrb[0].mxu0
  %v7904 = vadd.f32 0.0, %v7903
  %v7905 = vpop.f32.mrb[0].mxu0
  %7906 = vmatprep.mubr.bf16.mxu0 0
  %7907 = vmatmul.mubr.bf16.gmra.mrb[0].mxu0 %v7772
  %v7908 = vpop.f32.mrb[0].mxu0
  %v7909 = vadd.f32 0.0, %v7908
  %v7910 = vpop.f32.mrb[0].mxu0
  %v7911 = vpop.f32.mrb[0].mxu0
  %v7912 = vadd.f32 0.0, %v7911
  %v7913 = vpop.f32.mrb[0].mxu0
  %7914 = vmatprep.mubr.bf16.mxu0 0
  %7915 = vmatmul.mubr.bf16.gmra.mrb[0].mxu0 %v7773
  %v7916 = vpop.f32.mrb[0].mxu0
  %v7917 = vadd.f32 0.0, %v7916
  %v7918 = vpop.f32.mrb[0].mxu0
  %v7919 = vpop.f32.mrb[0].mxu0
  %v7920 = vadd.f32 0.0, %v7919
  %v7921 = vpop.f32.mrb[0].mxu0
  %7922 = vmatprep.mubr.bf16.mxu0 0
  %7923 = vmatmul.mubr.bf16.gmra.mrb[0].mxu0 %v7774
  %v7924 = vpop.f32.mrb[0].mxu0
  %v7925 = vadd.f32 0.0, %v7924
  %v7926 = vpop.f32.mrb[0].mxu0
  %v7927 = vpop.f32.mrb[0].mxu0
  %v7928 = vadd.f32 0.0, %v7927
  %v7929 = vpop.f32.mrb[0].mxu0
  %7930 = vmatprep.mubr.bf16.mxu0 0
  %7931 = vmatmul.mubr.bf16.gmra.mrb[0].mxu0 %v7775
  %v7932 = vpop.f32.mrb[0].mxu0
  %v7933 = vadd.f32 0.0, %v7932
  %v7934 = vpop.f32.mrb[0].mxu0
  %v7935 = vpop.f32.mrb[0].mxu0
  %v7936 = vadd.f32 0.0, %v7935
  %v7937 = vpop.f32.mrb[0].mxu0
  %7938 = vmatprep.mubr.bf16.mxu0 0
  %7939 = vmatmul.mubr.bf16.gmra.mrb[0].mxu0 %v7776
  %v7940 = vpop.f32.mrb[0].mxu0
  %v7941 = vadd.f32 0.0, %v7940
  %v7942 = vpop.f32.mrb[0].mxu0
  %v7943 = vpop.f32.mrb[0].mxu0
  %v7944 = vadd.f32 0.0, %v7943
  %v7945 = vpop.f32.mrb[0].mxu0
  %7946 = vmatprep.mubr.bf16.mxu0 0
  %7947 = vmatmul.mubr.bf16.gmra.mrb[0].mxu0 %v7777
  %v7948 = vpop.f32.mrb[0].mxu0
  %v7949 = vadd.f32 0.0, %v7948
  %v7950 = vpop.f32.mrb[0].mxu0
  %v7951 = vpop.f32.mrb[0].mxu0
  %v7952 = vadd.f32 0.0, %v7951
  %v7953 = vpop.f32.mrb[0].mxu0
  %7954 = vmatprep.mubr.bf16.mxu0 0
  %7955 = vmatmul.mubr.bf16.gmra.mrb[0].mxu0 %v7778
  %v7956 = vpop.f32.mrb[0].mxu0
  %v7957 = vadd.f32 0.0, %v7956
  %v7958 = vpop.f32.mrb[0].mxu0
  %v7959 = vpop.f32.mrb[0].mxu0
  %v7960 = vadd.f32 0.0, %v7959
  %v7961 = vpop.f32.mrb[0].mxu0
  %7962 = vmatprep.mubr.bf16.mxu0 0
  %7963 = vmatmul.mubr.bf16.gmra.mrb[0].mxu0 %v7779
  %v7964 = vpop.f32.mrb[0].mxu0
  %v7965 = vadd.f32 0.0, %v7964
  %v7966 = vpop.f32.mrb[0].mxu0
  %v7967 = vpop.f32.mrb[0].mxu0
  %v7968 = vadd.f32 0.0, %v7967
  %v7969 = vpop.f32.mrb[0].mxu0
  %7970 = vmatprep.mubr.bf16.mxu0 0
  %7971 = vmatmul.mubr.bf16.gmra.mrb[0].mxu0 %v7780
  %v7972 = vpop.f32.mrb[0].mxu0
  %v7973 = vadd.f32 0.0, %v7972
  %v7974 = vpop.f32.mrb[0].mxu0
  %v7975 = vpop.f32.mrb[0].mxu0
  %v7976 = vadd.f32 0.0, %v7975
  %v7977 = vpop.f32.mrb[0].mxu0
  %7978 = vmatprep.mubr.bf16.mxu0 0
  %7979 = vmatmul.mubr.bf16.gmra.mrb[0].mxu0 %v7781
  %v7980 = vpop.f32.mrb[0].mxu0
  %v7981 = vadd.f32 0.0, %v7980
  %v7982 = vpop.f32.mrb[0].mxu0
  %v7983 = vpop.f32.mrb[0].mxu0
  %v7984 = vadd.f32 0.0, %v7983
  %v7985 = vpop.f32.mrb[0].mxu0
  %7986 = vmatprep.mubr.bf16.mxu0 0
  %7987 = vmatmul.mubr.bf16.gmra.mrb[0].mxu0 %v7782
  %v7988 = vpop.f32.mrb[0].mxu0
  %v7989 = vadd.f32 0.0, %v7988
  %v7990 = vpop.f32.mrb[0].mxu0
  %v7991 = vpop.f32.mrb[0].mxu0
  %v7992 = vadd.f32 0.0, %v7991
  %v7993 = vpop.f32.mrb[0].mxu0
  %7994 = vmatprep.mubr.bf16.mxu0 0
  %7995 = vmatmul.mubr.bf16.gmra.mrb[0].mxu0 %v7783
  %v7996 = vpop.f32.mrb[0].mxu0
  %v7997 = vadd.f32 0.0, %v7996
  %v7998 = vpop.f32.mrb[0].mxu0
  %v7999 = vpop.f32.mrb[0].mxu0
  %v8000 = vadd.f32 0.0, %v7999
  %v8001 = vpop.f32.mrb[0].mxu0
  %8002 = vmatprep.mubr.bf16.mxu0 0
  %8003 = vmatmul.mubr.bf16.gmra.mrb[0].mxu0 %v7784
  %v8004 = vpop.f32.mrb[0].mxu0
  %v8005 = vadd.f32 0.0, %v8004
  %v8006 = vpop.f32.mrb[0].mxu0
  %v8007 = vpop.f32.mrb[0].mxu0
  %v8008 = vadd.f32 0.0, %v8007
  %v8009 = vpop.f32.mrb[0].mxu0
  %8010 = vdwg.mxu0
  %v8011 = vadd.f32 %v7611, %v7885
  %v8012 = vadd.f32 %v7614, %v7888
  %v8013 = vadd.f32 %v7619, %v7893
  %v8014 = vadd.f32 %v7622, %v7896
  %v8015 = vadd.f32 %v7627, %v7901
  %v8016 = vadd.f32 %v7630, %v7904
  %v8017 = vadd.f32 %v7635, %v7909
  %v8018 = vadd.f32 %v7638, %v7912
  %v8019 = vadd.f32 %v7643, %v7917
  %v8020 = vadd.f32 %v7646, %v7920
  %v8021 = vadd.f32 %v7651, %v7925
  %v8022 = vadd.f32 %v7654, %v7928
  %v8023 = vadd.f32 %v7659, %v7933
  %v8024 = vadd.f32 %v7662, %v7936
  %v8025 = vadd.f32 %v7667, %v7941
  %v8026 = vadd.f32 %v7670, %v7944
  %v8027 = vadd.f32 %v7675, %v7949
  %v8028 = vadd.f32 %v7678, %v7952
  %v8029 = vadd.f32 %v7683, %v7957
  %v8030 = vadd.f32 %v7686, %v7960
  %v8031 = vadd.f32 %v7691, %v7965
  %v8032 = vadd.f32 %v7694, %v7968
  %v8033 = vadd.f32 %v7699, %v7973
  %v8034 = vadd.f32 %v7702, %v7976
  %v8035 = vadd.f32 %v7707, %v7981
  %v8036 = vadd.f32 %v7710, %v7984
  %v8037 = vadd.f32 %v7715, %v7989
  %v8038 = vadd.f32 %v7718, %v7992
  %v8039 = vadd.f32 %v7723, %v7997
  %v8040 = vadd.f32 %v7726, %v8000
  %v8041 = vadd.f32 %v7731, %v8005
  %v8042 = vadd.f32 %v7734, %v8008
  %v8043 = vld [vmem:[%s4148] sm:$0xff]
  %v8044 = vld [vmem:[%s4148 + $0x10] sm:$0xff]
  %v8045 = vld [vmem:[%s4148 + $0x20] sm:$0xff]
  %v8046 = vld [vmem:[%s4148 + $0x30] sm:$0xff]
  %v8047 = vld [vmem:[%s4148 + $0x40] sm:$0xff]
  %v8048 = vld [vmem:[%s4148 + $0x50] sm:$0xff]
  %v8049 = vld [vmem:[%s4148 + $0x60] sm:$0xff]
  %v8050 = vld [vmem:[%s4148 + $0x70] sm:$0xff]
  %v8051 = vld [vmem:[%s4148 + $0x80] sm:$0xff]
  %v8052 = vld [vmem:[%s4148 + $0x90] sm:$0xff]
  %v8053 = vld [vmem:[%s4148 + $0xa0] sm:$0xff]
  %v8054 = vld [vmem:[%s4148 + $0xb0] sm:$0xff]
  %v8055 = vld [vmem:[%s4148 + $0xc0] sm:$0xff]
  %v8056 = vld [vmem:[%s4148 + $0xd0] sm:$0xff]
  %v8057 = vld [vmem:[%s4148 + $0xe0] sm:$0xff]
  %v8058 = vld [vmem:[%s4148 + $0xf0] sm:$0xff]
  %v8059 = vld [vmem:[%s4148 + $0x120] sm:$0xff]
  %v8060 = vld [vmem:[%s4148 + $0x130] sm:$0xff]
  %v8061 = vld [vmem:[%s4148 + $0x140] sm:$0xff]
  %v8062 = vld [vmem:[%s4148 + $0x150] sm:$0xff]
  %v8063 = vld [vmem:[%s4148 + $0x160] sm:$0xff]
  %v8064 = vld [vmem:[%s4148 + $0x170] sm:$0xff]
  %v8065 = vld [vmem:[%s4148 + $0x180] sm:$0xff]
  %v8066 = vld [vmem:[%s4148 + $0x190] sm:$0xff]
  %v8067 = vld [vmem:[%s4148 + $0x1a0] sm:$0xff]
  %v8068 = vld [vmem:[%s4148 + $0x1b0] sm:$0xff]
  %v8069 = vld [vmem:[%s4148 + $0x1c0] sm:$0xff]
  %v8070 = vld [vmem:[%s4148 + $0x1d0] sm:$0xff]
  %v8071 = vld [vmem:[%s4148 + $0x1e0] sm:$0xff]
  %v8072 = vld [vmem:[%s4148 + $0x1f0] sm:$0xff]
  %v8073 = vld [vmem:[%s4148 + $0x200] sm:$0xff]
  %v8074 = vld [vmem:[%s4148 + $0x210] sm:$0xff]
  %v8075 = vpack.c.bf16 %v8044, %v8043
  %v8076 = vpack.c.bf16 %v8046, %v8045
  %v8077 = vpack.c.bf16 %v8048, %v8047
  %v8078 = vpack.c.bf16 %v8050, %v8049
  %v8079 = vpack.c.bf16 %v8052, %v8051
  %v8080 = vpack.c.bf16 %v8054, %v8053
  %v8081 = vpack.c.bf16 %v8056, %v8055
  %v8082 = vpack.c.bf16 %v8058, %v8057
  %v8083 = vpack.c.bf16 %v8060, %v8059
  %v8084 = vpack.c.bf16 %v8062, %v8061
  %v8085 = vpack.c.bf16 %v8064, %v8063
  %v8086 = vpack.c.bf16 %v8066, %v8065
  %v8087 = vpack.c.bf16 %v8068, %v8067
  %v8088 = vpack.c.bf16 %v8070, %v8069
  %v8089 = vpack.c.bf16 %v8072, %v8071
  %v8090 = vpack.c.bf16 %v8074, %v8073
  %s8091 = scalar_lea.vmem %s11, 192
  %v8092 = vld [vmem:[%s8091] sm:$0xf]
  %v8093 = vld [vmem:[%s8091 + $0x4] sm:$0xf]
  %v8094 = vld [vmem:[%s8091 + $0x8] sm:$0xf]
  %v8095 = vld [vmem:[%s8091 + $0xc] sm:$0xf]
  %v8096 = vld [vmem:[%s8091 + $0x10] sm:$0xf]
  %v8097 = vld [vmem:[%s8091 + $0x14] sm:$0xf]
  %v8098 = vld [vmem:[%s8091 + $0x18] sm:$0xf]
  %v8099 = vld [vmem:[%s8091 + $0x1c] sm:$0xf]
  %v8100 = vld [vmem:[%s8091 + $0x20] sm:$0xf]
  %v8101 = vld [vmem:[%s8091 + $0x24] sm:$0xf]
  %v8102 = vld [vmem:[%s8091 + $0x28] sm:$0xf]
  %v8103 = vld [vmem:[%s8091 + $0x2c] sm:$0xf]
  %v8104 = vld [vmem:[%s8091 + $0x30] sm:$0xf]
  %v8105 = vld [vmem:[%s8091 + $0x34] sm:$0xf]
  %v8106 = vld [vmem:[%s8091 + $0x38] sm:$0xf]
  %v8107 = vld [vmem:[%s8091 + $0x3c] sm:$0xf]
  %v8124 = vunpack.c.l.b16 %v8092
  %v8125 = vunpack.c.l.b16 %v8093
  %v8126 = vunpack.c.l.b16 %v8094
  %v8127 = vunpack.c.l.b16 %v8095
  %v8128 = vunpack.c.l.b16 %v8096
  %v8129 = vunpack.c.l.b16 %v8097
  %v8130 = vunpack.c.l.b16 %v8098
  %v8131 = vunpack.c.l.b16 %v8099
  %v8132 = vunpack.c.l.b16 %v8100
  %v8133 = vunpack.c.l.b16 %v8101
  %v8134 = vunpack.c.l.b16 %v8102
  %v8135 = vunpack.c.l.b16 %v8103
  %v8136 = vunpack.c.l.b16 %v8104
  %v8137 = vunpack.c.l.b16 %v8105
  %v8138 = vunpack.c.l.b16 %v8106
  %v8139 = vunpack.c.l.b16 %v8107
  %v8140 = vpack.c.b16 %v8125, %v8124
  %v8141 = vpack.c.b16 %v8127, %v8126
  %v8142 = vpack.c.b16 %v8129, %v8128
  %v8143 = vpack.c.b16 %v8131, %v8130
  %v8144 = vpack.c.b16 %v8133, %v8132
  %v8145 = vpack.c.b16 %v8135, %v8134
  %v8146 = vpack.c.b16 %v8137, %v8136
  %v8147 = vpack.c.b16 %v8139, %v8138
  %8156 = vmatprep.subr.bf16.mxu0 0
  %8157 = vmatpush1.bf16.msra.mxu0 %v8140
  %8158 = vmatprep.subr.bf16.mxu0 0
  %8159 = vmatpush1.bf16.msra.mxu0 %v8141
  %8160 = vmatprep.subr.bf16.mxu0 0
  %8161 = vmatpush1.bf16.msra.mxu0 %v8142
  %8162 = vmatprep.subr.bf16.mxu0 0
  %8163 = vmatpush1.bf16.msra.mxu0 %v8143
  %8164 = vmatprep.subr.bf16.mxu0 0
  %8165 = vmatpush1.bf16.msra.mxu0 %v8144
  %8166 = vmatprep.subr.bf16.mxu0 0
  %8167 = vmatpush1.bf16.msra.mxu0 %v8145
  %8168 = vmatprep.subr.bf16.mxu0 0
  %8169 = vmatpush1.bf16.msra.mxu0 %v8146
  %8170 = vmatprep.subr.bf16.mxu0 0
  %8171 = vmatpush1.bf16.msra.mxu0 %v8147
  %8172 = vmatprep.subr.bf16.mxu0 0
  %8173 = vmatpush1.bf16.msra.mxu0 0
  %8174 = vmatprep.subr.bf16.mxu0 0
  %8175 = vmatpush1.bf16.msra.mxu0 0
  %8176 = vmatprep.subr.bf16.mxu0 0
  %8177 = vmatpush1.bf16.msra.mxu0 0
  %8178 = vmatprep.subr.bf16.mxu0 0
  %8179 = vmatpush1.bf16.msra.mxu0 0
  %8180 = vmatprep.subr.bf16.mxu0 0
  %8181 = vmatpush1.bf16.msra.mxu0 0
  %8182 = vmatprep.subr.bf16.mxu0 0
  %8183 = vmatpush1.bf16.msra.mxu0 0
  %8184 = vmatprep.subr.bf16.mxu0 0
  %8185 = vmatpush1.bf16.msra.mxu0 0
  %8186 = vmatprep.subr.bf16.mxu0 0
  %8187 = vmatpush1.bf16.msra.mxu0 0
  %8188 = vmatprep.mubr.bf16.mxu0 0
  %8189 = vmatmul.mubr.bf16.gmra.mrb[0].mxu0 %v8075
  %v8190 = vpop.f32.mrb[0].mxu0
  %v8191 = vadd.f32 0.0, %v8190
  %v8192 = vpop.f32.mrb[0].mxu0
  %v8193 = vpop.f32.mrb[0].mxu0
  %v8194 = vadd.f32 0.0, %v8193
  %v8195 = vpop.f32.mrb[0].mxu0
  %8196 = vmatprep.mubr.bf16.mxu0 0
  %8197 = vmatmul.mubr.bf16.gmra.mrb[0].mxu0 %v8076
  %v8198 = vpop.f32.mrb[0].mxu0
  %v8199 = vadd.f32 0.0, %v8198
  %v8200 = vpop.f32.mrb[0].mxu0
  %v8201 = vpop.f32.mrb[0].mxu0
  %v8202 = vadd.f32 0.0, %v8201
  %v8203 = vpop.f32.mrb[0].mxu0
  %8204 = vmatprep.mubr.bf16.mxu0 0
  %8205 = vmatmul.mubr.bf16.gmra.mrb[0].mxu0 %v8077
  %v8206 = vpop.f32.mrb[0].mxu0
  %v8207 = vadd.f32 0.0, %v8206
  %v8208 = vpop.f32.mrb[0].mxu0
  %v8209 = vpop.f32.mrb[0].mxu0
  %v8210 = vadd.f32 0.0, %v8209
  %v8211 = vpop.f32.mrb[0].mxu0
  %8212 = vmatprep.mubr.bf16.mxu0 0
  %8213 = vmatmul.mubr.bf16.gmra.mrb[0].mxu0 %v8078
  %v8214 = vpop.f32.mrb[0].mxu0
  %v8215 = vadd.f32 0.0, %v8214
  %v8216 = vpop.f32.mrb[0].mxu0
  %v8217 = vpop.f32.mrb[0].mxu0
  %v8218 = vadd.f32 0.0, %v8217
  %v8219 = vpop.f32.mrb[0].mxu0
  %8220 = vmatprep.mubr.bf16.mxu0 0
  %8221 = vmatmul.mubr.bf16.gmra.mrb[0].mxu0 %v8079
  %v8222 = vpop.f32.mrb[0].mxu0
  %v8223 = vadd.f32 0.0, %v8222
  %v8224 = vpop.f32.mrb[0].mxu0
  %v8225 = vpop.f32.mrb[0].mxu0
  %v8226 = vadd.f32 0.0, %v8225
  %v8227 = vpop.f32.mrb[0].mxu0
  %8228 = vmatprep.mubr.bf16.mxu0 0
  %8229 = vmatmul.mubr.bf16.gmra.mrb[0].mxu0 %v8080
  %v8230 = vpop.f32.mrb[0].mxu0
  %v8231 = vadd.f32 0.0, %v8230
  %v8232 = vpop.f32.mrb[0].mxu0
  %v8233 = vpop.f32.mrb[0].mxu0
  %v8234 = vadd.f32 0.0, %v8233
  %v8235 = vpop.f32.mrb[0].mxu0
  %8236 = vmatprep.mubr.bf16.mxu0 0
  %8237 = vmatmul.mubr.bf16.gmra.mrb[0].mxu0 %v8081
  %v8238 = vpop.f32.mrb[0].mxu0
  %v8239 = vadd.f32 0.0, %v8238
  %v8240 = vpop.f32.mrb[0].mxu0
  %v8241 = vpop.f32.mrb[0].mxu0
  %v8242 = vadd.f32 0.0, %v8241
  %v8243 = vpop.f32.mrb[0].mxu0
  %8244 = vmatprep.mubr.bf16.mxu0 0
  %8245 = vmatmul.mubr.bf16.gmra.mrb[0].mxu0 %v8082
  %v8246 = vpop.f32.mrb[0].mxu0
  %v8247 = vadd.f32 0.0, %v8246
  %v8248 = vpop.f32.mrb[0].mxu0
  %v8249 = vpop.f32.mrb[0].mxu0
  %v8250 = vadd.f32 0.0, %v8249
  %v8251 = vpop.f32.mrb[0].mxu0
  %8252 = vmatprep.mubr.bf16.mxu0 0
  %8253 = vmatmul.mubr.bf16.gmra.mrb[0].mxu0 %v8083
  %v8254 = vpop.f32.mrb[0].mxu0
  %v8255 = vadd.f32 0.0, %v8254
  %v8256 = vpop.f32.mrb[0].mxu0
  %v8257 = vpop.f32.mrb[0].mxu0
  %v8258 = vadd.f32 0.0, %v8257
  %v8259 = vpop.f32.mrb[0].mxu0
  %8260 = vmatprep.mubr.bf16.mxu0 0
  %8261 = vmatmul.mubr.bf16.gmra.mrb[0].mxu0 %v8084
  %v8262 = vpop.f32.mrb[0].mxu0
  %v8263 = vadd.f32 0.0, %v8262
  %v8264 = vpop.f32.mrb[0].mxu0
  %v8265 = vpop.f32.mrb[0].mxu0
  %v8266 = vadd.f32 0.0, %v8265
  %v8267 = vpop.f32.mrb[0].mxu0
  %8268 = vmatprep.mubr.bf16.mxu0 0
  %8269 = vmatmul.mubr.bf16.gmra.mrb[0].mxu0 %v8085
  %v8270 = vpop.f32.mrb[0].mxu0
  %v8271 = vadd.f32 0.0, %v8270
  %v8272 = vpop.f32.mrb[0].mxu0
  %v8273 = vpop.f32.mrb[0].mxu0
  %v8274 = vadd.f32 0.0, %v8273
  %v8275 = vpop.f32.mrb[0].mxu0
  %8276 = vmatprep.mubr.bf16.mxu0 0
  %8277 = vmatmul.mubr.bf16.gmra.mrb[0].mxu0 %v8086
  %v8278 = vpop.f32.mrb[0].mxu0
  %v8279 = vadd.f32 0.0, %v8278
  %v8280 = vpop.f32.mrb[0].mxu0
  %v8281 = vpop.f32.mrb[0].mxu0
  %v8282 = vadd.f32 0.0, %v8281
  %v8283 = vpop.f32.mrb[0].mxu0
  %8284 = vmatprep.mubr.bf16.mxu0 0
  %8285 = vmatmul.mubr.bf16.gmra.mrb[0].mxu0 %v8087
  %v8286 = vpop.f32.mrb[0].mxu0
  %v8287 = vadd.f32 0.0, %v8286
  %v8288 = vpop.f32.mrb[0].mxu0
  %v8289 = vpop.f32.mrb[0].mxu0
  %v8290 = vadd.f32 0.0, %v8289
  %v8291 = vpop.f32.mrb[0].mxu0
  %8292 = vmatprep.mubr.bf16.mxu0 0
  %8293 = vmatmul.mubr.bf16.gmra.mrb[0].mxu0 %v8088
  %v8294 = vpop.f32.mrb[0].mxu0
  %v8295 = vadd.f32 0.0, %v8294
  %v8296 = vpop.f32.mrb[0].mxu0
  %v8297 = vpop.f32.mrb[0].mxu0
  %v8298 = vadd.f32 0.0, %v8297
  %v8299 = vpop.f32.mrb[0].mxu0
  %8300 = vmatprep.mubr.bf16.mxu0 0
  %8301 = vmatmul.mubr.bf16.gmra.mrb[0].mxu0 %v8089
  %v8302 = vpop.f32.mrb[0].mxu0
  %v8303 = vadd.f32 0.0, %v8302
  %v8304 = vpop.f32.mrb[0].mxu0
  %v8305 = vpop.f32.mrb[0].mxu0
  %v8306 = vadd.f32 0.0, %v8305
  %v8307 = vpop.f32.mrb[0].mxu0
  %8308 = vmatprep.mubr.bf16.mxu0 0
  %8309 = vmatmul.mubr.bf16.gmra.mrb[0].mxu0 %v8090
  %v8310 = vpop.f32.mrb[0].mxu0
  %v8311 = vadd.f32 0.0, %v8310
  %v8312 = vpop.f32.mrb[0].mxu0
  %v8313 = vpop.f32.mrb[0].mxu0
  %v8314 = vadd.f32 0.0, %v8313
  %v8315 = vpop.f32.mrb[0].mxu0
  %8316 = vdwg.mxu0
  %v8317 = vadd.f32 %v8011, %v8191
  %v8318 = vadd.f32 %v8012, %v8194
  %v8319 = vadd.f32 %v8013, %v8199
  %v8320 = vadd.f32 %v8014, %v8202
  %v8321 = vadd.f32 %v8015, %v8207
  %v8322 = vadd.f32 %v8016, %v8210
  %v8323 = vadd.f32 %v8017, %v8215
  %v8324 = vadd.f32 %v8018, %v8218
  %v8325 = vadd.f32 %v8019, %v8223
  %v8326 = vadd.f32 %v8020, %v8226
  %v8327 = vadd.f32 %v8021, %v8231
  %v8328 = vadd.f32 %v8022, %v8234
  %v8329 = vadd.f32 %v8023, %v8239
  %v8330 = vadd.f32 %v8024, %v8242
  %v8331 = vadd.f32 %v8025, %v8247
  %v8332 = vadd.f32 %v8026, %v8250
  %v8333 = vadd.f32 %v8027, %v8255
  %v8334 = vadd.f32 %v8028, %v8258
  %v8335 = vadd.f32 %v8029, %v8263
  %v8336 = vadd.f32 %v8030, %v8266
  %v8337 = vadd.f32 %v8031, %v8271
  %v8338 = vadd.f32 %v8032, %v8274
  %v8339 = vadd.f32 %v8033, %v8279
  %v8340 = vadd.f32 %v8034, %v8282
  %v8341 = vadd.f32 %v8035, %v8287
  %v8342 = vadd.f32 %v8036, %v8290
  %v8343 = vadd.f32 %v8037, %v8295
  %v8344 = vadd.f32 %v8038, %v8298
  %v8345 = vadd.f32 %v8039, %v8303
  %v8346 = vadd.f32 %v8040, %v8306
  %v8347 = vadd.f32 %v8041, %v8311
  %v8348 = vadd.f32 %v8042, %v8314
  %v8349 = vld [vmem:[%s4148 + $0x1] sm:$0xff]
  %v8350 = vld [vmem:[%s4148 + $0x11] sm:$0xff]
  %v8351 = vld [vmem:[%s4148 + $0x21] sm:$0xff]
  %v8352 = vld [vmem:[%s4148 + $0x31] sm:$0xff]
  %v8353 = vld [vmem:[%s4148 + $0x41] sm:$0xff]
  %v8354 = vld [vmem:[%s4148 + $0x51] sm:$0xff]
  %v8355 = vld [vmem:[%s4148 + $0x61] sm:$0xff]
  %v8356 = vld [vmem:[%s4148 + $0x71] sm:$0xff]
  %v8357 = vld [vmem:[%s4148 + $0x81] sm:$0xff]
  %v8358 = vld [vmem:[%s4148 + $0x91] sm:$0xff]
  %v8359 = vld [vmem:[%s4148 + $0xa1] sm:$0xff]
  %v8360 = vld [vmem:[%s4148 + $0xb1] sm:$0xff]
  %v8361 = vld [vmem:[%s4148 + $0xc1] sm:$0xff]
  %v8362 = vld [vmem:[%s4148 + $0xd1] sm:$0xff]
  %v8363 = vld [vmem:[%s4148 + $0xe1] sm:$0xff]
  %v8364 = vld [vmem:[%s4148 + $0xf1] sm:$0xff]
  %v8365 = vld [vmem:[%s4148 + $0x121] sm:$0xff]
  %v8366 = vld [vmem:[%s4148 + $0x131] sm:$0xff]
  %v8367 = vld [vmem:[%s4148 + $0x141] sm:$0xff]
  %v8368 = vld [vmem:[%s4148 + $0x151] sm:$0xff]
  %v8369 = vld [vmem:[%s4148 + $0x161] sm:$0xff]
  %v8370 = vld [vmem:[%s4148 + $0x171] sm:$0xff]
  %v8371 = vld [vmem:[%s4148 + $0x181] sm:$0xff]
  %v8372 = vld [vmem:[%s4148 + $0x191] sm:$0xff]
  %v8373 = vld [vmem:[%s4148 + $0x1a1] sm:$0xff]
  %v8374 = vld [vmem:[%s4148 + $0x1b1] sm:$0xff]
  %v8375 = vld [vmem:[%s4148 + $0x1c1] sm:$0xff]
  %v8376 = vld [vmem:[%s4148 + $0x1d1] sm:$0xff]
  %v8377 = vld [vmem:[%s4148 + $0x1e1] sm:$0xff]
  %v8378 = vld [vmem:[%s4148 + $0x1f1] sm:$0xff]
  %v8379 = vld [vmem:[%s4148 + $0x201] sm:$0xff]
  %v8380 = vld [vmem:[%s4148 + $0x211] sm:$0xff]
  %v8381 = vpack.c.bf16 %v8350, %v8349
  %v8382 = vpack.c.bf16 %v8352, %v8351
  %v8383 = vpack.c.bf16 %v8354, %v8353
  %v8384 = vpack.c.bf16 %v8356, %v8355
  %v8385 = vpack.c.bf16 %v8358, %v8357
  %v8386 = vpack.c.bf16 %v8360, %v8359
  %v8387 = vpack.c.bf16 %v8362, %v8361
  %v8388 = vpack.c.bf16 %v8364, %v8363
  %v8389 = vpack.c.bf16 %v8366, %v8365
  %v8390 = vpack.c.bf16 %v8368, %v8367
  %v8391 = vpack.c.bf16 %v8370, %v8369
  %v8392 = vpack.c.bf16 %v8372, %v8371
  %v8393 = vpack.c.bf16 %v8374, %v8373
  %v8394 = vpack.c.bf16 %v8376, %v8375
  %v8395 = vpack.c.bf16 %v8378, %v8377
  %v8396 = vpack.c.bf16 %v8380, %v8379
  %s8397 = scalar_lea.vmem %s11, 256
  %v8398 = vld [vmem:[%s8397] sm:$0xf]
  %v8399 = vld [vmem:[%s8397 + $0x4] sm:$0xf]
  %v8400 = vld [vmem:[%s8397 + $0x8] sm:$0xf]
  %v8401 = vld [vmem:[%s8397 + $0xc] sm:$0xf]
  %v8402 = vld [vmem:[%s8397 + $0x10] sm:$0xf]
  %v8403 = vld [vmem:[%s8397 + $0x14] sm:$0xf]
  %v8404 = vld [vmem:[%s8397 + $0x18] sm:$0xf]
  %v8405 = vld [vmem:[%s8397 + $0x1c] sm:$0xf]
  %v8406 = vld [vmem:[%s8397 + $0x20] sm:$0xf]
  %v8407 = vld [vmem:[%s8397 + $0x24] sm:$0xf]
  %v8408 = vld [vmem:[%s8397 + $0x28] sm:$0xf]
  %v8409 = vld [vmem:[%s8397 + $0x2c] sm:$0xf]
  %v8410 = vld [vmem:[%s8397 + $0x30] sm:$0xf]
  %v8411 = vld [vmem:[%s8397 + $0x34] sm:$0xf]
  %v8412 = vld [vmem:[%s8397 + $0x38] sm:$0xf]
  %v8413 = vld [vmem:[%s8397 + $0x3c] sm:$0xf]
  %v8430 = vunpack.c.l.b16 %v8398
  %v8431 = vunpack.c.l.b16 %v8399
  %v8432 = vunpack.c.l.b16 %v8400
  %v8433 = vunpack.c.l.b16 %v8401
  %v8434 = vunpack.c.l.b16 %v8402
  %v8435 = vunpack.c.l.b16 %v8403
  %v8436 = vunpack.c.l.b16 %v8404
  %v8437 = vunpack.c.l.b16 %v8405
  %v8438 = vunpack.c.l.b16 %v8406
  %v8439 = vunpack.c.l.b16 %v8407
  %v8440 = vunpack.c.l.b16 %v8408
  %v8441 = vunpack.c.l.b16 %v8409
  %v8442 = vunpack.c.l.b16 %v8410
  %v8443 = vunpack.c.l.b16 %v8411
  %v8444 = vunpack.c.l.b16 %v8412
  %v8445 = vunpack.c.l.b16 %v8413
  %v8446 = vpack.c.b16 %v8431, %v8430
  %v8447 = vpack.c.b16 %v8433, %v8432
  %v8448 = vpack.c.b16 %v8435, %v8434
  %v8449 = vpack.c.b16 %v8437, %v8436
  %v8450 = vpack.c.b16 %v8439, %v8438
  %v8451 = vpack.c.b16 %v8441, %v8440
  %v8452 = vpack.c.b16 %v8443, %v8442
  %v8453 = vpack.c.b16 %v8445, %v8444
  %8462 = vmatprep.subr.bf16.mxu0 0
  %8463 = vmatpush1.bf16.msra.mxu0 %v8446
  %8464 = vmatprep.subr.bf16.mxu0 0
  %8465 = vmatpush1.bf16.msra.mxu0 %v8447
  %8466 = vmatprep.subr.bf16.mxu0 0
  %8467 = vmatpush1.bf16.msra.mxu0 %v8448
  %8468 = vmatprep.subr.bf16.mxu0 0
  %8469 = vmatpush1.bf16.msra.mxu0 %v8449
  %8470 = vmatprep.subr.bf16.mxu0 0
  %8471 = vmatpush1.bf16.msra.mxu0 %v8450
  %8472 = vmatprep.subr.bf16.mxu0 0
  %8473 = vmatpush1.bf16.msra.mxu0 %v8451
  %8474 = vmatprep.subr.bf16.mxu0 0
  %8475 = vmatpush1.bf16.msra.mxu0 %v8452
  %8476 = vmatprep.subr.bf16.mxu0 0
  %8477 = vmatpush1.bf16.msra.mxu0 %v8453
  %8478 = vmatprep.subr.bf16.mxu0 0
  %8479 = vmatpush1.bf16.msra.mxu0 0
  %8480 = vmatprep.subr.bf16.mxu0 0
  %8481 = vmatpush1.bf16.msra.mxu0 0
  %8482 = vmatprep.subr.bf16.mxu0 0
  %8483 = vmatpush1.bf16.msra.mxu0 0
  %8484 = vmatprep.subr.bf16.mxu0 0
  %8485 = vmatpush1.bf16.msra.mxu0 0
  %8486 = vmatprep.subr.bf16.mxu0 0
  %8487 = vmatpush1.bf16.msra.mxu0 0
  %8488 = vmatprep.subr.bf16.mxu0 0
  %8489 = vmatpush1.bf16.msra.mxu0 0
  %8490 = vmatprep.subr.bf16.mxu0 0
  %8491 = vmatpush1.bf16.msra.mxu0 0
  %8492 = vmatprep.subr.bf16.mxu0 0
  %8493 = vmatpush1.bf16.msra.mxu0 0
  %8494 = vmatprep.mubr.bf16.mxu0 0
  %8495 = vmatmul.mubr.bf16.gmra.mrb[0].mxu0 %v8381
  %v8496 = vpop.f32.mrb[0].mxu0
  %v8497 = vadd.f32 0.0, %v8496
  %v8498 = vpop.f32.mrb[0].mxu0
  %v8499 = vpop.f32.mrb[0].mxu0
  %v8500 = vadd.f32 0.0, %v8499
  %v8501 = vpop.f32.mrb[0].mxu0
  %8502 = vmatprep.mubr.bf16.mxu0 0
  %8503 = vmatmul.mubr.bf16.gmra.mrb[0].mxu0 %v8382
  %v8504 = vpop.f32.mrb[0].mxu0
  %v8505 = vadd.f32 0.0, %v8504
  %v8506 = vpop.f32.mrb[0].mxu0
  %v8507 = vpop.f32.mrb[0].mxu0
  %v8508 = vadd.f32 0.0, %v8507
  %v8509 = vpop.f32.mrb[0].mxu0
  %8510 = vmatprep.mubr.bf16.mxu0 0
  %8511 = vmatmul.mubr.bf16.gmra.mrb[0].mxu0 %v8383
  %v8512 = vpop.f32.mrb[0].mxu0
  %v8513 = vadd.f32 0.0, %v8512
  %v8514 = vpop.f32.mrb[0].mxu0
  %v8515 = vpop.f32.mrb[0].mxu0
  %v8516 = vadd.f32 0.0, %v8515
  %v8517 = vpop.f32.mrb[0].mxu0
  %8518 = vmatprep.mubr.bf16.mxu0 0
  %8519 = vmatmul.mubr.bf16.gmra.mrb[0].mxu0 %v8384
  %v8520 = vpop.f32.mrb[0].mxu0
  %v8521 = vadd.f32 0.0, %v8520
  %v8522 = vpop.f32.mrb[0].mxu0
  %v8523 = vpop.f32.mrb[0].mxu0
  %v8524 = vadd.f32 0.0, %v8523
  %v8525 = vpop.f32.mrb[0].mxu0
  %8526 = vmatprep.mubr.bf16.mxu0 0
  %8527 = vmatmul.mubr.bf16.gmra.mrb[0].mxu0 %v8385
  %v8528 = vpop.f32.mrb[0].mxu0
  %v8529 = vadd.f32 0.0, %v8528
  %v8530 = vpop.f32.mrb[0].mxu0
  %v8531 = vpop.f32.mrb[0].mxu0
  %v8532 = vadd.f32 0.0, %v8531
  %v8533 = vpop.f32.mrb[0].mxu0
  %8534 = vmatprep.mubr.bf16.mxu0 0
  %8535 = vmatmul.mubr.bf16.gmra.mrb[0].mxu0 %v8386
  %v8536 = vpop.f32.mrb[0].mxu0
  %v8537 = vadd.f32 0.0, %v8536
  %v8538 = vpop.f32.mrb[0].mxu0
  %v8539 = vpop.f32.mrb[0].mxu0
  %v8540 = vadd.f32 0.0, %v8539
  %v8541 = vpop.f32.mrb[0].mxu0
  %8542 = vmatprep.mubr.bf16.mxu0 0
  %8543 = vmatmul.mubr.bf16.gmra.mrb[0].mxu0 %v8387
  %v8544 = vpop.f32.mrb[0].mxu0
  %v8545 = vadd.f32 0.0, %v8544
  %v8546 = vpop.f32.mrb[0].mxu0
  %v8547 = vpop.f32.mrb[0].mxu0
  %v8548 = vadd.f32 0.0, %v8547
  %v8549 = vpop.f32.mrb[0].mxu0
  %8550 = vmatprep.mubr.bf16.mxu0 0
  %8551 = vmatmul.mubr.bf16.gmra.mrb[0].mxu0 %v8388
  %v8552 = vpop.f32.mrb[0].mxu0
  %v8553 = vadd.f32 0.0, %v8552
  %v8554 = vpop.f32.mrb[0].mxu0
  %v8555 = vpop.f32.mrb[0].mxu0
  %v8556 = vadd.f32 0.0, %v8555
  %v8557 = vpop.f32.mrb[0].mxu0
  %8558 = vmatprep.mubr.bf16.mxu0 0
  %8559 = vmatmul.mubr.bf16.gmra.mrb[0].mxu0 %v8389
  %v8560 = vpop.f32.mrb[0].mxu0
  %v8561 = vadd.f32 0.0, %v8560
  %v8562 = vpop.f32.mrb[0].mxu0
  %v8563 = vpop.f32.mrb[0].mxu0
  %v8564 = vadd.f32 0.0, %v8563
  %v8565 = vpop.f32.mrb[0].mxu0
  %8566 = vmatprep.mubr.bf16.mxu0 0
  %8567 = vmatmul.mubr.bf16.gmra.mrb[0].mxu0 %v8390
  %v8568 = vpop.f32.mrb[0].mxu0
  %v8569 = vadd.f32 0.0, %v8568
  %v8570 = vpop.f32.mrb[0].mxu0
  %v8571 = vpop.f32.mrb[0].mxu0
  %v8572 = vadd.f32 0.0, %v8571
  %v8573 = vpop.f32.mrb[0].mxu0
  %8574 = vmatprep.mubr.bf16.mxu0 0
  %8575 = vmatmul.mubr.bf16.gmra.mrb[0].mxu0 %v8391
  %v8576 = vpop.f32.mrb[0].mxu0
  %v8577 = vadd.f32 0.0, %v8576
  %v8578 = vpop.f32.mrb[0].mxu0
  %v8579 = vpop.f32.mrb[0].mxu0
  %v8580 = vadd.f32 0.0, %v8579
  %v8581 = vpop.f32.mrb[0].mxu0
  %8582 = vmatprep.mubr.bf16.mxu0 0
  %8583 = vmatmul.mubr.bf16.gmra.mrb[0].mxu0 %v8392
  %v8584 = vpop.f32.mrb[0].mxu0
  %v8585 = vadd.f32 0.0, %v8584
  %v8586 = vpop.f32.mrb[0].mxu0
  %v8587 = vpop.f32.mrb[0].mxu0
  %v8588 = vadd.f32 0.0, %v8587
  %v8589 = vpop.f32.mrb[0].mxu0
  %8590 = vmatprep.mubr.bf16.mxu0 0
  %8591 = vmatmul.mubr.bf16.gmra.mrb[0].mxu0 %v8393
  %v8592 = vpop.f32.mrb[0].mxu0
  %v8593 = vadd.f32 0.0, %v8592
  %v8594 = vpop.f32.mrb[0].mxu0
  %v8595 = vpop.f32.mrb[0].mxu0
  %v8596 = vadd.f32 0.0, %v8595
  %v8597 = vpop.f32.mrb[0].mxu0
  %8598 = vmatprep.mubr.bf16.mxu0 0
  %8599 = vmatmul.mubr.bf16.gmra.mrb[0].mxu0 %v8394
  %v8600 = vpop.f32.mrb[0].mxu0
  %v8601 = vadd.f32 0.0, %v8600
  %v8602 = vpop.f32.mrb[0].mxu0
  %v8603 = vpop.f32.mrb[0].mxu0
  %v8604 = vadd.f32 0.0, %v8603
  %v8605 = vpop.f32.mrb[0].mxu0
  %8606 = vmatprep.mubr.bf16.mxu0 0
  %8607 = vmatmul.mubr.bf16.gmra.mrb[0].mxu0 %v8395
  %v8608 = vpop.f32.mrb[0].mxu0
  %v8609 = vadd.f32 0.0, %v8608
  %v8610 = vpop.f32.mrb[0].mxu0
  %v8611 = vpop.f32.mrb[0].mxu0
  %v8612 = vadd.f32 0.0, %v8611
  %v8613 = vpop.f32.mrb[0].mxu0
  %8614 = vmatprep.mubr.bf16.mxu0 0
  %8615 = vmatmul.mubr.bf16.gmra.mrb[0].mxu0 %v8396
  %v8616 = vpop.f32.mrb[0].mxu0
  %v8617 = vadd.f32 0.0, %v8616
  %v8618 = vpop.f32.mrb[0].mxu0
  %v8619 = vpop.f32.mrb[0].mxu0
  %v8620 = vadd.f32 0.0, %v8619
  %v8621 = vpop.f32.mrb[0].mxu0
  %8622 = vdwg.mxu0
  %v8623 = vadd.f32 %v8317, %v8497
  %v8624 = vadd.f32 %v8318, %v8500
  %v8625 = vadd.f32 %v8319, %v8505
  %v8626 = vadd.f32 %v8320, %v8508
  %v8627 = vadd.f32 %v8321, %v8513
  %v8628 = vadd.f32 %v8322, %v8516
  %v8629 = vadd.f32 %v8323, %v8521
  %v8630 = vadd.f32 %v8324, %v8524
  %v8631 = vadd.f32 %v8325, %v8529
  %v8632 = vadd.f32 %v8326, %v8532
  %v8633 = vadd.f32 %v8327, %v8537
  %v8634 = vadd.f32 %v8328, %v8540
  %v8635 = vadd.f32 %v8329, %v8545
  %v8636 = vadd.f32 %v8330, %v8548
  %v8637 = vadd.f32 %v8331, %v8553
  %v8638 = vadd.f32 %v8332, %v8556
  %v8639 = vadd.f32 %v8333, %v8561
  %v8640 = vadd.f32 %v8334, %v8564
  %v8641 = vadd.f32 %v8335, %v8569
  %v8642 = vadd.f32 %v8336, %v8572
  %v8643 = vadd.f32 %v8337, %v8577
  %v8644 = vadd.f32 %v8338, %v8580
  %v8645 = vadd.f32 %v8339, %v8585
  %v8646 = vadd.f32 %v8340, %v8588
  %v8647 = vadd.f32 %v8341, %v8593
  %v8648 = vadd.f32 %v8342, %v8596
  %v8649 = vadd.f32 %v8343, %v8601
  %v8650 = vadd.f32 %v8344, %v8604
  %v8651 = vadd.f32 %v8345, %v8609
  %v8652 = vadd.f32 %v8346, %v8612
  %v8653 = vadd.f32 %v8347, %v8617
  %v8654 = vadd.f32 %v8348, %v8620
  %v8655 = vld [vmem:[%s4148 + $0x2] sm:$0xff]
  %v8656 = vld [vmem:[%s4148 + $0x12] sm:$0xff]
  %v8657 = vld [vmem:[%s4148 + $0x22] sm:$0xff]
  %v8658 = vld [vmem:[%s4148 + $0x32] sm:$0xff]
  %v8659 = vld [vmem:[%s4148 + $0x42] sm:$0xff]
  %v8660 = vld [vmem:[%s4148 + $0x52] sm:$0xff]
  %v8661 = vld [vmem:[%s4148 + $0x62] sm:$0xff]
  %v8662 = vld [vmem:[%s4148 + $0x72] sm:$0xff]
  %v8663 = vld [vmem:[%s4148 + $0x82] sm:$0xff]
  %v8664 = vld [vmem:[%s4148 + $0x92] sm:$0xff]
  %v8665 = vld [vmem:[%s4148 + $0xa2] sm:$0xff]
  %v8666 = vld [vmem:[%s4148 + $0xb2] sm:$0xff]
  %v8667 = vld [vmem:[%s4148 + $0xc2] sm:$0xff]
  %v8668 = vld [vmem:[%s4148 + $0xd2] sm:$0xff]
  %v8669 = vld [vmem:[%s4148 + $0xe2] sm:$0xff]
  %v8670 = vld [vmem:[%s4148 + $0xf2] sm:$0xff]
  %v8671 = vld [vmem:[%s4148 + $0x122] sm:$0xff]
  %v8672 = vld [vmem:[%s4148 + $0x132] sm:$0xff]
  %v8673 = vld [vmem:[%s4148 + $0x142] sm:$0xff]
  %v8674 = vld [vmem:[%s4148 + $0x152] sm:$0xff]
  %v8675 = vld [vmem:[%s4148 + $0x162] sm:$0xff]
  %v8676 = vld [vmem:[%s4148 + $0x172] sm:$0xff]
  %v8677 = vld [vmem:[%s4148 + $0x182] sm:$0xff]
  %v8678 = vld [vmem:[%s4148 + $0x192] sm:$0xff]
  %v8679 = vld [vmem:[%s4148 + $0x1a2] sm:$0xff]
  %v8680 = vld [vmem:[%s4148 + $0x1b2] sm:$0xff]
  %v8681 = vld [vmem:[%s4148 + $0x1c2] sm:$0xff]
  %v8682 = vld [vmem:[%s4148 + $0x1d2] sm:$0xff]
  %v8683 = vld [vmem:[%s4148 + $0x1e2] sm:$0xff]
  %v8684 = vld [vmem:[%s4148 + $0x1f2] sm:$0xff]
  %v8685 = vld [vmem:[%s4148 + $0x202] sm:$0xff]
  %v8686 = vld [vmem:[%s4148 + $0x212] sm:$0xff]
  %v8687 = vpack.c.bf16 %v8656, %v8655
  %v8688 = vpack.c.bf16 %v8658, %v8657
  %v8689 = vpack.c.bf16 %v8660, %v8659
  %v8690 = vpack.c.bf16 %v8662, %v8661
  %v8691 = vpack.c.bf16 %v8664, %v8663
  %v8692 = vpack.c.bf16 %v8666, %v8665
  %v8693 = vpack.c.bf16 %v8668, %v8667
  %v8694 = vpack.c.bf16 %v8670, %v8669
  %v8695 = vpack.c.bf16 %v8672, %v8671
  %v8696 = vpack.c.bf16 %v8674, %v8673
  %v8697 = vpack.c.bf16 %v8676, %v8675
  %v8698 = vpack.c.bf16 %v8678, %v8677
  %v8699 = vpack.c.bf16 %v8680, %v8679
  %v8700 = vpack.c.bf16 %v8682, %v8681
  %v8701 = vpack.c.bf16 %v8684, %v8683
  %v8702 = vpack.c.bf16 %v8686, %v8685
  %s8703 = scalar_lea.vmem %s11, 320
  %v8704 = vld [vmem:[%s8703] sm:$0xf]
  %v8705 = vld [vmem:[%s8703 + $0x4] sm:$0xf]
  %v8706 = vld [vmem:[%s8703 + $0x8] sm:$0xf]
  %v8707 = vld [vmem:[%s8703 + $0xc] sm:$0xf]
  %v8708 = vld [vmem:[%s8703 + $0x10] sm:$0xf]
  %v8709 = vld [vmem:[%s8703 + $0x14] sm:$0xf]
  %v8710 = vld [vmem:[%s8703 + $0x18] sm:$0xf]
  %v8711 = vld [vmem:[%s8703 + $0x1c] sm:$0xf]
  %v8712 = vld [vmem:[%s8703 + $0x20] sm:$0xf]
  %v8713 = vld [vmem:[%s8703 + $0x24] sm:$0xf]
  %v8714 = vld [vmem:[%s8703 + $0x28] sm:$0xf]
  %v8715 = vld [vmem:[%s8703 + $0x2c] sm:$0xf]
  %v8716 = vld [vmem:[%s8703 + $0x30] sm:$0xf]
  %v8717 = vld [vmem:[%s8703 + $0x34] sm:$0xf]
  %v8718 = vld [vmem:[%s8703 + $0x38] sm:$0xf]
  %v8719 = vld [vmem:[%s8703 + $0x3c] sm:$0xf]
  %v8736 = vunpack.c.l.b16 %v8704
  %v8737 = vunpack.c.l.b16 %v8705
  %v8738 = vunpack.c.l.b16 %v8706
  %v8739 = vunpack.c.l.b16 %v8707
  %v8740 = vunpack.c.l.b16 %v8708
  %v8741 = vunpack.c.l.b16 %v8709
  %v8742 = vunpack.c.l.b16 %v8710
  %v8743 = vunpack.c.l.b16 %v8711
  %v8744 = vunpack.c.l.b16 %v8712
  %v8745 = vunpack.c.l.b16 %v8713
  %v8746 = vunpack.c.l.b16 %v8714
  %v8747 = vunpack.c.l.b16 %v8715
  %v8748 = vunpack.c.l.b16 %v8716
  %v8749 = vunpack.c.l.b16 %v8717
  %v8750 = vunpack.c.l.b16 %v8718
  %v8751 = vunpack.c.l.b16 %v8719
  %v8752 = vpack.c.b16 %v8737, %v8736
  %v8753 = vpack.c.b16 %v8739, %v8738
  %v8754 = vpack.c.b16 %v8741, %v8740
  %v8755 = vpack.c.b16 %v8743, %v8742
  %v8756 = vpack.c.b16 %v8745, %v8744
  %v8757 = vpack.c.b16 %v8747, %v8746
  %v8758 = vpack.c.b16 %v8749, %v8748
  %v8759 = vpack.c.b16 %v8751, %v8750
  %8768 = vmatprep.subr.bf16.mxu0 0
  %8769 = vmatpush1.bf16.msra.mxu0 %v8752
  %8770 = vmatprep.subr.bf16.mxu0 0
  %8771 = vmatpush1.bf16.msra.mxu0 %v8753
  %8772 = vmatprep.subr.bf16.mxu0 0
  %8773 = vmatpush1.bf16.msra.mxu0 %v8754
  %8774 = vmatprep.subr.bf16.mxu0 0
  %8775 = vmatpush1.bf16.msra.mxu0 %v8755
  %8776 = vmatprep.subr.bf16.mxu0 0
  %8777 = vmatpush1.bf16.msra.mxu0 %v8756
  %8778 = vmatprep.subr.bf16.mxu0 0
  %8779 = vmatpush1.bf16.msra.mxu0 %v8757
  %8780 = vmatprep.subr.bf16.mxu0 0
  %8781 = vmatpush1.bf16.msra.mxu0 %v8758
  %8782 = vmatprep.subr.bf16.mxu0 0
  %8783 = vmatpush1.bf16.msra.mxu0 %v8759
  %8784 = vmatprep.subr.bf16.mxu0 0
  %8785 = vmatpush1.bf16.msra.mxu0 0
  %8786 = vmatprep.subr.bf16.mxu0 0
  %8787 = vmatpush1.bf16.msra.mxu0 0
  %8788 = vmatprep.subr.bf16.mxu0 0
  %8789 = vmatpush1.bf16.msra.mxu0 0
  %8790 = vmatprep.subr.bf16.mxu0 0
  %8791 = vmatpush1.bf16.msra.mxu0 0
  %8792 = vmatprep.subr.bf16.mxu0 0
  %8793 = vmatpush1.bf16.msra.mxu0 0
  %8794 = vmatprep.subr.bf16.mxu0 0
  %8795 = vmatpush1.bf16.msra.mxu0 0
  %8796 = vmatprep.subr.bf16.mxu0 0
  %8797 = vmatpush1.bf16.msra.mxu0 0
  %8798 = vmatprep.subr.bf16.mxu0 0
  %8799 = vmatpush1.bf16.msra.mxu0 0
  %8800 = vmatprep.mubr.bf16.mxu0 0
  %8801 = vmatmul.mubr.bf16.gmra.mrb[0].mxu0 %v8687
  %v8802 = vpop.f32.mrb[0].mxu0
  %v8803 = vadd.f32 0.0, %v8802
  %v8804 = vpop.f32.mrb[0].mxu0
  %v8805 = vpop.f32.mrb[0].mxu0
  %v8806 = vadd.f32 0.0, %v8805
  %v8807 = vpop.f32.mrb[0].mxu0
  %8808 = vmatprep.mubr.bf16.mxu0 0
  %8809 = vmatmul.mubr.bf16.gmra.mrb[0].mxu0 %v8688
  %v8810 = vpop.f32.mrb[0].mxu0
  %v8811 = vadd.f32 0.0, %v8810
  %v8812 = vpop.f32.mrb[0].mxu0
  %v8813 = vpop.f32.mrb[0].mxu0
  %v8814 = vadd.f32 0.0, %v8813
  %v8815 = vpop.f32.mrb[0].mxu0
  %8816 = vmatprep.mubr.bf16.mxu0 0
  %8817 = vmatmul.mubr.bf16.gmra.mrb[0].mxu0 %v8689
  %v8818 = vpop.f32.mrb[0].mxu0
  %v8819 = vadd.f32 0.0, %v8818
  %v8820 = vpop.f32.mrb[0].mxu0
  %v8821 = vpop.f32.mrb[0].mxu0
  %v8822 = vadd.f32 0.0, %v8821
  %v8823 = vpop.f32.mrb[0].mxu0
  %8824 = vmatprep.mubr.bf16.mxu0 0
  %8825 = vmatmul.mubr.bf16.gmra.mrb[0].mxu0 %v8690
  %v8826 = vpop.f32.mrb[0].mxu0
  %v8827 = vadd.f32 0.0, %v8826
  %v8828 = vpop.f32.mrb[0].mxu0
  %v8829 = vpop.f32.mrb[0].mxu0
  %v8830 = vadd.f32 0.0, %v8829
  %v8831 = vpop.f32.mrb[0].mxu0
  %8832 = vmatprep.mubr.bf16.mxu0 0
  %8833 = vmatmul.mubr.bf16.gmra.mrb[0].mxu0 %v8691
  %v8834 = vpop.f32.mrb[0].mxu0
  %v8835 = vadd.f32 0.0, %v8834
  %v8836 = vpop.f32.mrb[0].mxu0
  %v8837 = vpop.f32.mrb[0].mxu0
  %v8838 = vadd.f32 0.0, %v8837
  %v8839 = vpop.f32.mrb[0].mxu0
  %8840 = vmatprep.mubr.bf16.mxu0 0
  %8841 = vmatmul.mubr.bf16.gmra.mrb[0].mxu0 %v8692
  %v8842 = vpop.f32.mrb[0].mxu0
  %v8843 = vadd.f32 0.0, %v8842
  %v8844 = vpop.f32.mrb[0].mxu0
  %v8845 = vpop.f32.mrb[0].mxu0
  %v8846 = vadd.f32 0.0, %v8845
  %v8847 = vpop.f32.mrb[0].mxu0
  %8848 = vmatprep.mubr.bf16.mxu0 0
  %8849 = vmatmul.mubr.bf16.gmra.mrb[0].mxu0 %v8693
  %v8850 = vpop.f32.mrb[0].mxu0
  %v8851 = vadd.f32 0.0, %v8850
  %v8852 = vpop.f32.mrb[0].mxu0
  %v8853 = vpop.f32.mrb[0].mxu0
  %v8854 = vadd.f32 0.0, %v8853
  %v8855 = vpop.f32.mrb[0].mxu0
  %8856 = vmatprep.mubr.bf16.mxu0 0
  %8857 = vmatmul.mubr.bf16.gmra.mrb[0].mxu0 %v8694
  %v8858 = vpop.f32.mrb[0].mxu0
  %v8859 = vadd.f32 0.0, %v8858
  %v8860 = vpop.f32.mrb[0].mxu0
  %v8861 = vpop.f32.mrb[0].mxu0
  %v8862 = vadd.f32 0.0, %v8861
  %v8863 = vpop.f32.mrb[0].mxu0
  %8864 = vmatprep.mubr.bf16.mxu0 0
  %8865 = vmatmul.mubr.bf16.gmra.mrb[0].mxu0 %v8695
  %v8866 = vpop.f32.mrb[0].mxu0
  %v8867 = vadd.f32 0.0, %v8866
  %v8868 = vpop.f32.mrb[0].mxu0
  %v8869 = vpop.f32.mrb[0].mxu0
  %v8870 = vadd.f32 0.0, %v8869
  %v8871 = vpop.f32.mrb[0].mxu0
  %8872 = vmatprep.mubr.bf16.mxu0 0
  %8873 = vmatmul.mubr.bf16.gmra.mrb[0].mxu0 %v8696
  %v8874 = vpop.f32.mrb[0].mxu0
  %v8875 = vadd.f32 0.0, %v8874
  %v8876 = vpop.f32.mrb[0].mxu0
  %v8877 = vpop.f32.mrb[0].mxu0
  %v8878 = vadd.f32 0.0, %v8877
  %v8879 = vpop.f32.mrb[0].mxu0
  %8880 = vmatprep.mubr.bf16.mxu0 0
  %8881 = vmatmul.mubr.bf16.gmra.mrb[0].mxu0 %v8697
  %v8882 = vpop.f32.mrb[0].mxu0
  %v8883 = vadd.f32 0.0, %v8882
  %v8884 = vpop.f32.mrb[0].mxu0
  %v8885 = vpop.f32.mrb[0].mxu0
  %v8886 = vadd.f32 0.0, %v8885
  %v8887 = vpop.f32.mrb[0].mxu0
  %8888 = vmatprep.mubr.bf16.mxu0 0
  %8889 = vmatmul.mubr.bf16.gmra.mrb[0].mxu0 %v8698
  %v8890 = vpop.f32.mrb[0].mxu0
  %v8891 = vadd.f32 0.0, %v8890
  %v8892 = vpop.f32.mrb[0].mxu0
  %v8893 = vpop.f32.mrb[0].mxu0
  %v8894 = vadd.f32 0.0, %v8893
  %v8895 = vpop.f32.mrb[0].mxu0
  %8896 = vmatprep.mubr.bf16.mxu0 0
  %8897 = vmatmul.mubr.bf16.gmra.mrb[0].mxu0 %v8699
  %v8898 = vpop.f32.mrb[0].mxu0
  %v8899 = vadd.f32 0.0, %v8898
  %v8900 = vpop.f32.mrb[0].mxu0
  %v8901 = vpop.f32.mrb[0].mxu0
  %v8902 = vadd.f32 0.0, %v8901
  %v8903 = vpop.f32.mrb[0].mxu0
  %8904 = vmatprep.mubr.bf16.mxu0 0
  %8905 = vmatmul.mubr.bf16.gmra.mrb[0].mxu0 %v8700
  %v8906 = vpop.f32.mrb[0].mxu0
  %v8907 = vadd.f32 0.0, %v8906
  %v8908 = vpop.f32.mrb[0].mxu0
  %v8909 = vpop.f32.mrb[0].mxu0
  %v8910 = vadd.f32 0.0, %v8909
  %v8911 = vpop.f32.mrb[0].mxu0
  %8912 = vmatprep.mubr.bf16.mxu0 0
  %8913 = vmatmul.mubr.bf16.gmra.mrb[0].mxu0 %v8701
  %v8914 = vpop.f32.mrb[0].mxu0
  %v8915 = vadd.f32 0.0, %v8914
  %v8916 = vpop.f32.mrb[0].mxu0
  %v8917 = vpop.f32.mrb[0].mxu0
  %v8918 = vadd.f32 0.0, %v8917
  %v8919 = vpop.f32.mrb[0].mxu0
  %8920 = vmatprep.mubr.bf16.mxu0 0
  %8921 = vmatmul.mubr.bf16.gmra.mrb[0].mxu0 %v8702
  %v8922 = vpop.f32.mrb[0].mxu0
  %v8923 = vadd.f32 0.0, %v8922
  %v8924 = vpop.f32.mrb[0].mxu0
  %v8925 = vpop.f32.mrb[0].mxu0
  %v8926 = vadd.f32 0.0, %v8925
  %v8927 = vpop.f32.mrb[0].mxu0
  %8928 = vdwg.mxu0
  %v8929 = vadd.f32 %v8623, %v8803
  %v8930 = vadd.f32 %v8624, %v8806
  %v8931 = vadd.f32 %v8625, %v8811
  %v8932 = vadd.f32 %v8626, %v8814
  %v8933 = vadd.f32 %v8627, %v8819
  %v8934 = vadd.f32 %v8628, %v8822
  %v8935 = vadd.f32 %v8629, %v8827
  %v8936 = vadd.f32 %v8630, %v8830
  %v8937 = vadd.f32 %v8631, %v8835
  %v8938 = vadd.f32 %v8632, %v8838
  %v8939 = vadd.f32 %v8633, %v8843
  %v8940 = vadd.f32 %v8634, %v8846
  %v8941 = vadd.f32 %v8635, %v8851
  %v8942 = vadd.f32 %v8636, %v8854
  %v8943 = vadd.f32 %v8637, %v8859
  %v8944 = vadd.f32 %v8638, %v8862
  %v8945 = vadd.f32 %v8639, %v8867
  %v8946 = vadd.f32 %v8640, %v8870
  %v8947 = vadd.f32 %v8641, %v8875
  %v8948 = vadd.f32 %v8642, %v8878
  %v8949 = vadd.f32 %v8643, %v8883
  %v8950 = vadd.f32 %v8644, %v8886
  %v8951 = vadd.f32 %v8645, %v8891
  %v8952 = vadd.f32 %v8646, %v8894
  %v8953 = vadd.f32 %v8647, %v8899
  %v8954 = vadd.f32 %v8648, %v8902
  %v8955 = vadd.f32 %v8649, %v8907
  %v8956 = vadd.f32 %v8650, %v8910
  %v8957 = vadd.f32 %v8651, %v8915
  %v8958 = vadd.f32 %v8652, %v8918
  %v8959 = vadd.f32 %v8653, %v8923
  %v8960 = vadd.f32 %v8654, %v8926
  %v8961 = vld [vmem:[%s5952] sm:$0xff]
  %v8962 = vld [vmem:[%s5952 + $0x10] sm:$0xff]
  %v8963 = vld [vmem:[%s5952 + $0x20] sm:$0xff]
  %v8964 = vld [vmem:[%s5952 + $0x30] sm:$0xff]
  %v8965 = vld [vmem:[%s5952 + $0x40] sm:$0xff]
  %v8966 = vld [vmem:[%s5952 + $0x50] sm:$0xff]
  %v8967 = vld [vmem:[%s5952 + $0x60] sm:$0xff]
  %v8968 = vld [vmem:[%s5952 + $0x70] sm:$0xff]
  %v8969 = vld [vmem:[%s5952 + $0x80] sm:$0xff]
  %v8970 = vld [vmem:[%s5952 + $0x90] sm:$0xff]
  %v8971 = vld [vmem:[%s5952 + $0xa0] sm:$0xff]
  %v8972 = vld [vmem:[%s5952 + $0xb0] sm:$0xff]
  %v8973 = vld [vmem:[%s5952 + $0xc0] sm:$0xff]
  %v8974 = vld [vmem:[%s5952 + $0xd0] sm:$0xff]
  %v8975 = vld [vmem:[%s5952 + $0xe0] sm:$0xff]
  %v8976 = vld [vmem:[%s5952 + $0xf0] sm:$0xff]
  %v8977 = vld [vmem:[%s5952 + $0x120] sm:$0xff]
  %v8978 = vld [vmem:[%s5952 + $0x130] sm:$0xff]
  %v8979 = vld [vmem:[%s5952 + $0x140] sm:$0xff]
  %v8980 = vld [vmem:[%s5952 + $0x150] sm:$0xff]
  %v8981 = vld [vmem:[%s5952 + $0x160] sm:$0xff]
  %v8982 = vld [vmem:[%s5952 + $0x170] sm:$0xff]
  %v8983 = vld [vmem:[%s5952 + $0x180] sm:$0xff]
  %v8984 = vld [vmem:[%s5952 + $0x190] sm:$0xff]
  %v8985 = vld [vmem:[%s5952 + $0x1a0] sm:$0xff]
  %v8986 = vld [vmem:[%s5952 + $0x1b0] sm:$0xff]
  %v8987 = vld [vmem:[%s5952 + $0x1c0] sm:$0xff]
  %v8988 = vld [vmem:[%s5952 + $0x1d0] sm:$0xff]
  %v8989 = vld [vmem:[%s5952 + $0x1e0] sm:$0xff]
  %v8990 = vld [vmem:[%s5952 + $0x1f0] sm:$0xff]
  %v8991 = vld [vmem:[%s5952 + $0x200] sm:$0xff]
  %v8992 = vld [vmem:[%s5952 + $0x210] sm:$0xff]
  %v8993 = vpack.c.bf16 %v8962, %v8961
  %v8994 = vpack.c.bf16 %v8964, %v8963
  %v8995 = vpack.c.bf16 %v8966, %v8965
  %v8996 = vpack.c.bf16 %v8968, %v8967
  %v8997 = vpack.c.bf16 %v8970, %v8969
  %v8998 = vpack.c.bf16 %v8972, %v8971
  %v8999 = vpack.c.bf16 %v8974, %v8973
  %v9000 = vpack.c.bf16 %v8976, %v8975
  %v9001 = vpack.c.bf16 %v8978, %v8977
  %v9002 = vpack.c.bf16 %v8980, %v8979
  %v9003 = vpack.c.bf16 %v8982, %v8981
  %v9004 = vpack.c.bf16 %v8984, %v8983
  %v9005 = vpack.c.bf16 %v8986, %v8985
  %v9006 = vpack.c.bf16 %v8988, %v8987
  %v9007 = vpack.c.bf16 %v8990, %v8989
  %v9008 = vpack.c.bf16 %v8992, %v8991
  %s9009 = scalar_lea.vmem %s11, 384
  %v9010 = vld [vmem:[%s9009] sm:$0xf]
  %v9011 = vld [vmem:[%s9009 + $0x4] sm:$0xf]
  %v9012 = vld [vmem:[%s9009 + $0x8] sm:$0xf]
  %v9013 = vld [vmem:[%s9009 + $0xc] sm:$0xf]
  %v9014 = vld [vmem:[%s9009 + $0x10] sm:$0xf]
  %v9015 = vld [vmem:[%s9009 + $0x14] sm:$0xf]
  %v9016 = vld [vmem:[%s9009 + $0x18] sm:$0xf]
  %v9017 = vld [vmem:[%s9009 + $0x1c] sm:$0xf]
  %v9018 = vld [vmem:[%s9009 + $0x20] sm:$0xf]
  %v9019 = vld [vmem:[%s9009 + $0x24] sm:$0xf]
  %v9020 = vld [vmem:[%s9009 + $0x28] sm:$0xf]
  %v9021 = vld [vmem:[%s9009 + $0x2c] sm:$0xf]
  %v9022 = vld [vmem:[%s9009 + $0x30] sm:$0xf]
  %v9023 = vld [vmem:[%s9009 + $0x34] sm:$0xf]
  %v9024 = vld [vmem:[%s9009 + $0x38] sm:$0xf]
  %v9025 = vld [vmem:[%s9009 + $0x3c] sm:$0xf]
  %v9042 = vunpack.c.l.b16 %v9010
  %v9043 = vunpack.c.l.b16 %v9011
  %v9044 = vunpack.c.l.b16 %v9012
  %v9045 = vunpack.c.l.b16 %v9013
  %v9046 = vunpack.c.l.b16 %v9014
  %v9047 = vunpack.c.l.b16 %v9015
  %v9048 = vunpack.c.l.b16 %v9016
  %v9049 = vunpack.c.l.b16 %v9017
  %v9050 = vunpack.c.l.b16 %v9018
  %v9051 = vunpack.c.l.b16 %v9019
  %v9052 = vunpack.c.l.b16 %v9020
  %v9053 = vunpack.c.l.b16 %v9021
  %v9054 = vunpack.c.l.b16 %v9022
  %v9055 = vunpack.c.l.b16 %v9023
  %v9056 = vunpack.c.l.b16 %v9024
  %v9057 = vunpack.c.l.b16 %v9025
  %v9058 = vpack.c.b16 %v9043, %v9042
  %v9059 = vpack.c.b16 %v9045, %v9044
  %v9060 = vpack.c.b16 %v9047, %v9046
  %v9061 = vpack.c.b16 %v9049, %v9048
  %v9062 = vpack.c.b16 %v9051, %v9050
  %v9063 = vpack.c.b16 %v9053, %v9052
  %v9064 = vpack.c.b16 %v9055, %v9054
  %v9065 = vpack.c.b16 %v9057, %v9056
  %9074 = vmatprep.subr.bf16.mxu0 0
  %9075 = vmatpush1.bf16.msra.mxu0 %v9058
  %9076 = vmatprep.subr.bf16.mxu0 0
  %9077 = vmatpush1.bf16.msra.mxu0 %v9059
  %9078 = vmatprep.subr.bf16.mxu0 0
  %9079 = vmatpush1.bf16.msra.mxu0 %v9060
  %9080 = vmatprep.subr.bf16.mxu0 0
  %9081 = vmatpush1.bf16.msra.mxu0 %v9061
  %9082 = vmatprep.subr.bf16.mxu0 0
  %9083 = vmatpush1.bf16.msra.mxu0 %v9062
  %9084 = vmatprep.subr.bf16.mxu0 0
  %9085 = vmatpush1.bf16.msra.mxu0 %v9063
  %9086 = vmatprep.subr.bf16.mxu0 0
  %9087 = vmatpush1.bf16.msra.mxu0 %v9064
  %9088 = vmatprep.subr.bf16.mxu0 0
  %9089 = vmatpush1.bf16.msra.mxu0 %v9065
  %9090 = vmatprep.subr.bf16.mxu0 0
  %9091 = vmatpush1.bf16.msra.mxu0 0
  %9092 = vmatprep.subr.bf16.mxu0 0
  %9093 = vmatpush1.bf16.msra.mxu0 0
  %9094 = vmatprep.subr.bf16.mxu0 0
  %9095 = vmatpush1.bf16.msra.mxu0 0
  %9096 = vmatprep.subr.bf16.mxu0 0
  %9097 = vmatpush1.bf16.msra.mxu0 0
  %9098 = vmatprep.subr.bf16.mxu0 0
  %9099 = vmatpush1.bf16.msra.mxu0 0
  %9100 = vmatprep.subr.bf16.mxu0 0
  %9101 = vmatpush1.bf16.msra.mxu0 0
  %9102 = vmatprep.subr.bf16.mxu0 0
  %9103 = vmatpush1.bf16.msra.mxu0 0
  %9104 = vmatprep.subr.bf16.mxu0 0
  %9105 = vmatpush1.bf16.msra.mxu0 0
  %9106 = vmatprep.mubr.bf16.mxu0 0
  %9107 = vmatmul.mubr.bf16.gmra.mrb[0].mxu0 %v8993
  %v9108 = vpop.f32.mrb[0].mxu0
  %v9109 = vadd.f32 0.0, %v9108
  %v9110 = vpop.f32.mrb[0].mxu0
  %v9111 = vpop.f32.mrb[0].mxu0
  %v9112 = vadd.f32 0.0, %v9111
  %v9113 = vpop.f32.mrb[0].mxu0
  %9114 = vmatprep.mubr.bf16.mxu0 0
  %9115 = vmatmul.mubr.bf16.gmra.mrb[0].mxu0 %v8994
  %v9116 = vpop.f32.mrb[0].mxu0
  %v9117 = vadd.f32 0.0, %v9116
  %v9118 = vpop.f32.mrb[0].mxu0
  %v9119 = vpop.f32.mrb[0].mxu0
  %v9120 = vadd.f32 0.0, %v9119
  %v9121 = vpop.f32.mrb[0].mxu0
  %9122 = vmatprep.mubr.bf16.mxu0 0
  %9123 = vmatmul.mubr.bf16.gmra.mrb[0].mxu0 %v8995
  %v9124 = vpop.f32.mrb[0].mxu0
  %v9125 = vadd.f32 0.0, %v9124
  %v9126 = vpop.f32.mrb[0].mxu0
  %v9127 = vpop.f32.mrb[0].mxu0
  %v9128 = vadd.f32 0.0, %v9127
  %v9129 = vpop.f32.mrb[0].mxu0
  %9130 = vmatprep.mubr.bf16.mxu0 0
  %9131 = vmatmul.mubr.bf16.gmra.mrb[0].mxu0 %v8996
  %v9132 = vpop.f32.mrb[0].mxu0
  %v9133 = vadd.f32 0.0, %v9132
  %v9134 = vpop.f32.mrb[0].mxu0
  %v9135 = vpop.f32.mrb[0].mxu0
  %v9136 = vadd.f32 0.0, %v9135
  %v9137 = vpop.f32.mrb[0].mxu0
  %9138 = vmatprep.mubr.bf16.mxu0 0
  %9139 = vmatmul.mubr.bf16.gmra.mrb[0].mxu0 %v8997
  %v9140 = vpop.f32.mrb[0].mxu0
  %v9141 = vadd.f32 0.0, %v9140
  %v9142 = vpop.f32.mrb[0].mxu0
  %v9143 = vpop.f32.mrb[0].mxu0
  %v9144 = vadd.f32 0.0, %v9143
  %v9145 = vpop.f32.mrb[0].mxu0
  %9146 = vmatprep.mubr.bf16.mxu0 0
  %9147 = vmatmul.mubr.bf16.gmra.mrb[0].mxu0 %v8998
  %v9148 = vpop.f32.mrb[0].mxu0
  %v9149 = vadd.f32 0.0, %v9148
  %v9150 = vpop.f32.mrb[0].mxu0
  %v9151 = vpop.f32.mrb[0].mxu0
  %v9152 = vadd.f32 0.0, %v9151
  %v9153 = vpop.f32.mrb[0].mxu0
  %9154 = vmatprep.mubr.bf16.mxu0 0
  %9155 = vmatmul.mubr.bf16.gmra.mrb[0].mxu0 %v8999
  %v9156 = vpop.f32.mrb[0].mxu0
  %v9157 = vadd.f32 0.0, %v9156
  %v9158 = vpop.f32.mrb[0].mxu0
  %v9159 = vpop.f32.mrb[0].mxu0
  %v9160 = vadd.f32 0.0, %v9159
  %v9161 = vpop.f32.mrb[0].mxu0
  %9162 = vmatprep.mubr.bf16.mxu0 0
  %9163 = vmatmul.mubr.bf16.gmra.mrb[0].mxu0 %v9000
  %v9164 = vpop.f32.mrb[0].mxu0
  %v9165 = vadd.f32 0.0, %v9164
  %v9166 = vpop.f32.mrb[0].mxu0
  %v9167 = vpop.f32.mrb[0].mxu0
  %v9168 = vadd.f32 0.0, %v9167
  %v9169 = vpop.f32.mrb[0].mxu0
  %9170 = vmatprep.mubr.bf16.mxu0 0
  %9171 = vmatmul.mubr.bf16.gmra.mrb[0].mxu0 %v9001
  %v9172 = vpop.f32.mrb[0].mxu0
  %v9173 = vadd.f32 0.0, %v9172
  %v9174 = vpop.f32.mrb[0].mxu0
  %v9175 = vpop.f32.mrb[0].mxu0
  %v9176 = vadd.f32 0.0, %v9175
  %v9177 = vpop.f32.mrb[0].mxu0
  %9178 = vmatprep.mubr.bf16.mxu0 0
  %9179 = vmatmul.mubr.bf16.gmra.mrb[0].mxu0 %v9002
  %v9180 = vpop.f32.mrb[0].mxu0
  %v9181 = vadd.f32 0.0, %v9180
  %v9182 = vpop.f32.mrb[0].mxu0
  %v9183 = vpop.f32.mrb[0].mxu0
  %v9184 = vadd.f32 0.0, %v9183
  %v9185 = vpop.f32.mrb[0].mxu0
  %9186 = vmatprep.mubr.bf16.mxu0 0
  %9187 = vmatmul.mubr.bf16.gmra.mrb[0].mxu0 %v9003
  %v9188 = vpop.f32.mrb[0].mxu0
  %v9189 = vadd.f32 0.0, %v9188
  %v9190 = vpop.f32.mrb[0].mxu0
  %v9191 = vpop.f32.mrb[0].mxu0
  %v9192 = vadd.f32 0.0, %v9191
  %v9193 = vpop.f32.mrb[0].mxu0
  %9194 = vmatprep.mubr.bf16.mxu0 0
  %9195 = vmatmul.mubr.bf16.gmra.mrb[0].mxu0 %v9004
  %v9196 = vpop.f32.mrb[0].mxu0
  %v9197 = vadd.f32 0.0, %v9196
  %v9198 = vpop.f32.mrb[0].mxu0
  %v9199 = vpop.f32.mrb[0].mxu0
  %v9200 = vadd.f32 0.0, %v9199
  %v9201 = vpop.f32.mrb[0].mxu0
  %9202 = vmatprep.mubr.bf16.mxu0 0
  %9203 = vmatmul.mubr.bf16.gmra.mrb[0].mxu0 %v9005
  %v9204 = vpop.f32.mrb[0].mxu0
  %v9205 = vadd.f32 0.0, %v9204
  %v9206 = vpop.f32.mrb[0].mxu0
  %v9207 = vpop.f32.mrb[0].mxu0
  %v9208 = vadd.f32 0.0, %v9207
  %v9209 = vpop.f32.mrb[0].mxu0
  %9210 = vmatprep.mubr.bf16.mxu0 0
  %9211 = vmatmul.mubr.bf16.gmra.mrb[0].mxu0 %v9006
  %v9212 = vpop.f32.mrb[0].mxu0
  %v9213 = vadd.f32 0.0, %v9212
  %v9214 = vpop.f32.mrb[0].mxu0
  %v9215 = vpop.f32.mrb[0].mxu0
  %v9216 = vadd.f32 0.0, %v9215
  %v9217 = vpop.f32.mrb[0].mxu0
  %9218 = vmatprep.mubr.bf16.mxu0 0
  %9219 = vmatmul.mubr.bf16.gmra.mrb[0].mxu0 %v9007
  %v9220 = vpop.f32.mrb[0].mxu0
  %v9221 = vadd.f32 0.0, %v9220
  %v9222 = vpop.f32.mrb[0].mxu0
  %v9223 = vpop.f32.mrb[0].mxu0
  %v9224 = vadd.f32 0.0, %v9223
  %v9225 = vpop.f32.mrb[0].mxu0
  %9226 = vmatprep.mubr.bf16.mxu0 0
  %9227 = vmatmul.mubr.bf16.gmra.mrb[0].mxu0 %v9008
  %v9228 = vpop.f32.mrb[0].mxu0
  %v9229 = vadd.f32 0.0, %v9228
  %v9230 = vpop.f32.mrb[0].mxu0
  %v9231 = vpop.f32.mrb[0].mxu0
  %v9232 = vadd.f32 0.0, %v9231
  %v9233 = vpop.f32.mrb[0].mxu0
  %9234 = vdwg.mxu0
  %v9235 = vadd.f32 %v8929, %v9109
  %v9236 = vadd.f32 %v8930, %v9112
  %v9237 = vadd.f32 %v8931, %v9117
  %v9238 = vadd.f32 %v8932, %v9120
  %v9239 = vadd.f32 %v8933, %v9125
  %v9240 = vadd.f32 %v8934, %v9128
  %v9241 = vadd.f32 %v8935, %v9133
  %v9242 = vadd.f32 %v8936, %v9136
  %v9243 = vadd.f32 %v8937, %v9141
  %v9244 = vadd.f32 %v8938, %v9144
  %v9245 = vadd.f32 %v8939, %v9149
  %v9246 = vadd.f32 %v8940, %v9152
  %v9247 = vadd.f32 %v8941, %v9157
  %v9248 = vadd.f32 %v8942, %v9160
  %v9249 = vadd.f32 %v8943, %v9165
  %v9250 = vadd.f32 %v8944, %v9168
  %v9251 = vadd.f32 %v8945, %v9173
  %v9252 = vadd.f32 %v8946, %v9176
  %v9253 = vadd.f32 %v8947, %v9181
  %v9254 = vadd.f32 %v8948, %v9184
  %v9255 = vadd.f32 %v8949, %v9189
  %v9256 = vadd.f32 %v8950, %v9192
  %v9257 = vadd.f32 %v8951, %v9197
  %v9258 = vadd.f32 %v8952, %v9200
  %v9259 = vadd.f32 %v8953, %v9205
  %v9260 = vadd.f32 %v8954, %v9208
  %v9261 = vadd.f32 %v8955, %v9213
  %v9262 = vadd.f32 %v8956, %v9216
  %v9263 = vadd.f32 %v8957, %v9221
  %v9264 = vadd.f32 %v8958, %v9224
  %v9265 = vadd.f32 %v8959, %v9229
  %v9266 = vadd.f32 %v8960, %v9232
  %v9267 = vld [vmem:[%s5952 + $0x1] sm:$0xff]
  %v9268 = vld [vmem:[%s5952 + $0x11] sm:$0xff]
  %v9269 = vld [vmem:[%s5952 + $0x21] sm:$0xff]
  %v9270 = vld [vmem:[%s5952 + $0x31] sm:$0xff]
  %v9271 = vld [vmem:[%s5952 + $0x41] sm:$0xff]
  %v9272 = vld [vmem:[%s5952 + $0x51] sm:$0xff]
  %v9273 = vld [vmem:[%s5952 + $0x61] sm:$0xff]
  %v9274 = vld [vmem:[%s5952 + $0x71] sm:$0xff]
  %v9275 = vld [vmem:[%s5952 + $0x81] sm:$0xff]
  %v9276 = vld [vmem:[%s5952 + $0x91] sm:$0xff]
  %v9277 = vld [vmem:[%s5952 + $0xa1] sm:$0xff]
  %v9278 = vld [vmem:[%s5952 + $0xb1] sm:$0xff]
  %v9279 = vld [vmem:[%s5952 + $0xc1] sm:$0xff]
  %v9280 = vld [vmem:[%s5952 + $0xd1] sm:$0xff]
  %v9281 = vld [vmem:[%s5952 + $0xe1] sm:$0xff]
  %v9282 = vld [vmem:[%s5952 + $0xf1] sm:$0xff]
  %v9283 = vld [vmem:[%s5952 + $0x121] sm:$0xff]
  %v9284 = vld [vmem:[%s5952 + $0x131] sm:$0xff]
  %v9285 = vld [vmem:[%s5952 + $0x141] sm:$0xff]
  %v9286 = vld [vmem:[%s5952 + $0x151] sm:$0xff]
  %v9287 = vld [vmem:[%s5952 + $0x161] sm:$0xff]
  %v9288 = vld [vmem:[%s5952 + $0x171] sm:$0xff]
  %v9289 = vld [vmem:[%s5952 + $0x181] sm:$0xff]
  %v9290 = vld [vmem:[%s5952 + $0x191] sm:$0xff]
  %v9291 = vld [vmem:[%s5952 + $0x1a1] sm:$0xff]
  %v9292 = vld [vmem:[%s5952 + $0x1b1] sm:$0xff]
  %v9293 = vld [vmem:[%s5952 + $0x1c1] sm:$0xff]
  %v9294 = vld [vmem:[%s5952 + $0x1d1] sm:$0xff]
  %v9295 = vld [vmem:[%s5952 + $0x1e1] sm:$0xff]
  %v9296 = vld [vmem:[%s5952 + $0x1f1] sm:$0xff]
  %v9297 = vld [vmem:[%s5952 + $0x201] sm:$0xff]
  %v9298 = vld [vmem:[%s5952 + $0x211] sm:$0xff]
  %v9299 = vpack.c.bf16 %v9268, %v9267
  %v9300 = vpack.c.bf16 %v9270, %v9269
  %v9301 = vpack.c.bf16 %v9272, %v9271
  %v9302 = vpack.c.bf16 %v9274, %v9273
  %v9303 = vpack.c.bf16 %v9276, %v9275
  %v9304 = vpack.c.bf16 %v9278, %v9277
  %v9305 = vpack.c.bf16 %v9280, %v9279
  %v9306 = vpack.c.bf16 %v9282, %v9281
  %v9307 = vpack.c.bf16 %v9284, %v9283
  %v9308 = vpack.c.bf16 %v9286, %v9285
  %v9309 = vpack.c.bf16 %v9288, %v9287
  %v9310 = vpack.c.bf16 %v9290, %v9289
  %v9311 = vpack.c.bf16 %v9292, %v9291
  %v9312 = vpack.c.bf16 %v9294, %v9293
  %v9313 = vpack.c.bf16 %v9296, %v9295
  %v9314 = vpack.c.bf16 %v9298, %v9297
  %s9315 = scalar_lea.vmem %s11, 448
  %v9316 = vld [vmem:[%s9315] sm:$0xf]
  %v9317 = vld [vmem:[%s9315 + $0x4] sm:$0xf]
  %v9318 = vld [vmem:[%s9315 + $0x8] sm:$0xf]
  %v9319 = vld [vmem:[%s9315 + $0xc] sm:$0xf]
  %v9320 = vld [vmem:[%s9315 + $0x10] sm:$0xf]
  %v9321 = vld [vmem:[%s9315 + $0x14] sm:$0xf]
  %v9322 = vld [vmem:[%s9315 + $0x18] sm:$0xf]
  %v9323 = vld [vmem:[%s9315 + $0x1c] sm:$0xf]
  %v9324 = vld [vmem:[%s9315 + $0x20] sm:$0xf]
  %v9325 = vld [vmem:[%s9315 + $0x24] sm:$0xf]
  %v9326 = vld [vmem:[%s9315 + $0x28] sm:$0xf]
  %v9327 = vld [vmem:[%s9315 + $0x2c] sm:$0xf]
  %v9328 = vld [vmem:[%s9315 + $0x30] sm:$0xf]
  %v9329 = vld [vmem:[%s9315 + $0x34] sm:$0xf]
  %v9330 = vld [vmem:[%s9315 + $0x38] sm:$0xf]
  %v9331 = vld [vmem:[%s9315 + $0x3c] sm:$0xf]
  %v9348 = vunpack.c.l.b16 %v9316
  %v9349 = vunpack.c.l.b16 %v9317
  %v9350 = vunpack.c.l.b16 %v9318
  %v9351 = vunpack.c.l.b16 %v9319
  %v9352 = vunpack.c.l.b16 %v9320
  %v9353 = vunpack.c.l.b16 %v9321
  %v9354 = vunpack.c.l.b16 %v9322
  %v9355 = vunpack.c.l.b16 %v9323
  %v9356 = vunpack.c.l.b16 %v9324
  %v9357 = vunpack.c.l.b16 %v9325
  %v9358 = vunpack.c.l.b16 %v9326
  %v9359 = vunpack.c.l.b16 %v9327
  %v9360 = vunpack.c.l.b16 %v9328
  %v9361 = vunpack.c.l.b16 %v9329
  %v9362 = vunpack.c.l.b16 %v9330
  %v9363 = vunpack.c.l.b16 %v9331
  %v9364 = vpack.c.b16 %v9349, %v9348
  %v9365 = vpack.c.b16 %v9351, %v9350
  %v9366 = vpack.c.b16 %v9353, %v9352
  %v9367 = vpack.c.b16 %v9355, %v9354
  %v9368 = vpack.c.b16 %v9357, %v9356
  %v9369 = vpack.c.b16 %v9359, %v9358
  %v9370 = vpack.c.b16 %v9361, %v9360
  %v9371 = vpack.c.b16 %v9363, %v9362
  %9380 = vmatprep.subr.bf16.mxu0 0
  %9381 = vmatpush1.bf16.msra.mxu0 %v9364
  %9382 = vmatprep.subr.bf16.mxu0 0
  %9383 = vmatpush1.bf16.msra.mxu0 %v9365
  %9384 = vmatprep.subr.bf16.mxu0 0
  %9385 = vmatpush1.bf16.msra.mxu0 %v9366
  %9386 = vmatprep.subr.bf16.mxu0 0
  %9387 = vmatpush1.bf16.msra.mxu0 %v9367
  %9388 = vmatprep.subr.bf16.mxu0 0
  %9389 = vmatpush1.bf16.msra.mxu0 %v9368
  %9390 = vmatprep.subr.bf16.mxu0 0
  %9391 = vmatpush1.bf16.msra.mxu0 %v9369
  %9392 = vmatprep.subr.bf16.mxu0 0
  %9393 = vmatpush1.bf16.msra.mxu0 %v9370
  %9394 = vmatprep.subr.bf16.mxu0 0
  %9395 = vmatpush1.bf16.msra.mxu0 %v9371
  %9396 = vmatprep.subr.bf16.mxu0 0
  %9397 = vmatpush1.bf16.msra.mxu0 0
  %9398 = vmatprep.subr.bf16.mxu0 0
  %9399 = vmatpush1.bf16.msra.mxu0 0
  %9400 = vmatprep.subr.bf16.mxu0 0
  %9401 = vmatpush1.bf16.msra.mxu0 0
  %9402 = vmatprep.subr.bf16.mxu0 0
  %9403 = vmatpush1.bf16.msra.mxu0 0
  %9404 = vmatprep.subr.bf16.mxu0 0
  %9405 = vmatpush1.bf16.msra.mxu0 0
  %9406 = vmatprep.subr.bf16.mxu0 0
  %9407 = vmatpush1.bf16.msra.mxu0 0
  %9408 = vmatprep.subr.bf16.mxu0 0
  %9409 = vmatpush1.bf16.msra.mxu0 0
  %9410 = vmatprep.subr.bf16.mxu0 0
  %9411 = vmatpush1.bf16.msra.mxu0 0
  %9412 = vmatprep.mubr.bf16.mxu0 0
  %9413 = vmatmul.mubr.bf16.gmra.mrb[0].mxu0 %v9299
  %v9414 = vpop.f32.mrb[0].mxu0
  %v9415 = vadd.f32 0.0, %v9414
  %v9416 = vpop.f32.mrb[0].mxu0
  %v9417 = vpop.f32.mrb[0].mxu0
  %v9418 = vadd.f32 0.0, %v9417
  %v9419 = vpop.f32.mrb[0].mxu0
  %9420 = vmatprep.mubr.bf16.mxu0 0
  %9421 = vmatmul.mubr.bf16.gmra.mrb[0].mxu0 %v9300
  %v9422 = vpop.f32.mrb[0].mxu0
  %v9423 = vadd.f32 0.0, %v9422
  %v9424 = vpop.f32.mrb[0].mxu0
  %v9425 = vpop.f32.mrb[0].mxu0
  %v9426 = vadd.f32 0.0, %v9425
  %v9427 = vpop.f32.mrb[0].mxu0
  %9428 = vmatprep.mubr.bf16.mxu0 0
  %9429 = vmatmul.mubr.bf16.gmra.mrb[0].mxu0 %v9301
  %v9430 = vpop.f32.mrb[0].mxu0
  %v9431 = vadd.f32 0.0, %v9430
  %v9432 = vpop.f32.mrb[0].mxu0
  %v9433 = vpop.f32.mrb[0].mxu0
  %v9434 = vadd.f32 0.0, %v9433
  %v9435 = vpop.f32.mrb[0].mxu0
  %9436 = vmatprep.mubr.bf16.mxu0 0
  %9437 = vmatmul.mubr.bf16.gmra.mrb[0].mxu0 %v9302
  %v9438 = vpop.f32.mrb[0].mxu0
  %v9439 = vadd.f32 0.0, %v9438
  %v9440 = vpop.f32.mrb[0].mxu0
  %v9441 = vpop.f32.mrb[0].mxu0
  %v9442 = vadd.f32 0.0, %v9441
  %v9443 = vpop.f32.mrb[0].mxu0
  %9444 = vmatprep.mubr.bf16.mxu0 0
  %9445 = vmatmul.mubr.bf16.gmra.mrb[0].mxu0 %v9303
  %v9446 = vpop.f32.mrb[0].mxu0
  %v9447 = vadd.f32 0.0, %v9446
  %v9448 = vpop.f32.mrb[0].mxu0
  %v9449 = vpop.f32.mrb[0].mxu0
  %v9450 = vadd.f32 0.0, %v9449
  %v9451 = vpop.f32.mrb[0].mxu0
  %9452 = vmatprep.mubr.bf16.mxu0 0
  %9453 = vmatmul.mubr.bf16.gmra.mrb[0].mxu0 %v9304
  %v9454 = vpop.f32.mrb[0].mxu0
  %v9455 = vadd.f32 0.0, %v9454
  %v9456 = vpop.f32.mrb[0].mxu0
  %v9457 = vpop.f32.mrb[0].mxu0
  %v9458 = vadd.f32 0.0, %v9457
  %v9459 = vpop.f32.mrb[0].mxu0
  %9460 = vmatprep.mubr.bf16.mxu0 0
  %9461 = vmatmul.mubr.bf16.gmra.mrb[0].mxu0 %v9305
  %v9462 = vpop.f32.mrb[0].mxu0
  %v9463 = vadd.f32 0.0, %v9462
  %v9464 = vpop.f32.mrb[0].mxu0
  %v9465 = vpop.f32.mrb[0].mxu0
  %v9466 = vadd.f32 0.0, %v9465
  %v9467 = vpop.f32.mrb[0].mxu0
  %9468 = vmatprep.mubr.bf16.mxu0 0
  %9469 = vmatmul.mubr.bf16.gmra.mrb[0].mxu0 %v9306
  %v9470 = vpop.f32.mrb[0].mxu0
  %v9471 = vadd.f32 0.0, %v9470
  %v9472 = vpop.f32.mrb[0].mxu0
  %v9473 = vpop.f32.mrb[0].mxu0
  %v9474 = vadd.f32 0.0, %v9473
  %v9475 = vpop.f32.mrb[0].mxu0
  %9476 = vmatprep.mubr.bf16.mxu0 0
  %9477 = vmatmul.mubr.bf16.gmra.mrb[0].mxu0 %v9307
  %v9478 = vpop.f32.mrb[0].mxu0
  %v9479 = vadd.f32 0.0, %v9478
  %v9480 = vpop.f32.mrb[0].mxu0
  %v9481 = vpop.f32.mrb[0].mxu0
  %v9482 = vadd.f32 0.0, %v9481
  %v9483 = vpop.f32.mrb[0].mxu0
  %9484 = vmatprep.mubr.bf16.mxu0 0
  %9485 = vmatmul.mubr.bf16.gmra.mrb[0].mxu0 %v9308
  %v9486 = vpop.f32.mrb[0].mxu0
  %v9487 = vadd.f32 0.0, %v9486
  %v9488 = vpop.f32.mrb[0].mxu0
  %v9489 = vpop.f32.mrb[0].mxu0
  %v9490 = vadd.f32 0.0, %v9489
  %v9491 = vpop.f32.mrb[0].mxu0
  %9492 = vmatprep.mubr.bf16.mxu0 0
  %9493 = vmatmul.mubr.bf16.gmra.mrb[0].mxu0 %v9309
  %v9494 = vpop.f32.mrb[0].mxu0
  %v9495 = vadd.f32 0.0, %v9494
  %v9496 = vpop.f32.mrb[0].mxu0
  %v9497 = vpop.f32.mrb[0].mxu0
  %v9498 = vadd.f32 0.0, %v9497
  %v9499 = vpop.f32.mrb[0].mxu0
  %9500 = vmatprep.mubr.bf16.mxu0 0
  %9501 = vmatmul.mubr.bf16.gmra.mrb[0].mxu0 %v9310
  %v9502 = vpop.f32.mrb[0].mxu0
  %v9503 = vadd.f32 0.0, %v9502
  %v9504 = vpop.f32.mrb[0].mxu0
  %v9505 = vpop.f32.mrb[0].mxu0
  %v9506 = vadd.f32 0.0, %v9505
  %v9507 = vpop.f32.mrb[0].mxu0
  %9508 = vmatprep.mubr.bf16.mxu0 0
  %9509 = vmatmul.mubr.bf16.gmra.mrb[0].mxu0 %v9311
  %v9510 = vpop.f32.mrb[0].mxu0
  %v9511 = vadd.f32 0.0, %v9510
  %v9512 = vpop.f32.mrb[0].mxu0
  %v9513 = vpop.f32.mrb[0].mxu0
  %v9514 = vadd.f32 0.0, %v9513
  %v9515 = vpop.f32.mrb[0].mxu0
  %9516 = vmatprep.mubr.bf16.mxu0 0
  %9517 = vmatmul.mubr.bf16.gmra.mrb[0].mxu0 %v9312
  %v9518 = vpop.f32.mrb[0].mxu0
  %v9519 = vadd.f32 0.0, %v9518
  %v9520 = vpop.f32.mrb[0].mxu0
  %v9521 = vpop.f32.mrb[0].mxu0
  %v9522 = vadd.f32 0.0, %v9521
  %v9523 = vpop.f32.mrb[0].mxu0
  %9524 = vmatprep.mubr.bf16.mxu0 0
  %9525 = vmatmul.mubr.bf16.gmra.mrb[0].mxu0 %v9313
  %v9526 = vpop.f32.mrb[0].mxu0
  %v9527 = vadd.f32 0.0, %v9526
  %v9528 = vpop.f32.mrb[0].mxu0
  %v9529 = vpop.f32.mrb[0].mxu0
  %v9530 = vadd.f32 0.0, %v9529
  %v9531 = vpop.f32.mrb[0].mxu0
  %9532 = vmatprep.mubr.bf16.mxu0 0
  %9533 = vmatmul.mubr.bf16.gmra.mrb[0].mxu0 %v9314
  %v9534 = vpop.f32.mrb[0].mxu0
  %v9535 = vadd.f32 0.0, %v9534
  %v9536 = vpop.f32.mrb[0].mxu0
  %v9537 = vpop.f32.mrb[0].mxu0
  %v9538 = vadd.f32 0.0, %v9537
  %v9539 = vpop.f32.mrb[0].mxu0
  %9540 = vdwg.mxu0
  %v9541 = vadd.f32 %v9235, %v9415
  %v9542 = vadd.f32 %v9236, %v9418
  %v9543 = vadd.f32 %v9237, %v9423
  %v9544 = vadd.f32 %v9238, %v9426
  %v9545 = vadd.f32 %v9239, %v9431
  %v9546 = vadd.f32 %v9240, %v9434
  %v9547 = vadd.f32 %v9241, %v9439
  %v9548 = vadd.f32 %v9242, %v9442
  %v9549 = vadd.f32 %v9243, %v9447
  %v9550 = vadd.f32 %v9244, %v9450
  %v9551 = vadd.f32 %v9245, %v9455
  %v9552 = vadd.f32 %v9246, %v9458
  %v9553 = vadd.f32 %v9247, %v9463
  %v9554 = vadd.f32 %v9248, %v9466
  %v9555 = vadd.f32 %v9249, %v9471
  %v9556 = vadd.f32 %v9250, %v9474
  %v9557 = vadd.f32 %v9251, %v9479
  %v9558 = vadd.f32 %v9252, %v9482
  %v9559 = vadd.f32 %v9253, %v9487
  %v9560 = vadd.f32 %v9254, %v9490
  %v9561 = vadd.f32 %v9255, %v9495
  %v9562 = vadd.f32 %v9256, %v9498
  %v9563 = vadd.f32 %v9257, %v9503
  %v9564 = vadd.f32 %v9258, %v9506
  %v9565 = vadd.f32 %v9259, %v9511
  %v9566 = vadd.f32 %v9260, %v9514
  %v9567 = vadd.f32 %v9261, %v9519
  %v9568 = vadd.f32 %v9262, %v9522
  %v9569 = vadd.f32 %v9263, %v9527
  %v9570 = vadd.f32 %v9264, %v9530
  %v9571 = vadd.f32 %v9265, %v9535
  %v9572 = vadd.f32 %v9266, %v9538
  %v9573 = vld [vmem:[%s5952 + $0x2] sm:$0xff]
  %v9574 = vld [vmem:[%s5952 + $0x12] sm:$0xff]
  %v9575 = vld [vmem:[%s5952 + $0x22] sm:$0xff]
  %v9576 = vld [vmem:[%s5952 + $0x32] sm:$0xff]
  %v9577 = vld [vmem:[%s5952 + $0x42] sm:$0xff]
  %v9578 = vld [vmem:[%s5952 + $0x52] sm:$0xff]
  %v9579 = vld [vmem:[%s5952 + $0x62] sm:$0xff]
  %v9580 = vld [vmem:[%s5952 + $0x72] sm:$0xff]
  %v9581 = vld [vmem:[%s5952 + $0x82] sm:$0xff]
  %v9582 = vld [vmem:[%s5952 + $0x92] sm:$0xff]
  %v9583 = vld [vmem:[%s5952 + $0xa2] sm:$0xff]
  %v9584 = vld [vmem:[%s5952 + $0xb2] sm:$0xff]
  %v9585 = vld [vmem:[%s5952 + $0xc2] sm:$0xff]
  %v9586 = vld [vmem:[%s5952 + $0xd2] sm:$0xff]
  %v9587 = vld [vmem:[%s5952 + $0xe2] sm:$0xff]
  %v9588 = vld [vmem:[%s5952 + $0xf2] sm:$0xff]
  %v9589 = vld [vmem:[%s5952 + $0x122] sm:$0xff]
  %v9590 = vld [vmem:[%s5952 + $0x132] sm:$0xff]
  %v9591 = vld [vmem:[%s5952 + $0x142] sm:$0xff]
  %v9592 = vld [vmem:[%s5952 + $0x152] sm:$0xff]
  %v9593 = vld [vmem:[%s5952 + $0x162] sm:$0xff]
  %v9594 = vld [vmem:[%s5952 + $0x172] sm:$0xff]
  %v9595 = vld [vmem:[%s5952 + $0x182] sm:$0xff]
  %v9596 = vld [vmem:[%s5952 + $0x192] sm:$0xff]
  %v9597 = vld [vmem:[%s5952 + $0x1a2] sm:$0xff]
  %v9598 = vld [vmem:[%s5952 + $0x1b2] sm:$0xff]
  %v9599 = vld [vmem:[%s5952 + $0x1c2] sm:$0xff]
  %v9600 = vld [vmem:[%s5952 + $0x1d2] sm:$0xff]
  %v9601 = vld [vmem:[%s5952 + $0x1e2] sm:$0xff]
  %v9602 = vld [vmem:[%s5952 + $0x1f2] sm:$0xff]
  %v9603 = vld [vmem:[%s5952 + $0x202] sm:$0xff]
  %v9604 = vld [vmem:[%s5952 + $0x212] sm:$0xff]
  %v9605 = vpack.c.bf16 %v9574, %v9573
  %v9606 = vpack.c.bf16 %v9576, %v9575
  %v9607 = vpack.c.bf16 %v9578, %v9577
  %v9608 = vpack.c.bf16 %v9580, %v9579
  %v9609 = vpack.c.bf16 %v9582, %v9581
  %v9610 = vpack.c.bf16 %v9584, %v9583
  %v9611 = vpack.c.bf16 %v9586, %v9585
  %v9612 = vpack.c.bf16 %v9588, %v9587
  %v9613 = vpack.c.bf16 %v9590, %v9589
  %v9614 = vpack.c.bf16 %v9592, %v9591
  %v9615 = vpack.c.bf16 %v9594, %v9593
  %v9616 = vpack.c.bf16 %v9596, %v9595
  %v9617 = vpack.c.bf16 %v9598, %v9597
  %v9618 = vpack.c.bf16 %v9600, %v9599
  %v9619 = vpack.c.bf16 %v9602, %v9601
  %v9620 = vpack.c.bf16 %v9604, %v9603
  %s9621 = scalar_lea.vmem %s11, 512
  %v9622 = vld [vmem:[%s9621] sm:$0xf]
  %v9623 = vld [vmem:[%s9621 + $0x4] sm:$0xf]
  %v9624 = vld [vmem:[%s9621 + $0x8] sm:$0xf]
  %v9625 = vld [vmem:[%s9621 + $0xc] sm:$0xf]
  %v9626 = vld [vmem:[%s9621 + $0x10] sm:$0xf]
  %v9627 = vld [vmem:[%s9621 + $0x14] sm:$0xf]
  %v9628 = vld [vmem:[%s9621 + $0x18] sm:$0xf]
  %v9629 = vld [vmem:[%s9621 + $0x1c] sm:$0xf]
  %v9630 = vld [vmem:[%s9621 + $0x20] sm:$0xf]
  %v9631 = vld [vmem:[%s9621 + $0x24] sm:$0xf]
  %v9632 = vld [vmem:[%s9621 + $0x28] sm:$0xf]
  %v9633 = vld [vmem:[%s9621 + $0x2c] sm:$0xf]
  %v9634 = vld [vmem:[%s9621 + $0x30] sm:$0xf]
  %v9635 = vld [vmem:[%s9621 + $0x34] sm:$0xf]
  %v9636 = vld [vmem:[%s9621 + $0x38] sm:$0xf]
  %v9637 = vld [vmem:[%s9621 + $0x3c] sm:$0xf]
  %v9654 = vunpack.c.l.b16 %v9622
  %v9655 = vunpack.c.l.b16 %v9623
  %v9656 = vunpack.c.l.b16 %v9624
  %v9657 = vunpack.c.l.b16 %v9625
  %v9658 = vunpack.c.l.b16 %v9626
  %v9659 = vunpack.c.l.b16 %v9627
  %v9660 = vunpack.c.l.b16 %v9628
  %v9661 = vunpack.c.l.b16 %v9629
  %v9662 = vunpack.c.l.b16 %v9630
  %v9663 = vunpack.c.l.b16 %v9631
  %v9664 = vunpack.c.l.b16 %v9632
  %v9665 = vunpack.c.l.b16 %v9633
  %v9666 = vunpack.c.l.b16 %v9634
  %v9667 = vunpack.c.l.b16 %v9635
  %v9668 = vunpack.c.l.b16 %v9636
  %v9669 = vunpack.c.l.b16 %v9637
  %v9670 = vpack.c.b16 %v9655, %v9654
  %v9671 = vpack.c.b16 %v9657, %v9656
  %v9672 = vpack.c.b16 %v9659, %v9658
  %v9673 = vpack.c.b16 %v9661, %v9660
  %v9674 = vpack.c.b16 %v9663, %v9662
  %v9675 = vpack.c.b16 %v9665, %v9664
  %v9676 = vpack.c.b16 %v9667, %v9666
  %v9677 = vpack.c.b16 %v9669, %v9668
  %9686 = vmatprep.subr.bf16.mxu0 0
  %9687 = vmatpush1.bf16.msra.mxu0 %v9670
  %9688 = vmatprep.subr.bf16.mxu0 0
  %9689 = vmatpush1.bf16.msra.mxu0 %v9671
  %9690 = vmatprep.subr.bf16.mxu0 0
  %9691 = vmatpush1.bf16.msra.mxu0 %v9672
  %9692 = vmatprep.subr.bf16.mxu0 0
  %9693 = vmatpush1.bf16.msra.mxu0 %v9673
  %9694 = vmatprep.subr.bf16.mxu0 0
  %9695 = vmatpush1.bf16.msra.mxu0 %v9674
  %9696 = vmatprep.subr.bf16.mxu0 0
  %9697 = vmatpush1.bf16.msra.mxu0 %v9675
  %9698 = vmatprep.subr.bf16.mxu0 0
  %9699 = vmatpush1.bf16.msra.mxu0 %v9676
  %9700 = vmatprep.subr.bf16.mxu0 0
  %9701 = vmatpush1.bf16.msra.mxu0 %v9677
  %9702 = vmatprep.subr.bf16.mxu0 0
  %9703 = vmatpush1.bf16.msra.mxu0 0
  %9704 = vmatprep.subr.bf16.mxu0 0
  %9705 = vmatpush1.bf16.msra.mxu0 0
  %9706 = vmatprep.subr.bf16.mxu0 0
  %9707 = vmatpush1.bf16.msra.mxu0 0
  %9708 = vmatprep.subr.bf16.mxu0 0
  %9709 = vmatpush1.bf16.msra.mxu0 0
  %9710 = vmatprep.subr.bf16.mxu0 0
  %9711 = vmatpush1.bf16.msra.mxu0 0
  %9712 = vmatprep.subr.bf16.mxu0 0
  %9713 = vmatpush1.bf16.msra.mxu0 0
  %9714 = vmatprep.subr.bf16.mxu0 0
  %9715 = vmatpush1.bf16.msra.mxu0 0
  %9716 = vmatprep.subr.bf16.mxu0 0
  %9717 = vmatpush1.bf16.msra.mxu0 0
  %9718 = vmatprep.mubr.bf16.mxu0 0
  %9719 = vmatmul.mubr.bf16.gmra.mrb[0].mxu0 %v9605
  %v9720 = vpop.f32.mrb[0].mxu0
  %v9721 = vadd.f32 0.0, %v9720
  %v9722 = vpop.f32.mrb[0].mxu0
  %v9723 = vpop.f32.mrb[0].mxu0
  %v9724 = vadd.f32 0.0, %v9723
  %v9725 = vpop.f32.mrb[0].mxu0
  %9726 = vmatprep.mubr.bf16.mxu0 0
  %9727 = vmatmul.mubr.bf16.gmra.mrb[0].mxu0 %v9606
  %v9728 = vpop.f32.mrb[0].mxu0
  %v9729 = vadd.f32 0.0, %v9728
  %v9730 = vpop.f32.mrb[0].mxu0
  %v9731 = vpop.f32.mrb[0].mxu0
  %v9732 = vadd.f32 0.0, %v9731
  %v9733 = vpop.f32.mrb[0].mxu0
  %9734 = vmatprep.mubr.bf16.mxu0 0
  %9735 = vmatmul.mubr.bf16.gmra.mrb[0].mxu0 %v9607
  %v9736 = vpop.f32.mrb[0].mxu0
  %v9737 = vadd.f32 0.0, %v9736
  %v9738 = vpop.f32.mrb[0].mxu0
  %v9739 = vpop.f32.mrb[0].mxu0
  %v9740 = vadd.f32 0.0, %v9739
  %v9741 = vpop.f32.mrb[0].mxu0
  %9742 = vmatprep.mubr.bf16.mxu0 0
  %9743 = vmatmul.mubr.bf16.gmra.mrb[0].mxu0 %v9608
  %v9744 = vpop.f32.mrb[0].mxu0
  %v9745 = vadd.f32 0.0, %v9744
  %v9746 = vpop.f32.mrb[0].mxu0
  %v9747 = vpop.f32.mrb[0].mxu0
  %v9748 = vadd.f32 0.0, %v9747
  %v9749 = vpop.f32.mrb[0].mxu0
  %9750 = vmatprep.mubr.bf16.mxu0 0
  %9751 = vmatmul.mubr.bf16.gmra.mrb[0].mxu0 %v9609
  %v9752 = vpop.f32.mrb[0].mxu0
  %v9753 = vadd.f32 0.0, %v9752
  %v9754 = vpop.f32.mrb[0].mxu0
  %v9755 = vpop.f32.mrb[0].mxu0
  %v9756 = vadd.f32 0.0, %v9755
  %v9757 = vpop.f32.mrb[0].mxu0
  %9758 = vmatprep.mubr.bf16.mxu0 0
  %9759 = vmatmul.mubr.bf16.gmra.mrb[0].mxu0 %v9610
  %v9760 = vpop.f32.mrb[0].mxu0
  %v9761 = vadd.f32 0.0, %v9760
  %v9762 = vpop.f32.mrb[0].mxu0
  %v9763 = vpop.f32.mrb[0].mxu0
  %v9764 = vadd.f32 0.0, %v9763
  %v9765 = vpop.f32.mrb[0].mxu0
  %9766 = vmatprep.mubr.bf16.mxu0 0
  %9767 = vmatmul.mubr.bf16.gmra.mrb[0].mxu0 %v9611
  %v9768 = vpop.f32.mrb[0].mxu0
  %v9769 = vadd.f32 0.0, %v9768
  %v9770 = vpop.f32.mrb[0].mxu0
  %v9771 = vpop.f32.mrb[0].mxu0
  %v9772 = vadd.f32 0.0, %v9771
  %v9773 = vpop.f32.mrb[0].mxu0
  %9774 = vmatprep.mubr.bf16.mxu0 0
  %9775 = vmatmul.mubr.bf16.gmra.mrb[0].mxu0 %v9612
  %v9776 = vpop.f32.mrb[0].mxu0
  %v9777 = vadd.f32 0.0, %v9776
  %v9778 = vpop.f32.mrb[0].mxu0
  %v9779 = vpop.f32.mrb[0].mxu0
  %v9780 = vadd.f32 0.0, %v9779
  %v9781 = vpop.f32.mrb[0].mxu0
  %9782 = vmatprep.mubr.bf16.mxu0 0
  %9783 = vmatmul.mubr.bf16.gmra.mrb[0].mxu0 %v9613
  %v9784 = vpop.f32.mrb[0].mxu0
  %v9785 = vadd.f32 0.0, %v9784
  %v9786 = vpop.f32.mrb[0].mxu0
  %v9787 = vpop.f32.mrb[0].mxu0
  %v9788 = vadd.f32 0.0, %v9787
  %v9789 = vpop.f32.mrb[0].mxu0
  %9790 = vmatprep.mubr.bf16.mxu0 0
  %9791 = vmatmul.mubr.bf16.gmra.mrb[0].mxu0 %v9614
  %v9792 = vpop.f32.mrb[0].mxu0
  %v9793 = vadd.f32 0.0, %v9792
  %v9794 = vpop.f32.mrb[0].mxu0
  %v9795 = vpop.f32.mrb[0].mxu0
  %v9796 = vadd.f32 0.0, %v9795
  %v9797 = vpop.f32.mrb[0].mxu0
  %9798 = vmatprep.mubr.bf16.mxu0 0
  %9799 = vmatmul.mubr.bf16.gmra.mrb[0].mxu0 %v9615
  %v9800 = vpop.f32.mrb[0].mxu0
  %v9801 = vadd.f32 0.0, %v9800
  %v9802 = vpop.f32.mrb[0].mxu0
  %v9803 = vpop.f32.mrb[0].mxu0
  %v9804 = vadd.f32 0.0, %v9803
  %v9805 = vpop.f32.mrb[0].mxu0
  %9806 = vmatprep.mubr.bf16.mxu0 0
  %9807 = vmatmul.mubr.bf16.gmra.mrb[0].mxu0 %v9616
  %v9808 = vpop.f32.mrb[0].mxu0
  %v9809 = vadd.f32 0.0, %v9808
  %v9810 = vpop.f32.mrb[0].mxu0
  %v9811 = vpop.f32.mrb[0].mxu0
  %v9812 = vadd.f32 0.0, %v9811
  %v9813 = vpop.f32.mrb[0].mxu0
  %9814 = vmatprep.mubr.bf16.mxu0 0
  %9815 = vmatmul.mubr.bf16.gmra.mrb[0].mxu0 %v9617
  %v9816 = vpop.f32.mrb[0].mxu0
  %v9817 = vadd.f32 0.0, %v9816
  %v9818 = vpop.f32.mrb[0].mxu0
  %v9819 = vpop.f32.mrb[0].mxu0
  %v9820 = vadd.f32 0.0, %v9819
  %v9821 = vpop.f32.mrb[0].mxu0
  %9822 = vmatprep.mubr.bf16.mxu0 0
  %9823 = vmatmul.mubr.bf16.gmra.mrb[0].mxu0 %v9618
  %v9824 = vpop.f32.mrb[0].mxu0
  %v9825 = vadd.f32 0.0, %v9824
  %v9826 = vpop.f32.mrb[0].mxu0
  %v9827 = vpop.f32.mrb[0].mxu0
  %v9828 = vadd.f32 0.0, %v9827
  %v9829 = vpop.f32.mrb[0].mxu0
  %9830 = vmatprep.mubr.bf16.mxu0 0
  %9831 = vmatmul.mubr.bf16.gmra.mrb[0].mxu0 %v9619
  %v9832 = vpop.f32.mrb[0].mxu0
  %v9833 = vadd.f32 0.0, %v9832
  %v9834 = vpop.f32.mrb[0].mxu0
  %v9835 = vpop.f32.mrb[0].mxu0
  %v9836 = vadd.f32 0.0, %v9835
  %v9837 = vpop.f32.mrb[0].mxu0
  %9838 = vmatprep.mubr.bf16.mxu0 0
  %9839 = vmatmul.mubr.bf16.gmra.mrb[0].mxu0 %v9620
  %v9840 = vpop.f32.mrb[0].mxu0
  %v9841 = vadd.f32 0.0, %v9840
  %v9842 = vpop.f32.mrb[0].mxu0
  %v9843 = vpop.f32.mrb[0].mxu0
  %v9844 = vadd.f32 0.0, %v9843
  %v9845 = vpop.f32.mrb[0].mxu0
  %9846 = vdwg.mxu0
  %v9847 = vadd.f32 %v9541, %v9721
  %v9848 = vadd.f32 %v9542, %v9724
  %v9849 = vadd.f32 %v9543, %v9729
  %v9850 = vadd.f32 %v9544, %v9732
  %v9851 = vadd.f32 %v9545, %v9737
  %v9852 = vadd.f32 %v9546, %v9740
  %v9853 = vadd.f32 %v9547, %v9745
  %v9854 = vadd.f32 %v9548, %v9748
  %v9855 = vadd.f32 %v9549, %v9753
  %v9856 = vadd.f32 %v9550, %v9756
  %v9857 = vadd.f32 %v9551, %v9761
  %v9858 = vadd.f32 %v9552, %v9764
  %v9859 = vadd.f32 %v9553, %v9769
  %v9860 = vadd.f32 %v9554, %v9772
  %v9861 = vadd.f32 %v9555, %v9777
  %v9862 = vadd.f32 %v9556, %v9780
  %v9863 = vadd.f32 %v9557, %v9785
  %v9864 = vadd.f32 %v9558, %v9788
  %v9865 = vadd.f32 %v9559, %v9793
  %v9866 = vadd.f32 %v9560, %v9796
  %v9867 = vadd.f32 %v9561, %v9801
  %v9868 = vadd.f32 %v9562, %v9804
  %v9869 = vadd.f32 %v9563, %v9809
  %v9870 = vadd.f32 %v9564, %v9812
  %v9871 = vadd.f32 %v9565, %v9817
  %v9872 = vadd.f32 %v9566, %v9820
  %v9873 = vadd.f32 %v9567, %v9825
  %v9874 = vadd.f32 %v9568, %v9828
  %v9875 = vadd.f32 %v9569, %v9833
  %v9876 = vadd.f32 %v9570, %v9836
  %v9877 = vadd.f32 %v9571, %v9841
  %v9878 = vadd.f32 %v9572, %v9844
  %v9879 = vadd.f32 %v9847, %v9848
  %v9880 = vadd.f32 %v9879, %v9849
  %v9881 = vadd.f32 %v9880, %v9850
  %v9882 = vadd.f32 %v9881, %v9851
  %v9883 = vadd.f32 %v9882, %v9852
  %v9884 = vadd.f32 %v9883, %v9853
  %v9885 = vadd.f32 %v9884, %v9854
  %v9886 = vadd.f32 %v9885, %v9855
  %v9887 = vadd.f32 %v9886, %v9856
  %v9888 = vadd.f32 %v9887, %v9857
  %v9889 = vadd.f32 %v9888, %v9858
  %v9890 = vadd.f32 %v9889, %v9859
  %v9891 = vadd.f32 %v9890, %v9860
  %v9892 = vadd.f32 %v9891, %v9861
  %v9893 = vadd.f32 %v9892, %v9862
  %v9894 = vadd.f32 %v9893, %v9863
  %v9895 = vadd.f32 %v9894, %v9864
  %v9896 = vadd.f32 %v9895, %v9865
  %v9897 = vadd.f32 %v9896, %v9866
  %v9898 = vadd.f32 %v9897, %v9867
  %v9899 = vadd.f32 %v9898, %v9868
  %v9900 = vadd.f32 %v9899, %v9869
  %v9901 = vadd.f32 %v9900, %v9870
  %v9902 = vadd.f32 %v9901, %v9871
  %v9903 = vadd.f32 %v9902, %v9872
  %v9904 = vadd.f32 %v9903, %v9873
  %v9905 = vadd.f32 %v9904, %v9874
  %v9906 = vadd.f32 %v9905, %v9875
  %v9907 = vadd.f32 %v9906, %v9876
  %v9908 = vadd.f32 %v9907, %v9877
  %v9909 = vadd.f32 %v9908, %v9878
  %v9910 = vrot.slane %v9909, 4
  %v9911 = vadd.f32 %v9909, %v9910
  %v9912 = vrot.slane %v9911, 2
  %v9913 = vadd.f32 %v9911, %v9912
  %v9914 = vrot.slane %v9913, 1
  %v9915 = vadd.f32 %v9913, %v9914
  %v9916 = vmul.f32 %v9915, 0.00390625
  %v9917 = vmul.f32 %v9847, %v9847
  %v9918 = vmul.f32 %v9848, %v9848
  %v9919 = vmul.f32 %v9849, %v9849
  %v9920 = vmul.f32 %v9850, %v9850
  %v9921 = vmul.f32 %v9851, %v9851
  %v9922 = vmul.f32 %v9852, %v9852
  %v9923 = vmul.f32 %v9853, %v9853
  %v9924 = vmul.f32 %v9854, %v9854
  %v9925 = vmul.f32 %v9855, %v9855
  %v9926 = vmul.f32 %v9856, %v9856
  %v9927 = vmul.f32 %v9857, %v9857
  %v9928 = vmul.f32 %v9858, %v9858
  %v9929 = vmul.f32 %v9859, %v9859
  %v9930 = vmul.f32 %v9860, %v9860
  %v9931 = vmul.f32 %v9861, %v9861
  %v9932 = vmul.f32 %v9862, %v9862
  %v9933 = vmul.f32 %v9863, %v9863
  %v9934 = vmul.f32 %v9864, %v9864
  %v9935 = vmul.f32 %v9865, %v9865
  %v9936 = vmul.f32 %v9866, %v9866
  %v9937 = vmul.f32 %v9867, %v9867
  %v9938 = vmul.f32 %v9868, %v9868
  %v9939 = vmul.f32 %v9869, %v9869
  %v9940 = vmul.f32 %v9870, %v9870
  %v9941 = vmul.f32 %v9871, %v9871
  %v9942 = vmul.f32 %v9872, %v9872
  %v9943 = vmul.f32 %v9873, %v9873
  %v9944 = vmul.f32 %v9874, %v9874
  %v9945 = vmul.f32 %v9875, %v9875
  %v9946 = vmul.f32 %v9876, %v9876
  %v9947 = vmul.f32 %v9877, %v9877
  %v9948 = vmul.f32 %v9878, %v9878
  %v9949 = vadd.f32 %v9917, %v9918
  %v9950 = vadd.f32 %v9949, %v9919
  %v9951 = vadd.f32 %v9950, %v9920
  %v9952 = vadd.f32 %v9951, %v9921
  %v9953 = vadd.f32 %v9952, %v9922
  %v9954 = vadd.f32 %v9953, %v9923
  %v9955 = vadd.f32 %v9954, %v9924
  %v9956 = vadd.f32 %v9955, %v9925
  %v9957 = vadd.f32 %v9956, %v9926
  %v9958 = vadd.f32 %v9957, %v9927
  %v9959 = vadd.f32 %v9958, %v9928
  %v9960 = vadd.f32 %v9959, %v9929
  %v9961 = vadd.f32 %v9960, %v9930
  %v9962 = vadd.f32 %v9961, %v9931
  %v9963 = vadd.f32 %v9962, %v9932
  %v9964 = vadd.f32 %v9963, %v9933
  %v9965 = vadd.f32 %v9964, %v9934
  %v9966 = vadd.f32 %v9965, %v9935
  %v9967 = vadd.f32 %v9966, %v9936
  %v9968 = vadd.f32 %v9967, %v9937
  %v9969 = vadd.f32 %v9968, %v9938
  %v9970 = vadd.f32 %v9969, %v9939
  %v9971 = vadd.f32 %v9970, %v9940
  %v9972 = vadd.f32 %v9971, %v9941
  %v9973 = vadd.f32 %v9972, %v9942
  %v9974 = vadd.f32 %v9973, %v9943
  %v9975 = vadd.f32 %v9974, %v9944
  %v9976 = vadd.f32 %v9975, %v9945
  %v9977 = vadd.f32 %v9976, %v9946
  %v9978 = vadd.f32 %v9977, %v9947
  %v9979 = vadd.f32 %v9978, %v9948
  %v9980 = vrot.slane %v9979, 4
  %v9981 = vadd.f32 %v9979, %v9980
  %v9982 = vrot.slane %v9981, 2
  %v9983 = vadd.f32 %v9981, %v9982
  %v9984 = vrot.slane %v9983, 1
  %v9985 = vadd.f32 %v9983, %v9984
  %v9986 = vmul.f32 %v9985, 0.00390625
  %v9987 = vmul.f32 %v9916, %v9916
  %v9988 = vsub.f32 %v9986, %v9987
  %v9989 = vmax.f32 %v9988, 0.0
  %v9990 = vsub.f32 %v9847, %v9916
  %v9991 = vsub.f32 %v9848, %v9916
  %v9992 = vsub.f32 %v9849, %v9916
  %v9993 = vsub.f32 %v9850, %v9916
  %v9994 = vsub.f32 %v9851, %v9916
  %v9995 = vsub.f32 %v9852, %v9916
  %v9996 = vsub.f32 %v9853, %v9916
  %v9997 = vsub.f32 %v9854, %v9916
  %v9998 = vsub.f32 %v9855, %v9916
  %v9999 = vsub.f32 %v9856, %v9916
  %v10000 = vsub.f32 %v9857, %v9916
  %v10001 = vsub.f32 %v9858, %v9916
  %v10002 = vsub.f32 %v9859, %v9916
  %v10003 = vsub.f32 %v9860, %v9916
  %v10004 = vsub.f32 %v9861, %v9916
  %v10005 = vsub.f32 %v9862, %v9916
  %v10006 = vsub.f32 %v9863, %v9916
  %v10007 = vsub.f32 %v9864, %v9916
  %v10008 = vsub.f32 %v9865, %v9916
  %v10009 = vsub.f32 %v9866, %v9916
  %v10010 = vsub.f32 %v9867, %v9916
  %v10011 = vsub.f32 %v9868, %v9916
  %v10012 = vsub.f32 %v9869, %v9916
  %v10013 = vsub.f32 %v9870, %v9916
  %v10014 = vsub.f32 %v9871, %v9916
  %v10015 = vsub.f32 %v9872, %v9916
  %v10016 = vsub.f32 %v9873, %v9916
  %v10017 = vsub.f32 %v9874, %v9916
  %v10018 = vsub.f32 %v9875, %v9916
  %v10019 = vsub.f32 %v9876, %v9916
  %v10020 = vsub.f32 %v9877, %v9916
  %v10021 = vsub.f32 %v9878, %v9916
  %v10022 = vadd.f32 %v9989, 1e-05
  %v10023 = vrsqrt.pop %v10022
  %v10024 = vmul.f32 %v9990, %v10023
  %v10025 = vmul.f32 %v9991, %v10023
  %v10026 = vmul.f32 %v9992, %v10023
  %v10027 = vmul.f32 %v9993, %v10023
  %v10028 = vmul.f32 %v9994, %v10023
  %v10029 = vmul.f32 %v9995, %v10023
  %v10030 = vmul.f32 %v9996, %v10023
  %v10031 = vmul.f32 %v9997, %v10023
  %v10032 = vmul.f32 %v9998, %v10023
  %v10033 = vmul.f32 %v9999, %v10023
  %v10034 = vmul.f32 %v10000, %v10023
  %v10035 = vmul.f32 %v10001, %v10023
  %v10036 = vmul.f32 %v10002, %v10023
  %v10037 = vmul.f32 %v10003, %v10023
  %v10038 = vmul.f32 %v10004, %v10023
  %v10039 = vmul.f32 %v10005, %v10023
  %v10040 = vmul.f32 %v10006, %v10023
  %v10041 = vmul.f32 %v10007, %v10023
  %v10042 = vmul.f32 %v10008, %v10023
  %v10043 = vmul.f32 %v10009, %v10023
  %v10044 = vmul.f32 %v10010, %v10023
  %v10045 = vmul.f32 %v10011, %v10023
  %v10046 = vmul.f32 %v10012, %v10023
  %v10047 = vmul.f32 %v10013, %v10023
  %v10048 = vmul.f32 %v10014, %v10023
  %v10049 = vmul.f32 %v10015, %v10023
  %v10050 = vmul.f32 %v10016, %v10023
  %v10051 = vmul.f32 %v10017, %v10023
  %v10052 = vmul.f32 %v10018, %v10023
  %v10053 = vmul.f32 %v10019, %v10023
  %v10054 = vmul.f32 %v10020, %v10023
  %v10055 = vmul.f32 %v10021, %v10023
  %v10056 = vld [vmem:[%s12] sm:$0x1]
  %v10058 = vlaneseq
  %v10059 = vshrl.u32 %v10058, 7
  %v10060 = vsub.s32 0, %v10059
  %v10061 = vrot.slane %v10056, %v10060
  %v10063 = vmul.f32 %v10024, %v10061
  %v10064 = vmul.f32 %v10025, %v10061
  %v10065 = vmul.f32 %v10026, %v10061
  %v10066 = vmul.f32 %v10027, %v10061
  %v10067 = vmul.f32 %v10028, %v10061
  %v10068 = vmul.f32 %v10029, %v10061
  %v10069 = vmul.f32 %v10030, %v10061
  %v10070 = vmul.f32 %v10031, %v10061
  %v10071 = vmul.f32 %v10032, %v10061
  %v10072 = vmul.f32 %v10033, %v10061
  %v10073 = vmul.f32 %v10034, %v10061
  %v10074 = vmul.f32 %v10035, %v10061
  %v10075 = vmul.f32 %v10036, %v10061
  %v10076 = vmul.f32 %v10037, %v10061
  %v10077 = vmul.f32 %v10038, %v10061
  %v10078 = vmul.f32 %v10039, %v10061
  %v10079 = vmul.f32 %v10040, %v10061
  %v10080 = vmul.f32 %v10041, %v10061
  %v10081 = vmul.f32 %v10042, %v10061
  %v10082 = vmul.f32 %v10043, %v10061
  %v10083 = vmul.f32 %v10044, %v10061
  %v10084 = vmul.f32 %v10045, %v10061
  %v10085 = vmul.f32 %v10046, %v10061
  %v10086 = vmul.f32 %v10047, %v10061
  %v10087 = vmul.f32 %v10048, %v10061
  %v10088 = vmul.f32 %v10049, %v10061
  %v10089 = vmul.f32 %v10050, %v10061
  %v10090 = vmul.f32 %v10051, %v10061
  %v10091 = vmul.f32 %v10052, %v10061
  %v10092 = vmul.f32 %v10053, %v10061
  %v10093 = vmul.f32 %v10054, %v10061
  %v10094 = vmul.f32 %v10055, %v10061
  %v10095 = vld [vmem:[%s13] sm:$0x1]
  %v10097 = vlaneseq
  %v10098 = vshrl.u32 %v10097, 7
  %v10099 = vsub.s32 0, %v10098
  %v10100 = vrot.slane %v10095, %v10099
  %v10102 = vadd.f32 %v10063, %v10100
  %v10103 = vadd.f32 %v10064, %v10100
  %v10104 = vadd.f32 %v10065, %v10100
  %v10105 = vadd.f32 %v10066, %v10100
  %v10106 = vadd.f32 %v10067, %v10100
  %v10107 = vadd.f32 %v10068, %v10100
  %v10108 = vadd.f32 %v10069, %v10100
  %v10109 = vadd.f32 %v10070, %v10100
  %v10110 = vadd.f32 %v10071, %v10100
  %v10111 = vadd.f32 %v10072, %v10100
  %v10112 = vadd.f32 %v10073, %v10100
  %v10113 = vadd.f32 %v10074, %v10100
  %v10114 = vadd.f32 %v10075, %v10100
  %v10115 = vadd.f32 %v10076, %v10100
  %v10116 = vadd.f32 %v10077, %v10100
  %v10117 = vadd.f32 %v10078, %v10100
  %v10118 = vadd.f32 %v10079, %v10100
  %v10119 = vadd.f32 %v10080, %v10100
  %v10120 = vadd.f32 %v10081, %v10100
  %v10121 = vadd.f32 %v10082, %v10100
  %v10122 = vadd.f32 %v10083, %v10100
  %v10123 = vadd.f32 %v10084, %v10100
  %v10124 = vadd.f32 %v10085, %v10100
  %v10125 = vadd.f32 %v10086, %v10100
  %v10126 = vadd.f32 %v10087, %v10100
  %v10127 = vadd.f32 %v10088, %v10100
  %v10128 = vadd.f32 %v10089, %v10100
  %v10129 = vadd.f32 %v10090, %v10100
  %v10130 = vadd.f32 %v10091, %v10100
  %v10131 = vadd.f32 %v10092, %v10100
  %v10132 = vadd.f32 %v10093, %v10100
  %v10133 = vadd.f32 %v10094, %v10100
  %v10134 = vmax.f32 %v10102, 0.0
  %v10135 = vmax.f32 %v10103, 0.0
  %v10136 = vmax.f32 %v10104, 0.0
  %v10137 = vmax.f32 %v10105, 0.0
  %v10138 = vmax.f32 %v10106, 0.0
  %v10139 = vmax.f32 %v10107, 0.0
  %v10140 = vmax.f32 %v10108, 0.0
  %v10141 = vmax.f32 %v10109, 0.0
  %v10142 = vmax.f32 %v10110, 0.0
  %v10143 = vmax.f32 %v10111, 0.0
  %v10144 = vmax.f32 %v10112, 0.0
  %v10145 = vmax.f32 %v10113, 0.0
  %v10146 = vmax.f32 %v10114, 0.0
  %v10147 = vmax.f32 %v10115, 0.0
  %v10148 = vmax.f32 %v10116, 0.0
  %v10149 = vmax.f32 %v10117, 0.0
  %v10150 = vmax.f32 %v10118, 0.0
  %v10151 = vmax.f32 %v10119, 0.0
  %v10152 = vmax.f32 %v10120, 0.0
  %v10153 = vmax.f32 %v10121, 0.0
  %v10154 = vmax.f32 %v10122, 0.0
  %v10155 = vmax.f32 %v10123, 0.0
  %v10156 = vmax.f32 %v10124, 0.0
  %v10157 = vmax.f32 %v10125, 0.0
  %v10158 = vmax.f32 %v10126, 0.0
  %v10159 = vmax.f32 %v10127, 0.0
  %v10160 = vmax.f32 %v10128, 0.0
  %v10161 = vmax.f32 %v10129, 0.0
  %v10162 = vmax.f32 %v10130, 0.0
  %v10163 = vmax.f32 %v10131, 0.0
  %v10164 = vmax.f32 %v10132, 0.0
  %v10165 = vmax.f32 %v10133, 0.0
  %v10166 = vmax.f32 %v10134, %v10136
  %v10167 = vmax.f32 %v10135, %v10137
  %v10168 = vmax.f32 %v10166, %v10138
  %v10169 = vmax.f32 %v10167, %v10139
  %v10170 = vmax.f32 %v10168, %v10140
  %v10171 = vmax.f32 %v10169, %v10141
  %v10172 = vmax.f32 %v10170, %v10142
  %v10173 = vmax.f32 %v10171, %v10143
  %v10174 = vmax.f32 %v10172, %v10144
  %v10175 = vmax.f32 %v10173, %v10145
  %v10176 = vmax.f32 %v10174, %v10146
  %v10177 = vmax.f32 %v10175, %v10147
  %v10178 = vmax.f32 %v10176, %v10148
  %v10179 = vmax.f32 %v10177, %v10149
  %v10180 = vmax.f32 %v10178, %v10179
  %v10181 = vmax.f32 %v10150, %v10152
  %v10182 = vmax.f32 %v10151, %v10153
  %v10183 = vmax.f32 %v10181, %v10154
  %v10184 = vmax.f32 %v10182, %v10155
  %v10185 = vmax.f32 %v10183, %v10156
  %v10186 = vmax.f32 %v10184, %v10157
  %v10187 = vmax.f32 %v10185, %v10158
  %v10188 = vmax.f32 %v10186, %v10159
  %v10189 = vmax.f32 %v10187, %v10160
  %v10190 = vmax.f32 %v10188, %v10161
  %v10191 = vmax.f32 %v10189, %v10162
  %v10192 = vmax.f32 %v10190, %v10163
  %v10193 = vmax.f32 %v10191, %v10164
  %v10194 = vmax.f32 %v10192, %v10165
  %v10195 = vmax.f32 %v10193, %v10194
  %10196 = vst [vmem:[%s15] sm:$0xff] %v10180
  %10197 = vst [vmem:[%s15 + $0x8] sm:$0xff] %v10195
  // Predicated region
  $region58: #{point_net_set_abstraction.1} parent=0 // pred_check
    _
  $region59: #{point_net_set_abstraction.1} parent=0 // pred_check_branch
    %10199 = sbr.rel (0) target = $region61
  $region60: #{point_net_set_abstraction.1} parent=0 // pred_region
    _
  $region61: #{point_net_set_abstraction.1} parent=0 // pred_fallthru
    _
  // Predicated region
  $region62: #{point_net_set_abstraction.1} parent=0 // pred_check
    _
  $region63: #{point_net_set_abstraction.1} parent=0 // pred_check_branch
    %10201 = sbr.rel (0) target = $region65
  $region64: #{point_net_set_abstraction.1} parent=0 // pred_region
    _
  $region65: #{point_net_set_abstraction.1} parent=0 // pred_fallthru
    _
  // Predicated region
  $region66: #{point_net_set_abstraction.1} parent=0 // pred_check
    _
  $region67: #{point_net_set_abstraction.1} parent=0 // pred_check_branch
    %10203 = sbr.rel (0) target = $region69
  $region68: #{point_net_set_abstraction.1} parent=0 // pred_region
    _
  $region69: #{point_net_set_abstraction.1} parent=0 // pred_fallthru
    _
  // Predicated region
  $region70: #{point_net_set_abstraction.1} parent=0 // pred_check
    _
  $region71: #{point_net_set_abstraction.1} parent=0 // pred_check_branch
    %10205 = sbr.rel (0) target = $region73
  $region72: #{point_net_set_abstraction.1} parent=0 // pred_region
    _
  $region73: #{point_net_set_abstraction.1} parent=0 // pred_fallthru
    _

</llo_original>
